<compile_context>
chip_gen: v5e
topology: v5e:2x2
jax: 0.10.0
libtpu: 0.0.40
codegen_flags: <defaults>
</compile_context>

<pallas_src>
import jax
import jax.numpy as jnp
import numpy as np
from jax import lax
from jax.experimental import pallas as pl
from jax.experimental.pallas import tpu as pltpu


def _fused_basic_block_kernel(x_ref, w1_ref, b1_ref, w2_ref, b2_ref, o_ref,
                              xpad_scr):
    # x_ref : (N, H, W, C)   bf16 NHWC input (whole batch, single grid step)
    # w*_ref: (9*C, C)       bf16 3x3 HWIO weights, BN scale folded in, the
    #                        (ky, kx, cin) taps flattened into the K dim
    # b*_ref: (1, C)         f32 folded BatchNorm bias (beta - mean*scale)
    # o_ref : (C, N*H*W)     f32 output, transposed so the last dim is lane-dense
    # xpad_scr: VMEM (N, H+2, W+2, C) bf16 -- zero-halo padded conv input (reused)
    N, H, W, C = x_ref.shape
    M = N * H * W

    x = x_ref[...]                                           # (N, H, W, C) bf16

    # In-kernel halo: zero the padded scratch once, then fill the interior.
    # (Ring-only zeroing is a production-shape optimization; buffer is ~5 KiB here.)
    xpad_scr[...] = jnp.zeros_like(xpad_scr)
    xpad_scr[:, 1:H + 1, 1:W + 1, :] = x

    def conv3x3_bn_relu(w_ref, b_ref):
        # im2col with K = 9*C: a single MXU matmul per conv, no accumulator scratch.
        patches = jnp.concatenate(
            [xpad_scr[:, dy:dy + H, dx:dx + W, :].reshape(M, C)
             for dy in range(3) for dx in range(3)],
            axis=-1)                                         # (M, 9*C) bf16
        y = jnp.dot(patches, w_ref[...],
                    preferred_element_type=jnp.float32)      # (M, C) f32 (MXU acc)
        # folded BatchNorm (eval) + ReLU == the ConvBlock epilogue
        return jnp.maximum(y + b_ref[0], 0.0)

    # conv1block
    y1 = conv3x3_bn_relu(w1_ref, b1_ref)

    # Stage conv2's input straight back into the padded VMEM scratch (bf16);
    # the intermediate never touches HBM and the zero halo is preserved.
    xpad_scr[:, 1:H + 1, 1:W + 1, :] = y1.astype(jnp.bfloat16).reshape(N, H, W, C)

    # conv2block
    y2 = conv3x3_bn_relu(w2_ref, b2_ref)

    # Residual identity = already-resident input tile; then the final BasicBlock ReLU.
    identity = x.reshape(M, C).astype(jnp.float32)
    out = jnp.maximum(y2 + identity, 0.0)                    # (M, C) f32

    # Lane-dense store: (C, M) has a 128-multiple last dim -> unmasked vst.
    o_ref[...] = jnp.transpose(out).astype(o_ref.dtype)


@jax.jit
def basic_block_forward(x_nchw, params):
    """BasicBlock.forward (inference). Input/output are NCHW (PyTorch layout)."""
    N, C, H, W = x_nchw.shape
    M = N * H * W
    x_nhwc = jnp.transpose(x_nchw, (0, 2, 3, 1)).astype(jnp.bfloat16)

    out_t = pl.pallas_call(
        _fused_basic_block_kernel,
        out_shape=jax.ShapeDtypeStruct((C, M), jnp.float32),
        grid=(1,),
        in_specs=[
            pl.BlockSpec((N, H, W, C), lambda i: (0, 0, 0, 0)),   # x (whole batch)
            pl.BlockSpec((9 * C, C), lambda i: (0, 0)),           # w1 (folded, K=9C)
            pl.BlockSpec((1, C), lambda i: (0, 0)),               # b1 (folded BN)
            pl.BlockSpec((9 * C, C), lambda i: (0, 0)),           # w2 (folded, K=9C)
            pl.BlockSpec((1, C), lambda i: (0, 0)),               # b2 (folded BN)
        ],
        out_specs=pl.BlockSpec((C, M), lambda i: (0, 0)),
        scratch_shapes=[
            pltpu.VMEM((N, H + 2, W + 2, C), jnp.bfloat16),       # padded conv input
        ],
        compiler_params=pltpu.CompilerParams(
            dimension_semantics=("arbitrary",),
            vmem_limit_bytes=32 * 1024 * 1024,
        ),
    )(x_nhwc, params["w1"], params["b1"], params["w2"], params["b2"])

    # (C, N*H*W) -> NCHW (tiny boundary reshape/transpose, ~8 KB at this shape).
    return jnp.transpose(out_t.reshape(C, N, H, W), (1, 0, 2, 3))


def init_basic_block_params(key, planes, eps=1e-5):
    """Random Conv+BN parameters for both ConvBlocks, pre-folded for inference.

    Kernel-ready params:
      w1, w2: (9*C, C) bf16 -- 3x3 HWIO weights * BN scale, (ky,kx,cin) folded into K
      b1, b2: (1, C)   f32  -- beta - running_mean * scale
    Also returns the plain HWIO bf16 weights for the pure-JAX reference.
    """
    C = planes
    ks = jax.random.split(key, 10)

    def conv_w(k):
        fan_in = C * 9
        return jax.random.normal(k, (3, 3, C, C), jnp.float32) / np.sqrt(fan_in)

    def bn(kg, kb, km, kv):
        gamma = 1.0 + 0.1 * jax.random.normal(kg, (C,), jnp.float32)
        beta = 0.1 * jax.random.normal(kb, (C,), jnp.float32)
        rmean = 0.1 * jax.random.normal(km, (C,), jnp.float32)
        rvar = jnp.abs(jax.random.normal(kv, (C,), jnp.float32)) + 0.5
        scale = gamma / jnp.sqrt(rvar + eps)
        bias = beta - rmean * scale
        return scale, bias

    def fold(w, scale, bias):
        w_hwio = (w * scale[None, None, None, :]).astype(jnp.bfloat16)
        w_k = w_hwio.reshape(9 * C, C)            # (ky,kx,cin) -> K, row-major
        b_k = bias.reshape(1, C).astype(jnp.float32)
        return w_hwio, w_k, b_k

    s1, b1 = bn(ks[1], ks[2], ks[3], ks[4])
    s2, b2 = bn(ks[6], ks[7], ks[8], ks[9])
    w1_hwio, w1k, b1k = fold(conv_w(ks[0]), s1, b1)
    w2_hwio, w2k, b2k = fold(conv_w(ks[5]), s2, b2)
    return dict(w1=w1k, b1=b1k, w2=w2k, b2=b2k,
                w1_hwio=w1_hwio, w2_hwio=w2_hwio)


def _reference_forward(x_nchw, params):
    """Pure-JAX/XLA reference with the same folded BN and bf16 cast points."""
    x = jnp.transpose(x_nchw, (0, 2, 3, 1)).astype(jnp.bfloat16)

    def convblock(z, w_hwio, b):
        y = lax.conv_general_dilated(
            z, w_hwio, window_strides=(1, 1), padding=((1, 1), (1, 1)),
            dimension_numbers=('NHWC', 'HWIO', 'NHWC'),
            preferred_element_type=jnp.float32)
        return jnp.maximum(y + b, 0.0)

    y1 = convblock(x, params['w1_hwio'], params['b1'])
    y2 = convblock(y1.astype(jnp.bfloat16), params['w2_hwio'], params['b2'])
    out = jnp.maximum(y2 + x.astype(jnp.float32), 0.0)
    return jnp.transpose(out, (0, 3, 1, 2))


if __name__ == "__main__":
    key = jax.random.PRNGKey(0)
    k_x, k_p = jax.random.split(key)

    N, C, H, W = 2, 4, 16, 16            # inplanes == planes == 4, stride=1
    x = jax.random.normal(k_x, (N, C, H, W), jnp.float32)
    params = init_basic_block_params(k_p, planes=C)

    out = jax.block_until_ready(basic_block_forward(x, params))
    ref = jax.block_until_ready(_reference_forward(x, params))

    np.testing.assert_allclose(np.asarray(out), np.asarray(ref),
                               rtol=1e-2, atol=1e-2)
    print("KERNEL_OK")
</pallas_src>

<mosaic_0001>
module attributes {stable_mosaic.version = 11 : i64} {
  func.func @_fused_basic_block_kernel(%arg0: i32, %arg1: memref<2x16x16x4xbf16, #tpu.memory_space<vmem>>, %arg2: memref<36x4xbf16, #tpu.memory_space<vmem>>, %arg3: memref<1x4xf32, #tpu.memory_space<vmem>>, %arg4: memref<36x4xbf16, #tpu.memory_space<vmem>>, %arg5: memref<1x4xf32, #tpu.memory_space<vmem>>, %arg6: memref<4x512xf32, #tpu.memory_space<vmem>>, %arg7: memref<2x18x18x4xbf16, #tpu.memory_space<vmem>>) attributes {dimension_semantics = [#tpu.dimension_semantics<arbitrary>], iteration_bounds = array<i64: 1>, scalar_prefetch = 0 : i64, scratch_operands = 1 : i64, tpu.core_type = #tpu.core_type<tc>, window_params = [{pipeline_mode = #tpu.pipeline_mode<synchronous>, transform_indices = @transform_0, window_bounds = array<i64: 2, 16, 16, 4>}, {pipeline_mode = #tpu.pipeline_mode<synchronous>, transform_indices = @transform_1, window_bounds = array<i64: 36, 4>}, {pipeline_mode = #tpu.pipeline_mode<synchronous>, transform_indices = @transform_2, window_bounds = array<i64: 1, 4>}, {pipeline_mode = #tpu.pipeline_mode<synchronous>, transform_indices = @transform_3, window_bounds = array<i64: 36, 4>}, {pipeline_mode = #tpu.pipeline_mode<synchronous>, transform_indices = @transform_4, window_bounds = array<i64: 1, 4>}, {pipeline_mode = #tpu.pipeline_mode<synchronous>, transform_indices = @transform_5, window_bounds = array<i64: 4, 512>}]} {
    %c0 = arith.constant 0 : index
    %c0_0 = arith.constant 0 : index
    %c0_1 = arith.constant 0 : index
    %c0_2 = arith.constant 0 : index
    %0 = vector.load %arg1[%c0, %c0_0, %c0_1, %c0_2] : memref<2x16x16x4xbf16, #tpu.memory_space<vmem>>, vector<2x16x16x4xbf16>
    %cst = arith.constant 0.000000e+00 : bf16
    %1 = vector.broadcast %cst : bf16 to vector<2x18x18x4xbf16>
    %c0_3 = arith.constant 0 : index
    %c0_4 = arith.constant 0 : index
    %c0_5 = arith.constant 0 : index
    %c0_6 = arith.constant 0 : index
    %2 = vector.load %arg7[%c0_3, %c0_4, %c0_5, %c0_6] : memref<2x18x18x4xbf16, #tpu.memory_space<vmem>>, vector<2x18x18x4xbf16>
    tpu.vector_store %arg7[%c0_3, %c0_4, %c0_5, %c0_6], %1 {strides = array<i32>} : memref<2x18x18x4xbf16, #tpu.memory_space<vmem>>, vector<2x18x18x4xbf16>,
    %c0_7 = arith.constant 0 : index
    %c1 = arith.constant 1 : index
    %c1_8 = arith.constant 1 : index
    %c0_9 = arith.constant 0 : index
    %3 = vector.load %arg7[%c0_7, %c1, %c1_8, %c0_9] : memref<2x18x18x4xbf16, #tpu.memory_space<vmem>>, vector<2x16x16x4xbf16>
    tpu.vector_store %arg7[%c0_7, %c1, %c1_8, %c0_9], %0 {strides = array<i32>} : memref<2x18x18x4xbf16, #tpu.memory_space<vmem>>, vector<2x16x16x4xbf16>,
    %c0_10 = arith.constant 0 : index
    %c0_11 = arith.constant 0 : index
    %c0_12 = arith.constant 0 : index
    %c0_13 = arith.constant 0 : index
    %4 = vector.load %arg7[%c0_10, %c0_11, %c0_12, %c0_13] : memref<2x18x18x4xbf16, #tpu.memory_space<vmem>>, vector<2x16x16x4xbf16>
    %5 = vector.shape_cast %4 : vector<2x16x16x4xbf16> to vector<512x4xbf16>
    %c0_14 = arith.constant 0 : index
    %c0_15 = arith.constant 0 : index
    %c1_16 = arith.constant 1 : index
    %c0_17 = arith.constant 0 : index
    %6 = vector.load %arg7[%c0_14, %c0_15, %c1_16, %c0_17] : memref<2x18x18x4xbf16, #tpu.memory_space<vmem>>, vector<2x16x16x4xbf16>
    %7 = vector.shape_cast %6 : vector<2x16x16x4xbf16> to vector<512x4xbf16>
    %c0_18 = arith.constant 0 : index
    %c0_19 = arith.constant 0 : index
    %c2 = arith.constant 2 : index
    %c0_20 = arith.constant 0 : index
    %8 = vector.load %arg7[%c0_18, %c0_19, %c2, %c0_20] : memref<2x18x18x4xbf16, #tpu.memory_space<vmem>>, vector<2x16x16x4xbf16>
    %9 = vector.shape_cast %8 : vector<2x16x16x4xbf16> to vector<512x4xbf16>
    %c0_21 = arith.constant 0 : index
    %c1_22 = arith.constant 1 : index
    %c0_23 = arith.constant 0 : index
    %c0_24 = arith.constant 0 : index
    %10 = vector.load %arg7[%c0_21, %c1_22, %c0_23, %c0_24] : memref<2x18x18x4xbf16, #tpu.memory_space<vmem>>, vector<2x16x16x4xbf16>
    %11 = vector.shape_cast %10 : vector<2x16x16x4xbf16> to vector<512x4xbf16>
    %c0_25 = arith.constant 0 : index
    %c1_26 = arith.constant 1 : index
    %c1_27 = arith.constant 1 : index
    %c0_28 = arith.constant 0 : index
    %12 = vector.load %arg7[%c0_25, %c1_26, %c1_27, %c0_28] : memref<2x18x18x4xbf16, #tpu.memory_space<vmem>>, vector<2x16x16x4xbf16>
    %13 = vector.shape_cast %12 : vector<2x16x16x4xbf16> to vector<512x4xbf16>
    %c0_29 = arith.constant 0 : index
    %c1_30 = arith.constant 1 : index
    %c2_31 = arith.constant 2 : index
    %c0_32 = arith.constant 0 : index
    %14 = vector.load %arg7[%c0_29, %c1_30, %c2_31, %c0_32] : memref<2x18x18x4xbf16, #tpu.memory_space<vmem>>, vector<2x16x16x4xbf16>
    %15 = vector.shape_cast %14 : vector<2x16x16x4xbf16> to vector<512x4xbf16>
    %c0_33 = arith.constant 0 : index
    %c2_34 = arith.constant 2 : index
    %c0_35 = arith.constant 0 : index
    %c0_36 = arith.constant 0 : index
    %16 = vector.load %arg7[%c0_33, %c2_34, %c0_35, %c0_36] : memref<2x18x18x4xbf16, #tpu.memory_space<vmem>>, vector<2x16x16x4xbf16>
    %17 = vector.shape_cast %16 : vector<2x16x16x4xbf16> to vector<512x4xbf16>
    %c0_37 = arith.constant 0 : index
    %c2_38 = arith.constant 2 : index
    %c1_39 = arith.constant 1 : index
    %c0_40 = arith.constant 0 : index
    %18 = vector.load %arg7[%c0_37, %c2_38, %c1_39, %c0_40] : memref<2x18x18x4xbf16, #tpu.memory_space<vmem>>, vector<2x16x16x4xbf16>
    %19 = vector.shape_cast %18 : vector<2x16x16x4xbf16> to vector<512x4xbf16>
    %c0_41 = arith.constant 0 : index
    %c2_42 = arith.constant 2 : index
    %c2_43 = arith.constant 2 : index
    %c0_44 = arith.constant 0 : index
    %20 = vector.load %arg7[%c0_41, %c2_42, %c2_43, %c0_44] : memref<2x18x18x4xbf16, #tpu.memory_space<vmem>>, vector<2x16x16x4xbf16>
    %21 = vector.shape_cast %20 : vector<2x16x16x4xbf16> to vector<512x4xbf16>
    %22 = tpu.concatenate %5, %7, %9, %11, %13, %15, %17, %19, %21 in 1 : vector<512x4xbf16>, vector<512x4xbf16>, vector<512x4xbf16>, vector<512x4xbf16>, vector<512x4xbf16>, vector<512x4xbf16>, vector<512x4xbf16>, vector<512x4xbf16>, vector<512x4xbf16> -> vector<512x36xbf16>
    %c0_45 = arith.constant 0 : index
    %c0_46 = arith.constant 0 : index
    %23 = vector.load %arg2[%c0_45, %c0_46] : memref<36x4xbf16, #tpu.memory_space<vmem>>, vector<36x4xbf16>
    %cst_47 = arith.constant dense<0.000000e+00> : vector<512x4xf32>
    %24 = tpu.matmul %22, %23, %cst_47 {dimension_numbers = #tpu.dot_dimension_numbers<[1], [0], [0], [1], [0, 0, 1, 1], [], []>} : vector<512x36xbf16>, vector<36x4xbf16>, vector<512x4xf32> -> vector<512x4xf32>
    %c0_48 = arith.constant 0 : index
    %c0_49 = arith.constant 0 : index
    %25 = vector.load %arg3[%c0_48, %c0_49] : memref<1x4xf32, #tpu.memory_space<vmem>>, vector<1x4xf32>
    %26 = vector.shape_cast %25 : vector<1x4xf32> to vector<4xf32>
    %27 = vector.shape_cast %26 : vector<4xf32> to vector<1x4xf32>
    %28 = vector.broadcast %27 : vector<1x4xf32> to vector<512x4xf32>
    %29 = arith.addf %24, %28 : vector<512x4xf32>
    %cst_50 = arith.constant 0.000000e+00 : f32
    %30 = vector.broadcast %cst_50 : f32 to vector<512x4xf32>
    %31 = arith.maximumf %29, %30 : vector<512x4xf32>
    %32 = arith.truncf %31 : vector<512x4xf32> to vector<512x4xbf16>
    %33 = vector.shape_cast %32 : vector<512x4xbf16> to vector<2x16x16x4xbf16>
    %c0_51 = arith.constant 0 : index
    %c1_52 = arith.constant 1 : index
    %c1_53 = arith.constant 1 : index
    %c0_54 = arith.constant 0 : index
    %34 = vector.load %arg7[%c0_51, %c1_52, %c1_53, %c0_54] : memref<2x18x18x4xbf16, #tpu.memory_space<vmem>>, vector<2x16x16x4xbf16>
    tpu.vector_store %arg7[%c0_51, %c1_52, %c1_53, %c0_54], %33 {strides = array<i32>} : memref<2x18x18x4xbf16, #tpu.memory_space<vmem>>, vector<2x16x16x4xbf16>,
    %c0_55 = arith.constant 0 : index
    %c0_56 = arith.constant 0 : index
    %c0_57 = arith.constant 0 : index
    %c0_58 = arith.constant 0 : index
    %35 = vector.load %arg7[%c0_55, %c0_56, %c0_57, %c0_58] : memref<2x18x18x4xbf16, #tpu.memory_space<vmem>>, vector<2x16x16x4xbf16>
    %36 = vector.shape_cast %35 : vector<2x16x16x4xbf16> to vector<512x4xbf16>
    %c0_59 = arith.constant 0 : index
    %c0_60 = arith.constant 0 : index
    %c1_61 = arith.constant 1 : index
    %c0_62 = arith.constant 0 : index
    %37 = vector.load %arg7[%c0_59, %c0_60, %c1_61, %c0_62] : memref<2x18x18x4xbf16, #tpu.memory_space<vmem>>, vector<2x16x16x4xbf16>
    %38 = vector.shape_cast %37 : vector<2x16x16x4xbf16> to vector<512x4xbf16>
    %c0_63 = arith.constant 0 : index
    %c0_64 = arith.constant 0 : index
    %c2_65 = arith.constant 2 : index
    %c0_66 = arith.constant 0 : index
    %39 = vector.load %arg7[%c0_63, %c0_64, %c2_65, %c0_66] : memref<2x18x18x4xbf16, #tpu.memory_space<vmem>>, vector<2x16x16x4xbf16>
    %40 = vector.shape_cast %39 : vector<2x16x16x4xbf16> to vector<512x4xbf16>
    %c0_67 = arith.constant 0 : index
    %c1_68 = arith.constant 1 : index
    %c0_69 = arith.constant 0 : index
    %c0_70 = arith.constant 0 : index
    %41 = vector.load %arg7[%c0_67, %c1_68, %c0_69, %c0_70] : memref<2x18x18x4xbf16, #tpu.memory_space<vmem>>, vector<2x16x16x4xbf16>
    %42 = vector.shape_cast %41 : vector<2x16x16x4xbf16> to vector<512x4xbf16>
    %c0_71 = arith.constant 0 : index
    %c1_72 = arith.constant 1 : index
    %c1_73 = arith.constant 1 : index
    %c0_74 = arith.constant 0 : index
    %43 = vector.load %arg7[%c0_71, %c1_72, %c1_73, %c0_74] : memref<2x18x18x4xbf16, #tpu.memory_space<vmem>>, vector<2x16x16x4xbf16>
    %44 = vector.shape_cast %43 : vector<2x16x16x4xbf16> to vector<512x4xbf16>
    %c0_75 = arith.constant 0 : index
    %c1_76 = arith.constant 1 : index
    %c2_77 = arith.constant 2 : index
    %c0_78 = arith.constant 0 : index
    %45 = vector.load %arg7[%c0_75, %c1_76, %c2_77, %c0_78] : memref<2x18x18x4xbf16, #tpu.memory_space<vmem>>, vector<2x16x16x4xbf16>
    %46 = vector.shape_cast %45 : vector<2x16x16x4xbf16> to vector<512x4xbf16>
    %c0_79 = arith.constant 0 : index
    %c2_80 = arith.constant 2 : index
    %c0_81 = arith.constant 0 : index
    %c0_82 = arith.constant 0 : index
    %47 = vector.load %arg7[%c0_79, %c2_80, %c0_81, %c0_82] : memref<2x18x18x4xbf16, #tpu.memory_space<vmem>>, vector<2x16x16x4xbf16>
    %48 = vector.shape_cast %47 : vector<2x16x16x4xbf16> to vector<512x4xbf16>
    %c0_83 = arith.constant 0 : index
    %c2_84 = arith.constant 2 : index
    %c1_85 = arith.constant 1 : index
    %c0_86 = arith.constant 0 : index
    %49 = vector.load %arg7[%c0_83, %c2_84, %c1_85, %c0_86] : memref<2x18x18x4xbf16, #tpu.memory_space<vmem>>, vector<2x16x16x4xbf16>
    %50 = vector.shape_cast %49 : vector<2x16x16x4xbf16> to vector<512x4xbf16>
    %c0_87 = arith.constant 0 : index
    %c2_88 = arith.constant 2 : index
    %c2_89 = arith.constant 2 : index
    %c0_90 = arith.constant 0 : index
    %51 = vector.load %arg7[%c0_87, %c2_88, %c2_89, %c0_90] : memref<2x18x18x4xbf16, #tpu.memory_space<vmem>>, vector<2x16x16x4xbf16>
    %52 = vector.shape_cast %51 : vector<2x16x16x4xbf16> to vector<512x4xbf16>
    %53 = tpu.concatenate %36, %38, %40, %42, %44, %46, %48, %50, %52 in 1 : vector<512x4xbf16>, vector<512x4xbf16>, vector<512x4xbf16>, vector<512x4xbf16>, vector<512x4xbf16>, vector<512x4xbf16>, vector<512x4xbf16>, vector<512x4xbf16>, vector<512x4xbf16> -> vector<512x36xbf16>
    %c0_91 = arith.constant 0 : index
    %c0_92 = arith.constant 0 : index
    %54 = vector.load %arg4[%c0_91, %c0_92] : memref<36x4xbf16, #tpu.memory_space<vmem>>, vector<36x4xbf16>
    %cst_93 = arith.constant dense<0.000000e+00> : vector<512x4xf32>
    %55 = tpu.matmul %53, %54, %cst_93 {dimension_numbers = #tpu.dot_dimension_numbers<[1], [0], [0], [1], [0, 0, 1, 1], [], []>} : vector<512x36xbf16>, vector<36x4xbf16>, vector<512x4xf32> -> vector<512x4xf32>
    %c0_94 = arith.constant 0 : index
    %c0_95 = arith.constant 0 : index
    %56 = vector.load %arg5[%c0_94, %c0_95] : memref<1x4xf32, #tpu.memory_space<vmem>>, vector<1x4xf32>
    %57 = vector.shape_cast %56 : vector<1x4xf32> to vector<4xf32>
    %58 = vector.shape_cast %57 : vector<4xf32> to vector<1x4xf32>
    %59 = vector.broadcast %58 : vector<1x4xf32> to vector<512x4xf32>
    %60 = arith.addf %55, %59 : vector<512x4xf32>
    %cst_96 = arith.constant 0.000000e+00 : f32
    %61 = vector.broadcast %cst_96 : f32 to vector<512x4xf32>
    %62 = arith.maximumf %60, %61 : vector<512x4xf32>
    %63 = vector.shape_cast %0 : vector<2x16x16x4xbf16> to vector<512x4xbf16>
    %64 = arith.extf %63 : vector<512x4xbf16> to vector<512x4xf32>
    %65 = arith.addf %62, %64 : vector<512x4xf32>
    %cst_97 = arith.constant 0.000000e+00 : f32
    %66 = vector.broadcast %cst_97 : f32 to vector<512x4xf32>
    %67 = arith.maximumf %65, %66 : vector<512x4xf32>
    %68 = tpu.transpose %67, [1, 0] : vector<512x4xf32> -> vector<4x512xf32>
    %c0_98 = arith.constant 0 : index
    %c0_99 = arith.constant 0 : index
    %69 = vector.load %arg6[%c0_98, %c0_99] : memref<4x512xf32, #tpu.memory_space<vmem>>, vector<4x512xf32>
    tpu.vector_store %arg6[%c0_98, %c0_99], %68 {strides = array<i32>} : memref<4x512xf32, #tpu.memory_space<vmem>>, vector<4x512xf32>,
    return
  }
  func.func @transform_0(%arg0: i32) -> (i32, i32, i32, i32) {
    %c0_i32 = arith.constant 0 : i32
    %c0_i32_0 = arith.constant 0 : i32
    %c0_i32_1 = arith.constant 0 : i32
    %c0_i32_2 = arith.constant 0 : i32
    %c0_i32_3 = arith.constant 0 : i32
    return %c0_i32, %c0_i32_0, %c0_i32_1, %c0_i32_2 : i32, i32, i32, i32
  }
  func.func @transform_1(%arg0: i32) -> (i32, i32) {
    %c0_i32 = arith.constant 0 : i32
    %c0_i32_0 = arith.constant 0 : i32
    %c0_i32_1 = arith.constant 0 : i32
    return %c0_i32, %c0_i32_0 : i32, i32
  }
  func.func @transform_2(%arg0: i32) -> (i32, i32) {
    %c0_i32 = arith.constant 0 : i32
    %c0_i32_0 = arith.constant 0 : i32
    %c0_i32_1 = arith.constant 0 : i32
    return %c0_i32, %c0_i32_0 : i32, i32
  }
  func.func @transform_3(%arg0: i32) -> (i32, i32) {
    %c0_i32 = arith.constant 0 : i32
    %c0_i32_0 = arith.constant 0 : i32
    %c0_i32_1 = arith.constant 0 : i32
    return %c0_i32, %c0_i32_0 : i32, i32
  }
  func.func @transform_4(%arg0: i32) -> (i32, i32) {
    %c0_i32 = arith.constant 0 : i32
    %c0_i32_0 = arith.constant 0 : i32
    %c0_i32_1 = arith.constant 0 : i32
    return %c0_i32, %c0_i32_0 : i32, i32
  }
  func.func @transform_5(%arg0: i32) -> (i32, i32) {
    %c0_i32 = arith.constant 0 : i32
    %c0_i32_0 = arith.constant 0 : i32
    %c0_i32_1 = arith.constant 0 : i32
    return %c0_i32, %c0_i32_0 : i32, i32
  }
}

</mosaic_0001>

<llo_original>
// kernel: basic_block_forward.1
$region0: #{basic_block_forward.1}
  #allocation0 [shape = 'u32[]', space=smem, size = 0x4, offset = 0x4, fixed_abs, tag = 'smem constant byte address 0x4 - core index']
  #allocation1 [shape = 'u32[72,128]{1,0:T(1,128)}', space=vmem, size = 0x9000, scoped, tag = 'internal scratch']
  #allocation2 [shape = 'bf16[2,18,18,4]{3,2,1,0:T(8,128)(2,1)}', space=vmem, size = 0x36000, scoped, tag = 'scratch operand']
  %s0 = inlined_call_operand.vmem [shape: bf16[2,16,16,4], index: 0, kind: input, shape index: {}]
  %s1 = inlined_call_operand.vmem [shape: bf16[36,4], index: 1, kind: input, shape index: {}]
  %s2 = inlined_call_operand.vmem [shape: f32[1,4], index: 2, kind: input, shape index: {}]
  %s3 = inlined_call_operand.vmem [shape: bf16[36,4], index: 3, kind: input, shape index: {}]
  %s4 = inlined_call_operand.vmem [shape: f32[1,4], index: 4, kind: input, shape index: {}]
  %s5 = inlined_call_operand.vmem [shape: f32[4,512], index: 5, kind: output, shape index: {}]
  %s6 = sld [smem:[#allocation0]]
  $region30: #{basic_block_forward.1} parent=0
    _
  %s8 = ssub.s32 1, %s6
  %s9 = scalar_select 0, %s8, %s6
  // Predicated region
  $region2: #{basic_block_forward.1} parent=0 // pred_check
    _
  $region3: #{basic_block_forward.1} parent=0 // pred_check_branch
    %11 = sbr.rel (0) target = $region5
  $region4: #{basic_block_forward.1} parent=0 // pred_region
    _
  $region5: #{basic_block_forward.1} parent=0 // pred_fallthru
    _
  // Predicated region
  $region6: #{basic_block_forward.1} parent=0 // pred_check
    _
  $region7: #{basic_block_forward.1} parent=0 // pred_check_branch
    %13 = sbr.rel (0) target = $region9
  $region8: #{basic_block_forward.1} parent=0 // pred_region
    _
  $region9: #{basic_block_forward.1} parent=0 // pred_fallthru
    _
  // Predicated region
  $region10: #{basic_block_forward.1} parent=0 // pred_check
    _
  $region11: #{basic_block_forward.1} parent=0 // pred_check_branch
    %15 = sbr.rel (0) target = $region13
  $region12: #{basic_block_forward.1} parent=0 // pred_region
    _
  $region13: #{basic_block_forward.1} parent=0 // pred_fallthru
    _
  // Predicated region
  $region14: #{basic_block_forward.1} parent=0 // pred_check
    _
  $region15: #{basic_block_forward.1} parent=0 // pred_check_branch
    %17 = sbr.rel (0) target = $region17
  $region16: #{basic_block_forward.1} parent=0 // pred_region
    _
  $region17: #{basic_block_forward.1} parent=0 // pred_fallthru
    _
  // Predicated region
  $region18: #{basic_block_forward.1} parent=0 // pred_check
    _
  $region19: #{basic_block_forward.1} parent=0 // pred_check_branch
    %19 = sbr.rel (0) target = $region21
  $region20: #{basic_block_forward.1} parent=0 // pred_region
    _
  $region21: #{basic_block_forward.1} parent=0 // pred_fallthru
    _
  %v21 = vld [vmem:[%s0] sm:$0xf]
  %v22 = vld [vmem:[%s0 + $0x4] sm:$0xf]
  %v23 = vld [vmem:[%s0 + $0x8] sm:$0xf]
  %v24 = vld [vmem:[%s0 + $0xc] sm:$0xf]
  %v25 = vld [vmem:[%s0 + $0x10] sm:$0xf]
  %v26 = vld [vmem:[%s0 + $0x14] sm:$0xf]
  %v27 = vld [vmem:[%s0 + $0x18] sm:$0xf]
  %v28 = vld [vmem:[%s0 + $0x1c] sm:$0xf]
  %v29 = vld [vmem:[%s0 + $0x20] sm:$0xf]
  %v30 = vld [vmem:[%s0 + $0x24] sm:$0xf]
  %v31 = vld [vmem:[%s0 + $0x28] sm:$0xf]
  %v32 = vld [vmem:[%s0 + $0x2c] sm:$0xf]
  %v33 = vld [vmem:[%s0 + $0x30] sm:$0xf]
  %v34 = vld [vmem:[%s0 + $0x34] sm:$0xf]
  %v35 = vld [vmem:[%s0 + $0x38] sm:$0xf]
  %v36 = vld [vmem:[%s0 + $0x3c] sm:$0xf]
  %v37 = vld [vmem:[%s0 + $0x40] sm:$0xf]
  %v38 = vld [vmem:[%s0 + $0x44] sm:$0xf]
  %v39 = vld [vmem:[%s0 + $0x48] sm:$0xf]
  %v40 = vld [vmem:[%s0 + $0x4c] sm:$0xf]
  %v41 = vld [vmem:[%s0 + $0x50] sm:$0xf]
  %v42 = vld [vmem:[%s0 + $0x54] sm:$0xf]
  %v43 = vld [vmem:[%s0 + $0x58] sm:$0xf]
  %v44 = vld [vmem:[%s0 + $0x5c] sm:$0xf]
  %v45 = vld [vmem:[%s0 + $0x60] sm:$0xf]
  %v46 = vld [vmem:[%s0 + $0x64] sm:$0xf]
  %v47 = vld [vmem:[%s0 + $0x68] sm:$0xf]
  %v48 = vld [vmem:[%s0 + $0x6c] sm:$0xf]
  %v49 = vld [vmem:[%s0 + $0x70] sm:$0xf]
  %v50 = vld [vmem:[%s0 + $0x74] sm:$0xf]
  %v51 = vld [vmem:[%s0 + $0x78] sm:$0xf]
  %v52 = vld [vmem:[%s0 + $0x7c] sm:$0xf]
  %v53 = vld [vmem:[%s0 + $0x80] sm:$0xf]
  %v54 = vld [vmem:[%s0 + $0x84] sm:$0xf]
  %v55 = vld [vmem:[%s0 + $0x88] sm:$0xf]
  %v56 = vld [vmem:[%s0 + $0x8c] sm:$0xf]
  %v57 = vld [vmem:[%s0 + $0x90] sm:$0xf]
  %v58 = vld [vmem:[%s0 + $0x94] sm:$0xf]
  %v59 = vld [vmem:[%s0 + $0x98] sm:$0xf]
  %v60 = vld [vmem:[%s0 + $0x9c] sm:$0xf]
  %v61 = vld [vmem:[%s0 + $0xa0] sm:$0xf]
  %v62 = vld [vmem:[%s0 + $0xa4] sm:$0xf]
  %v63 = vld [vmem:[%s0 + $0xa8] sm:$0xf]
  %v64 = vld [vmem:[%s0 + $0xac] sm:$0xf]
  %v65 = vld [vmem:[%s0 + $0xb0] sm:$0xf]
  %v66 = vld [vmem:[%s0 + $0xb4] sm:$0xf]
  %v67 = vld [vmem:[%s0 + $0xb8] sm:$0xf]
  %v68 = vld [vmem:[%s0 + $0xbc] sm:$0xf]
  %v69 = vld [vmem:[%s0 + $0xc0] sm:$0xf]
  %v70 = vld [vmem:[%s0 + $0xc4] sm:$0xf]
  %v71 = vld [vmem:[%s0 + $0xc8] sm:$0xf]
  %v72 = vld [vmem:[%s0 + $0xcc] sm:$0xf]
  %v73 = vld [vmem:[%s0 + $0xd0] sm:$0xf]
  %v74 = vld [vmem:[%s0 + $0xd4] sm:$0xf]
  %v75 = vld [vmem:[%s0 + $0xd8] sm:$0xf]
  %v76 = vld [vmem:[%s0 + $0xdc] sm:$0xf]
  %v77 = vld [vmem:[%s0 + $0xe0] sm:$0xf]
  %v78 = vld [vmem:[%s0 + $0xe4] sm:$0xf]
  %v79 = vld [vmem:[%s0 + $0xe8] sm:$0xf]
  %v80 = vld [vmem:[%s0 + $0xec] sm:$0xf]
  %v81 = vld [vmem:[%s0 + $0xf0] sm:$0xf]
  %v82 = vld [vmem:[%s0 + $0xf4] sm:$0xf]
  %v83 = vld [vmem:[%s0 + $0xf8] sm:$0xf]
  %v84 = vld [vmem:[%s0 + $0xfc] sm:$0xf]
  %vm85 = vcmask 27648
  %86 = vst.msk [vmem:[#allocation2] sm:$0xf] %vm85, 0
  %87 = vst.msk [vmem:[#allocation2 + $0x4] sm:$0xf] %vm85, 0
  %vm88 = vcmask 24576
  %89 = vst.msk [vmem:[#allocation2 + $0x8] sm:$0x1] %vm88, 0
  %90 = vst.msk [vmem:[#allocation2 + $0xc] sm:$0xf] %vm85, 0
  %91 = vst.msk [vmem:[#allocation2 + $0x10] sm:$0xf] %vm85, 0
  %92 = vst.msk [vmem:[#allocation2 + $0x14] sm:$0x1] %vm88, 0
  %93 = vst.msk [vmem:[#allocation2 + $0x18] sm:$0xf] %vm85, 0
  %94 = vst.msk [vmem:[#allocation2 + $0x1c] sm:$0xf] %vm85, 0
  %95 = vst.msk [vmem:[#allocation2 + $0x20] sm:$0x1] %vm88, 0
  %96 = vst.msk [vmem:[#allocation2 + $0x24] sm:$0xf] %vm85, 0
  %97 = vst.msk [vmem:[#allocation2 + $0x28] sm:$0xf] %vm85, 0
  %98 = vst.msk [vmem:[#allocation2 + $0x2c] sm:$0x1] %vm88, 0
  %99 = vst.msk [vmem:[#allocation2 + $0x30] sm:$0xf] %vm85, 0
  %100 = vst.msk [vmem:[#allocation2 + $0x34] sm:$0xf] %vm85, 0
  %101 = vst.msk [vmem:[#allocation2 + $0x38] sm:$0x1] %vm88, 0
  %102 = vst.msk [vmem:[#allocation2 + $0x3c] sm:$0xf] %vm85, 0
  %103 = vst.msk [vmem:[#allocation2 + $0x40] sm:$0xf] %vm85, 0
  %104 = vst.msk [vmem:[#allocation2 + $0x44] sm:$0x1] %vm88, 0
  %105 = vst.msk [vmem:[#allocation2 + $0x48] sm:$0xf] %vm85, 0
  %106 = vst.msk [vmem:[#allocation2 + $0x4c] sm:$0xf] %vm85, 0
  %107 = vst.msk [vmem:[#allocation2 + $0x50] sm:$0x1] %vm88, 0
  %108 = vst.msk [vmem:[#allocation2 + $0x54] sm:$0xf] %vm85, 0
  %109 = vst.msk [vmem:[#allocation2 + $0x58] sm:$0xf] %vm85, 0
  %110 = vst.msk [vmem:[#allocation2 + $0x5c] sm:$0x1] %vm88, 0
  %111 = vst.msk [vmem:[#allocation2 + $0x60] sm:$0xf] %vm85, 0
  %112 = vst.msk [vmem:[#allocation2 + $0x64] sm:$0xf] %vm85, 0
  %113 = vst.msk [vmem:[#allocation2 + $0x68] sm:$0x1] %vm88, 0
  %114 = vst.msk [vmem:[#allocation2 + $0x6c] sm:$0xf] %vm85, 0
  %115 = vst.msk [vmem:[#allocation2 + $0x70] sm:$0xf] %vm85, 0
  %116 = vst.msk [vmem:[#allocation2 + $0x74] sm:$0x1] %vm88, 0
  %117 = vst.msk [vmem:[#allocation2 + $0x78] sm:$0xf] %vm85, 0
  %118 = vst.msk [vmem:[#allocation2 + $0x7c] sm:$0xf] %vm85, 0
  %119 = vst.msk [vmem:[#allocation2 + $0x80] sm:$0x1] %vm88, 0
  %120 = vst.msk [vmem:[#allocation2 + $0x84] sm:$0xf] %vm85, 0
  %121 = vst.msk [vmem:[#allocation2 + $0x88] sm:$0xf] %vm85, 0
  %122 = vst.msk [vmem:[#allocation2 + $0x8c] sm:$0x1] %vm88, 0
  %123 = vst.msk [vmem:[#allocation2 + $0x90] sm:$0xf] %vm85, 0
  %124 = vst.msk [vmem:[#allocation2 + $0x94] sm:$0xf] %vm85, 0
  %125 = vst.msk [vmem:[#allocation2 + $0x98] sm:$0x1] %vm88, 0
  %126 = vst.msk [vmem:[#allocation2 + $0x9c] sm:$0xf] %vm85, 0
  %127 = vst.msk [vmem:[#allocation2 + $0xa0] sm:$0xf] %vm85, 0
  %128 = vst.msk [vmem:[#allocation2 + $0xa4] sm:$0x1] %vm88, 0
  %129 = vst.msk [vmem:[#allocation2 + $0xa8] sm:$0xf] %vm85, 0
  %130 = vst.msk [vmem:[#allocation2 + $0xac] sm:$0xf] %vm85, 0
  %131 = vst.msk [vmem:[#allocation2 + $0xb0] sm:$0x1] %vm88, 0
  %132 = vst.msk [vmem:[#allocation2 + $0xb4] sm:$0xf] %vm85, 0
  %133 = vst.msk [vmem:[#allocation2 + $0xb8] sm:$0xf] %vm85, 0
  %134 = vst.msk [vmem:[#allocation2 + $0xbc] sm:$0x1] %vm88, 0
  %135 = vst.msk [vmem:[#allocation2 + $0xc0] sm:$0xf] %vm85, 0
  %136 = vst.msk [vmem:[#allocation2 + $0xc4] sm:$0xf] %vm85, 0
  %137 = vst.msk [vmem:[#allocation2 + $0xc8] sm:$0x1] %vm88, 0
  %138 = vst.msk [vmem:[#allocation2 + $0xcc] sm:$0xf] %vm85, 0
  %139 = vst.msk [vmem:[#allocation2 + $0xd0] sm:$0xf] %vm85, 0
  %140 = vst.msk [vmem:[#allocation2 + $0xd4] sm:$0x1] %vm88, 0
  %141 = vst.msk [vmem:[#allocation2 + $0xd8] sm:$0xf] %vm85, 0
  %142 = vst.msk [vmem:[#allocation2 + $0xdc] sm:$0xf] %vm85, 0
  %143 = vst.msk [vmem:[#allocation2 + $0xe0] sm:$0x1] %vm88, 0
  %144 = vst.msk [vmem:[#allocation2 + $0xe4] sm:$0xf] %vm85, 0
  %145 = vst.msk [vmem:[#allocation2 + $0xe8] sm:$0xf] %vm85, 0
  %146 = vst.msk [vmem:[#allocation2 + $0xec] sm:$0x1] %vm88, 0
  %147 = vst.msk [vmem:[#allocation2 + $0xf0] sm:$0xf] %vm85, 0
  %148 = vst.msk [vmem:[#allocation2 + $0xf4] sm:$0xf] %vm85, 0
  %149 = vst.msk [vmem:[#allocation2 + $0xf8] sm:$0x1] %vm88, 0
  %150 = vst.msk [vmem:[#allocation2 + $0xfc] sm:$0xf] %vm85, 0
  %151 = vst.msk [vmem:[#allocation2 + $0x100] sm:$0xf] %vm85, 0
  %152 = vst.msk [vmem:[#allocation2 + $0x104] sm:$0x1] %vm88, 0
  %153 = vst.msk [vmem:[#allocation2 + $0x108] sm:$0xf] %vm85, 0
  %154 = vst.msk [vmem:[#allocation2 + $0x10c] sm:$0xf] %vm85, 0
  %155 = vst.msk [vmem:[#allocation2 + $0x110] sm:$0x1] %vm88, 0
  %156 = vst.msk [vmem:[#allocation2 + $0x114] sm:$0xf] %vm85, 0
  %157 = vst.msk [vmem:[#allocation2 + $0x118] sm:$0xf] %vm85, 0
  %158 = vst.msk [vmem:[#allocation2 + $0x11c] sm:$0x1] %vm88, 0
  %159 = vst.msk [vmem:[#allocation2 + $0x120] sm:$0xf] %vm85, 0
  %160 = vst.msk [vmem:[#allocation2 + $0x124] sm:$0xf] %vm85, 0
  %161 = vst.msk [vmem:[#allocation2 + $0x128] sm:$0x1] %vm88, 0
  %162 = vst.msk [vmem:[#allocation2 + $0x12c] sm:$0xf] %vm85, 0
  %163 = vst.msk [vmem:[#allocation2 + $0x130] sm:$0xf] %vm85, 0
  %164 = vst.msk [vmem:[#allocation2 + $0x134] sm:$0x1] %vm88, 0
  %165 = vst.msk [vmem:[#allocation2 + $0x138] sm:$0xf] %vm85, 0
  %166 = vst.msk [vmem:[#allocation2 + $0x13c] sm:$0xf] %vm85, 0
  %167 = vst.msk [vmem:[#allocation2 + $0x140] sm:$0x1] %vm88, 0
  %168 = vst.msk [vmem:[#allocation2 + $0x144] sm:$0xf] %vm85, 0
  %169 = vst.msk [vmem:[#allocation2 + $0x148] sm:$0xf] %vm85, 0
  %170 = vst.msk [vmem:[#allocation2 + $0x14c] sm:$0x1] %vm88, 0
  %171 = vst.msk [vmem:[#allocation2 + $0x150] sm:$0xf] %vm85, 0
  %172 = vst.msk [vmem:[#allocation2 + $0x154] sm:$0xf] %vm85, 0
  %173 = vst.msk [vmem:[#allocation2 + $0x158] sm:$0x1] %vm88, 0
  %174 = vst.msk [vmem:[#allocation2 + $0x15c] sm:$0xf] %vm85, 0
  %175 = vst.msk [vmem:[#allocation2 + $0x160] sm:$0xf] %vm85, 0
  %176 = vst.msk [vmem:[#allocation2 + $0x164] sm:$0x1] %vm88, 0
  %177 = vst.msk [vmem:[#allocation2 + $0x168] sm:$0xf] %vm85, 0
  %178 = vst.msk [vmem:[#allocation2 + $0x16c] sm:$0xf] %vm85, 0
  %179 = vst.msk [vmem:[#allocation2 + $0x170] sm:$0x1] %vm88, 0
  %180 = vst.msk [vmem:[#allocation2 + $0x174] sm:$0xf] %vm85, 0
  %181 = vst.msk [vmem:[#allocation2 + $0x178] sm:$0xf] %vm85, 0
  %182 = vst.msk [vmem:[#allocation2 + $0x17c] sm:$0x1] %vm88, 0
  %183 = vst.msk [vmem:[#allocation2 + $0x180] sm:$0xf] %vm85, 0
  %184 = vst.msk [vmem:[#allocation2 + $0x184] sm:$0xf] %vm85, 0
  %185 = vst.msk [vmem:[#allocation2 + $0x188] sm:$0x1] %vm88, 0
  %186 = vst.msk [vmem:[#allocation2 + $0x18c] sm:$0xf] %vm85, 0
  %187 = vst.msk [vmem:[#allocation2 + $0x190] sm:$0xf] %vm85, 0
  %188 = vst.msk [vmem:[#allocation2 + $0x194] sm:$0x1] %vm88, 0
  %189 = vst.msk [vmem:[#allocation2 + $0x198] sm:$0xf] %vm85, 0
  %190 = vst.msk [vmem:[#allocation2 + $0x19c] sm:$0xf] %vm85, 0
  %191 = vst.msk [vmem:[#allocation2 + $0x1a0] sm:$0x1] %vm88, 0
  %192 = vst.msk [vmem:[#allocation2 + $0x1a4] sm:$0xf] %vm85, 0
  %193 = vst.msk [vmem:[#allocation2 + $0x1a8] sm:$0xf] %vm85, 0
  %194 = vst.msk [vmem:[#allocation2 + $0x1ac] sm:$0x1] %vm88, 0
  %vm195 = vsmask.f32 256
  %vm196 = vsmask.f32 4368
  %vm197 = vmor %vm195, %vm196
  %v199 = vshrl.u32 %v21, 16
  %v201 = vrot.slane %v199, 7
  %v202 = vshll.u32 %v21, 16
  %v204 = vor.u32 %v201, %v202
  %v205 = vrot.slane %v201, 4
  %v207 = vshrl.u32 %v22, 16
  %v209 = vrot.slane %v207, 7
  %v210 = vshll.u32 %v22, 16
  %v212 = vor.u32 %v209, %v210
  %v213 = vsel %vm197, %v205, %v212
  %v214 = vrot.slane %v209, 4
  %v216 = vshrl.u32 %v23, 16
  %v218 = vrot.slane %v216, 7
  %v219 = vshll.u32 %v23, 16
  %v221 = vor.u32 %v218, %v219
  %v222 = vrot.slane %v218, 4
  %v224 = vshrl.u32 %v24, 16
  %v226 = vrot.slane %v224, 7
  %v227 = vshll.u32 %v24, 16
  %v229 = vor.u32 %v226, %v227
  %v230 = vsel %vm197, %v222, %v229
  %v231 = vrot.slane %v226, 4
  %v233 = vshrl.u32 %v25, 16
  %v235 = vrot.slane %v233, 7
  %v236 = vshll.u32 %v25, 16
  %v238 = vor.u32 %v235, %v236
  %v239 = vrot.slane %v235, 4
  %v241 = vshrl.u32 %v26, 16
  %v243 = vrot.slane %v241, 7
  %v244 = vshll.u32 %v26, 16
  %v246 = vor.u32 %v243, %v244
  %v247 = vsel %vm197, %v239, %v246
  %v248 = vrot.slane %v243, 4
  %v250 = vshrl.u32 %v27, 16
  %v252 = vrot.slane %v250, 7
  %v253 = vshll.u32 %v27, 16
  %v255 = vor.u32 %v252, %v253
  %v256 = vrot.slane %v252, 4
  %v258 = vshrl.u32 %v28, 16
  %v260 = vrot.slane %v258, 7
  %v261 = vshll.u32 %v28, 16
  %v263 = vor.u32 %v260, %v261
  %v264 = vsel %vm197, %v256, %v263
  %v265 = vrot.slane %v260, 4
  %v267 = vshrl.u32 %v29, 16
  %v269 = vrot.slane %v267, 7
  %v270 = vshll.u32 %v29, 16
  %v272 = vor.u32 %v269, %v270
  %v273 = vrot.slane %v269, 4
  %v275 = vshrl.u32 %v30, 16
  %v277 = vrot.slane %v275, 7
  %v278 = vshll.u32 %v30, 16
  %v280 = vor.u32 %v277, %v278
  %v281 = vsel %vm197, %v273, %v280
  %v282 = vrot.slane %v277, 4
  %v284 = vshrl.u32 %v31, 16
  %v286 = vrot.slane %v284, 7
  %v287 = vshll.u32 %v31, 16
  %v289 = vor.u32 %v286, %v287
  %v290 = vrot.slane %v286, 4
  %v292 = vshrl.u32 %v32, 16
  %v294 = vrot.slane %v292, 7
  %v295 = vshll.u32 %v32, 16
  %v297 = vor.u32 %v294, %v295
  %v298 = vsel %vm197, %v290, %v297
  %v299 = vrot.slane %v294, 4
  %v301 = vshrl.u32 %v33, 16
  %v303 = vrot.slane %v301, 7
  %v304 = vshll.u32 %v33, 16
  %v306 = vor.u32 %v303, %v304
  %v307 = vrot.slane %v303, 4
  %v309 = vshrl.u32 %v34, 16
  %v311 = vrot.slane %v309, 7
  %v312 = vshll.u32 %v34, 16
  %v314 = vor.u32 %v311, %v312
  %v315 = vsel %vm197, %v307, %v314
  %v316 = vrot.slane %v311, 4
  %v318 = vshrl.u32 %v35, 16
  %v320 = vrot.slane %v318, 7
  %v321 = vshll.u32 %v35, 16
  %v323 = vor.u32 %v320, %v321
  %v324 = vrot.slane %v320, 4
  %v326 = vshrl.u32 %v36, 16
  %v328 = vrot.slane %v326, 7
  %v329 = vshll.u32 %v36, 16
  %v331 = vor.u32 %v328, %v329
  %v332 = vsel %vm197, %v324, %v331
  %v333 = vrot.slane %v328, 4
  %v335 = vshrl.u32 %v37, 16
  %v337 = vrot.slane %v335, 7
  %v338 = vshll.u32 %v37, 16
  %v340 = vor.u32 %v337, %v338
  %v341 = vrot.slane %v337, 4
  %v343 = vshrl.u32 %v38, 16
  %v345 = vrot.slane %v343, 7
  %v346 = vshll.u32 %v38, 16
  %v348 = vor.u32 %v345, %v346
  %v349 = vsel %vm197, %v341, %v348
  %v350 = vrot.slane %v345, 4
  %v352 = vshrl.u32 %v39, 16
  %v354 = vrot.slane %v352, 7
  %v355 = vshll.u32 %v39, 16
  %v357 = vor.u32 %v354, %v355
  %v358 = vrot.slane %v354, 4
  %v360 = vshrl.u32 %v40, 16
  %v362 = vrot.slane %v360, 7
  %v363 = vshll.u32 %v40, 16
  %v365 = vor.u32 %v362, %v363
  %v366 = vsel %vm197, %v358, %v365
  %v367 = vrot.slane %v362, 4
  %v369 = vshrl.u32 %v41, 16
  %v371 = vrot.slane %v369, 7
  %v372 = vshll.u32 %v41, 16
  %v374 = vor.u32 %v371, %v372
  %v375 = vrot.slane %v371, 4
  %v377 = vshrl.u32 %v42, 16
  %v379 = vrot.slane %v377, 7
  %v380 = vshll.u32 %v42, 16
  %v382 = vor.u32 %v379, %v380
  %v383 = vsel %vm197, %v375, %v382
  %v384 = vrot.slane %v379, 4
  %v386 = vshrl.u32 %v43, 16
  %v388 = vrot.slane %v386, 7
  %v389 = vshll.u32 %v43, 16
  %v391 = vor.u32 %v388, %v389
  %v392 = vrot.slane %v388, 4
  %v394 = vshrl.u32 %v44, 16
  %v396 = vrot.slane %v394, 7
  %v397 = vshll.u32 %v44, 16
  %v399 = vor.u32 %v396, %v397
  %v400 = vsel %vm197, %v392, %v399
  %v401 = vrot.slane %v396, 4
  %v403 = vshrl.u32 %v45, 16
  %v405 = vrot.slane %v403, 7
  %v406 = vshll.u32 %v45, 16
  %v408 = vor.u32 %v405, %v406
  %v409 = vrot.slane %v405, 4
  %v411 = vshrl.u32 %v46, 16
  %v413 = vrot.slane %v411, 7
  %v414 = vshll.u32 %v46, 16
  %v416 = vor.u32 %v413, %v414
  %v417 = vsel %vm197, %v409, %v416
  %v418 = vrot.slane %v413, 4
  %v420 = vshrl.u32 %v47, 16
  %v422 = vrot.slane %v420, 7
  %v423 = vshll.u32 %v47, 16
  %v425 = vor.u32 %v422, %v423
  %v426 = vrot.slane %v422, 4
  %v428 = vshrl.u32 %v48, 16
  %v430 = vrot.slane %v428, 7
  %v431 = vshll.u32 %v48, 16
  %v433 = vor.u32 %v430, %v431
  %v434 = vsel %vm197, %v426, %v433
  %v435 = vrot.slane %v430, 4
  %v437 = vshrl.u32 %v49, 16
  %v439 = vrot.slane %v437, 7
  %v440 = vshll.u32 %v49, 16
  %v442 = vor.u32 %v439, %v440
  %v443 = vrot.slane %v439, 4
  %v445 = vshrl.u32 %v50, 16
  %v447 = vrot.slane %v445, 7
  %v448 = vshll.u32 %v50, 16
  %v450 = vor.u32 %v447, %v448
  %v451 = vsel %vm197, %v443, %v450
  %v452 = vrot.slane %v447, 4
  %v454 = vshrl.u32 %v51, 16
  %v456 = vrot.slane %v454, 7
  %v457 = vshll.u32 %v51, 16
  %v459 = vor.u32 %v456, %v457
  %v460 = vrot.slane %v456, 4
  %v462 = vshrl.u32 %v52, 16
  %v464 = vrot.slane %v462, 7
  %v465 = vshll.u32 %v52, 16
  %v467 = vor.u32 %v464, %v465
  %v468 = vsel %vm197, %v460, %v467
  %v469 = vrot.slane %v464, 4
  %v471 = vshrl.u32 %v53, 16
  %v473 = vrot.slane %v471, 7
  %v474 = vshll.u32 %v53, 16
  %v476 = vor.u32 %v473, %v474
  %v477 = vrot.slane %v473, 4
  %v479 = vshrl.u32 %v54, 16
  %v481 = vrot.slane %v479, 7
  %v482 = vshll.u32 %v54, 16
  %v484 = vor.u32 %v481, %v482
  %v485 = vsel %vm197, %v477, %v484
  %v486 = vrot.slane %v481, 4
  %v488 = vshrl.u32 %v55, 16
  %v490 = vrot.slane %v488, 7
  %v491 = vshll.u32 %v55, 16
  %v493 = vor.u32 %v490, %v491
  %v494 = vrot.slane %v490, 4
  %v496 = vshrl.u32 %v56, 16
  %v498 = vrot.slane %v496, 7
  %v499 = vshll.u32 %v56, 16
  %v501 = vor.u32 %v498, %v499
  %v502 = vsel %vm197, %v494, %v501
  %v503 = vrot.slane %v498, 4
  %v505 = vshrl.u32 %v57, 16
  %v507 = vrot.slane %v505, 7
  %v508 = vshll.u32 %v57, 16
  %v510 = vor.u32 %v507, %v508
  %v511 = vrot.slane %v507, 4
  %v513 = vshrl.u32 %v58, 16
  %v515 = vrot.slane %v513, 7
  %v516 = vshll.u32 %v58, 16
  %v518 = vor.u32 %v515, %v516
  %v519 = vsel %vm197, %v511, %v518
  %v520 = vrot.slane %v515, 4
  %v522 = vshrl.u32 %v59, 16
  %v524 = vrot.slane %v522, 7
  %v525 = vshll.u32 %v59, 16
  %v527 = vor.u32 %v524, %v525
  %v528 = vrot.slane %v524, 4
  %v530 = vshrl.u32 %v60, 16
  %v532 = vrot.slane %v530, 7
  %v533 = vshll.u32 %v60, 16
  %v535 = vor.u32 %v532, %v533
  %v536 = vsel %vm197, %v528, %v535
  %v537 = vrot.slane %v532, 4
  %v539 = vshrl.u32 %v61, 16
  %v541 = vrot.slane %v539, 7
  %v542 = vshll.u32 %v61, 16
  %v544 = vor.u32 %v541, %v542
  %v545 = vrot.slane %v541, 4
  %v547 = vshrl.u32 %v62, 16
  %v549 = vrot.slane %v547, 7
  %v550 = vshll.u32 %v62, 16
  %v552 = vor.u32 %v549, %v550
  %v553 = vsel %vm197, %v545, %v552
  %v554 = vrot.slane %v549, 4
  %v556 = vshrl.u32 %v63, 16
  %v558 = vrot.slane %v556, 7
  %v559 = vshll.u32 %v63, 16
  %v561 = vor.u32 %v558, %v559
  %v562 = vrot.slane %v558, 4
  %v564 = vshrl.u32 %v64, 16
  %v566 = vrot.slane %v564, 7
  %v567 = vshll.u32 %v64, 16
  %v569 = vor.u32 %v566, %v567
  %v570 = vsel %vm197, %v562, %v569
  %v571 = vrot.slane %v566, 4
  %v573 = vshrl.u32 %v65, 16
  %v575 = vrot.slane %v573, 7
  %v576 = vshll.u32 %v65, 16
  %v578 = vor.u32 %v575, %v576
  %v579 = vrot.slane %v575, 4
  %v581 = vshrl.u32 %v66, 16
  %v583 = vrot.slane %v581, 7
  %v584 = vshll.u32 %v66, 16
  %v586 = vor.u32 %v583, %v584
  %v587 = vsel %vm197, %v579, %v586
  %v588 = vrot.slane %v583, 4
  %v590 = vshrl.u32 %v67, 16
  %v592 = vrot.slane %v590, 7
  %v593 = vshll.u32 %v67, 16
  %v595 = vor.u32 %v592, %v593
  %v596 = vrot.slane %v592, 4
  %v598 = vshrl.u32 %v68, 16
  %v600 = vrot.slane %v598, 7
  %v601 = vshll.u32 %v68, 16
  %v603 = vor.u32 %v600, %v601
  %v604 = vsel %vm197, %v596, %v603
  %v605 = vrot.slane %v600, 4
  %v607 = vshrl.u32 %v69, 16
  %v609 = vrot.slane %v607, 7
  %v610 = vshll.u32 %v69, 16
  %v612 = vor.u32 %v609, %v610
  %v613 = vrot.slane %v609, 4
  %v615 = vshrl.u32 %v70, 16
  %v617 = vrot.slane %v615, 7
  %v618 = vshll.u32 %v70, 16
  %v620 = vor.u32 %v617, %v618
  %v621 = vsel %vm197, %v613, %v620
  %v622 = vrot.slane %v617, 4
  %v624 = vshrl.u32 %v71, 16
  %v626 = vrot.slane %v624, 7
  %v627 = vshll.u32 %v71, 16
  %v629 = vor.u32 %v626, %v627
  %v630 = vrot.slane %v626, 4
  %v632 = vshrl.u32 %v72, 16
  %v634 = vrot.slane %v632, 7
  %v635 = vshll.u32 %v72, 16
  %v637 = vor.u32 %v634, %v635
  %v638 = vsel %vm197, %v630, %v637
  %v639 = vrot.slane %v634, 4
  %v641 = vshrl.u32 %v73, 16
  %v643 = vrot.slane %v641, 7
  %v644 = vshll.u32 %v73, 16
  %v646 = vor.u32 %v643, %v644
  %v647 = vrot.slane %v643, 4
  %v649 = vshrl.u32 %v74, 16
  %v651 = vrot.slane %v649, 7
  %v652 = vshll.u32 %v74, 16
  %v654 = vor.u32 %v651, %v652
  %v655 = vsel %vm197, %v647, %v654
  %v656 = vrot.slane %v651, 4
  %v658 = vshrl.u32 %v75, 16
  %v660 = vrot.slane %v658, 7
  %v661 = vshll.u32 %v75, 16
  %v663 = vor.u32 %v660, %v661
  %v664 = vrot.slane %v660, 4
  %v666 = vshrl.u32 %v76, 16
  %v668 = vrot.slane %v666, 7
  %v669 = vshll.u32 %v76, 16
  %v671 = vor.u32 %v668, %v669
  %v672 = vsel %vm197, %v664, %v671
  %v673 = vrot.slane %v668, 4
  %v675 = vshrl.u32 %v77, 16
  %v677 = vrot.slane %v675, 7
  %v678 = vshll.u32 %v77, 16
  %v680 = vor.u32 %v677, %v678
  %v681 = vrot.slane %v677, 4
  %v683 = vshrl.u32 %v78, 16
  %v685 = vrot.slane %v683, 7
  %v686 = vshll.u32 %v78, 16
  %v688 = vor.u32 %v685, %v686
  %v689 = vsel %vm197, %v681, %v688
  %v690 = vrot.slane %v685, 4
  %v692 = vshrl.u32 %v79, 16
  %v694 = vrot.slane %v692, 7
  %v695 = vshll.u32 %v79, 16
  %v697 = vor.u32 %v694, %v695
  %v698 = vrot.slane %v694, 4
  %v700 = vshrl.u32 %v80, 16
  %v702 = vrot.slane %v700, 7
  %v703 = vshll.u32 %v80, 16
  %v705 = vor.u32 %v702, %v703
  %v706 = vsel %vm197, %v698, %v705
  %v707 = vrot.slane %v702, 4
  %v709 = vshrl.u32 %v81, 16
  %v711 = vrot.slane %v709, 7
  %v712 = vshll.u32 %v81, 16
  %v714 = vor.u32 %v711, %v712
  %v715 = vrot.slane %v711, 4
  %v717 = vshrl.u32 %v82, 16
  %v719 = vrot.slane %v717, 7
  %v720 = vshll.u32 %v82, 16
  %v722 = vor.u32 %v719, %v720
  %v723 = vsel %vm197, %v715, %v722
  %v724 = vrot.slane %v719, 4
  %v726 = vshrl.u32 %v83, 16
  %v728 = vrot.slane %v726, 7
  %v729 = vshll.u32 %v83, 16
  %v731 = vor.u32 %v728, %v729
  %v732 = vrot.slane %v728, 4
  %v734 = vshrl.u32 %v84, 16
  %v736 = vrot.slane %v734, 7
  %v737 = vshll.u32 %v84, 16
  %v739 = vor.u32 %v736, %v737
  %v740 = vsel %vm197, %v732, %v739
  %v741 = vrot.slane %v736, 4
  %s838 = scalar_lea.vmem [#allocation2], 12
  %vm839 = vcmask 27648
  %vm840 = vsmask.f32 7938
  %vm841 = vmand %vm839, %vm840
  %v842 = vld [vmem:[%s838] sm:$0xf]
  %v843 = vsel %vm841, %v204, %v842
  %844 = vst [vmem:[%s838] sm:$0xf] %v843
  %845 = vst.msk [vmem:[%s838 + $0x4] sm:$0xf] %vm85, %v213
  %vm846 = vcmask 24576
  %vm847 = vmand %vm846, %vm195
  %v848 = vld [vmem:[%s838 + $0x8] sm:$0x1]
  %v849 = vsel %vm847, %v214, %v848
  %850 = vst [vmem:[%s838 + $0x8] sm:$0x1] %v849
  %v851 = vld [vmem:[%s838 + $0xc] sm:$0xf]
  %v852 = vsel %vm841, %v221, %v851
  %853 = vst [vmem:[%s838 + $0xc] sm:$0xf] %v852
  %854 = vst.msk [vmem:[%s838 + $0x10] sm:$0xf] %vm85, %v230
  %v855 = vld [vmem:[%s838 + $0x14] sm:$0x1]
  %v856 = vsel %vm847, %v231, %v855
  %857 = vst [vmem:[%s838 + $0x14] sm:$0x1] %v856
  %v858 = vld [vmem:[%s838 + $0x18] sm:$0xf]
  %v859 = vsel %vm841, %v238, %v858
  %860 = vst [vmem:[%s838 + $0x18] sm:$0xf] %v859
  %861 = vst.msk [vmem:[%s838 + $0x1c] sm:$0xf] %vm85, %v247
  %v862 = vld [vmem:[%s838 + $0x20] sm:$0x1]
  %v863 = vsel %vm847, %v248, %v862
  %864 = vst [vmem:[%s838 + $0x20] sm:$0x1] %v863
  %v865 = vld [vmem:[%s838 + $0x24] sm:$0xf]
  %v866 = vsel %vm841, %v255, %v865
  %867 = vst [vmem:[%s838 + $0x24] sm:$0xf] %v866
  %868 = vst.msk [vmem:[%s838 + $0x28] sm:$0xf] %vm85, %v264
  %v869 = vld [vmem:[%s838 + $0x2c] sm:$0x1]
  %v870 = vsel %vm847, %v265, %v869
  %871 = vst [vmem:[%s838 + $0x2c] sm:$0x1] %v870
  %v872 = vld [vmem:[%s838 + $0x30] sm:$0xf]
  %v873 = vsel %vm841, %v272, %v872
  %874 = vst [vmem:[%s838 + $0x30] sm:$0xf] %v873
  %875 = vst.msk [vmem:[%s838 + $0x34] sm:$0xf] %vm85, %v281
  %v876 = vld [vmem:[%s838 + $0x38] sm:$0x1]
  %v877 = vsel %vm847, %v282, %v876
  %878 = vst [vmem:[%s838 + $0x38] sm:$0x1] %v877
  %v879 = vld [vmem:[%s838 + $0x3c] sm:$0xf]
  %v880 = vsel %vm841, %v289, %v879
  %881 = vst [vmem:[%s838 + $0x3c] sm:$0xf] %v880
  %882 = vst.msk [vmem:[%s838 + $0x40] sm:$0xf] %vm85, %v298
  %v883 = vld [vmem:[%s838 + $0x44] sm:$0x1]
  %v884 = vsel %vm847, %v299, %v883
  %885 = vst [vmem:[%s838 + $0x44] sm:$0x1] %v884
  %v886 = vld [vmem:[%s838 + $0x48] sm:$0xf]
  %v887 = vsel %vm841, %v306, %v886
  %888 = vst [vmem:[%s838 + $0x48] sm:$0xf] %v887
  %889 = vst.msk [vmem:[%s838 + $0x4c] sm:$0xf] %vm85, %v315
  %v890 = vld [vmem:[%s838 + $0x50] sm:$0x1]
  %v891 = vsel %vm847, %v316, %v890
  %892 = vst [vmem:[%s838 + $0x50] sm:$0x1] %v891
  %v893 = vld [vmem:[%s838 + $0x54] sm:$0xf]
  %v894 = vsel %vm841, %v323, %v893
  %895 = vst [vmem:[%s838 + $0x54] sm:$0xf] %v894
  %896 = vst.msk [vmem:[%s838 + $0x58] sm:$0xf] %vm85, %v332
  %v897 = vld [vmem:[%s838 + $0x5c] sm:$0x1]
  %v898 = vsel %vm847, %v333, %v897
  %899 = vst [vmem:[%s838 + $0x5c] sm:$0x1] %v898
  %v900 = vld [vmem:[%s838 + $0x60] sm:$0xf]
  %v901 = vsel %vm841, %v340, %v900
  %902 = vst [vmem:[%s838 + $0x60] sm:$0xf] %v901
  %903 = vst.msk [vmem:[%s838 + $0x64] sm:$0xf] %vm85, %v349
  %v904 = vld [vmem:[%s838 + $0x68] sm:$0x1]
  %v905 = vsel %vm847, %v350, %v904
  %906 = vst [vmem:[%s838 + $0x68] sm:$0x1] %v905
  %v907 = vld [vmem:[%s838 + $0x6c] sm:$0xf]
  %v908 = vsel %vm841, %v357, %v907
  %909 = vst [vmem:[%s838 + $0x6c] sm:$0xf] %v908
  %910 = vst.msk [vmem:[%s838 + $0x70] sm:$0xf] %vm85, %v366
  %v911 = vld [vmem:[%s838 + $0x74] sm:$0x1]
  %v912 = vsel %vm847, %v367, %v911
  %913 = vst [vmem:[%s838 + $0x74] sm:$0x1] %v912
  %v914 = vld [vmem:[%s838 + $0x78] sm:$0xf]
  %v915 = vsel %vm841, %v374, %v914
  %916 = vst [vmem:[%s838 + $0x78] sm:$0xf] %v915
  %917 = vst.msk [vmem:[%s838 + $0x7c] sm:$0xf] %vm85, %v383
  %v918 = vld [vmem:[%s838 + $0x80] sm:$0x1]
  %v919 = vsel %vm847, %v384, %v918
  %920 = vst [vmem:[%s838 + $0x80] sm:$0x1] %v919
  %v921 = vld [vmem:[%s838 + $0x84] sm:$0xf]
  %v922 = vsel %vm841, %v391, %v921
  %923 = vst [vmem:[%s838 + $0x84] sm:$0xf] %v922
  %924 = vst.msk [vmem:[%s838 + $0x88] sm:$0xf] %vm85, %v400
  %v925 = vld [vmem:[%s838 + $0x8c] sm:$0x1]
  %v926 = vsel %vm847, %v401, %v925
  %927 = vst [vmem:[%s838 + $0x8c] sm:$0x1] %v926
  %v928 = vld [vmem:[%s838 + $0x90] sm:$0xf]
  %v929 = vsel %vm841, %v408, %v928
  %930 = vst [vmem:[%s838 + $0x90] sm:$0xf] %v929
  %931 = vst.msk [vmem:[%s838 + $0x94] sm:$0xf] %vm85, %v417
  %v932 = vld [vmem:[%s838 + $0x98] sm:$0x1]
  %v933 = vsel %vm847, %v418, %v932
  %934 = vst [vmem:[%s838 + $0x98] sm:$0x1] %v933
  %v935 = vld [vmem:[%s838 + $0x9c] sm:$0xf]
  %v936 = vsel %vm841, %v425, %v935
  %937 = vst [vmem:[%s838 + $0x9c] sm:$0xf] %v936
  %938 = vst.msk [vmem:[%s838 + $0xa0] sm:$0xf] %vm85, %v434
  %v939 = vld [vmem:[%s838 + $0xa4] sm:$0x1]
  %v940 = vsel %vm847, %v435, %v939
  %941 = vst [vmem:[%s838 + $0xa4] sm:$0x1] %v940
  %v942 = vld [vmem:[%s838 + $0xa8] sm:$0xf]
  %v943 = vsel %vm841, %v442, %v942
  %944 = vst [vmem:[%s838 + $0xa8] sm:$0xf] %v943
  %945 = vst.msk [vmem:[%s838 + $0xac] sm:$0xf] %vm85, %v451
  %v946 = vld [vmem:[%s838 + $0xb0] sm:$0x1]
  %v947 = vsel %vm847, %v452, %v946
  %948 = vst [vmem:[%s838 + $0xb0] sm:$0x1] %v947
  %v949 = vld [vmem:[%s838 + $0xb4] sm:$0xf]
  %v950 = vsel %vm841, %v459, %v949
  %951 = vst [vmem:[%s838 + $0xb4] sm:$0xf] %v950
  %952 = vst.msk [vmem:[%s838 + $0xb8] sm:$0xf] %vm85, %v468
  %v953 = vld [vmem:[%s838 + $0xbc] sm:$0x1]
  %v954 = vsel %vm847, %v469, %v953
  %955 = vst [vmem:[%s838 + $0xbc] sm:$0x1] %v954
  %v956 = vld [vmem:[%s838 + $0xd8] sm:$0xf]
  %v957 = vsel %vm841, %v476, %v956
  %958 = vst [vmem:[%s838 + $0xd8] sm:$0xf] %v957
  %959 = vst.msk [vmem:[%s838 + $0xdc] sm:$0xf] %vm85, %v485
  %v960 = vld [vmem:[%s838 + $0xe0] sm:$0x1]
  %v961 = vsel %vm847, %v486, %v960
  %962 = vst [vmem:[%s838 + $0xe0] sm:$0x1] %v961
  %v963 = vld [vmem:[%s838 + $0xe4] sm:$0xf]
  %v964 = vsel %vm841, %v493, %v963
  %965 = vst [vmem:[%s838 + $0xe4] sm:$0xf] %v964
  %966 = vst.msk [vmem:[%s838 + $0xe8] sm:$0xf] %vm85, %v502
  %v967 = vld [vmem:[%s838 + $0xec] sm:$0x1]
  %v968 = vsel %vm847, %v503, %v967
  %969 = vst [vmem:[%s838 + $0xec] sm:$0x1] %v968
  %v970 = vld [vmem:[%s838 + $0xf0] sm:$0xf]
  %v971 = vsel %vm841, %v510, %v970
  %972 = vst [vmem:[%s838 + $0xf0] sm:$0xf] %v971
  %973 = vst.msk [vmem:[%s838 + $0xf4] sm:$0xf] %vm85, %v519
  %v974 = vld [vmem:[%s838 + $0xf8] sm:$0x1]
  %v975 = vsel %vm847, %v520, %v974
  %976 = vst [vmem:[%s838 + $0xf8] sm:$0x1] %v975
  %v977 = vld [vmem:[%s838 + $0xfc] sm:$0xf]
  %v978 = vsel %vm841, %v527, %v977
  %979 = vst [vmem:[%s838 + $0xfc] sm:$0xf] %v978
  %980 = vst.msk [vmem:[%s838 + $0x100] sm:$0xf] %vm85, %v536
  %v981 = vld [vmem:[%s838 + $0x104] sm:$0x1]
  %v982 = vsel %vm847, %v537, %v981
  %983 = vst [vmem:[%s838 + $0x104] sm:$0x1] %v982
  %v984 = vld [vmem:[%s838 + $0x108] sm:$0xf]
  %v985 = vsel %vm841, %v544, %v984
  %986 = vst [vmem:[%s838 + $0x108] sm:$0xf] %v985
  %987 = vst.msk [vmem:[%s838 + $0x10c] sm:$0xf] %vm85, %v553
  %v988 = vld [vmem:[%s838 + $0x110] sm:$0x1]
  %v989 = vsel %vm847, %v554, %v988
  %990 = vst [vmem:[%s838 + $0x110] sm:$0x1] %v989
  %v991 = vld [vmem:[%s838 + $0x114] sm:$0xf]
  %v992 = vsel %vm841, %v561, %v991
  %993 = vst [vmem:[%s838 + $0x114] sm:$0xf] %v992
  %994 = vst.msk [vmem:[%s838 + $0x118] sm:$0xf] %vm85, %v570
  %v995 = vld [vmem:[%s838 + $0x11c] sm:$0x1]
  %v996 = vsel %vm847, %v571, %v995
  %997 = vst [vmem:[%s838 + $0x11c] sm:$0x1] %v996
  %v998 = vld [vmem:[%s838 + $0x120] sm:$0xf]
  %v999 = vsel %vm841, %v578, %v998
  %1000 = vst [vmem:[%s838 + $0x120] sm:$0xf] %v999
  %1001 = vst.msk [vmem:[%s838 + $0x124] sm:$0xf] %vm85, %v587
  %v1002 = vld [vmem:[%s838 + $0x128] sm:$0x1]
  %v1003 = vsel %vm847, %v588, %v1002
  %1004 = vst [vmem:[%s838 + $0x128] sm:$0x1] %v1003
  %v1005 = vld [vmem:[%s838 + $0x12c] sm:$0xf]
  %v1006 = vsel %vm841, %v595, %v1005
  %1007 = vst [vmem:[%s838 + $0x12c] sm:$0xf] %v1006
  %1008 = vst.msk [vmem:[%s838 + $0x130] sm:$0xf] %vm85, %v604
  %v1009 = vld [vmem:[%s838 + $0x134] sm:$0x1]
  %v1010 = vsel %vm847, %v605, %v1009
  %1011 = vst [vmem:[%s838 + $0x134] sm:$0x1] %v1010
  %v1012 = vld [vmem:[%s838 + $0x138] sm:$0xf]
  %v1013 = vsel %vm841, %v612, %v1012
  %1014 = vst [vmem:[%s838 + $0x138] sm:$0xf] %v1013
  %1015 = vst.msk [vmem:[%s838 + $0x13c] sm:$0xf] %vm85, %v621
  %v1016 = vld [vmem:[%s838 + $0x140] sm:$0x1]
  %v1017 = vsel %vm847, %v622, %v1016
  %1018 = vst [vmem:[%s838 + $0x140] sm:$0x1] %v1017
  %v1019 = vld [vmem:[%s838 + $0x144] sm:$0xf]
  %v1020 = vsel %vm841, %v629, %v1019
  %1021 = vst [vmem:[%s838 + $0x144] sm:$0xf] %v1020
  %1022 = vst.msk [vmem:[%s838 + $0x148] sm:$0xf] %vm85, %v638
  %v1023 = vld [vmem:[%s838 + $0x14c] sm:$0x1]
  %v1024 = vsel %vm847, %v639, %v1023
  %1025 = vst [vmem:[%s838 + $0x14c] sm:$0x1] %v1024
  %v1026 = vld [vmem:[%s838 + $0x150] sm:$0xf]
  %v1027 = vsel %vm841, %v646, %v1026
  %1028 = vst [vmem:[%s838 + $0x150] sm:$0xf] %v1027
  %1029 = vst.msk [vmem:[%s838 + $0x154] sm:$0xf] %vm85, %v655
  %v1030 = vld [vmem:[%s838 + $0x158] sm:$0x1]
  %v1031 = vsel %vm847, %v656, %v1030
  %1032 = vst [vmem:[%s838 + $0x158] sm:$0x1] %v1031
  %v1033 = vld [vmem:[%s838 + $0x15c] sm:$0xf]
  %v1034 = vsel %vm841, %v663, %v1033
  %1035 = vst [vmem:[%s838 + $0x15c] sm:$0xf] %v1034
  %1036 = vst.msk [vmem:[%s838 + $0x160] sm:$0xf] %vm85, %v672
  %v1037 = vld [vmem:[%s838 + $0x164] sm:$0x1]
  %v1038 = vsel %vm847, %v673, %v1037
  %1039 = vst [vmem:[%s838 + $0x164] sm:$0x1] %v1038
  %v1040 = vld [vmem:[%s838 + $0x168] sm:$0xf]
  %v1041 = vsel %vm841, %v680, %v1040
  %1042 = vst [vmem:[%s838 + $0x168] sm:$0xf] %v1041
  %1043 = vst.msk [vmem:[%s838 + $0x16c] sm:$0xf] %vm85, %v689
  %v1044 = vld [vmem:[%s838 + $0x170] sm:$0x1]
  %v1045 = vsel %vm847, %v690, %v1044
  %1046 = vst [vmem:[%s838 + $0x170] sm:$0x1] %v1045
  %v1047 = vld [vmem:[%s838 + $0x174] sm:$0xf]
  %v1048 = vsel %vm841, %v697, %v1047
  %1049 = vst [vmem:[%s838 + $0x174] sm:$0xf] %v1048
  %1050 = vst.msk [vmem:[%s838 + $0x178] sm:$0xf] %vm85, %v706
  %v1051 = vld [vmem:[%s838 + $0x17c] sm:$0x1]
  %v1052 = vsel %vm847, %v707, %v1051
  %1053 = vst [vmem:[%s838 + $0x17c] sm:$0x1] %v1052
  %v1054 = vld [vmem:[%s838 + $0x180] sm:$0xf]
  %v1055 = vsel %vm841, %v714, %v1054
  %1056 = vst [vmem:[%s838 + $0x180] sm:$0xf] %v1055
  %1057 = vst.msk [vmem:[%s838 + $0x184] sm:$0xf] %vm85, %v723
  %v1058 = vld [vmem:[%s838 + $0x188] sm:$0x1]
  %v1059 = vsel %vm847, %v724, %v1058
  %1060 = vst [vmem:[%s838 + $0x188] sm:$0x1] %v1059
  %v1061 = vld [vmem:[%s838 + $0x18c] sm:$0xf]
  %v1062 = vsel %vm841, %v731, %v1061
  %1063 = vst [vmem:[%s838 + $0x18c] sm:$0xf] %v1062
  %1064 = vst.msk [vmem:[%s838 + $0x190] sm:$0xf] %vm85, %v740
  %v1065 = vld [vmem:[%s838 + $0x194] sm:$0x1]
  %v1066 = vsel %vm847, %v741, %v1065
  %1067 = vst [vmem:[%s838 + $0x194] sm:$0x1] %v1066
  %v1068 = vld [vmem:[#allocation2] sm:$0xf]
  %v1069 = vld [vmem:[#allocation2 + $0x4] sm:$0xf]
  %v1070 = vld [vmem:[#allocation2 + $0xc] sm:$0xf]
  %v1071 = vld [vmem:[#allocation2 + $0x10] sm:$0xf]
  %v1072 = vld [vmem:[#allocation2 + $0x18] sm:$0xf]
  %v1073 = vld [vmem:[#allocation2 + $0x1c] sm:$0xf]
  %v1074 = vld [vmem:[#allocation2 + $0x24] sm:$0xf]
  %v1075 = vld [vmem:[#allocation2 + $0x28] sm:$0xf]
  %v1076 = vld [vmem:[#allocation2 + $0x30] sm:$0xf]
  %v1077 = vld [vmem:[#allocation2 + $0x34] sm:$0xf]
  %v1078 = vld [vmem:[#allocation2 + $0x3c] sm:$0xf]
  %v1079 = vld [vmem:[#allocation2 + $0x40] sm:$0xf]
  %v1080 = vld [vmem:[#allocation2 + $0x48] sm:$0xf]
  %v1081 = vld [vmem:[#allocation2 + $0x4c] sm:$0xf]
  %v1082 = vld [vmem:[#allocation2 + $0x54] sm:$0xf]
  %v1083 = vld [vmem:[#allocation2 + $0x58] sm:$0xf]
  %v1084 = vld [vmem:[#allocation2 + $0x60] sm:$0xf]
  %v1085 = vld [vmem:[#allocation2 + $0x64] sm:$0xf]
  %v1086 = vld [vmem:[#allocation2 + $0x6c] sm:$0xf]
  %v1087 = vld [vmem:[#allocation2 + $0x70] sm:$0xf]
  %v1088 = vld [vmem:[#allocation2 + $0x78] sm:$0xf]
  %v1089 = vld [vmem:[#allocation2 + $0x7c] sm:$0xf]
  %v1090 = vld [vmem:[#allocation2 + $0x84] sm:$0xf]
  %v1091 = vld [vmem:[#allocation2 + $0x88] sm:$0xf]
  %v1092 = vld [vmem:[#allocation2 + $0x90] sm:$0xf]
  %v1093 = vld [vmem:[#allocation2 + $0x94] sm:$0xf]
  %v1094 = vld [vmem:[#allocation2 + $0x9c] sm:$0xf]
  %v1095 = vld [vmem:[#allocation2 + $0xa0] sm:$0xf]
  %v1096 = vld [vmem:[#allocation2 + $0xa8] sm:$0xf]
  %v1097 = vld [vmem:[#allocation2 + $0xac] sm:$0xf]
  %v1098 = vld [vmem:[#allocation2 + $0xb4] sm:$0xf]
  %v1099 = vld [vmem:[#allocation2 + $0xb8] sm:$0xf]
  %v1100 = vld [vmem:[#allocation2 + $0xd8] sm:$0xf]
  %v1101 = vld [vmem:[#allocation2 + $0xdc] sm:$0xf]
  %v1102 = vld [vmem:[#allocation2 + $0xe4] sm:$0xf]
  %v1103 = vld [vmem:[#allocation2 + $0xe8] sm:$0xf]
  %v1104 = vld [vmem:[#allocation2 + $0xf0] sm:$0xf]
  %v1105 = vld [vmem:[#allocation2 + $0xf4] sm:$0xf]
  %v1106 = vld [vmem:[#allocation2 + $0xfc] sm:$0xf]
  %v1107 = vld [vmem:[#allocation2 + $0x100] sm:$0xf]
  %v1108 = vld [vmem:[#allocation2 + $0x108] sm:$0xf]
  %v1109 = vld [vmem:[#allocation2 + $0x10c] sm:$0xf]
  %v1110 = vld [vmem:[#allocation2 + $0x114] sm:$0xf]
  %v1111 = vld [vmem:[#allocation2 + $0x118] sm:$0xf]
  %v1112 = vld [vmem:[#allocation2 + $0x120] sm:$0xf]
  %v1113 = vld [vmem:[#allocation2 + $0x124] sm:$0xf]
  %v1114 = vld [vmem:[#allocation2 + $0x12c] sm:$0xf]
  %v1115 = vld [vmem:[#allocation2 + $0x130] sm:$0xf]
  %v1116 = vld [vmem:[#allocation2 + $0x138] sm:$0xf]
  %v1117 = vld [vmem:[#allocation2 + $0x13c] sm:$0xf]
  %v1118 = vld [vmem:[#allocation2 + $0x144] sm:$0xf]
  %v1119 = vld [vmem:[#allocation2 + $0x148] sm:$0xf]
  %v1120 = vld [vmem:[#allocation2 + $0x150] sm:$0xf]
  %v1121 = vld [vmem:[#allocation2 + $0x154] sm:$0xf]
  %v1122 = vld [vmem:[#allocation2 + $0x15c] sm:$0xf]
  %v1123 = vld [vmem:[#allocation2 + $0x160] sm:$0xf]
  %v1124 = vld [vmem:[#allocation2 + $0x168] sm:$0xf]
  %v1125 = vld [vmem:[#allocation2 + $0x16c] sm:$0xf]
  %v1126 = vld [vmem:[#allocation2 + $0x174] sm:$0xf]
  %v1127 = vld [vmem:[#allocation2 + $0x178] sm:$0xf]
  %v1128 = vld [vmem:[#allocation2 + $0x180] sm:$0xf]
  %v1129 = vld [vmem:[#allocation2 + $0x184] sm:$0xf]
  %v1130 = vld [vmem:[#allocation2 + $0x18c] sm:$0xf]
  %v1131 = vld [vmem:[#allocation2 + $0x190] sm:$0xf]
  %v1132 = vld [vmem:[#allocation2 + $0x8] sm:$0x1]
  %v1133 = vld [vmem:[#allocation2 + $0x14] sm:$0x1]
  %v1134 = vld [vmem:[#allocation2 + $0x20] sm:$0x1]
  %v1135 = vld [vmem:[#allocation2 + $0x2c] sm:$0x1]
  %v1136 = vld [vmem:[#allocation2 + $0x38] sm:$0x1]
  %v1137 = vld [vmem:[#allocation2 + $0x44] sm:$0x1]
  %v1138 = vld [vmem:[#allocation2 + $0x50] sm:$0x1]
  %v1139 = vld [vmem:[#allocation2 + $0x5c] sm:$0x1]
  %v1140 = vld [vmem:[#allocation2 + $0x68] sm:$0x1]
  %v1141 = vld [vmem:[#allocation2 + $0x74] sm:$0x1]
  %v1142 = vld [vmem:[#allocation2 + $0x80] sm:$0x1]
  %v1143 = vld [vmem:[#allocation2 + $0x8c] sm:$0x1]
  %v1144 = vld [vmem:[#allocation2 + $0x98] sm:$0x1]
  %v1145 = vld [vmem:[#allocation2 + $0xa4] sm:$0x1]
  %v1146 = vld [vmem:[#allocation2 + $0xb0] sm:$0x1]
  %v1147 = vld [vmem:[#allocation2 + $0xbc] sm:$0x1]
  %v1148 = vld [vmem:[#allocation2 + $0xe0] sm:$0x1]
  %v1149 = vld [vmem:[#allocation2 + $0xec] sm:$0x1]
  %v1150 = vld [vmem:[#allocation2 + $0xf8] sm:$0x1]
  %v1151 = vld [vmem:[#allocation2 + $0x104] sm:$0x1]
  %v1152 = vld [vmem:[#allocation2 + $0x110] sm:$0x1]
  %v1153 = vld [vmem:[#allocation2 + $0x11c] sm:$0x1]
  %v1154 = vld [vmem:[#allocation2 + $0x128] sm:$0x1]
  %v1155 = vld [vmem:[#allocation2 + $0x134] sm:$0x1]
  %v1156 = vld [vmem:[#allocation2 + $0x140] sm:$0x1]
  %v1157 = vld [vmem:[#allocation2 + $0x14c] sm:$0x1]
  %v1158 = vld [vmem:[#allocation2 + $0x158] sm:$0x1]
  %v1159 = vld [vmem:[#allocation2 + $0x164] sm:$0x1]
  %v1160 = vld [vmem:[#allocation2 + $0x170] sm:$0x1]
  %v1161 = vld [vmem:[#allocation2 + $0x17c] sm:$0x1]
  %v1162 = vld [vmem:[#allocation2 + $0x188] sm:$0x1]
  %v1163 = vld [vmem:[#allocation2 + $0x194] sm:$0x1]
  %vm1164 = vsmask.f32 3328
  %vm1165 = vsmask.f32 7440
  %vm1166 = vmor %vm1164, %vm1165
  %v1168 = vshrl.u32 %v1068, 16
  %v1170 = vrot.slane %v1168, 4
  %v1171 = vshll.u32 %v1068, 16
  %v1173 = vrot.slane %v1171, 5
  %v1174 = vor.u32 %v1170, %v1173
  %v1175 = vrot.slane %v1174, 4
  %v1177 = vshll.u32 %v1069, 16
  %v1179 = vrot.slane %v1177, 5
  %v1180 = vsel %vm1166, %v1175, %v1179
  %v1181 = vshrl.u32 %v1069, 16
  %v1183 = vrot.slane %v1181, 4
  %v1184 = vor.u32 %v1183, %v1179
  %v1185 = vrot.slane %v1184, 4
  %v1187 = vshll.u32 %v1132, 16
  %v1189 = vrot.slane %v1187, 5
  %v1190 = vsel %vm1166, %v1185, %v1189
  %v1192 = vshrl.u32 %v1070, 16
  %v1194 = vrot.slane %v1192, 4
  %v1195 = vshll.u32 %v1070, 16
  %v1197 = vrot.slane %v1195, 5
  %v1198 = vor.u32 %v1194, %v1197
  %v1199 = vrot.slane %v1198, 4
  %v1201 = vshll.u32 %v1071, 16
  %v1203 = vrot.slane %v1201, 5
  %v1204 = vsel %vm1166, %v1199, %v1203
  %v1205 = vshrl.u32 %v1071, 16
  %v1207 = vrot.slane %v1205, 4
  %v1208 = vor.u32 %v1207, %v1203
  %v1209 = vrot.slane %v1208, 4
  %v1211 = vshll.u32 %v1133, 16
  %v1213 = vrot.slane %v1211, 5
  %v1214 = vsel %vm1166, %v1209, %v1213
  %v1216 = vshrl.u32 %v1072, 16
  %v1218 = vrot.slane %v1216, 4
  %v1219 = vshll.u32 %v1072, 16
  %v1221 = vrot.slane %v1219, 5
  %v1222 = vor.u32 %v1218, %v1221
  %v1223 = vrot.slane %v1222, 4
  %v1225 = vshll.u32 %v1073, 16
  %v1227 = vrot.slane %v1225, 5
  %v1228 = vsel %vm1166, %v1223, %v1227
  %v1229 = vshrl.u32 %v1073, 16
  %v1231 = vrot.slane %v1229, 4
  %v1232 = vor.u32 %v1231, %v1227
  %v1233 = vrot.slane %v1232, 4
  %v1235 = vshll.u32 %v1134, 16
  %v1237 = vrot.slane %v1235, 5
  %v1238 = vsel %vm1166, %v1233, %v1237
  %v1240 = vshrl.u32 %v1074, 16
  %v1242 = vrot.slane %v1240, 4
  %v1243 = vshll.u32 %v1074, 16
  %v1245 = vrot.slane %v1243, 5
  %v1246 = vor.u32 %v1242, %v1245
  %v1247 = vrot.slane %v1246, 4
  %v1249 = vshll.u32 %v1075, 16
  %v1251 = vrot.slane %v1249, 5
  %v1252 = vsel %vm1166, %v1247, %v1251
  %v1253 = vshrl.u32 %v1075, 16
  %v1255 = vrot.slane %v1253, 4
  %v1256 = vor.u32 %v1255, %v1251
  %v1257 = vrot.slane %v1256, 4
  %v1259 = vshll.u32 %v1135, 16
  %v1261 = vrot.slane %v1259, 5
  %v1262 = vsel %vm1166, %v1257, %v1261
  %v1264 = vshrl.u32 %v1076, 16
  %v1266 = vrot.slane %v1264, 4
  %v1267 = vshll.u32 %v1076, 16
  %v1269 = vrot.slane %v1267, 5
  %v1270 = vor.u32 %v1266, %v1269
  %v1271 = vrot.slane %v1270, 4
  %v1273 = vshll.u32 %v1077, 16
  %v1275 = vrot.slane %v1273, 5
  %v1276 = vsel %vm1166, %v1271, %v1275
  %v1277 = vshrl.u32 %v1077, 16
  %v1279 = vrot.slane %v1277, 4
  %v1280 = vor.u32 %v1279, %v1275
  %v1281 = vrot.slane %v1280, 4
  %v1283 = vshll.u32 %v1136, 16
  %v1285 = vrot.slane %v1283, 5
  %v1286 = vsel %vm1166, %v1281, %v1285
  %v1288 = vshrl.u32 %v1078, 16
  %v1290 = vrot.slane %v1288, 4
  %v1291 = vshll.u32 %v1078, 16
  %v1293 = vrot.slane %v1291, 5
  %v1294 = vor.u32 %v1290, %v1293
  %v1295 = vrot.slane %v1294, 4
  %v1297 = vshll.u32 %v1079, 16
  %v1299 = vrot.slane %v1297, 5
  %v1300 = vsel %vm1166, %v1295, %v1299
  %v1301 = vshrl.u32 %v1079, 16
  %v1303 = vrot.slane %v1301, 4
  %v1304 = vor.u32 %v1303, %v1299
  %v1305 = vrot.slane %v1304, 4
  %v1307 = vshll.u32 %v1137, 16
  %v1309 = vrot.slane %v1307, 5
  %v1310 = vsel %vm1166, %v1305, %v1309
  %v1312 = vshrl.u32 %v1080, 16
  %v1314 = vrot.slane %v1312, 4
  %v1315 = vshll.u32 %v1080, 16
  %v1317 = vrot.slane %v1315, 5
  %v1318 = vor.u32 %v1314, %v1317
  %v1319 = vrot.slane %v1318, 4
  %v1321 = vshll.u32 %v1081, 16
  %v1323 = vrot.slane %v1321, 5
  %v1324 = vsel %vm1166, %v1319, %v1323
  %v1325 = vshrl.u32 %v1081, 16
  %v1327 = vrot.slane %v1325, 4
  %v1328 = vor.u32 %v1327, %v1323
  %v1329 = vrot.slane %v1328, 4
  %v1331 = vshll.u32 %v1138, 16
  %v1333 = vrot.slane %v1331, 5
  %v1334 = vsel %vm1166, %v1329, %v1333
  %v1336 = vshrl.u32 %v1082, 16
  %v1338 = vrot.slane %v1336, 4
  %v1339 = vshll.u32 %v1082, 16
  %v1341 = vrot.slane %v1339, 5
  %v1342 = vor.u32 %v1338, %v1341
  %v1343 = vrot.slane %v1342, 4
  %v1345 = vshll.u32 %v1083, 16
  %v1347 = vrot.slane %v1345, 5
  %v1348 = vsel %vm1166, %v1343, %v1347
  %v1349 = vshrl.u32 %v1083, 16
  %v1351 = vrot.slane %v1349, 4
  %v1352 = vor.u32 %v1351, %v1347
  %v1353 = vrot.slane %v1352, 4
  %v1355 = vshll.u32 %v1139, 16
  %v1357 = vrot.slane %v1355, 5
  %v1358 = vsel %vm1166, %v1353, %v1357
  %v1360 = vshrl.u32 %v1084, 16
  %v1362 = vrot.slane %v1360, 4
  %v1363 = vshll.u32 %v1084, 16
  %v1365 = vrot.slane %v1363, 5
  %v1366 = vor.u32 %v1362, %v1365
  %v1367 = vrot.slane %v1366, 4
  %v1369 = vshll.u32 %v1085, 16
  %v1371 = vrot.slane %v1369, 5
  %v1372 = vsel %vm1166, %v1367, %v1371
  %v1373 = vshrl.u32 %v1085, 16
  %v1375 = vrot.slane %v1373, 4
  %v1376 = vor.u32 %v1375, %v1371
  %v1377 = vrot.slane %v1376, 4
  %v1379 = vshll.u32 %v1140, 16
  %v1381 = vrot.slane %v1379, 5
  %v1382 = vsel %vm1166, %v1377, %v1381
  %v1384 = vshrl.u32 %v1086, 16
  %v1386 = vrot.slane %v1384, 4
  %v1387 = vshll.u32 %v1086, 16
  %v1389 = vrot.slane %v1387, 5
  %v1390 = vor.u32 %v1386, %v1389
  %v1391 = vrot.slane %v1390, 4
  %v1393 = vshll.u32 %v1087, 16
  %v1395 = vrot.slane %v1393, 5
  %v1396 = vsel %vm1166, %v1391, %v1395
  %v1397 = vshrl.u32 %v1087, 16
  %v1399 = vrot.slane %v1397, 4
  %v1400 = vor.u32 %v1399, %v1395
  %v1401 = vrot.slane %v1400, 4
  %v1403 = vshll.u32 %v1141, 16
  %v1405 = vrot.slane %v1403, 5
  %v1406 = vsel %vm1166, %v1401, %v1405
  %v1408 = vshrl.u32 %v1088, 16
  %v1410 = vrot.slane %v1408, 4
  %v1411 = vshll.u32 %v1088, 16
  %v1413 = vrot.slane %v1411, 5
  %v1414 = vor.u32 %v1410, %v1413
  %v1415 = vrot.slane %v1414, 4
  %v1417 = vshll.u32 %v1089, 16
  %v1419 = vrot.slane %v1417, 5
  %v1420 = vsel %vm1166, %v1415, %v1419
  %v1421 = vshrl.u32 %v1089, 16
  %v1423 = vrot.slane %v1421, 4
  %v1424 = vor.u32 %v1423, %v1419
  %v1425 = vrot.slane %v1424, 4
  %v1427 = vshll.u32 %v1142, 16
  %v1429 = vrot.slane %v1427, 5
  %v1430 = vsel %vm1166, %v1425, %v1429
  %v1432 = vshrl.u32 %v1090, 16
  %v1434 = vrot.slane %v1432, 4
  %v1435 = vshll.u32 %v1090, 16
  %v1437 = vrot.slane %v1435, 5
  %v1438 = vor.u32 %v1434, %v1437
  %v1439 = vrot.slane %v1438, 4
  %v1441 = vshll.u32 %v1091, 16
  %v1443 = vrot.slane %v1441, 5
  %v1444 = vsel %vm1166, %v1439, %v1443
  %v1445 = vshrl.u32 %v1091, 16
  %v1447 = vrot.slane %v1445, 4
  %v1448 = vor.u32 %v1447, %v1443
  %v1449 = vrot.slane %v1448, 4
  %v1451 = vshll.u32 %v1143, 16
  %v1453 = vrot.slane %v1451, 5
  %v1454 = vsel %vm1166, %v1449, %v1453
  %v1456 = vshrl.u32 %v1092, 16
  %v1458 = vrot.slane %v1456, 4
  %v1459 = vshll.u32 %v1092, 16
  %v1461 = vrot.slane %v1459, 5
  %v1462 = vor.u32 %v1458, %v1461
  %v1463 = vrot.slane %v1462, 4
  %v1465 = vshll.u32 %v1093, 16
  %v1467 = vrot.slane %v1465, 5
  %v1468 = vsel %vm1166, %v1463, %v1467
  %v1469 = vshrl.u32 %v1093, 16
  %v1471 = vrot.slane %v1469, 4
  %v1472 = vor.u32 %v1471, %v1467
  %v1473 = vrot.slane %v1472, 4
  %v1475 = vshll.u32 %v1144, 16
  %v1477 = vrot.slane %v1475, 5
  %v1478 = vsel %vm1166, %v1473, %v1477
  %v1480 = vshrl.u32 %v1094, 16
  %v1482 = vrot.slane %v1480, 4
  %v1483 = vshll.u32 %v1094, 16
  %v1485 = vrot.slane %v1483, 5
  %v1486 = vor.u32 %v1482, %v1485
  %v1487 = vrot.slane %v1486, 4
  %v1489 = vshll.u32 %v1095, 16
  %v1491 = vrot.slane %v1489, 5
  %v1492 = vsel %vm1166, %v1487, %v1491
  %v1493 = vshrl.u32 %v1095, 16
  %v1495 = vrot.slane %v1493, 4
  %v1496 = vor.u32 %v1495, %v1491
  %v1497 = vrot.slane %v1496, 4
  %v1499 = vshll.u32 %v1145, 16
  %v1501 = vrot.slane %v1499, 5
  %v1502 = vsel %vm1166, %v1497, %v1501
  %v1504 = vshrl.u32 %v1096, 16
  %v1506 = vrot.slane %v1504, 4
  %v1507 = vshll.u32 %v1096, 16
  %v1509 = vrot.slane %v1507, 5
  %v1510 = vor.u32 %v1506, %v1509
  %v1511 = vrot.slane %v1510, 4
  %v1513 = vshll.u32 %v1097, 16
  %v1515 = vrot.slane %v1513, 5
  %v1516 = vsel %vm1166, %v1511, %v1515
  %v1517 = vshrl.u32 %v1097, 16
  %v1519 = vrot.slane %v1517, 4
  %v1520 = vor.u32 %v1519, %v1515
  %v1521 = vrot.slane %v1520, 4
  %v1523 = vshll.u32 %v1146, 16
  %v1525 = vrot.slane %v1523, 5
  %v1526 = vsel %vm1166, %v1521, %v1525
  %v1528 = vshrl.u32 %v1098, 16
  %v1530 = vrot.slane %v1528, 4
  %v1531 = vshll.u32 %v1098, 16
  %v1533 = vrot.slane %v1531, 5
  %v1534 = vor.u32 %v1530, %v1533
  %v1535 = vrot.slane %v1534, 4
  %v1537 = vshll.u32 %v1099, 16
  %v1539 = vrot.slane %v1537, 5
  %v1540 = vsel %vm1166, %v1535, %v1539
  %v1541 = vshrl.u32 %v1099, 16
  %v1543 = vrot.slane %v1541, 4
  %v1544 = vor.u32 %v1543, %v1539
  %v1545 = vrot.slane %v1544, 4
  %v1547 = vshll.u32 %v1147, 16
  %v1549 = vrot.slane %v1547, 5
  %v1550 = vsel %vm1166, %v1545, %v1549
  %v1552 = vshrl.u32 %v1100, 16
  %v1554 = vrot.slane %v1552, 4
  %v1555 = vshll.u32 %v1100, 16
  %v1557 = vrot.slane %v1555, 5
  %v1558 = vor.u32 %v1554, %v1557
  %v1559 = vrot.slane %v1558, 4
  %v1561 = vshll.u32 %v1101, 16
  %v1563 = vrot.slane %v1561, 5
  %v1564 = vsel %vm1166, %v1559, %v1563
  %v1565 = vshrl.u32 %v1101, 16
  %v1567 = vrot.slane %v1565, 4
  %v1568 = vor.u32 %v1567, %v1563
  %v1569 = vrot.slane %v1568, 4
  %v1571 = vshll.u32 %v1148, 16
  %v1573 = vrot.slane %v1571, 5
  %v1574 = vsel %vm1166, %v1569, %v1573
  %v1576 = vshrl.u32 %v1102, 16
  %v1578 = vrot.slane %v1576, 4
  %v1579 = vshll.u32 %v1102, 16
  %v1581 = vrot.slane %v1579, 5
  %v1582 = vor.u32 %v1578, %v1581
  %v1583 = vrot.slane %v1582, 4
  %v1585 = vshll.u32 %v1103, 16
  %v1587 = vrot.slane %v1585, 5
  %v1588 = vsel %vm1166, %v1583, %v1587
  %v1589 = vshrl.u32 %v1103, 16
  %v1591 = vrot.slane %v1589, 4
  %v1592 = vor.u32 %v1591, %v1587
  %v1593 = vrot.slane %v1592, 4
  %v1595 = vshll.u32 %v1149, 16
  %v1597 = vrot.slane %v1595, 5
  %v1598 = vsel %vm1166, %v1593, %v1597
  %v1600 = vshrl.u32 %v1104, 16
  %v1602 = vrot.slane %v1600, 4
  %v1603 = vshll.u32 %v1104, 16
  %v1605 = vrot.slane %v1603, 5
  %v1606 = vor.u32 %v1602, %v1605
  %v1607 = vrot.slane %v1606, 4
  %v1609 = vshll.u32 %v1105, 16
  %v1611 = vrot.slane %v1609, 5
  %v1612 = vsel %vm1166, %v1607, %v1611
  %v1613 = vshrl.u32 %v1105, 16
  %v1615 = vrot.slane %v1613, 4
  %v1616 = vor.u32 %v1615, %v1611
  %v1617 = vrot.slane %v1616, 4
  %v1619 = vshll.u32 %v1150, 16
  %v1621 = vrot.slane %v1619, 5
  %v1622 = vsel %vm1166, %v1617, %v1621
  %v1624 = vshrl.u32 %v1106, 16
  %v1626 = vrot.slane %v1624, 4
  %v1627 = vshll.u32 %v1106, 16
  %v1629 = vrot.slane %v1627, 5
  %v1630 = vor.u32 %v1626, %v1629
  %v1631 = vrot.slane %v1630, 4
  %v1633 = vshll.u32 %v1107, 16
  %v1635 = vrot.slane %v1633, 5
  %v1636 = vsel %vm1166, %v1631, %v1635
  %v1637 = vshrl.u32 %v1107, 16
  %v1639 = vrot.slane %v1637, 4
  %v1640 = vor.u32 %v1639, %v1635
  %v1641 = vrot.slane %v1640, 4
  %v1643 = vshll.u32 %v1151, 16
  %v1645 = vrot.slane %v1643, 5
  %v1646 = vsel %vm1166, %v1641, %v1645
  %v1648 = vshrl.u32 %v1108, 16
  %v1650 = vrot.slane %v1648, 4
  %v1651 = vshll.u32 %v1108, 16
  %v1653 = vrot.slane %v1651, 5
  %v1654 = vor.u32 %v1650, %v1653
  %v1655 = vrot.slane %v1654, 4
  %v1657 = vshll.u32 %v1109, 16
  %v1659 = vrot.slane %v1657, 5
  %v1660 = vsel %vm1166, %v1655, %v1659
  %v1661 = vshrl.u32 %v1109, 16
  %v1663 = vrot.slane %v1661, 4
  %v1664 = vor.u32 %v1663, %v1659
  %v1665 = vrot.slane %v1664, 4
  %v1667 = vshll.u32 %v1152, 16
  %v1669 = vrot.slane %v1667, 5
  %v1670 = vsel %vm1166, %v1665, %v1669
  %v1672 = vshrl.u32 %v1110, 16
  %v1674 = vrot.slane %v1672, 4
  %v1675 = vshll.u32 %v1110, 16
  %v1677 = vrot.slane %v1675, 5
  %v1678 = vor.u32 %v1674, %v1677
  %v1679 = vrot.slane %v1678, 4
  %v1681 = vshll.u32 %v1111, 16
  %v1683 = vrot.slane %v1681, 5
  %v1684 = vsel %vm1166, %v1679, %v1683
  %v1685 = vshrl.u32 %v1111, 16
  %v1687 = vrot.slane %v1685, 4
  %v1688 = vor.u32 %v1687, %v1683
  %v1689 = vrot.slane %v1688, 4
  %v1691 = vshll.u32 %v1153, 16
  %v1693 = vrot.slane %v1691, 5
  %v1694 = vsel %vm1166, %v1689, %v1693
  %v1696 = vshrl.u32 %v1112, 16
  %v1698 = vrot.slane %v1696, 4
  %v1699 = vshll.u32 %v1112, 16
  %v1701 = vrot.slane %v1699, 5
  %v1702 = vor.u32 %v1698, %v1701
  %v1703 = vrot.slane %v1702, 4
  %v1705 = vshll.u32 %v1113, 16
  %v1707 = vrot.slane %v1705, 5
  %v1708 = vsel %vm1166, %v1703, %v1707
  %v1709 = vshrl.u32 %v1113, 16
  %v1711 = vrot.slane %v1709, 4
  %v1712 = vor.u32 %v1711, %v1707
  %v1713 = vrot.slane %v1712, 4
  %v1715 = vshll.u32 %v1154, 16
  %v1717 = vrot.slane %v1715, 5
  %v1718 = vsel %vm1166, %v1713, %v1717
  %v1720 = vshrl.u32 %v1114, 16
  %v1722 = vrot.slane %v1720, 4
  %v1723 = vshll.u32 %v1114, 16
  %v1725 = vrot.slane %v1723, 5
  %v1726 = vor.u32 %v1722, %v1725
  %v1727 = vrot.slane %v1726, 4
  %v1729 = vshll.u32 %v1115, 16
  %v1731 = vrot.slane %v1729, 5
  %v1732 = vsel %vm1166, %v1727, %v1731
  %v1733 = vshrl.u32 %v1115, 16
  %v1735 = vrot.slane %v1733, 4
  %v1736 = vor.u32 %v1735, %v1731
  %v1737 = vrot.slane %v1736, 4
  %v1739 = vshll.u32 %v1155, 16
  %v1741 = vrot.slane %v1739, 5
  %v1742 = vsel %vm1166, %v1737, %v1741
  %v1744 = vshrl.u32 %v1116, 16
  %v1746 = vrot.slane %v1744, 4
  %v1747 = vshll.u32 %v1116, 16
  %v1749 = vrot.slane %v1747, 5
  %v1750 = vor.u32 %v1746, %v1749
  %v1751 = vrot.slane %v1750, 4
  %v1753 = vshll.u32 %v1117, 16
  %v1755 = vrot.slane %v1753, 5
  %v1756 = vsel %vm1166, %v1751, %v1755
  %v1757 = vshrl.u32 %v1117, 16
  %v1759 = vrot.slane %v1757, 4
  %v1760 = vor.u32 %v1759, %v1755
  %v1761 = vrot.slane %v1760, 4
  %v1763 = vshll.u32 %v1156, 16
  %v1765 = vrot.slane %v1763, 5
  %v1766 = vsel %vm1166, %v1761, %v1765
  %v1768 = vshrl.u32 %v1118, 16
  %v1770 = vrot.slane %v1768, 4
  %v1771 = vshll.u32 %v1118, 16
  %v1773 = vrot.slane %v1771, 5
  %v1774 = vor.u32 %v1770, %v1773
  %v1775 = vrot.slane %v1774, 4
  %v1777 = vshll.u32 %v1119, 16
  %v1779 = vrot.slane %v1777, 5
  %v1780 = vsel %vm1166, %v1775, %v1779
  %v1781 = vshrl.u32 %v1119, 16
  %v1783 = vrot.slane %v1781, 4
  %v1784 = vor.u32 %v1783, %v1779
  %v1785 = vrot.slane %v1784, 4
  %v1787 = vshll.u32 %v1157, 16
  %v1789 = vrot.slane %v1787, 5
  %v1790 = vsel %vm1166, %v1785, %v1789
  %v1792 = vshrl.u32 %v1120, 16
  %v1794 = vrot.slane %v1792, 4
  %v1795 = vshll.u32 %v1120, 16
  %v1797 = vrot.slane %v1795, 5
  %v1798 = vor.u32 %v1794, %v1797
  %v1799 = vrot.slane %v1798, 4
  %v1801 = vshll.u32 %v1121, 16
  %v1803 = vrot.slane %v1801, 5
  %v1804 = vsel %vm1166, %v1799, %v1803
  %v1805 = vshrl.u32 %v1121, 16
  %v1807 = vrot.slane %v1805, 4
  %v1808 = vor.u32 %v1807, %v1803
  %v1809 = vrot.slane %v1808, 4
  %v1811 = vshll.u32 %v1158, 16
  %v1813 = vrot.slane %v1811, 5
  %v1814 = vsel %vm1166, %v1809, %v1813
  %v1816 = vshrl.u32 %v1122, 16
  %v1818 = vrot.slane %v1816, 4
  %v1819 = vshll.u32 %v1122, 16
  %v1821 = vrot.slane %v1819, 5
  %v1822 = vor.u32 %v1818, %v1821
  %v1823 = vrot.slane %v1822, 4
  %v1825 = vshll.u32 %v1123, 16
  %v1827 = vrot.slane %v1825, 5
  %v1828 = vsel %vm1166, %v1823, %v1827
  %v1829 = vshrl.u32 %v1123, 16
  %v1831 = vrot.slane %v1829, 4
  %v1832 = vor.u32 %v1831, %v1827
  %v1833 = vrot.slane %v1832, 4
  %v1835 = vshll.u32 %v1159, 16
  %v1837 = vrot.slane %v1835, 5
  %v1838 = vsel %vm1166, %v1833, %v1837
  %v1840 = vshrl.u32 %v1124, 16
  %v1842 = vrot.slane %v1840, 4
  %v1843 = vshll.u32 %v1124, 16
  %v1845 = vrot.slane %v1843, 5
  %v1846 = vor.u32 %v1842, %v1845
  %v1847 = vrot.slane %v1846, 4
  %v1849 = vshll.u32 %v1125, 16
  %v1851 = vrot.slane %v1849, 5
  %v1852 = vsel %vm1166, %v1847, %v1851
  %v1853 = vshrl.u32 %v1125, 16
  %v1855 = vrot.slane %v1853, 4
  %v1856 = vor.u32 %v1855, %v1851
  %v1857 = vrot.slane %v1856, 4
  %v1859 = vshll.u32 %v1160, 16
  %v1861 = vrot.slane %v1859, 5
  %v1862 = vsel %vm1166, %v1857, %v1861
  %v1864 = vshrl.u32 %v1126, 16
  %v1866 = vrot.slane %v1864, 4
  %v1867 = vshll.u32 %v1126, 16
  %v1869 = vrot.slane %v1867, 5
  %v1870 = vor.u32 %v1866, %v1869
  %v1871 = vrot.slane %v1870, 4
  %v1873 = vshll.u32 %v1127, 16
  %v1875 = vrot.slane %v1873, 5
  %v1876 = vsel %vm1166, %v1871, %v1875
  %v1877 = vshrl.u32 %v1127, 16
  %v1879 = vrot.slane %v1877, 4
  %v1880 = vor.u32 %v1879, %v1875
  %v1881 = vrot.slane %v1880, 4
  %v1883 = vshll.u32 %v1161, 16
  %v1885 = vrot.slane %v1883, 5
  %v1886 = vsel %vm1166, %v1881, %v1885
  %v1888 = vshrl.u32 %v1128, 16
  %v1890 = vrot.slane %v1888, 4
  %v1891 = vshll.u32 %v1128, 16
  %v1893 = vrot.slane %v1891, 5
  %v1894 = vor.u32 %v1890, %v1893
  %v1895 = vrot.slane %v1894, 4
  %v1897 = vshll.u32 %v1129, 16
  %v1899 = vrot.slane %v1897, 5
  %v1900 = vsel %vm1166, %v1895, %v1899
  %v1901 = vshrl.u32 %v1129, 16
  %v1903 = vrot.slane %v1901, 4
  %v1904 = vor.u32 %v1903, %v1899
  %v1905 = vrot.slane %v1904, 4
  %v1907 = vshll.u32 %v1162, 16
  %v1909 = vrot.slane %v1907, 5
  %v1910 = vsel %vm1166, %v1905, %v1909
  %v1912 = vshrl.u32 %v1130, 16
  %v1914 = vrot.slane %v1912, 4
  %v1915 = vshll.u32 %v1130, 16
  %v1917 = vrot.slane %v1915, 5
  %v1918 = vor.u32 %v1914, %v1917
  %v1919 = vrot.slane %v1918, 4
  %v1921 = vshll.u32 %v1131, 16
  %v1923 = vrot.slane %v1921, 5
  %v1924 = vsel %vm1166, %v1919, %v1923
  %v1925 = vshrl.u32 %v1131, 16
  %v1927 = vrot.slane %v1925, 4
  %v1928 = vor.u32 %v1927, %v1923
  %v1929 = vrot.slane %v1928, 4
  %v1931 = vshll.u32 %v1163, 16
  %v1933 = vrot.slane %v1931, 5
  %v1934 = vsel %vm1166, %v1929, %v1933
  %v1935 = vld [vmem:[#allocation2] sm:$0xe]
  %v1936 = vld [vmem:[#allocation2 + $0xc] sm:$0xe]
  %v1937 = vld [vmem:[#allocation2 + $0x18] sm:$0xe]
  %v1938 = vld [vmem:[#allocation2 + $0x24] sm:$0xe]
  %v1939 = vld [vmem:[#allocation2 + $0x30] sm:$0xe]
  %v1940 = vld [vmem:[#allocation2 + $0x3c] sm:$0xe]
  %v1941 = vld [vmem:[#allocation2 + $0x48] sm:$0xe]
  %v1942 = vld [vmem:[#allocation2 + $0x54] sm:$0xe]
  %v1943 = vld [vmem:[#allocation2 + $0x60] sm:$0xe]
  %v1944 = vld [vmem:[#allocation2 + $0x6c] sm:$0xe]
  %v1945 = vld [vmem:[#allocation2 + $0x78] sm:$0xe]
  %v1946 = vld [vmem:[#allocation2 + $0x84] sm:$0xe]
  %v1947 = vld [vmem:[#allocation2 + $0x90] sm:$0xe]
  %v1948 = vld [vmem:[#allocation2 + $0x9c] sm:$0xe]
  %v1949 = vld [vmem:[#allocation2 + $0xa8] sm:$0xe]
  %v1950 = vld [vmem:[#allocation2 + $0xb4] sm:$0xe]
  %v1951 = vld [vmem:[#allocation2 + $0xd8] sm:$0xe]
  %v1952 = vld [vmem:[#allocation2 + $0xe4] sm:$0xe]
  %v1953 = vld [vmem:[#allocation2 + $0xf0] sm:$0xe]
  %v1954 = vld [vmem:[#allocation2 + $0xfc] sm:$0xe]
  %v1955 = vld [vmem:[#allocation2 + $0x108] sm:$0xe]
  %v1956 = vld [vmem:[#allocation2 + $0x114] sm:$0xe]
  %v1957 = vld [vmem:[#allocation2 + $0x120] sm:$0xe]
  %v1958 = vld [vmem:[#allocation2 + $0x12c] sm:$0xe]
  %v1959 = vld [vmem:[#allocation2 + $0x138] sm:$0xe]
  %v1960 = vld [vmem:[#allocation2 + $0x144] sm:$0xe]
  %v1961 = vld [vmem:[#allocation2 + $0x150] sm:$0xe]
  %v1962 = vld [vmem:[#allocation2 + $0x15c] sm:$0xe]
  %v1963 = vld [vmem:[#allocation2 + $0x168] sm:$0xe]
  %v1964 = vld [vmem:[#allocation2 + $0x174] sm:$0xe]
  %v1965 = vld [vmem:[#allocation2 + $0x180] sm:$0xe]
  %v1966 = vld [vmem:[#allocation2 + $0x18c] sm:$0xe]
  %vm2063 = vcmask 1042432
  %vm2064 = vcmask 1046532
  %vm2065 = vmor %vm2063, %vm2064
  %v2066 = vrot.slane %v1935, 5
  %v2067 = vrot.slane %v2066, 4
  %v2068 = vrot.slane %v1069, 5
  %v2069 = vsel %vm2065, %v2067, %v2068
  %v2070 = vrot.slane %v2068, 4
  %v2071 = vrot.slane %v1132, 5
  %v2072 = vsel %vm2065, %v2070, %v2071
  %v2073 = vrot.slane %v1936, 5
  %v2074 = vrot.slane %v2073, 4
  %v2075 = vrot.slane %v1071, 5
  %v2076 = vsel %vm2065, %v2074, %v2075
  %v2077 = vrot.slane %v2075, 4
  %v2078 = vrot.slane %v1133, 5
  %v2079 = vsel %vm2065, %v2077, %v2078
  %v2080 = vrot.slane %v1937, 5
  %v2081 = vrot.slane %v2080, 4
  %v2082 = vrot.slane %v1073, 5
  %v2083 = vsel %vm2065, %v2081, %v2082
  %v2084 = vrot.slane %v2082, 4
  %v2085 = vrot.slane %v1134, 5
  %v2086 = vsel %vm2065, %v2084, %v2085
  %v2087 = vrot.slane %v1938, 5
  %v2088 = vrot.slane %v2087, 4
  %v2089 = vrot.slane %v1075, 5
  %v2090 = vsel %vm2065, %v2088, %v2089
  %v2091 = vrot.slane %v2089, 4
  %v2092 = vrot.slane %v1135, 5
  %v2093 = vsel %vm2065, %v2091, %v2092
  %v2094 = vrot.slane %v1939, 5
  %v2095 = vrot.slane %v2094, 4
  %v2096 = vrot.slane %v1077, 5
  %v2097 = vsel %vm2065, %v2095, %v2096
  %v2098 = vrot.slane %v2096, 4
  %v2099 = vrot.slane %v1136, 5
  %v2100 = vsel %vm2065, %v2098, %v2099
  %v2101 = vrot.slane %v1940, 5
  %v2102 = vrot.slane %v2101, 4
  %v2103 = vrot.slane %v1079, 5
  %v2104 = vsel %vm2065, %v2102, %v2103
  %v2105 = vrot.slane %v2103, 4
  %v2106 = vrot.slane %v1137, 5
  %v2107 = vsel %vm2065, %v2105, %v2106
  %v2108 = vrot.slane %v1941, 5
  %v2109 = vrot.slane %v2108, 4
  %v2110 = vrot.slane %v1081, 5
  %v2111 = vsel %vm2065, %v2109, %v2110
  %v2112 = vrot.slane %v2110, 4
  %v2113 = vrot.slane %v1138, 5
  %v2114 = vsel %vm2065, %v2112, %v2113
  %v2115 = vrot.slane %v1942, 5
  %v2116 = vrot.slane %v2115, 4
  %v2117 = vrot.slane %v1083, 5
  %v2118 = vsel %vm2065, %v2116, %v2117
  %v2119 = vrot.slane %v2117, 4
  %v2120 = vrot.slane %v1139, 5
  %v2121 = vsel %vm2065, %v2119, %v2120
  %v2122 = vrot.slane %v1943, 5
  %v2123 = vrot.slane %v2122, 4
  %v2124 = vrot.slane %v1085, 5
  %v2125 = vsel %vm2065, %v2123, %v2124
  %v2126 = vrot.slane %v2124, 4
  %v2127 = vrot.slane %v1140, 5
  %v2128 = vsel %vm2065, %v2126, %v2127
  %v2129 = vrot.slane %v1944, 5
  %v2130 = vrot.slane %v2129, 4
  %v2131 = vrot.slane %v1087, 5
  %v2132 = vsel %vm2065, %v2130, %v2131
  %v2133 = vrot.slane %v2131, 4
  %v2134 = vrot.slane %v1141, 5
  %v2135 = vsel %vm2065, %v2133, %v2134
  %v2136 = vrot.slane %v1945, 5
  %v2137 = vrot.slane %v2136, 4
  %v2138 = vrot.slane %v1089, 5
  %v2139 = vsel %vm2065, %v2137, %v2138
  %v2140 = vrot.slane %v2138, 4
  %v2141 = vrot.slane %v1142, 5
  %v2142 = vsel %vm2065, %v2140, %v2141
  %v2143 = vrot.slane %v1946, 5
  %v2144 = vrot.slane %v2143, 4
  %v2145 = vrot.slane %v1091, 5
  %v2146 = vsel %vm2065, %v2144, %v2145
  %v2147 = vrot.slane %v2145, 4
  %v2148 = vrot.slane %v1143, 5
  %v2149 = vsel %vm2065, %v2147, %v2148
  %v2150 = vrot.slane %v1947, 5
  %v2151 = vrot.slane %v2150, 4
  %v2152 = vrot.slane %v1093, 5
  %v2153 = vsel %vm2065, %v2151, %v2152
  %v2154 = vrot.slane %v2152, 4
  %v2155 = vrot.slane %v1144, 5
  %v2156 = vsel %vm2065, %v2154, %v2155
  %v2157 = vrot.slane %v1948, 5
  %v2158 = vrot.slane %v2157, 4
  %v2159 = vrot.slane %v1095, 5
  %v2160 = vsel %vm2065, %v2158, %v2159
  %v2161 = vrot.slane %v2159, 4
  %v2162 = vrot.slane %v1145, 5
  %v2163 = vsel %vm2065, %v2161, %v2162
  %v2164 = vrot.slane %v1949, 5
  %v2165 = vrot.slane %v2164, 4
  %v2166 = vrot.slane %v1097, 5
  %v2167 = vsel %vm2065, %v2165, %v2166
  %v2168 = vrot.slane %v2166, 4
  %v2169 = vrot.slane %v1146, 5
  %v2170 = vsel %vm2065, %v2168, %v2169
  %v2171 = vrot.slane %v1950, 5
  %v2172 = vrot.slane %v2171, 4
  %v2173 = vrot.slane %v1099, 5
  %v2174 = vsel %vm2065, %v2172, %v2173
  %v2175 = vrot.slane %v2173, 4
  %v2176 = vrot.slane %v1147, 5
  %v2177 = vsel %vm2065, %v2175, %v2176
  %v2178 = vrot.slane %v1951, 5
  %v2179 = vrot.slane %v2178, 4
  %v2180 = vrot.slane %v1101, 5
  %v2181 = vsel %vm2065, %v2179, %v2180
  %v2182 = vrot.slane %v2180, 4
  %v2183 = vrot.slane %v1148, 5
  %v2184 = vsel %vm2065, %v2182, %v2183
  %v2185 = vrot.slane %v1952, 5
  %v2186 = vrot.slane %v2185, 4
  %v2187 = vrot.slane %v1103, 5
  %v2188 = vsel %vm2065, %v2186, %v2187
  %v2189 = vrot.slane %v2187, 4
  %v2190 = vrot.slane %v1149, 5
  %v2191 = vsel %vm2065, %v2189, %v2190
  %v2192 = vrot.slane %v1953, 5
  %v2193 = vrot.slane %v2192, 4
  %v2194 = vrot.slane %v1105, 5
  %v2195 = vsel %vm2065, %v2193, %v2194
  %v2196 = vrot.slane %v2194, 4
  %v2197 = vrot.slane %v1150, 5
  %v2198 = vsel %vm2065, %v2196, %v2197
  %v2199 = vrot.slane %v1954, 5
  %v2200 = vrot.slane %v2199, 4
  %v2201 = vrot.slane %v1107, 5
  %v2202 = vsel %vm2065, %v2200, %v2201
  %v2203 = vrot.slane %v2201, 4
  %v2204 = vrot.slane %v1151, 5
  %v2205 = vsel %vm2065, %v2203, %v2204
  %v2206 = vrot.slane %v1955, 5
  %v2207 = vrot.slane %v2206, 4
  %v2208 = vrot.slane %v1109, 5
  %v2209 = vsel %vm2065, %v2207, %v2208
  %v2210 = vrot.slane %v2208, 4
  %v2211 = vrot.slane %v1152, 5
  %v2212 = vsel %vm2065, %v2210, %v2211
  %v2213 = vrot.slane %v1956, 5
  %v2214 = vrot.slane %v2213, 4
  %v2215 = vrot.slane %v1111, 5
  %v2216 = vsel %vm2065, %v2214, %v2215
  %v2217 = vrot.slane %v2215, 4
  %v2218 = vrot.slane %v1153, 5
  %v2219 = vsel %vm2065, %v2217, %v2218
  %v2220 = vrot.slane %v1957, 5
  %v2221 = vrot.slane %v2220, 4
  %v2222 = vrot.slane %v1113, 5
  %v2223 = vsel %vm2065, %v2221, %v2222
  %v2224 = vrot.slane %v2222, 4
  %v2225 = vrot.slane %v1154, 5
  %v2226 = vsel %vm2065, %v2224, %v2225
  %v2227 = vrot.slane %v1958, 5
  %v2228 = vrot.slane %v2227, 4
  %v2229 = vrot.slane %v1115, 5
  %v2230 = vsel %vm2065, %v2228, %v2229
  %v2231 = vrot.slane %v2229, 4
  %v2232 = vrot.slane %v1155, 5
  %v2233 = vsel %vm2065, %v2231, %v2232
  %v2234 = vrot.slane %v1959, 5
  %v2235 = vrot.slane %v2234, 4
  %v2236 = vrot.slane %v1117, 5
  %v2237 = vsel %vm2065, %v2235, %v2236
  %v2238 = vrot.slane %v2236, 4
  %v2239 = vrot.slane %v1156, 5
  %v2240 = vsel %vm2065, %v2238, %v2239
  %v2241 = vrot.slane %v1960, 5
  %v2242 = vrot.slane %v2241, 4
  %v2243 = vrot.slane %v1119, 5
  %v2244 = vsel %vm2065, %v2242, %v2243
  %v2245 = vrot.slane %v2243, 4
  %v2246 = vrot.slane %v1157, 5
  %v2247 = vsel %vm2065, %v2245, %v2246
  %v2248 = vrot.slane %v1961, 5
  %v2249 = vrot.slane %v2248, 4
  %v2250 = vrot.slane %v1121, 5
  %v2251 = vsel %vm2065, %v2249, %v2250
  %v2252 = vrot.slane %v2250, 4
  %v2253 = vrot.slane %v1158, 5
  %v2254 = vsel %vm2065, %v2252, %v2253
  %v2255 = vrot.slane %v1962, 5
  %v2256 = vrot.slane %v2255, 4
  %v2257 = vrot.slane %v1123, 5
  %v2258 = vsel %vm2065, %v2256, %v2257
  %v2259 = vrot.slane %v2257, 4
  %v2260 = vrot.slane %v1159, 5
  %v2261 = vsel %vm2065, %v2259, %v2260
  %v2262 = vrot.slane %v1963, 5
  %v2263 = vrot.slane %v2262, 4
  %v2264 = vrot.slane %v1125, 5
  %v2265 = vsel %vm2065, %v2263, %v2264
  %v2266 = vrot.slane %v2264, 4
  %v2267 = vrot.slane %v1160, 5
  %v2268 = vsel %vm2065, %v2266, %v2267
  %v2269 = vrot.slane %v1964, 5
  %v2270 = vrot.slane %v2269, 4
  %v2271 = vrot.slane %v1127, 5
  %v2272 = vsel %vm2065, %v2270, %v2271
  %v2273 = vrot.slane %v2271, 4
  %v2274 = vrot.slane %v1161, 5
  %v2275 = vsel %vm2065, %v2273, %v2274
  %v2276 = vrot.slane %v1965, 5
  %v2277 = vrot.slane %v2276, 4
  %v2278 = vrot.slane %v1129, 5
  %v2279 = vsel %vm2065, %v2277, %v2278
  %v2280 = vrot.slane %v2278, 4
  %v2281 = vrot.slane %v1162, 5
  %v2282 = vsel %vm2065, %v2280, %v2281
  %v2283 = vrot.slane %v1966, 5
  %v2284 = vrot.slane %v2283, 4
  %v2285 = vrot.slane %v1131, 5
  %v2286 = vsel %vm2065, %v2284, %v2285
  %v2287 = vrot.slane %v2285, 4
  %v2288 = vrot.slane %v1163, 5
  %v2289 = vsel %vm2065, %v2287, %v2288
  %v2290 = vld [vmem:[%s838] sm:$0xf]
  %v2291 = vld [vmem:[%s838 + $0x4] sm:$0xf]
  %v2292 = vld [vmem:[%s838 + $0xc] sm:$0xf]
  %v2293 = vld [vmem:[%s838 + $0x10] sm:$0xf]
  %v2294 = vld [vmem:[%s838 + $0x18] sm:$0xf]
  %v2295 = vld [vmem:[%s838 + $0x1c] sm:$0xf]
  %v2296 = vld [vmem:[%s838 + $0x24] sm:$0xf]
  %v2297 = vld [vmem:[%s838 + $0x28] sm:$0xf]
  %v2298 = vld [vmem:[%s838 + $0x30] sm:$0xf]
  %v2299 = vld [vmem:[%s838 + $0x34] sm:$0xf]
  %v2300 = vld [vmem:[%s838 + $0x3c] sm:$0xf]
  %v2301 = vld [vmem:[%s838 + $0x40] sm:$0xf]
  %v2302 = vld [vmem:[%s838 + $0x48] sm:$0xf]
  %v2303 = vld [vmem:[%s838 + $0x4c] sm:$0xf]
  %v2304 = vld [vmem:[%s838 + $0x54] sm:$0xf]
  %v2305 = vld [vmem:[%s838 + $0x58] sm:$0xf]
  %v2306 = vld [vmem:[%s838 + $0x60] sm:$0xf]
  %v2307 = vld [vmem:[%s838 + $0x64] sm:$0xf]
  %v2308 = vld [vmem:[%s838 + $0x6c] sm:$0xf]
  %v2309 = vld [vmem:[%s838 + $0x70] sm:$0xf]
  %v2310 = vld [vmem:[%s838 + $0x78] sm:$0xf]
  %v2311 = vld [vmem:[%s838 + $0x7c] sm:$0xf]
  %v2312 = vld [vmem:[%s838 + $0x84] sm:$0xf]
  %v2313 = vld [vmem:[%s838 + $0x88] sm:$0xf]
  %v2314 = vld [vmem:[%s838 + $0x90] sm:$0xf]
  %v2315 = vld [vmem:[%s838 + $0x94] sm:$0xf]
  %v2316 = vld [vmem:[%s838 + $0x9c] sm:$0xf]
  %v2317 = vld [vmem:[%s838 + $0xa0] sm:$0xf]
  %v2318 = vld [vmem:[%s838 + $0xa8] sm:$0xf]
  %v2319 = vld [vmem:[%s838 + $0xac] sm:$0xf]
  %v2320 = vld [vmem:[%s838 + $0xb4] sm:$0xf]
  %v2321 = vld [vmem:[%s838 + $0xb8] sm:$0xf]
  %v2322 = vld [vmem:[%s838 + $0xd8] sm:$0xf]
  %v2323 = vld [vmem:[%s838 + $0xdc] sm:$0xf]
  %v2324 = vld [vmem:[%s838 + $0xe4] sm:$0xf]
  %v2325 = vld [vmem:[%s838 + $0xe8] sm:$0xf]
  %v2326 = vld [vmem:[%s838 + $0xf0] sm:$0xf]
  %v2327 = vld [vmem:[%s838 + $0xf4] sm:$0xf]
  %v2328 = vld [vmem:[%s838 + $0xfc] sm:$0xf]
  %v2329 = vld [vmem:[%s838 + $0x100] sm:$0xf]
  %v2330 = vld [vmem:[%s838 + $0x108] sm:$0xf]
  %v2331 = vld [vmem:[%s838 + $0x10c] sm:$0xf]
  %v2332 = vld [vmem:[%s838 + $0x114] sm:$0xf]
  %v2333 = vld [vmem:[%s838 + $0x118] sm:$0xf]
  %v2334 = vld [vmem:[%s838 + $0x120] sm:$0xf]
  %v2335 = vld [vmem:[%s838 + $0x124] sm:$0xf]
  %v2336 = vld [vmem:[%s838 + $0x12c] sm:$0xf]
  %v2337 = vld [vmem:[%s838 + $0x130] sm:$0xf]
  %v2338 = vld [vmem:[%s838 + $0x138] sm:$0xf]
  %v2339 = vld [vmem:[%s838 + $0x13c] sm:$0xf]
  %v2340 = vld [vmem:[%s838 + $0x144] sm:$0xf]
  %v2341 = vld [vmem:[%s838 + $0x148] sm:$0xf]
  %v2342 = vld [vmem:[%s838 + $0x150] sm:$0xf]
  %v2343 = vld [vmem:[%s838 + $0x154] sm:$0xf]
  %v2344 = vld [vmem:[%s838 + $0x15c] sm:$0xf]
  %v2345 = vld [vmem:[%s838 + $0x160] sm:$0xf]
  %v2346 = vld [vmem:[%s838 + $0x168] sm:$0xf]
  %v2347 = vld [vmem:[%s838 + $0x16c] sm:$0xf]
  %v2348 = vld [vmem:[%s838 + $0x174] sm:$0xf]
  %v2349 = vld [vmem:[%s838 + $0x178] sm:$0xf]
  %v2350 = vld [vmem:[%s838 + $0x180] sm:$0xf]
  %v2351 = vld [vmem:[%s838 + $0x184] sm:$0xf]
  %v2352 = vld [vmem:[%s838 + $0x18c] sm:$0xf]
  %v2353 = vld [vmem:[%s838 + $0x190] sm:$0xf]
  %v2354 = vld [vmem:[%s838 + $0x8] sm:$0x1]
  %v2355 = vld [vmem:[%s838 + $0x14] sm:$0x1]
  %v2356 = vld [vmem:[%s838 + $0x20] sm:$0x1]
  %v2357 = vld [vmem:[%s838 + $0x2c] sm:$0x1]
  %v2358 = vld [vmem:[%s838 + $0x38] sm:$0x1]
  %v2359 = vld [vmem:[%s838 + $0x44] sm:$0x1]
  %v2360 = vld [vmem:[%s838 + $0x50] sm:$0x1]
  %v2361 = vld [vmem:[%s838 + $0x5c] sm:$0x1]
  %v2362 = vld [vmem:[%s838 + $0x68] sm:$0x1]
  %v2363 = vld [vmem:[%s838 + $0x74] sm:$0x1]
  %v2364 = vld [vmem:[%s838 + $0x80] sm:$0x1]
  %v2365 = vld [vmem:[%s838 + $0x8c] sm:$0x1]
  %v2366 = vld [vmem:[%s838 + $0x98] sm:$0x1]
  %v2367 = vld [vmem:[%s838 + $0xa4] sm:$0x1]
  %v2368 = vld [vmem:[%s838 + $0xb0] sm:$0x1]
  %v2369 = vld [vmem:[%s838 + $0xbc] sm:$0x1]
  %v2370 = vld [vmem:[%s838 + $0xe0] sm:$0x1]
  %v2371 = vld [vmem:[%s838 + $0xec] sm:$0x1]
  %v2372 = vld [vmem:[%s838 + $0xf8] sm:$0x1]
  %v2373 = vld [vmem:[%s838 + $0x104] sm:$0x1]
  %v2374 = vld [vmem:[%s838 + $0x110] sm:$0x1]
  %v2375 = vld [vmem:[%s838 + $0x11c] sm:$0x1]
  %v2376 = vld [vmem:[%s838 + $0x128] sm:$0x1]
  %v2377 = vld [vmem:[%s838 + $0x134] sm:$0x1]
  %v2378 = vld [vmem:[%s838 + $0x140] sm:$0x1]
  %v2379 = vld [vmem:[%s838 + $0x14c] sm:$0x1]
  %v2380 = vld [vmem:[%s838 + $0x158] sm:$0x1]
  %v2381 = vld [vmem:[%s838 + $0x164] sm:$0x1]
  %v2382 = vld [vmem:[%s838 + $0x170] sm:$0x1]
  %v2383 = vld [vmem:[%s838 + $0x17c] sm:$0x1]
  %v2384 = vld [vmem:[%s838 + $0x188] sm:$0x1]
  %v2385 = vld [vmem:[%s838 + $0x194] sm:$0x1]
  %v2387 = vshrl.u32 %v2290, 16
  %v2389 = vrot.slane %v2387, 4
  %v2390 = vshll.u32 %v2290, 16
  %v2392 = vrot.slane %v2390, 5
  %v2393 = vor.u32 %v2389, %v2392
  %v2394 = vrot.slane %v2393, 4
  %v2396 = vshll.u32 %v2291, 16
  %v2398 = vrot.slane %v2396, 5
  %v2399 = vsel %vm1166, %v2394, %v2398
  %v2400 = vshrl.u32 %v2291, 16
  %v2402 = vrot.slane %v2400, 4
  %v2403 = vor.u32 %v2402, %v2398
  %v2404 = vrot.slane %v2403, 4
  %v2406 = vshll.u32 %v2354, 16
  %v2408 = vrot.slane %v2406, 5
  %v2409 = vsel %vm1166, %v2404, %v2408
  %v2411 = vshrl.u32 %v2292, 16
  %v2413 = vrot.slane %v2411, 4
  %v2414 = vshll.u32 %v2292, 16
  %v2416 = vrot.slane %v2414, 5
  %v2417 = vor.u32 %v2413, %v2416
  %v2418 = vrot.slane %v2417, 4
  %v2420 = vshll.u32 %v2293, 16
  %v2422 = vrot.slane %v2420, 5
  %v2423 = vsel %vm1166, %v2418, %v2422
  %v2424 = vshrl.u32 %v2293, 16
  %v2426 = vrot.slane %v2424, 4
  %v2427 = vor.u32 %v2426, %v2422
  %v2428 = vrot.slane %v2427, 4
  %v2430 = vshll.u32 %v2355, 16
  %v2432 = vrot.slane %v2430, 5
  %v2433 = vsel %vm1166, %v2428, %v2432
  %v2435 = vshrl.u32 %v2294, 16
  %v2437 = vrot.slane %v2435, 4
  %v2438 = vshll.u32 %v2294, 16
  %v2440 = vrot.slane %v2438, 5
  %v2441 = vor.u32 %v2437, %v2440
  %v2442 = vrot.slane %v2441, 4
  %v2444 = vshll.u32 %v2295, 16
  %v2446 = vrot.slane %v2444, 5
  %v2447 = vsel %vm1166, %v2442, %v2446
  %v2448 = vshrl.u32 %v2295, 16
  %v2450 = vrot.slane %v2448, 4
  %v2451 = vor.u32 %v2450, %v2446
  %v2452 = vrot.slane %v2451, 4
  %v2454 = vshll.u32 %v2356, 16
  %v2456 = vrot.slane %v2454, 5
  %v2457 = vsel %vm1166, %v2452, %v2456
  %v2459 = vshrl.u32 %v2296, 16
  %v2461 = vrot.slane %v2459, 4
  %v2462 = vshll.u32 %v2296, 16
  %v2464 = vrot.slane %v2462, 5
  %v2465 = vor.u32 %v2461, %v2464
  %v2466 = vrot.slane %v2465, 4
  %v2468 = vshll.u32 %v2297, 16
  %v2470 = vrot.slane %v2468, 5
  %v2471 = vsel %vm1166, %v2466, %v2470
  %v2472 = vshrl.u32 %v2297, 16
  %v2474 = vrot.slane %v2472, 4
  %v2475 = vor.u32 %v2474, %v2470
  %v2476 = vrot.slane %v2475, 4
  %v2478 = vshll.u32 %v2357, 16
  %v2480 = vrot.slane %v2478, 5
  %v2481 = vsel %vm1166, %v2476, %v2480
  %v2483 = vshrl.u32 %v2298, 16
  %v2485 = vrot.slane %v2483, 4
  %v2486 = vshll.u32 %v2298, 16
  %v2488 = vrot.slane %v2486, 5
  %v2489 = vor.u32 %v2485, %v2488
  %v2490 = vrot.slane %v2489, 4
  %v2492 = vshll.u32 %v2299, 16
  %v2494 = vrot.slane %v2492, 5
  %v2495 = vsel %vm1166, %v2490, %v2494
  %v2496 = vshrl.u32 %v2299, 16
  %v2498 = vrot.slane %v2496, 4
  %v2499 = vor.u32 %v2498, %v2494
  %v2500 = vrot.slane %v2499, 4
  %v2502 = vshll.u32 %v2358, 16
  %v2504 = vrot.slane %v2502, 5
  %v2505 = vsel %vm1166, %v2500, %v2504
  %v2507 = vshrl.u32 %v2300, 16
  %v2509 = vrot.slane %v2507, 4
  %v2510 = vshll.u32 %v2300, 16
  %v2512 = vrot.slane %v2510, 5
  %v2513 = vor.u32 %v2509, %v2512
  %v2514 = vrot.slane %v2513, 4
  %v2516 = vshll.u32 %v2301, 16
  %v2518 = vrot.slane %v2516, 5
  %v2519 = vsel %vm1166, %v2514, %v2518
  %v2520 = vshrl.u32 %v2301, 16
  %v2522 = vrot.slane %v2520, 4
  %v2523 = vor.u32 %v2522, %v2518
  %v2524 = vrot.slane %v2523, 4
  %v2526 = vshll.u32 %v2359, 16
  %v2528 = vrot.slane %v2526, 5
  %v2529 = vsel %vm1166, %v2524, %v2528
  %v2531 = vshrl.u32 %v2302, 16
  %v2533 = vrot.slane %v2531, 4
  %v2534 = vshll.u32 %v2302, 16
  %v2536 = vrot.slane %v2534, 5
  %v2537 = vor.u32 %v2533, %v2536
  %v2538 = vrot.slane %v2537, 4
  %v2540 = vshll.u32 %v2303, 16
  %v2542 = vrot.slane %v2540, 5
  %v2543 = vsel %vm1166, %v2538, %v2542
  %v2544 = vshrl.u32 %v2303, 16
  %v2546 = vrot.slane %v2544, 4
  %v2547 = vor.u32 %v2546, %v2542
  %v2548 = vrot.slane %v2547, 4
  %v2550 = vshll.u32 %v2360, 16
  %v2552 = vrot.slane %v2550, 5
  %v2553 = vsel %vm1166, %v2548, %v2552
  %v2555 = vshrl.u32 %v2304, 16
  %v2557 = vrot.slane %v2555, 4
  %v2558 = vshll.u32 %v2304, 16
  %v2560 = vrot.slane %v2558, 5
  %v2561 = vor.u32 %v2557, %v2560
  %v2562 = vrot.slane %v2561, 4
  %v2564 = vshll.u32 %v2305, 16
  %v2566 = vrot.slane %v2564, 5
  %v2567 = vsel %vm1166, %v2562, %v2566
  %v2568 = vshrl.u32 %v2305, 16
  %v2570 = vrot.slane %v2568, 4
  %v2571 = vor.u32 %v2570, %v2566
  %v2572 = vrot.slane %v2571, 4
  %v2574 = vshll.u32 %v2361, 16
  %v2576 = vrot.slane %v2574, 5
  %v2577 = vsel %vm1166, %v2572, %v2576
  %v2579 = vshrl.u32 %v2306, 16
  %v2581 = vrot.slane %v2579, 4
  %v2582 = vshll.u32 %v2306, 16
  %v2584 = vrot.slane %v2582, 5
  %v2585 = vor.u32 %v2581, %v2584
  %v2586 = vrot.slane %v2585, 4
  %v2588 = vshll.u32 %v2307, 16
  %v2590 = vrot.slane %v2588, 5
  %v2591 = vsel %vm1166, %v2586, %v2590
  %v2592 = vshrl.u32 %v2307, 16
  %v2594 = vrot.slane %v2592, 4
  %v2595 = vor.u32 %v2594, %v2590
  %v2596 = vrot.slane %v2595, 4
  %v2598 = vshll.u32 %v2362, 16
  %v2600 = vrot.slane %v2598, 5
  %v2601 = vsel %vm1166, %v2596, %v2600
  %v2603 = vshrl.u32 %v2308, 16
  %v2605 = vrot.slane %v2603, 4
  %v2606 = vshll.u32 %v2308, 16
  %v2608 = vrot.slane %v2606, 5
  %v2609 = vor.u32 %v2605, %v2608
  %v2610 = vrot.slane %v2609, 4
  %v2612 = vshll.u32 %v2309, 16
  %v2614 = vrot.slane %v2612, 5
  %v2615 = vsel %vm1166, %v2610, %v2614
  %v2616 = vshrl.u32 %v2309, 16
  %v2618 = vrot.slane %v2616, 4
  %v2619 = vor.u32 %v2618, %v2614
  %v2620 = vrot.slane %v2619, 4
  %v2622 = vshll.u32 %v2363, 16
  %v2624 = vrot.slane %v2622, 5
  %v2625 = vsel %vm1166, %v2620, %v2624
  %v2627 = vshrl.u32 %v2310, 16
  %v2629 = vrot.slane %v2627, 4
  %v2630 = vshll.u32 %v2310, 16
  %v2632 = vrot.slane %v2630, 5
  %v2633 = vor.u32 %v2629, %v2632
  %v2634 = vrot.slane %v2633, 4
  %v2636 = vshll.u32 %v2311, 16
  %v2638 = vrot.slane %v2636, 5
  %v2639 = vsel %vm1166, %v2634, %v2638
  %v2640 = vshrl.u32 %v2311, 16
  %v2642 = vrot.slane %v2640, 4
  %v2643 = vor.u32 %v2642, %v2638
  %v2644 = vrot.slane %v2643, 4
  %v2646 = vshll.u32 %v2364, 16
  %v2648 = vrot.slane %v2646, 5
  %v2649 = vsel %vm1166, %v2644, %v2648
  %v2651 = vshrl.u32 %v2312, 16
  %v2653 = vrot.slane %v2651, 4
  %v2654 = vshll.u32 %v2312, 16
  %v2656 = vrot.slane %v2654, 5
  %v2657 = vor.u32 %v2653, %v2656
  %v2658 = vrot.slane %v2657, 4
  %v2660 = vshll.u32 %v2313, 16
  %v2662 = vrot.slane %v2660, 5
  %v2663 = vsel %vm1166, %v2658, %v2662
  %v2664 = vshrl.u32 %v2313, 16
  %v2666 = vrot.slane %v2664, 4
  %v2667 = vor.u32 %v2666, %v2662
  %v2668 = vrot.slane %v2667, 4
  %v2670 = vshll.u32 %v2365, 16
  %v2672 = vrot.slane %v2670, 5
  %v2673 = vsel %vm1166, %v2668, %v2672
  %v2675 = vshrl.u32 %v2314, 16
  %v2677 = vrot.slane %v2675, 4
  %v2678 = vshll.u32 %v2314, 16
  %v2680 = vrot.slane %v2678, 5
  %v2681 = vor.u32 %v2677, %v2680
  %v2682 = vrot.slane %v2681, 4
  %v2684 = vshll.u32 %v2315, 16
  %v2686 = vrot.slane %v2684, 5
  %v2687 = vsel %vm1166, %v2682, %v2686
  %v2688 = vshrl.u32 %v2315, 16
  %v2690 = vrot.slane %v2688, 4
  %v2691 = vor.u32 %v2690, %v2686
  %v2692 = vrot.slane %v2691, 4
  %v2694 = vshll.u32 %v2366, 16
  %v2696 = vrot.slane %v2694, 5
  %v2697 = vsel %vm1166, %v2692, %v2696
  %v2699 = vshrl.u32 %v2316, 16
  %v2701 = vrot.slane %v2699, 4
  %v2702 = vshll.u32 %v2316, 16
  %v2704 = vrot.slane %v2702, 5
  %v2705 = vor.u32 %v2701, %v2704
  %v2706 = vrot.slane %v2705, 4
  %v2708 = vshll.u32 %v2317, 16
  %v2710 = vrot.slane %v2708, 5
  %v2711 = vsel %vm1166, %v2706, %v2710
  %v2712 = vshrl.u32 %v2317, 16
  %v2714 = vrot.slane %v2712, 4
  %v2715 = vor.u32 %v2714, %v2710
  %v2716 = vrot.slane %v2715, 4
  %v2718 = vshll.u32 %v2367, 16
  %v2720 = vrot.slane %v2718, 5
  %v2721 = vsel %vm1166, %v2716, %v2720
  %v2723 = vshrl.u32 %v2318, 16
  %v2725 = vrot.slane %v2723, 4
  %v2726 = vshll.u32 %v2318, 16
  %v2728 = vrot.slane %v2726, 5
  %v2729 = vor.u32 %v2725, %v2728
  %v2730 = vrot.slane %v2729, 4
  %v2732 = vshll.u32 %v2319, 16
  %v2734 = vrot.slane %v2732, 5
  %v2735 = vsel %vm1166, %v2730, %v2734
  %v2736 = vshrl.u32 %v2319, 16
  %v2738 = vrot.slane %v2736, 4
  %v2739 = vor.u32 %v2738, %v2734
  %v2740 = vrot.slane %v2739, 4
  %v2742 = vshll.u32 %v2368, 16
  %v2744 = vrot.slane %v2742, 5
  %v2745 = vsel %vm1166, %v2740, %v2744
  %v2747 = vshrl.u32 %v2320, 16
  %v2749 = vrot.slane %v2747, 4
  %v2750 = vshll.u32 %v2320, 16
  %v2752 = vrot.slane %v2750, 5
  %v2753 = vor.u32 %v2749, %v2752
  %v2754 = vrot.slane %v2753, 4
  %v2756 = vshll.u32 %v2321, 16
  %v2758 = vrot.slane %v2756, 5
  %v2759 = vsel %vm1166, %v2754, %v2758
  %v2760 = vshrl.u32 %v2321, 16
  %v2762 = vrot.slane %v2760, 4
  %v2763 = vor.u32 %v2762, %v2758
  %v2764 = vrot.slane %v2763, 4
  %v2766 = vshll.u32 %v2369, 16
  %v2768 = vrot.slane %v2766, 5
  %v2769 = vsel %vm1166, %v2764, %v2768
  %v2771 = vshrl.u32 %v2322, 16
  %v2773 = vrot.slane %v2771, 4
  %v2774 = vshll.u32 %v2322, 16
  %v2776 = vrot.slane %v2774, 5
  %v2777 = vor.u32 %v2773, %v2776
  %v2778 = vrot.slane %v2777, 4
  %v2780 = vshll.u32 %v2323, 16
  %v2782 = vrot.slane %v2780, 5
  %v2783 = vsel %vm1166, %v2778, %v2782
  %v2784 = vshrl.u32 %v2323, 16
  %v2786 = vrot.slane %v2784, 4
  %v2787 = vor.u32 %v2786, %v2782
  %v2788 = vrot.slane %v2787, 4
  %v2790 = vshll.u32 %v2370, 16
  %v2792 = vrot.slane %v2790, 5
  %v2793 = vsel %vm1166, %v2788, %v2792
  %v2795 = vshrl.u32 %v2324, 16
  %v2797 = vrot.slane %v2795, 4
  %v2798 = vshll.u32 %v2324, 16
  %v2800 = vrot.slane %v2798, 5
  %v2801 = vor.u32 %v2797, %v2800
  %v2802 = vrot.slane %v2801, 4
  %v2804 = vshll.u32 %v2325, 16
  %v2806 = vrot.slane %v2804, 5
  %v2807 = vsel %vm1166, %v2802, %v2806
  %v2808 = vshrl.u32 %v2325, 16
  %v2810 = vrot.slane %v2808, 4
  %v2811 = vor.u32 %v2810, %v2806
  %v2812 = vrot.slane %v2811, 4
  %v2814 = vshll.u32 %v2371, 16
  %v2816 = vrot.slane %v2814, 5
  %v2817 = vsel %vm1166, %v2812, %v2816
  %v2819 = vshrl.u32 %v2326, 16
  %v2821 = vrot.slane %v2819, 4
  %v2822 = vshll.u32 %v2326, 16
  %v2824 = vrot.slane %v2822, 5
  %v2825 = vor.u32 %v2821, %v2824
  %v2826 = vrot.slane %v2825, 4
  %v2828 = vshll.u32 %v2327, 16
  %v2830 = vrot.slane %v2828, 5
  %v2831 = vsel %vm1166, %v2826, %v2830
  %v2832 = vshrl.u32 %v2327, 16
  %v2834 = vrot.slane %v2832, 4
  %v2835 = vor.u32 %v2834, %v2830
  %v2836 = vrot.slane %v2835, 4
  %v2838 = vshll.u32 %v2372, 16
  %v2840 = vrot.slane %v2838, 5
  %v2841 = vsel %vm1166, %v2836, %v2840
  %v2843 = vshrl.u32 %v2328, 16
  %v2845 = vrot.slane %v2843, 4
  %v2846 = vshll.u32 %v2328, 16
  %v2848 = vrot.slane %v2846, 5
  %v2849 = vor.u32 %v2845, %v2848
  %v2850 = vrot.slane %v2849, 4
  %v2852 = vshll.u32 %v2329, 16
  %v2854 = vrot.slane %v2852, 5
  %v2855 = vsel %vm1166, %v2850, %v2854
  %v2856 = vshrl.u32 %v2329, 16
  %v2858 = vrot.slane %v2856, 4
  %v2859 = vor.u32 %v2858, %v2854
  %v2860 = vrot.slane %v2859, 4
  %v2862 = vshll.u32 %v2373, 16
  %v2864 = vrot.slane %v2862, 5
  %v2865 = vsel %vm1166, %v2860, %v2864
  %v2867 = vshrl.u32 %v2330, 16
  %v2869 = vrot.slane %v2867, 4
  %v2870 = vshll.u32 %v2330, 16
  %v2872 = vrot.slane %v2870, 5
  %v2873 = vor.u32 %v2869, %v2872
  %v2874 = vrot.slane %v2873, 4
  %v2876 = vshll.u32 %v2331, 16
  %v2878 = vrot.slane %v2876, 5
  %v2879 = vsel %vm1166, %v2874, %v2878
  %v2880 = vshrl.u32 %v2331, 16
  %v2882 = vrot.slane %v2880, 4
  %v2883 = vor.u32 %v2882, %v2878
  %v2884 = vrot.slane %v2883, 4
  %v2886 = vshll.u32 %v2374, 16
  %v2888 = vrot.slane %v2886, 5
  %v2889 = vsel %vm1166, %v2884, %v2888
  %v2891 = vshrl.u32 %v2332, 16
  %v2893 = vrot.slane %v2891, 4
  %v2894 = vshll.u32 %v2332, 16
  %v2896 = vrot.slane %v2894, 5
  %v2897 = vor.u32 %v2893, %v2896
  %v2898 = vrot.slane %v2897, 4
  %v2900 = vshll.u32 %v2333, 16
  %v2902 = vrot.slane %v2900, 5
  %v2903 = vsel %vm1166, %v2898, %v2902
  %v2904 = vshrl.u32 %v2333, 16
  %v2906 = vrot.slane %v2904, 4
  %v2907 = vor.u32 %v2906, %v2902
  %v2908 = vrot.slane %v2907, 4
  %v2910 = vshll.u32 %v2375, 16
  %v2912 = vrot.slane %v2910, 5
  %v2913 = vsel %vm1166, %v2908, %v2912
  %v2915 = vshrl.u32 %v2334, 16
  %v2917 = vrot.slane %v2915, 4
  %v2918 = vshll.u32 %v2334, 16
  %v2920 = vrot.slane %v2918, 5
  %v2921 = vor.u32 %v2917, %v2920
  %v2922 = vrot.slane %v2921, 4
  %v2924 = vshll.u32 %v2335, 16
  %v2926 = vrot.slane %v2924, 5
  %v2927 = vsel %vm1166, %v2922, %v2926
  %v2928 = vshrl.u32 %v2335, 16
  %v2930 = vrot.slane %v2928, 4
  %v2931 = vor.u32 %v2930, %v2926
  %v2932 = vrot.slane %v2931, 4
  %v2934 = vshll.u32 %v2376, 16
  %v2936 = vrot.slane %v2934, 5
  %v2937 = vsel %vm1166, %v2932, %v2936
  %v2939 = vshrl.u32 %v2336, 16
  %v2941 = vrot.slane %v2939, 4
  %v2942 = vshll.u32 %v2336, 16
  %v2944 = vrot.slane %v2942, 5
  %v2945 = vor.u32 %v2941, %v2944
  %v2946 = vrot.slane %v2945, 4
  %v2948 = vshll.u32 %v2337, 16
  %v2950 = vrot.slane %v2948, 5
  %v2951 = vsel %vm1166, %v2946, %v2950
  %v2952 = vshrl.u32 %v2337, 16
  %v2954 = vrot.slane %v2952, 4
  %v2955 = vor.u32 %v2954, %v2950
  %v2956 = vrot.slane %v2955, 4
  %v2958 = vshll.u32 %v2377, 16
  %v2960 = vrot.slane %v2958, 5
  %v2961 = vsel %vm1166, %v2956, %v2960
  %v2963 = vshrl.u32 %v2338, 16
  %v2965 = vrot.slane %v2963, 4
  %v2966 = vshll.u32 %v2338, 16
  %v2968 = vrot.slane %v2966, 5
  %v2969 = vor.u32 %v2965, %v2968
  %v2970 = vrot.slane %v2969, 4
  %v2972 = vshll.u32 %v2339, 16
  %v2974 = vrot.slane %v2972, 5
  %v2975 = vsel %vm1166, %v2970, %v2974
  %v2976 = vshrl.u32 %v2339, 16
  %v2978 = vrot.slane %v2976, 4
  %v2979 = vor.u32 %v2978, %v2974
  %v2980 = vrot.slane %v2979, 4
  %v2982 = vshll.u32 %v2378, 16
  %v2984 = vrot.slane %v2982, 5
  %v2985 = vsel %vm1166, %v2980, %v2984
  %v2987 = vshrl.u32 %v2340, 16
  %v2989 = vrot.slane %v2987, 4
  %v2990 = vshll.u32 %v2340, 16
  %v2992 = vrot.slane %v2990, 5
  %v2993 = vor.u32 %v2989, %v2992
  %v2994 = vrot.slane %v2993, 4
  %v2996 = vshll.u32 %v2341, 16
  %v2998 = vrot.slane %v2996, 5
  %v2999 = vsel %vm1166, %v2994, %v2998
  %v3000 = vshrl.u32 %v2341, 16
  %v3002 = vrot.slane %v3000, 4
  %v3003 = vor.u32 %v3002, %v2998
  %v3004 = vrot.slane %v3003, 4
  %v3006 = vshll.u32 %v2379, 16
  %v3008 = vrot.slane %v3006, 5
  %v3009 = vsel %vm1166, %v3004, %v3008
  %v3011 = vshrl.u32 %v2342, 16
  %v3013 = vrot.slane %v3011, 4
  %v3014 = vshll.u32 %v2342, 16
  %v3016 = vrot.slane %v3014, 5
  %v3017 = vor.u32 %v3013, %v3016
  %v3018 = vrot.slane %v3017, 4
  %v3020 = vshll.u32 %v2343, 16
  %v3022 = vrot.slane %v3020, 5
  %v3023 = vsel %vm1166, %v3018, %v3022
  %v3024 = vshrl.u32 %v2343, 16
  %v3026 = vrot.slane %v3024, 4
  %v3027 = vor.u32 %v3026, %v3022
  %v3028 = vrot.slane %v3027, 4
  %v3030 = vshll.u32 %v2380, 16
  %v3032 = vrot.slane %v3030, 5
  %v3033 = vsel %vm1166, %v3028, %v3032
  %v3035 = vshrl.u32 %v2344, 16
  %v3037 = vrot.slane %v3035, 4
  %v3038 = vshll.u32 %v2344, 16
  %v3040 = vrot.slane %v3038, 5
  %v3041 = vor.u32 %v3037, %v3040
  %v3042 = vrot.slane %v3041, 4
  %v3044 = vshll.u32 %v2345, 16
  %v3046 = vrot.slane %v3044, 5
  %v3047 = vsel %vm1166, %v3042, %v3046
  %v3048 = vshrl.u32 %v2345, 16
  %v3050 = vrot.slane %v3048, 4
  %v3051 = vor.u32 %v3050, %v3046
  %v3052 = vrot.slane %v3051, 4
  %v3054 = vshll.u32 %v2381, 16
  %v3056 = vrot.slane %v3054, 5
  %v3057 = vsel %vm1166, %v3052, %v3056
  %v3059 = vshrl.u32 %v2346, 16
  %v3061 = vrot.slane %v3059, 4
  %v3062 = vshll.u32 %v2346, 16
  %v3064 = vrot.slane %v3062, 5
  %v3065 = vor.u32 %v3061, %v3064
  %v3066 = vrot.slane %v3065, 4
  %v3068 = vshll.u32 %v2347, 16
  %v3070 = vrot.slane %v3068, 5
  %v3071 = vsel %vm1166, %v3066, %v3070
  %v3072 = vshrl.u32 %v2347, 16
  %v3074 = vrot.slane %v3072, 4
  %v3075 = vor.u32 %v3074, %v3070
  %v3076 = vrot.slane %v3075, 4
  %v3078 = vshll.u32 %v2382, 16
  %v3080 = vrot.slane %v3078, 5
  %v3081 = vsel %vm1166, %v3076, %v3080
  %v3083 = vshrl.u32 %v2348, 16
  %v3085 = vrot.slane %v3083, 4
  %v3086 = vshll.u32 %v2348, 16
  %v3088 = vrot.slane %v3086, 5
  %v3089 = vor.u32 %v3085, %v3088
  %v3090 = vrot.slane %v3089, 4
  %v3092 = vshll.u32 %v2349, 16
  %v3094 = vrot.slane %v3092, 5
  %v3095 = vsel %vm1166, %v3090, %v3094
  %v3096 = vshrl.u32 %v2349, 16
  %v3098 = vrot.slane %v3096, 4
  %v3099 = vor.u32 %v3098, %v3094
  %v3100 = vrot.slane %v3099, 4
  %v3102 = vshll.u32 %v2383, 16
  %v3104 = vrot.slane %v3102, 5
  %v3105 = vsel %vm1166, %v3100, %v3104
  %v3107 = vshrl.u32 %v2350, 16
  %v3109 = vrot.slane %v3107, 4
  %v3110 = vshll.u32 %v2350, 16
  %v3112 = vrot.slane %v3110, 5
  %v3113 = vor.u32 %v3109, %v3112
  %v3114 = vrot.slane %v3113, 4
  %v3116 = vshll.u32 %v2351, 16
  %v3118 = vrot.slane %v3116, 5
  %v3119 = vsel %vm1166, %v3114, %v3118
  %v3120 = vshrl.u32 %v2351, 16
  %v3122 = vrot.slane %v3120, 4
  %v3123 = vor.u32 %v3122, %v3118
  %v3124 = vrot.slane %v3123, 4
  %v3126 = vshll.u32 %v2384, 16
  %v3128 = vrot.slane %v3126, 5
  %v3129 = vsel %vm1166, %v3124, %v3128
  %v3131 = vshrl.u32 %v2352, 16
  %v3133 = vrot.slane %v3131, 4
  %v3134 = vshll.u32 %v2352, 16
  %v3136 = vrot.slane %v3134, 5
  %v3137 = vor.u32 %v3133, %v3136
  %v3138 = vrot.slane %v3137, 4
  %v3140 = vshll.u32 %v2353, 16
  %v3142 = vrot.slane %v3140, 5
  %v3143 = vsel %vm1166, %v3138, %v3142
  %v3144 = vshrl.u32 %v2353, 16
  %v3146 = vrot.slane %v3144, 4
  %v3147 = vor.u32 %v3146, %v3142
  %v3148 = vrot.slane %v3147, 4
  %v3150 = vshll.u32 %v2385, 16
  %v3152 = vrot.slane %v3150, 5
  %v3153 = vsel %vm1166, %v3148, %v3152
  %v3154 = vld [vmem:[%s838] sm:$0xe]
  %v3155 = vld [vmem:[%s838 + $0xc] sm:$0xe]
  %v3156 = vld [vmem:[%s838 + $0x18] sm:$0xe]
  %v3157 = vld [vmem:[%s838 + $0x24] sm:$0xe]
  %v3158 = vld [vmem:[%s838 + $0x30] sm:$0xe]
  %v3159 = vld [vmem:[%s838 + $0x3c] sm:$0xe]
  %v3160 = vld [vmem:[%s838 + $0x48] sm:$0xe]
  %v3161 = vld [vmem:[%s838 + $0x54] sm:$0xe]
  %v3162 = vld [vmem:[%s838 + $0x60] sm:$0xe]
  %v3163 = vld [vmem:[%s838 + $0x6c] sm:$0xe]
  %v3164 = vld [vmem:[%s838 + $0x78] sm:$0xe]
  %v3165 = vld [vmem:[%s838 + $0x84] sm:$0xe]
  %v3166 = vld [vmem:[%s838 + $0x90] sm:$0xe]
  %v3167 = vld [vmem:[%s838 + $0x9c] sm:$0xe]
  %v3168 = vld [vmem:[%s838 + $0xa8] sm:$0xe]
  %v3169 = vld [vmem:[%s838 + $0xb4] sm:$0xe]
  %v3170 = vld [vmem:[%s838 + $0xd8] sm:$0xe]
  %v3171 = vld [vmem:[%s838 + $0xe4] sm:$0xe]
  %v3172 = vld [vmem:[%s838 + $0xf0] sm:$0xe]
  %v3173 = vld [vmem:[%s838 + $0xfc] sm:$0xe]
  %v3174 = vld [vmem:[%s838 + $0x108] sm:$0xe]
  %v3175 = vld [vmem:[%s838 + $0x114] sm:$0xe]
  %v3176 = vld [vmem:[%s838 + $0x120] sm:$0xe]
  %v3177 = vld [vmem:[%s838 + $0x12c] sm:$0xe]
  %v3178 = vld [vmem:[%s838 + $0x138] sm:$0xe]
  %v3179 = vld [vmem:[%s838 + $0x144] sm:$0xe]
  %v3180 = vld [vmem:[%s838 + $0x150] sm:$0xe]
  %v3181 = vld [vmem:[%s838 + $0x15c] sm:$0xe]
  %v3182 = vld [vmem:[%s838 + $0x168] sm:$0xe]
  %v3183 = vld [vmem:[%s838 + $0x174] sm:$0xe]
  %v3184 = vld [vmem:[%s838 + $0x180] sm:$0xe]
  %v3185 = vld [vmem:[%s838 + $0x18c] sm:$0xe]
  %v3282 = vrot.slane %v3154, 5
  %v3283 = vrot.slane %v3282, 4
  %v3284 = vrot.slane %v2291, 5
  %v3285 = vsel %vm2065, %v3283, %v3284
  %v3286 = vrot.slane %v3284, 4
  %v3287 = vrot.slane %v2354, 5
  %v3288 = vsel %vm2065, %v3286, %v3287
  %v3289 = vrot.slane %v3155, 5
  %v3290 = vrot.slane %v3289, 4
  %v3291 = vrot.slane %v2293, 5
  %v3292 = vsel %vm2065, %v3290, %v3291
  %v3293 = vrot.slane %v3291, 4
  %v3294 = vrot.slane %v2355, 5
  %v3295 = vsel %vm2065, %v3293, %v3294
  %v3296 = vrot.slane %v3156, 5
  %v3297 = vrot.slane %v3296, 4
  %v3298 = vrot.slane %v2295, 5
  %v3299 = vsel %vm2065, %v3297, %v3298
  %v3300 = vrot.slane %v3298, 4
  %v3301 = vrot.slane %v2356, 5
  %v3302 = vsel %vm2065, %v3300, %v3301
  %v3303 = vrot.slane %v3157, 5
  %v3304 = vrot.slane %v3303, 4
  %v3305 = vrot.slane %v2297, 5
  %v3306 = vsel %vm2065, %v3304, %v3305
  %v3307 = vrot.slane %v3305, 4
  %v3308 = vrot.slane %v2357, 5
  %v3309 = vsel %vm2065, %v3307, %v3308
  %v3310 = vrot.slane %v3158, 5
  %v3311 = vrot.slane %v3310, 4
  %v3312 = vrot.slane %v2299, 5
  %v3313 = vsel %vm2065, %v3311, %v3312
  %v3314 = vrot.slane %v3312, 4
  %v3315 = vrot.slane %v2358, 5
  %v3316 = vsel %vm2065, %v3314, %v3315
  %v3317 = vrot.slane %v3159, 5
  %v3318 = vrot.slane %v3317, 4
  %v3319 = vrot.slane %v2301, 5
  %v3320 = vsel %vm2065, %v3318, %v3319
  %v3321 = vrot.slane %v3319, 4
  %v3322 = vrot.slane %v2359, 5
  %v3323 = vsel %vm2065, %v3321, %v3322
  %v3324 = vrot.slane %v3160, 5
  %v3325 = vrot.slane %v3324, 4
  %v3326 = vrot.slane %v2303, 5
  %v3327 = vsel %vm2065, %v3325, %v3326
  %v3328 = vrot.slane %v3326, 4
  %v3329 = vrot.slane %v2360, 5
  %v3330 = vsel %vm2065, %v3328, %v3329
  %v3331 = vrot.slane %v3161, 5
  %v3332 = vrot.slane %v3331, 4
  %v3333 = vrot.slane %v2305, 5
  %v3334 = vsel %vm2065, %v3332, %v3333
  %v3335 = vrot.slane %v3333, 4
  %v3336 = vrot.slane %v2361, 5
  %v3337 = vsel %vm2065, %v3335, %v3336
  %v3338 = vrot.slane %v3162, 5
  %v3339 = vrot.slane %v3338, 4
  %v3340 = vrot.slane %v2307, 5
  %v3341 = vsel %vm2065, %v3339, %v3340
  %v3342 = vrot.slane %v3340, 4
  %v3343 = vrot.slane %v2362, 5
  %v3344 = vsel %vm2065, %v3342, %v3343
  %v3345 = vrot.slane %v3163, 5
  %v3346 = vrot.slane %v3345, 4
  %v3347 = vrot.slane %v2309, 5
  %v3348 = vsel %vm2065, %v3346, %v3347
  %v3349 = vrot.slane %v3347, 4
  %v3350 = vrot.slane %v2363, 5
  %v3351 = vsel %vm2065, %v3349, %v3350
  %v3352 = vrot.slane %v3164, 5
  %v3353 = vrot.slane %v3352, 4
  %v3354 = vrot.slane %v2311, 5
  %v3355 = vsel %vm2065, %v3353, %v3354
  %v3356 = vrot.slane %v3354, 4
  %v3357 = vrot.slane %v2364, 5
  %v3358 = vsel %vm2065, %v3356, %v3357
  %v3359 = vrot.slane %v3165, 5
  %v3360 = vrot.slane %v3359, 4
  %v3361 = vrot.slane %v2313, 5
  %v3362 = vsel %vm2065, %v3360, %v3361
  %v3363 = vrot.slane %v3361, 4
  %v3364 = vrot.slane %v2365, 5
  %v3365 = vsel %vm2065, %v3363, %v3364
  %v3366 = vrot.slane %v3166, 5
  %v3367 = vrot.slane %v3366, 4
  %v3368 = vrot.slane %v2315, 5
  %v3369 = vsel %vm2065, %v3367, %v3368
  %v3370 = vrot.slane %v3368, 4
  %v3371 = vrot.slane %v2366, 5
  %v3372 = vsel %vm2065, %v3370, %v3371
  %v3373 = vrot.slane %v3167, 5
  %v3374 = vrot.slane %v3373, 4
  %v3375 = vrot.slane %v2317, 5
  %v3376 = vsel %vm2065, %v3374, %v3375
  %v3377 = vrot.slane %v3375, 4
  %v3378 = vrot.slane %v2367, 5
  %v3379 = vsel %vm2065, %v3377, %v3378
  %v3380 = vrot.slane %v3168, 5
  %v3381 = vrot.slane %v3380, 4
  %v3382 = vrot.slane %v2319, 5
  %v3383 = vsel %vm2065, %v3381, %v3382
  %v3384 = vrot.slane %v3382, 4
  %v3385 = vrot.slane %v2368, 5
  %v3386 = vsel %vm2065, %v3384, %v3385
  %v3387 = vrot.slane %v3169, 5
  %v3388 = vrot.slane %v3387, 4
  %v3389 = vrot.slane %v2321, 5
  %v3390 = vsel %vm2065, %v3388, %v3389
  %v3391 = vrot.slane %v3389, 4
  %v3392 = vrot.slane %v2369, 5
  %v3393 = vsel %vm2065, %v3391, %v3392
  %v3394 = vrot.slane %v3170, 5
  %v3395 = vrot.slane %v3394, 4
  %v3396 = vrot.slane %v2323, 5
  %v3397 = vsel %vm2065, %v3395, %v3396
  %v3398 = vrot.slane %v3396, 4
  %v3399 = vrot.slane %v2370, 5
  %v3400 = vsel %vm2065, %v3398, %v3399
  %v3401 = vrot.slane %v3171, 5
  %v3402 = vrot.slane %v3401, 4
  %v3403 = vrot.slane %v2325, 5
  %v3404 = vsel %vm2065, %v3402, %v3403
  %v3405 = vrot.slane %v3403, 4
  %v3406 = vrot.slane %v2371, 5
  %v3407 = vsel %vm2065, %v3405, %v3406
  %v3408 = vrot.slane %v3172, 5
  %v3409 = vrot.slane %v3408, 4
  %v3410 = vrot.slane %v2327, 5
  %v3411 = vsel %vm2065, %v3409, %v3410
  %v3412 = vrot.slane %v3410, 4
  %v3413 = vrot.slane %v2372, 5
  %v3414 = vsel %vm2065, %v3412, %v3413
  %v3415 = vrot.slane %v3173, 5
  %v3416 = vrot.slane %v3415, 4
  %v3417 = vrot.slane %v2329, 5
  %v3418 = vsel %vm2065, %v3416, %v3417
  %v3419 = vrot.slane %v3417, 4
  %v3420 = vrot.slane %v2373, 5
  %v3421 = vsel %vm2065, %v3419, %v3420
  %v3422 = vrot.slane %v3174, 5
  %v3423 = vrot.slane %v3422, 4
  %v3424 = vrot.slane %v2331, 5
  %v3425 = vsel %vm2065, %v3423, %v3424
  %v3426 = vrot.slane %v3424, 4
  %v3427 = vrot.slane %v2374, 5
  %v3428 = vsel %vm2065, %v3426, %v3427
  %v3429 = vrot.slane %v3175, 5
  %v3430 = vrot.slane %v3429, 4
  %v3431 = vrot.slane %v2333, 5
  %v3432 = vsel %vm2065, %v3430, %v3431
  %v3433 = vrot.slane %v3431, 4
  %v3434 = vrot.slane %v2375, 5
  %v3435 = vsel %vm2065, %v3433, %v3434
  %v3436 = vrot.slane %v3176, 5
  %v3437 = vrot.slane %v3436, 4
  %v3438 = vrot.slane %v2335, 5
  %v3439 = vsel %vm2065, %v3437, %v3438
  %v3440 = vrot.slane %v3438, 4
  %v3441 = vrot.slane %v2376, 5
  %v3442 = vsel %vm2065, %v3440, %v3441
  %v3443 = vrot.slane %v3177, 5
  %v3444 = vrot.slane %v3443, 4
  %v3445 = vrot.slane %v2337, 5
  %v3446 = vsel %vm2065, %v3444, %v3445
  %v3447 = vrot.slane %v3445, 4
  %v3448 = vrot.slane %v2377, 5
  %v3449 = vsel %vm2065, %v3447, %v3448
  %v3450 = vrot.slane %v3178, 5
  %v3451 = vrot.slane %v3450, 4
  %v3452 = vrot.slane %v2339, 5
  %v3453 = vsel %vm2065, %v3451, %v3452
  %v3454 = vrot.slane %v3452, 4
  %v3455 = vrot.slane %v2378, 5
  %v3456 = vsel %vm2065, %v3454, %v3455
  %v3457 = vrot.slane %v3179, 5
  %v3458 = vrot.slane %v3457, 4
  %v3459 = vrot.slane %v2341, 5
  %v3460 = vsel %vm2065, %v3458, %v3459
  %v3461 = vrot.slane %v3459, 4
  %v3462 = vrot.slane %v2379, 5
  %v3463 = vsel %vm2065, %v3461, %v3462
  %v3464 = vrot.slane %v3180, 5
  %v3465 = vrot.slane %v3464, 4
  %v3466 = vrot.slane %v2343, 5
  %v3467 = vsel %vm2065, %v3465, %v3466
  %v3468 = vrot.slane %v3466, 4
  %v3469 = vrot.slane %v2380, 5
  %v3470 = vsel %vm2065, %v3468, %v3469
  %v3471 = vrot.slane %v3181, 5
  %v3472 = vrot.slane %v3471, 4
  %v3473 = vrot.slane %v2345, 5
  %v3474 = vsel %vm2065, %v3472, %v3473
  %v3475 = vrot.slane %v3473, 4
  %v3476 = vrot.slane %v2381, 5
  %v3477 = vsel %vm2065, %v3475, %v3476
  %v3478 = vrot.slane %v3182, 5
  %v3479 = vrot.slane %v3478, 4
  %v3480 = vrot.slane %v2347, 5
  %v3481 = vsel %vm2065, %v3479, %v3480
  %v3482 = vrot.slane %v3480, 4
  %v3483 = vrot.slane %v2382, 5
  %v3484 = vsel %vm2065, %v3482, %v3483
  %v3485 = vrot.slane %v3183, 5
  %v3486 = vrot.slane %v3485, 4
  %v3487 = vrot.slane %v2349, 5
  %v3488 = vsel %vm2065, %v3486, %v3487
  %v3489 = vrot.slane %v3487, 4
  %v3490 = vrot.slane %v2383, 5
  %v3491 = vsel %vm2065, %v3489, %v3490
  %v3492 = vrot.slane %v3184, 5
  %v3493 = vrot.slane %v3492, 4
  %v3494 = vrot.slane %v2351, 5
  %v3495 = vsel %vm2065, %v3493, %v3494
  %v3496 = vrot.slane %v3494, 4
  %v3497 = vrot.slane %v2384, 5
  %v3498 = vsel %vm2065, %v3496, %v3497
  %v3499 = vrot.slane %v3185, 5
  %v3500 = vrot.slane %v3499, 4
  %v3501 = vrot.slane %v2353, 5
  %v3502 = vsel %vm2065, %v3500, %v3501
  %v3503 = vrot.slane %v3501, 4
  %v3504 = vrot.slane %v2385, 5
  %v3505 = vsel %vm2065, %v3503, %v3504
  %s3506 = scalar_lea.vmem [#allocation2], 24
  %v3507 = vld [vmem:[%s3506] sm:$0xf]
  %v3508 = vld [vmem:[%s3506 + $0x4] sm:$0xf]
  %v3509 = vld [vmem:[%s3506 + $0xc] sm:$0xf]
  %v3510 = vld [vmem:[%s3506 + $0x10] sm:$0xf]
  %v3511 = vld [vmem:[%s3506 + $0x18] sm:$0xf]
  %v3512 = vld [vmem:[%s3506 + $0x1c] sm:$0xf]
  %v3513 = vld [vmem:[%s3506 + $0x24] sm:$0xf]
  %v3514 = vld [vmem:[%s3506 + $0x28] sm:$0xf]
  %v3515 = vld [vmem:[%s3506 + $0x30] sm:$0xf]
  %v3516 = vld [vmem:[%s3506 + $0x34] sm:$0xf]
  %v3517 = vld [vmem:[%s3506 + $0x3c] sm:$0xf]
  %v3518 = vld [vmem:[%s3506 + $0x40] sm:$0xf]
  %v3519 = vld [vmem:[%s3506 + $0x48] sm:$0xf]
  %v3520 = vld [vmem:[%s3506 + $0x4c] sm:$0xf]
  %v3521 = vld [vmem:[%s3506 + $0x54] sm:$0xf]
  %v3522 = vld [vmem:[%s3506 + $0x58] sm:$0xf]
  %v3523 = vld [vmem:[%s3506 + $0x60] sm:$0xf]
  %v3524 = vld [vmem:[%s3506 + $0x64] sm:$0xf]
  %v3525 = vld [vmem:[%s3506 + $0x6c] sm:$0xf]
  %v3526 = vld [vmem:[%s3506 + $0x70] sm:$0xf]
  %v3527 = vld [vmem:[%s3506 + $0x78] sm:$0xf]
  %v3528 = vld [vmem:[%s3506 + $0x7c] sm:$0xf]
  %v3529 = vld [vmem:[%s3506 + $0x84] sm:$0xf]
  %v3530 = vld [vmem:[%s3506 + $0x88] sm:$0xf]
  %v3531 = vld [vmem:[%s3506 + $0x90] sm:$0xf]
  %v3532 = vld [vmem:[%s3506 + $0x94] sm:$0xf]
  %v3533 = vld [vmem:[%s3506 + $0x9c] sm:$0xf]
  %v3534 = vld [vmem:[%s3506 + $0xa0] sm:$0xf]
  %v3535 = vld [vmem:[%s3506 + $0xa8] sm:$0xf]
  %v3536 = vld [vmem:[%s3506 + $0xac] sm:$0xf]
  %v3537 = vld [vmem:[%s3506 + $0xb4] sm:$0xf]
  %v3538 = vld [vmem:[%s3506 + $0xb8] sm:$0xf]
  %v3539 = vld [vmem:[%s3506 + $0xd8] sm:$0xf]
  %v3540 = vld [vmem:[%s3506 + $0xdc] sm:$0xf]
  %v3541 = vld [vmem:[%s3506 + $0xe4] sm:$0xf]
  %v3542 = vld [vmem:[%s3506 + $0xe8] sm:$0xf]
  %v3543 = vld [vmem:[%s3506 + $0xf0] sm:$0xf]
  %v3544 = vld [vmem:[%s3506 + $0xf4] sm:$0xf]
  %v3545 = vld [vmem:[%s3506 + $0xfc] sm:$0xf]
  %v3546 = vld [vmem:[%s3506 + $0x100] sm:$0xf]
  %v3547 = vld [vmem:[%s3506 + $0x108] sm:$0xf]
  %v3548 = vld [vmem:[%s3506 + $0x10c] sm:$0xf]
  %v3549 = vld [vmem:[%s3506 + $0x114] sm:$0xf]
  %v3550 = vld [vmem:[%s3506 + $0x118] sm:$0xf]
  %v3551 = vld [vmem:[%s3506 + $0x120] sm:$0xf]
  %v3552 = vld [vmem:[%s3506 + $0x124] sm:$0xf]
  %v3553 = vld [vmem:[%s3506 + $0x12c] sm:$0xf]
  %v3554 = vld [vmem:[%s3506 + $0x130] sm:$0xf]
  %v3555 = vld [vmem:[%s3506 + $0x138] sm:$0xf]
  %v3556 = vld [vmem:[%s3506 + $0x13c] sm:$0xf]
  %v3557 = vld [vmem:[%s3506 + $0x144] sm:$0xf]
  %v3558 = vld [vmem:[%s3506 + $0x148] sm:$0xf]
  %v3559 = vld [vmem:[%s3506 + $0x150] sm:$0xf]
  %v3560 = vld [vmem:[%s3506 + $0x154] sm:$0xf]
  %v3561 = vld [vmem:[%s3506 + $0x15c] sm:$0xf]
  %v3562 = vld [vmem:[%s3506 + $0x160] sm:$0xf]
  %v3563 = vld [vmem:[%s3506 + $0x168] sm:$0xf]
  %v3564 = vld [vmem:[%s3506 + $0x16c] sm:$0xf]
  %v3565 = vld [vmem:[%s3506 + $0x174] sm:$0xf]
  %v3566 = vld [vmem:[%s3506 + $0x178] sm:$0xf]
  %v3567 = vld [vmem:[%s3506 + $0x180] sm:$0xf]
  %v3568 = vld [vmem:[%s3506 + $0x184] sm:$0xf]
  %v3569 = vld [vmem:[%s3506 + $0x18c] sm:$0xf]
  %v3570 = vld [vmem:[%s3506 + $0x190] sm:$0xf]
  %v3571 = vld [vmem:[%s3506 + $0x8] sm:$0x1]
  %v3572 = vld [vmem:[%s3506 + $0x14] sm:$0x1]
  %v3573 = vld [vmem:[%s3506 + $0x20] sm:$0x1]
  %v3574 = vld [vmem:[%s3506 + $0x2c] sm:$0x1]
  %v3575 = vld [vmem:[%s3506 + $0x38] sm:$0x1]
  %v3576 = vld [vmem:[%s3506 + $0x44] sm:$0x1]
  %v3577 = vld [vmem:[%s3506 + $0x50] sm:$0x1]
  %v3578 = vld [vmem:[%s3506 + $0x5c] sm:$0x1]
  %v3579 = vld [vmem:[%s3506 + $0x68] sm:$0x1]
  %v3580 = vld [vmem:[%s3506 + $0x74] sm:$0x1]
  %v3581 = vld [vmem:[%s3506 + $0x80] sm:$0x1]
  %v3582 = vld [vmem:[%s3506 + $0x8c] sm:$0x1]
  %v3583 = vld [vmem:[%s3506 + $0x98] sm:$0x1]
  %v3584 = vld [vmem:[%s3506 + $0xa4] sm:$0x1]
  %v3585 = vld [vmem:[%s3506 + $0xb0] sm:$0x1]
  %v3586 = vld [vmem:[%s3506 + $0xbc] sm:$0x1]
  %v3587 = vld [vmem:[%s3506 + $0xe0] sm:$0x1]
  %v3588 = vld [vmem:[%s3506 + $0xec] sm:$0x1]
  %v3589 = vld [vmem:[%s3506 + $0xf8] sm:$0x1]
  %v3590 = vld [vmem:[%s3506 + $0x104] sm:$0x1]
  %v3591 = vld [vmem:[%s3506 + $0x110] sm:$0x1]
  %v3592 = vld [vmem:[%s3506 + $0x11c] sm:$0x1]
  %v3593 = vld [vmem:[%s3506 + $0x128] sm:$0x1]
  %v3594 = vld [vmem:[%s3506 + $0x134] sm:$0x1]
  %v3595 = vld [vmem:[%s3506 + $0x140] sm:$0x1]
  %v3596 = vld [vmem:[%s3506 + $0x14c] sm:$0x1]
  %v3597 = vld [vmem:[%s3506 + $0x158] sm:$0x1]
  %v3598 = vld [vmem:[%s3506 + $0x164] sm:$0x1]
  %v3599 = vld [vmem:[%s3506 + $0x170] sm:$0x1]
  %v3600 = vld [vmem:[%s3506 + $0x17c] sm:$0x1]
  %v3601 = vld [vmem:[%s3506 + $0x188] sm:$0x1]
  %v3602 = vld [vmem:[%s3506 + $0x194] sm:$0x1]
  %v3604 = vshrl.u32 %v3507, 16
  %v3606 = vrot.slane %v3604, 4
  %v3607 = vshll.u32 %v3507, 16
  %v3609 = vrot.slane %v3607, 5
  %v3610 = vor.u32 %v3606, %v3609
  %v3611 = vrot.slane %v3610, 4
  %v3613 = vshll.u32 %v3508, 16
  %v3615 = vrot.slane %v3613, 5
  %v3616 = vsel %vm1166, %v3611, %v3615
  %v3617 = vshrl.u32 %v3508, 16
  %v3619 = vrot.slane %v3617, 4
  %v3620 = vor.u32 %v3619, %v3615
  %v3621 = vrot.slane %v3620, 4
  %v3623 = vshll.u32 %v3571, 16
  %v3625 = vrot.slane %v3623, 5
  %v3626 = vsel %vm1166, %v3621, %v3625
  %v3628 = vshrl.u32 %v3509, 16
  %v3630 = vrot.slane %v3628, 4
  %v3631 = vshll.u32 %v3509, 16
  %v3633 = vrot.slane %v3631, 5
  %v3634 = vor.u32 %v3630, %v3633
  %v3635 = vrot.slane %v3634, 4
  %v3637 = vshll.u32 %v3510, 16
  %v3639 = vrot.slane %v3637, 5
  %v3640 = vsel %vm1166, %v3635, %v3639
  %v3641 = vshrl.u32 %v3510, 16
  %v3643 = vrot.slane %v3641, 4
  %v3644 = vor.u32 %v3643, %v3639
  %v3645 = vrot.slane %v3644, 4
  %v3647 = vshll.u32 %v3572, 16
  %v3649 = vrot.slane %v3647, 5
  %v3650 = vsel %vm1166, %v3645, %v3649
  %v3652 = vshrl.u32 %v3511, 16
  %v3654 = vrot.slane %v3652, 4
  %v3655 = vshll.u32 %v3511, 16
  %v3657 = vrot.slane %v3655, 5
  %v3658 = vor.u32 %v3654, %v3657
  %v3659 = vrot.slane %v3658, 4
  %v3661 = vshll.u32 %v3512, 16
  %v3663 = vrot.slane %v3661, 5
  %v3664 = vsel %vm1166, %v3659, %v3663
  %v3665 = vshrl.u32 %v3512, 16
  %v3667 = vrot.slane %v3665, 4
  %v3668 = vor.u32 %v3667, %v3663
  %v3669 = vrot.slane %v3668, 4
  %v3671 = vshll.u32 %v3573, 16
  %v3673 = vrot.slane %v3671, 5
  %v3674 = vsel %vm1166, %v3669, %v3673
  %v3676 = vshrl.u32 %v3513, 16
  %v3678 = vrot.slane %v3676, 4
  %v3679 = vshll.u32 %v3513, 16
  %v3681 = vrot.slane %v3679, 5
  %v3682 = vor.u32 %v3678, %v3681
  %v3683 = vrot.slane %v3682, 4
  %v3685 = vshll.u32 %v3514, 16
  %v3687 = vrot.slane %v3685, 5
  %v3688 = vsel %vm1166, %v3683, %v3687
  %v3689 = vshrl.u32 %v3514, 16
  %v3691 = vrot.slane %v3689, 4
  %v3692 = vor.u32 %v3691, %v3687
  %v3693 = vrot.slane %v3692, 4
  %v3695 = vshll.u32 %v3574, 16
  %v3697 = vrot.slane %v3695, 5
  %v3698 = vsel %vm1166, %v3693, %v3697
  %v3700 = vshrl.u32 %v3515, 16
  %v3702 = vrot.slane %v3700, 4
  %v3703 = vshll.u32 %v3515, 16
  %v3705 = vrot.slane %v3703, 5
  %v3706 = vor.u32 %v3702, %v3705
  %v3707 = vrot.slane %v3706, 4
  %v3709 = vshll.u32 %v3516, 16
  %v3711 = vrot.slane %v3709, 5
  %v3712 = vsel %vm1166, %v3707, %v3711
  %v3713 = vshrl.u32 %v3516, 16
  %v3715 = vrot.slane %v3713, 4
  %v3716 = vor.u32 %v3715, %v3711
  %v3717 = vrot.slane %v3716, 4
  %v3719 = vshll.u32 %v3575, 16
  %v3721 = vrot.slane %v3719, 5
  %v3722 = vsel %vm1166, %v3717, %v3721
  %v3724 = vshrl.u32 %v3517, 16
  %v3726 = vrot.slane %v3724, 4
  %v3727 = vshll.u32 %v3517, 16
  %v3729 = vrot.slane %v3727, 5
  %v3730 = vor.u32 %v3726, %v3729
  %v3731 = vrot.slane %v3730, 4
  %v3733 = vshll.u32 %v3518, 16
  %v3735 = vrot.slane %v3733, 5
  %v3736 = vsel %vm1166, %v3731, %v3735
  %v3737 = vshrl.u32 %v3518, 16
  %v3739 = vrot.slane %v3737, 4
  %v3740 = vor.u32 %v3739, %v3735
  %v3741 = vrot.slane %v3740, 4
  %v3743 = vshll.u32 %v3576, 16
  %v3745 = vrot.slane %v3743, 5
  %v3746 = vsel %vm1166, %v3741, %v3745
  %v3748 = vshrl.u32 %v3519, 16
  %v3750 = vrot.slane %v3748, 4
  %v3751 = vshll.u32 %v3519, 16
  %v3753 = vrot.slane %v3751, 5
  %v3754 = vor.u32 %v3750, %v3753
  %v3755 = vrot.slane %v3754, 4
  %v3757 = vshll.u32 %v3520, 16
  %v3759 = vrot.slane %v3757, 5
  %v3760 = vsel %vm1166, %v3755, %v3759
  %v3761 = vshrl.u32 %v3520, 16
  %v3763 = vrot.slane %v3761, 4
  %v3764 = vor.u32 %v3763, %v3759
  %v3765 = vrot.slane %v3764, 4
  %v3767 = vshll.u32 %v3577, 16
  %v3769 = vrot.slane %v3767, 5
  %v3770 = vsel %vm1166, %v3765, %v3769
  %v3772 = vshrl.u32 %v3521, 16
  %v3774 = vrot.slane %v3772, 4
  %v3775 = vshll.u32 %v3521, 16
  %v3777 = vrot.slane %v3775, 5
  %v3778 = vor.u32 %v3774, %v3777
  %v3779 = vrot.slane %v3778, 4
  %v3781 = vshll.u32 %v3522, 16
  %v3783 = vrot.slane %v3781, 5
  %v3784 = vsel %vm1166, %v3779, %v3783
  %v3785 = vshrl.u32 %v3522, 16
  %v3787 = vrot.slane %v3785, 4
  %v3788 = vor.u32 %v3787, %v3783
  %v3789 = vrot.slane %v3788, 4
  %v3791 = vshll.u32 %v3578, 16
  %v3793 = vrot.slane %v3791, 5
  %v3794 = vsel %vm1166, %v3789, %v3793
  %v3796 = vshrl.u32 %v3523, 16
  %v3798 = vrot.slane %v3796, 4
  %v3799 = vshll.u32 %v3523, 16
  %v3801 = vrot.slane %v3799, 5
  %v3802 = vor.u32 %v3798, %v3801
  %v3803 = vrot.slane %v3802, 4
  %v3805 = vshll.u32 %v3524, 16
  %v3807 = vrot.slane %v3805, 5
  %v3808 = vsel %vm1166, %v3803, %v3807
  %v3809 = vshrl.u32 %v3524, 16
  %v3811 = vrot.slane %v3809, 4
  %v3812 = vor.u32 %v3811, %v3807
  %v3813 = vrot.slane %v3812, 4
  %v3815 = vshll.u32 %v3579, 16
  %v3817 = vrot.slane %v3815, 5
  %v3818 = vsel %vm1166, %v3813, %v3817
  %v3820 = vshrl.u32 %v3525, 16
  %v3822 = vrot.slane %v3820, 4
  %v3823 = vshll.u32 %v3525, 16
  %v3825 = vrot.slane %v3823, 5
  %v3826 = vor.u32 %v3822, %v3825
  %v3827 = vrot.slane %v3826, 4
  %v3829 = vshll.u32 %v3526, 16
  %v3831 = vrot.slane %v3829, 5
  %v3832 = vsel %vm1166, %v3827, %v3831
  %v3833 = vshrl.u32 %v3526, 16
  %v3835 = vrot.slane %v3833, 4
  %v3836 = vor.u32 %v3835, %v3831
  %v3837 = vrot.slane %v3836, 4
  %v3839 = vshll.u32 %v3580, 16
  %v3841 = vrot.slane %v3839, 5
  %v3842 = vsel %vm1166, %v3837, %v3841
  %v3844 = vshrl.u32 %v3527, 16
  %v3846 = vrot.slane %v3844, 4
  %v3847 = vshll.u32 %v3527, 16
  %v3849 = vrot.slane %v3847, 5
  %v3850 = vor.u32 %v3846, %v3849
  %v3851 = vrot.slane %v3850, 4
  %v3853 = vshll.u32 %v3528, 16
  %v3855 = vrot.slane %v3853, 5
  %v3856 = vsel %vm1166, %v3851, %v3855
  %v3857 = vshrl.u32 %v3528, 16
  %v3859 = vrot.slane %v3857, 4
  %v3860 = vor.u32 %v3859, %v3855
  %v3861 = vrot.slane %v3860, 4
  %v3863 = vshll.u32 %v3581, 16
  %v3865 = vrot.slane %v3863, 5
  %v3866 = vsel %vm1166, %v3861, %v3865
  %v3868 = vshrl.u32 %v3529, 16
  %v3870 = vrot.slane %v3868, 4
  %v3871 = vshll.u32 %v3529, 16
  %v3873 = vrot.slane %v3871, 5
  %v3874 = vor.u32 %v3870, %v3873
  %v3875 = vrot.slane %v3874, 4
  %v3877 = vshll.u32 %v3530, 16
  %v3879 = vrot.slane %v3877, 5
  %v3880 = vsel %vm1166, %v3875, %v3879
  %v3881 = vshrl.u32 %v3530, 16
  %v3883 = vrot.slane %v3881, 4
  %v3884 = vor.u32 %v3883, %v3879
  %v3885 = vrot.slane %v3884, 4
  %v3887 = vshll.u32 %v3582, 16
  %v3889 = vrot.slane %v3887, 5
  %v3890 = vsel %vm1166, %v3885, %v3889
  %v3892 = vshrl.u32 %v3531, 16
  %v3894 = vrot.slane %v3892, 4
  %v3895 = vshll.u32 %v3531, 16
  %v3897 = vrot.slane %v3895, 5
  %v3898 = vor.u32 %v3894, %v3897
  %v3899 = vrot.slane %v3898, 4
  %v3901 = vshll.u32 %v3532, 16
  %v3903 = vrot.slane %v3901, 5
  %v3904 = vsel %vm1166, %v3899, %v3903
  %v3905 = vshrl.u32 %v3532, 16
  %v3907 = vrot.slane %v3905, 4
  %v3908 = vor.u32 %v3907, %v3903
  %v3909 = vrot.slane %v3908, 4
  %v3911 = vshll.u32 %v3583, 16
  %v3913 = vrot.slane %v3911, 5
  %v3914 = vsel %vm1166, %v3909, %v3913
  %v3916 = vshrl.u32 %v3533, 16
  %v3918 = vrot.slane %v3916, 4
  %v3919 = vshll.u32 %v3533, 16
  %v3921 = vrot.slane %v3919, 5
  %v3922 = vor.u32 %v3918, %v3921
  %v3923 = vrot.slane %v3922, 4
  %v3925 = vshll.u32 %v3534, 16
  %v3927 = vrot.slane %v3925, 5
  %v3928 = vsel %vm1166, %v3923, %v3927
  %v3929 = vshrl.u32 %v3534, 16
  %v3931 = vrot.slane %v3929, 4
  %v3932 = vor.u32 %v3931, %v3927
  %v3933 = vrot.slane %v3932, 4
  %v3935 = vshll.u32 %v3584, 16
  %v3937 = vrot.slane %v3935, 5
  %v3938 = vsel %vm1166, %v3933, %v3937
  %v3940 = vshrl.u32 %v3535, 16
  %v3942 = vrot.slane %v3940, 4
  %v3943 = vshll.u32 %v3535, 16
  %v3945 = vrot.slane %v3943, 5
  %v3946 = vor.u32 %v3942, %v3945
  %v3947 = vrot.slane %v3946, 4
  %v3949 = vshll.u32 %v3536, 16
  %v3951 = vrot.slane %v3949, 5
  %v3952 = vsel %vm1166, %v3947, %v3951
  %v3953 = vshrl.u32 %v3536, 16
  %v3955 = vrot.slane %v3953, 4
  %v3956 = vor.u32 %v3955, %v3951
  %v3957 = vrot.slane %v3956, 4
  %v3959 = vshll.u32 %v3585, 16
  %v3961 = vrot.slane %v3959, 5
  %v3962 = vsel %vm1166, %v3957, %v3961
  %v3964 = vshrl.u32 %v3537, 16
  %v3966 = vrot.slane %v3964, 4
  %v3967 = vshll.u32 %v3537, 16
  %v3969 = vrot.slane %v3967, 5
  %v3970 = vor.u32 %v3966, %v3969
  %v3971 = vrot.slane %v3970, 4
  %v3973 = vshll.u32 %v3538, 16
  %v3975 = vrot.slane %v3973, 5
  %v3976 = vsel %vm1166, %v3971, %v3975
  %v3977 = vshrl.u32 %v3538, 16
  %v3979 = vrot.slane %v3977, 4
  %v3980 = vor.u32 %v3979, %v3975
  %v3981 = vrot.slane %v3980, 4
  %v3983 = vshll.u32 %v3586, 16
  %v3985 = vrot.slane %v3983, 5
  %v3986 = vsel %vm1166, %v3981, %v3985
  %v3988 = vshrl.u32 %v3539, 16
  %v3990 = vrot.slane %v3988, 4
  %v3991 = vshll.u32 %v3539, 16
  %v3993 = vrot.slane %v3991, 5
  %v3994 = vor.u32 %v3990, %v3993
  %v3995 = vrot.slane %v3994, 4
  %v3997 = vshll.u32 %v3540, 16
  %v3999 = vrot.slane %v3997, 5
  %v4000 = vsel %vm1166, %v3995, %v3999
  %v4001 = vshrl.u32 %v3540, 16
  %v4003 = vrot.slane %v4001, 4
  %v4004 = vor.u32 %v4003, %v3999
  %v4005 = vrot.slane %v4004, 4
  %v4007 = vshll.u32 %v3587, 16
  %v4009 = vrot.slane %v4007, 5
  %v4010 = vsel %vm1166, %v4005, %v4009
  %v4012 = vshrl.u32 %v3541, 16
  %v4014 = vrot.slane %v4012, 4
  %v4015 = vshll.u32 %v3541, 16
  %v4017 = vrot.slane %v4015, 5
  %v4018 = vor.u32 %v4014, %v4017
  %v4019 = vrot.slane %v4018, 4
  %v4021 = vshll.u32 %v3542, 16
  %v4023 = vrot.slane %v4021, 5
  %v4024 = vsel %vm1166, %v4019, %v4023
  %v4025 = vshrl.u32 %v3542, 16
  %v4027 = vrot.slane %v4025, 4
  %v4028 = vor.u32 %v4027, %v4023
  %v4029 = vrot.slane %v4028, 4
  %v4031 = vshll.u32 %v3588, 16
  %v4033 = vrot.slane %v4031, 5
  %v4034 = vsel %vm1166, %v4029, %v4033
  %v4036 = vshrl.u32 %v3543, 16
  %v4038 = vrot.slane %v4036, 4
  %v4039 = vshll.u32 %v3543, 16
  %v4041 = vrot.slane %v4039, 5
  %v4042 = vor.u32 %v4038, %v4041
  %v4043 = vrot.slane %v4042, 4
  %v4045 = vshll.u32 %v3544, 16
  %v4047 = vrot.slane %v4045, 5
  %v4048 = vsel %vm1166, %v4043, %v4047
  %v4049 = vshrl.u32 %v3544, 16
  %v4051 = vrot.slane %v4049, 4
  %v4052 = vor.u32 %v4051, %v4047
  %v4053 = vrot.slane %v4052, 4
  %v4055 = vshll.u32 %v3589, 16
  %v4057 = vrot.slane %v4055, 5
  %v4058 = vsel %vm1166, %v4053, %v4057
  %v4060 = vshrl.u32 %v3545, 16
  %v4062 = vrot.slane %v4060, 4
  %v4063 = vshll.u32 %v3545, 16
  %v4065 = vrot.slane %v4063, 5
  %v4066 = vor.u32 %v4062, %v4065
  %v4067 = vrot.slane %v4066, 4
  %v4069 = vshll.u32 %v3546, 16
  %v4071 = vrot.slane %v4069, 5
  %v4072 = vsel %vm1166, %v4067, %v4071
  %v4073 = vshrl.u32 %v3546, 16
  %v4075 = vrot.slane %v4073, 4
  %v4076 = vor.u32 %v4075, %v4071
  %v4077 = vrot.slane %v4076, 4
  %v4079 = vshll.u32 %v3590, 16
  %v4081 = vrot.slane %v4079, 5
  %v4082 = vsel %vm1166, %v4077, %v4081
  %v4084 = vshrl.u32 %v3547, 16
  %v4086 = vrot.slane %v4084, 4
  %v4087 = vshll.u32 %v3547, 16
  %v4089 = vrot.slane %v4087, 5
  %v4090 = vor.u32 %v4086, %v4089
  %v4091 = vrot.slane %v4090, 4
  %v4093 = vshll.u32 %v3548, 16
  %v4095 = vrot.slane %v4093, 5
  %v4096 = vsel %vm1166, %v4091, %v4095
  %v4097 = vshrl.u32 %v3548, 16
  %v4099 = vrot.slane %v4097, 4
  %v4100 = vor.u32 %v4099, %v4095
  %v4101 = vrot.slane %v4100, 4
  %v4103 = vshll.u32 %v3591, 16
  %v4105 = vrot.slane %v4103, 5
  %v4106 = vsel %vm1166, %v4101, %v4105
  %v4108 = vshrl.u32 %v3549, 16
  %v4110 = vrot.slane %v4108, 4
  %v4111 = vshll.u32 %v3549, 16
  %v4113 = vrot.slane %v4111, 5
  %v4114 = vor.u32 %v4110, %v4113
  %v4115 = vrot.slane %v4114, 4
  %v4117 = vshll.u32 %v3550, 16
  %v4119 = vrot.slane %v4117, 5
  %v4120 = vsel %vm1166, %v4115, %v4119
  %v4121 = vshrl.u32 %v3550, 16
  %v4123 = vrot.slane %v4121, 4
  %v4124 = vor.u32 %v4123, %v4119
  %v4125 = vrot.slane %v4124, 4
  %v4127 = vshll.u32 %v3592, 16
  %v4129 = vrot.slane %v4127, 5
  %v4130 = vsel %vm1166, %v4125, %v4129
  %v4132 = vshrl.u32 %v3551, 16
  %v4134 = vrot.slane %v4132, 4
  %v4135 = vshll.u32 %v3551, 16
  %v4137 = vrot.slane %v4135, 5
  %v4138 = vor.u32 %v4134, %v4137
  %v4139 = vrot.slane %v4138, 4
  %v4141 = vshll.u32 %v3552, 16
  %v4143 = vrot.slane %v4141, 5
  %v4144 = vsel %vm1166, %v4139, %v4143
  %v4145 = vshrl.u32 %v3552, 16
  %v4147 = vrot.slane %v4145, 4
  %v4148 = vor.u32 %v4147, %v4143
  %v4149 = vrot.slane %v4148, 4
  %v4151 = vshll.u32 %v3593, 16
  %v4153 = vrot.slane %v4151, 5
  %v4154 = vsel %vm1166, %v4149, %v4153
  %v4156 = vshrl.u32 %v3553, 16
  %v4158 = vrot.slane %v4156, 4
  %v4159 = vshll.u32 %v3553, 16
  %v4161 = vrot.slane %v4159, 5
  %v4162 = vor.u32 %v4158, %v4161
  %v4163 = vrot.slane %v4162, 4
  %v4165 = vshll.u32 %v3554, 16
  %v4167 = vrot.slane %v4165, 5
  %v4168 = vsel %vm1166, %v4163, %v4167
  %v4169 = vshrl.u32 %v3554, 16
  %v4171 = vrot.slane %v4169, 4
  %v4172 = vor.u32 %v4171, %v4167
  %v4173 = vrot.slane %v4172, 4
  %v4175 = vshll.u32 %v3594, 16
  %v4177 = vrot.slane %v4175, 5
  %v4178 = vsel %vm1166, %v4173, %v4177
  %v4180 = vshrl.u32 %v3555, 16
  %v4182 = vrot.slane %v4180, 4
  %v4183 = vshll.u32 %v3555, 16
  %v4185 = vrot.slane %v4183, 5
  %v4186 = vor.u32 %v4182, %v4185
  %v4187 = vrot.slane %v4186, 4
  %v4189 = vshll.u32 %v3556, 16
  %v4191 = vrot.slane %v4189, 5
  %v4192 = vsel %vm1166, %v4187, %v4191
  %v4193 = vshrl.u32 %v3556, 16
  %v4195 = vrot.slane %v4193, 4
  %v4196 = vor.u32 %v4195, %v4191
  %v4197 = vrot.slane %v4196, 4
  %v4199 = vshll.u32 %v3595, 16
  %v4201 = vrot.slane %v4199, 5
  %v4202 = vsel %vm1166, %v4197, %v4201
  %v4204 = vshrl.u32 %v3557, 16
  %v4206 = vrot.slane %v4204, 4
  %v4207 = vshll.u32 %v3557, 16
  %v4209 = vrot.slane %v4207, 5
  %v4210 = vor.u32 %v4206, %v4209
  %v4211 = vrot.slane %v4210, 4
  %v4213 = vshll.u32 %v3558, 16
  %v4215 = vrot.slane %v4213, 5
  %v4216 = vsel %vm1166, %v4211, %v4215
  %v4217 = vshrl.u32 %v3558, 16
  %v4219 = vrot.slane %v4217, 4
  %v4220 = vor.u32 %v4219, %v4215
  %v4221 = vrot.slane %v4220, 4
  %v4223 = vshll.u32 %v3596, 16
  %v4225 = vrot.slane %v4223, 5
  %v4226 = vsel %vm1166, %v4221, %v4225
  %v4228 = vshrl.u32 %v3559, 16
  %v4230 = vrot.slane %v4228, 4
  %v4231 = vshll.u32 %v3559, 16
  %v4233 = vrot.slane %v4231, 5
  %v4234 = vor.u32 %v4230, %v4233
  %v4235 = vrot.slane %v4234, 4
  %v4237 = vshll.u32 %v3560, 16
  %v4239 = vrot.slane %v4237, 5
  %v4240 = vsel %vm1166, %v4235, %v4239
  %v4241 = vshrl.u32 %v3560, 16
  %v4243 = vrot.slane %v4241, 4
  %v4244 = vor.u32 %v4243, %v4239
  %v4245 = vrot.slane %v4244, 4
  %v4247 = vshll.u32 %v3597, 16
  %v4249 = vrot.slane %v4247, 5
  %v4250 = vsel %vm1166, %v4245, %v4249
  %v4252 = vshrl.u32 %v3561, 16
  %v4254 = vrot.slane %v4252, 4
  %v4255 = vshll.u32 %v3561, 16
  %v4257 = vrot.slane %v4255, 5
  %v4258 = vor.u32 %v4254, %v4257
  %v4259 = vrot.slane %v4258, 4
  %v4261 = vshll.u32 %v3562, 16
  %v4263 = vrot.slane %v4261, 5
  %v4264 = vsel %vm1166, %v4259, %v4263
  %v4265 = vshrl.u32 %v3562, 16
  %v4267 = vrot.slane %v4265, 4
  %v4268 = vor.u32 %v4267, %v4263
  %v4269 = vrot.slane %v4268, 4
  %v4271 = vshll.u32 %v3598, 16
  %v4273 = vrot.slane %v4271, 5
  %v4274 = vsel %vm1166, %v4269, %v4273
  %v4276 = vshrl.u32 %v3563, 16
  %v4278 = vrot.slane %v4276, 4
  %v4279 = vshll.u32 %v3563, 16
  %v4281 = vrot.slane %v4279, 5
  %v4282 = vor.u32 %v4278, %v4281
  %v4283 = vrot.slane %v4282, 4
  %v4285 = vshll.u32 %v3564, 16
  %v4287 = vrot.slane %v4285, 5
  %v4288 = vsel %vm1166, %v4283, %v4287
  %v4289 = vshrl.u32 %v3564, 16
  %v4291 = vrot.slane %v4289, 4
  %v4292 = vor.u32 %v4291, %v4287
  %v4293 = vrot.slane %v4292, 4
  %v4295 = vshll.u32 %v3599, 16
  %v4297 = vrot.slane %v4295, 5
  %v4298 = vsel %vm1166, %v4293, %v4297
  %v4300 = vshrl.u32 %v3565, 16
  %v4302 = vrot.slane %v4300, 4
  %v4303 = vshll.u32 %v3565, 16
  %v4305 = vrot.slane %v4303, 5
  %v4306 = vor.u32 %v4302, %v4305
  %v4307 = vrot.slane %v4306, 4
  %v4309 = vshll.u32 %v3566, 16
  %v4311 = vrot.slane %v4309, 5
  %v4312 = vsel %vm1166, %v4307, %v4311
  %v4313 = vshrl.u32 %v3566, 16
  %v4315 = vrot.slane %v4313, 4
  %v4316 = vor.u32 %v4315, %v4311
  %v4317 = vrot.slane %v4316, 4
  %v4319 = vshll.u32 %v3600, 16
  %v4321 = vrot.slane %v4319, 5
  %v4322 = vsel %vm1166, %v4317, %v4321
  %v4324 = vshrl.u32 %v3567, 16
  %v4326 = vrot.slane %v4324, 4
  %v4327 = vshll.u32 %v3567, 16
  %v4329 = vrot.slane %v4327, 5
  %v4330 = vor.u32 %v4326, %v4329
  %v4331 = vrot.slane %v4330, 4
  %v4333 = vshll.u32 %v3568, 16
  %v4335 = vrot.slane %v4333, 5
  %v4336 = vsel %vm1166, %v4331, %v4335
  %v4337 = vshrl.u32 %v3568, 16
  %v4339 = vrot.slane %v4337, 4
  %v4340 = vor.u32 %v4339, %v4335
  %v4341 = vrot.slane %v4340, 4
  %v4343 = vshll.u32 %v3601, 16
  %v4345 = vrot.slane %v4343, 5
  %v4346 = vsel %vm1166, %v4341, %v4345
  %v4348 = vshrl.u32 %v3569, 16
  %v4350 = vrot.slane %v4348, 4
  %v4351 = vshll.u32 %v3569, 16
  %v4353 = vrot.slane %v4351, 5
  %v4354 = vor.u32 %v4350, %v4353
  %v4355 = vrot.slane %v4354, 4
  %v4357 = vshll.u32 %v3570, 16
  %v4359 = vrot.slane %v4357, 5
  %v4360 = vsel %vm1166, %v4355, %v4359
  %v4361 = vshrl.u32 %v3570, 16
  %v4363 = vrot.slane %v4361, 4
  %v4364 = vor.u32 %v4363, %v4359
  %v4365 = vrot.slane %v4364, 4
  %v4367 = vshll.u32 %v3602, 16
  %v4369 = vrot.slane %v4367, 5
  %v4370 = vsel %vm1166, %v4365, %v4369
  %v4371 = vld [vmem:[%s3506] sm:$0xe]
  %v4372 = vld [vmem:[%s3506 + $0xc] sm:$0xe]
  %v4373 = vld [vmem:[%s3506 + $0x18] sm:$0xe]
  %v4374 = vld [vmem:[%s3506 + $0x24] sm:$0xe]
  %v4375 = vld [vmem:[%s3506 + $0x30] sm:$0xe]
  %v4376 = vld [vmem:[%s3506 + $0x3c] sm:$0xe]
  %v4377 = vld [vmem:[%s3506 + $0x48] sm:$0xe]
  %v4378 = vld [vmem:[%s3506 + $0x54] sm:$0xe]
  %v4379 = vld [vmem:[%s3506 + $0x60] sm:$0xe]
  %v4380 = vld [vmem:[%s3506 + $0x6c] sm:$0xe]
  %v4381 = vld [vmem:[%s3506 + $0x78] sm:$0xe]
  %v4382 = vld [vmem:[%s3506 + $0x84] sm:$0xe]
  %v4383 = vld [vmem:[%s3506 + $0x90] sm:$0xe]
  %v4384 = vld [vmem:[%s3506 + $0x9c] sm:$0xe]
  %v4385 = vld [vmem:[%s3506 + $0xa8] sm:$0xe]
  %v4386 = vld [vmem:[%s3506 + $0xb4] sm:$0xe]
  %v4387 = vld [vmem:[%s3506 + $0xd8] sm:$0xe]
  %v4388 = vld [vmem:[%s3506 + $0xe4] sm:$0xe]
  %v4389 = vld [vmem:[%s3506 + $0xf0] sm:$0xe]
  %v4390 = vld [vmem:[%s3506 + $0xfc] sm:$0xe]
  %v4391 = vld [vmem:[%s3506 + $0x108] sm:$0xe]
  %v4392 = vld [vmem:[%s3506 + $0x114] sm:$0xe]
  %v4393 = vld [vmem:[%s3506 + $0x120] sm:$0xe]
  %v4394 = vld [vmem:[%s3506 + $0x12c] sm:$0xe]
  %v4395 = vld [vmem:[%s3506 + $0x138] sm:$0xe]
  %v4396 = vld [vmem:[%s3506 + $0x144] sm:$0xe]
  %v4397 = vld [vmem:[%s3506 + $0x150] sm:$0xe]
  %v4398 = vld [vmem:[%s3506 + $0x15c] sm:$0xe]
  %v4399 = vld [vmem:[%s3506 + $0x168] sm:$0xe]
  %v4400 = vld [vmem:[%s3506 + $0x174] sm:$0xe]
  %v4401 = vld [vmem:[%s3506 + $0x180] sm:$0xe]
  %v4402 = vld [vmem:[%s3506 + $0x18c] sm:$0xe]
  %v4499 = vrot.slane %v4371, 5
  %v4500 = vrot.slane %v4499, 4
  %v4501 = vrot.slane %v3508, 5
  %v4502 = vsel %vm2065, %v4500, %v4501
  %v4503 = vrot.slane %v4501, 4
  %v4504 = vrot.slane %v3571, 5
  %v4505 = vsel %vm2065, %v4503, %v4504
  %v4506 = vrot.slane %v4372, 5
  %v4507 = vrot.slane %v4506, 4
  %v4508 = vrot.slane %v3510, 5
  %v4509 = vsel %vm2065, %v4507, %v4508
  %v4510 = vrot.slane %v4508, 4
  %v4511 = vrot.slane %v3572, 5
  %v4512 = vsel %vm2065, %v4510, %v4511
  %v4513 = vrot.slane %v4373, 5
  %v4514 = vrot.slane %v4513, 4
  %v4515 = vrot.slane %v3512, 5
  %v4516 = vsel %vm2065, %v4514, %v4515
  %v4517 = vrot.slane %v4515, 4
  %v4518 = vrot.slane %v3573, 5
  %v4519 = vsel %vm2065, %v4517, %v4518
  %v4520 = vrot.slane %v4374, 5
  %v4521 = vrot.slane %v4520, 4
  %v4522 = vrot.slane %v3514, 5
  %v4523 = vsel %vm2065, %v4521, %v4522
  %v4524 = vrot.slane %v4522, 4
  %v4525 = vrot.slane %v3574, 5
  %v4526 = vsel %vm2065, %v4524, %v4525
  %v4527 = vrot.slane %v4375, 5
  %v4528 = vrot.slane %v4527, 4
  %v4529 = vrot.slane %v3516, 5
  %v4530 = vsel %vm2065, %v4528, %v4529
  %v4531 = vrot.slane %v4529, 4
  %v4532 = vrot.slane %v3575, 5
  %v4533 = vsel %vm2065, %v4531, %v4532
  %v4534 = vrot.slane %v4376, 5
  %v4535 = vrot.slane %v4534, 4
  %v4536 = vrot.slane %v3518, 5
  %v4537 = vsel %vm2065, %v4535, %v4536
  %v4538 = vrot.slane %v4536, 4
  %v4539 = vrot.slane %v3576, 5
  %v4540 = vsel %vm2065, %v4538, %v4539
  %v4541 = vrot.slane %v4377, 5
  %v4542 = vrot.slane %v4541, 4
  %v4543 = vrot.slane %v3520, 5
  %v4544 = vsel %vm2065, %v4542, %v4543
  %v4545 = vrot.slane %v4543, 4
  %v4546 = vrot.slane %v3577, 5
  %v4547 = vsel %vm2065, %v4545, %v4546
  %v4548 = vrot.slane %v4378, 5
  %v4549 = vrot.slane %v4548, 4
  %v4550 = vrot.slane %v3522, 5
  %v4551 = vsel %vm2065, %v4549, %v4550
  %v4552 = vrot.slane %v4550, 4
  %v4553 = vrot.slane %v3578, 5
  %v4554 = vsel %vm2065, %v4552, %v4553
  %v4555 = vrot.slane %v4379, 5
  %v4556 = vrot.slane %v4555, 4
  %v4557 = vrot.slane %v3524, 5
  %v4558 = vsel %vm2065, %v4556, %v4557
  %v4559 = vrot.slane %v4557, 4
  %v4560 = vrot.slane %v3579, 5
  %v4561 = vsel %vm2065, %v4559, %v4560
  %v4562 = vrot.slane %v4380, 5
  %v4563 = vrot.slane %v4562, 4
  %v4564 = vrot.slane %v3526, 5
  %v4565 = vsel %vm2065, %v4563, %v4564
  %v4566 = vrot.slane %v4564, 4
  %v4567 = vrot.slane %v3580, 5
  %v4568 = vsel %vm2065, %v4566, %v4567
  %v4569 = vrot.slane %v4381, 5
  %v4570 = vrot.slane %v4569, 4
  %v4571 = vrot.slane %v3528, 5
  %v4572 = vsel %vm2065, %v4570, %v4571
  %v4573 = vrot.slane %v4571, 4
  %v4574 = vrot.slane %v3581, 5
  %v4575 = vsel %vm2065, %v4573, %v4574
  %v4576 = vrot.slane %v4382, 5
  %v4577 = vrot.slane %v4576, 4
  %v4578 = vrot.slane %v3530, 5
  %v4579 = vsel %vm2065, %v4577, %v4578
  %v4580 = vrot.slane %v4578, 4
  %v4581 = vrot.slane %v3582, 5
  %v4582 = vsel %vm2065, %v4580, %v4581
  %v4583 = vrot.slane %v4383, 5
  %v4584 = vrot.slane %v4583, 4
  %v4585 = vrot.slane %v3532, 5
  %v4586 = vsel %vm2065, %v4584, %v4585
  %v4587 = vrot.slane %v4585, 4
  %v4588 = vrot.slane %v3583, 5
  %v4589 = vsel %vm2065, %v4587, %v4588
  %v4590 = vrot.slane %v4384, 5
  %v4591 = vrot.slane %v4590, 4
  %v4592 = vrot.slane %v3534, 5
  %v4593 = vsel %vm2065, %v4591, %v4592
  %v4594 = vrot.slane %v4592, 4
  %v4595 = vrot.slane %v3584, 5
  %v4596 = vsel %vm2065, %v4594, %v4595
  %v4597 = vrot.slane %v4385, 5
  %v4598 = vrot.slane %v4597, 4
  %v4599 = vrot.slane %v3536, 5
  %v4600 = vsel %vm2065, %v4598, %v4599
  %v4601 = vrot.slane %v4599, 4
  %v4602 = vrot.slane %v3585, 5
  %v4603 = vsel %vm2065, %v4601, %v4602
  %v4604 = vrot.slane %v4386, 5
  %v4605 = vrot.slane %v4604, 4
  %v4606 = vrot.slane %v3538, 5
  %v4607 = vsel %vm2065, %v4605, %v4606
  %v4608 = vrot.slane %v4606, 4
  %v4609 = vrot.slane %v3586, 5
  %v4610 = vsel %vm2065, %v4608, %v4609
  %v4611 = vrot.slane %v4387, 5
  %v4612 = vrot.slane %v4611, 4
  %v4613 = vrot.slane %v3540, 5
  %v4614 = vsel %vm2065, %v4612, %v4613
  %v4615 = vrot.slane %v4613, 4
  %v4616 = vrot.slane %v3587, 5
  %v4617 = vsel %vm2065, %v4615, %v4616
  %v4618 = vrot.slane %v4388, 5
  %v4619 = vrot.slane %v4618, 4
  %v4620 = vrot.slane %v3542, 5
  %v4621 = vsel %vm2065, %v4619, %v4620
  %v4622 = vrot.slane %v4620, 4
  %v4623 = vrot.slane %v3588, 5
  %v4624 = vsel %vm2065, %v4622, %v4623
  %v4625 = vrot.slane %v4389, 5
  %v4626 = vrot.slane %v4625, 4
  %v4627 = vrot.slane %v3544, 5
  %v4628 = vsel %vm2065, %v4626, %v4627
  %v4629 = vrot.slane %v4627, 4
  %v4630 = vrot.slane %v3589, 5
  %v4631 = vsel %vm2065, %v4629, %v4630
  %v4632 = vrot.slane %v4390, 5
  %v4633 = vrot.slane %v4632, 4
  %v4634 = vrot.slane %v3546, 5
  %v4635 = vsel %vm2065, %v4633, %v4634
  %v4636 = vrot.slane %v4634, 4
  %v4637 = vrot.slane %v3590, 5
  %v4638 = vsel %vm2065, %v4636, %v4637
  %v4639 = vrot.slane %v4391, 5
  %v4640 = vrot.slane %v4639, 4
  %v4641 = vrot.slane %v3548, 5
  %v4642 = vsel %vm2065, %v4640, %v4641
  %v4643 = vrot.slane %v4641, 4
  %v4644 = vrot.slane %v3591, 5
  %v4645 = vsel %vm2065, %v4643, %v4644
  %v4646 = vrot.slane %v4392, 5
  %v4647 = vrot.slane %v4646, 4
  %v4648 = vrot.slane %v3550, 5
  %v4649 = vsel %vm2065, %v4647, %v4648
  %v4650 = vrot.slane %v4648, 4
  %v4651 = vrot.slane %v3592, 5
  %v4652 = vsel %vm2065, %v4650, %v4651
  %v4653 = vrot.slane %v4393, 5
  %v4654 = vrot.slane %v4653, 4
  %v4655 = vrot.slane %v3552, 5
  %v4656 = vsel %vm2065, %v4654, %v4655
  %v4657 = vrot.slane %v4655, 4
  %v4658 = vrot.slane %v3593, 5
  %v4659 = vsel %vm2065, %v4657, %v4658
  %v4660 = vrot.slane %v4394, 5
  %v4661 = vrot.slane %v4660, 4
  %v4662 = vrot.slane %v3554, 5
  %v4663 = vsel %vm2065, %v4661, %v4662
  %v4664 = vrot.slane %v4662, 4
  %v4665 = vrot.slane %v3594, 5
  %v4666 = vsel %vm2065, %v4664, %v4665
  %v4667 = vrot.slane %v4395, 5
  %v4668 = vrot.slane %v4667, 4
  %v4669 = vrot.slane %v3556, 5
  %v4670 = vsel %vm2065, %v4668, %v4669
  %v4671 = vrot.slane %v4669, 4
  %v4672 = vrot.slane %v3595, 5
  %v4673 = vsel %vm2065, %v4671, %v4672
  %v4674 = vrot.slane %v4396, 5
  %v4675 = vrot.slane %v4674, 4
  %v4676 = vrot.slane %v3558, 5
  %v4677 = vsel %vm2065, %v4675, %v4676
  %v4678 = vrot.slane %v4676, 4
  %v4679 = vrot.slane %v3596, 5
  %v4680 = vsel %vm2065, %v4678, %v4679
  %v4681 = vrot.slane %v4397, 5
  %v4682 = vrot.slane %v4681, 4
  %v4683 = vrot.slane %v3560, 5
  %v4684 = vsel %vm2065, %v4682, %v4683
  %v4685 = vrot.slane %v4683, 4
  %v4686 = vrot.slane %v3597, 5
  %v4687 = vsel %vm2065, %v4685, %v4686
  %v4688 = vrot.slane %v4398, 5
  %v4689 = vrot.slane %v4688, 4
  %v4690 = vrot.slane %v3562, 5
  %v4691 = vsel %vm2065, %v4689, %v4690
  %v4692 = vrot.slane %v4690, 4
  %v4693 = vrot.slane %v3598, 5
  %v4694 = vsel %vm2065, %v4692, %v4693
  %v4695 = vrot.slane %v4399, 5
  %v4696 = vrot.slane %v4695, 4
  %v4697 = vrot.slane %v3564, 5
  %v4698 = vsel %vm2065, %v4696, %v4697
  %v4699 = vrot.slane %v4697, 4
  %v4700 = vrot.slane %v3599, 5
  %v4701 = vsel %vm2065, %v4699, %v4700
  %v4702 = vrot.slane %v4400, 5
  %v4703 = vrot.slane %v4702, 4
  %v4704 = vrot.slane %v3566, 5
  %v4705 = vsel %vm2065, %v4703, %v4704
  %v4706 = vrot.slane %v4704, 4
  %v4707 = vrot.slane %v3600, 5
  %v4708 = vsel %vm2065, %v4706, %v4707
  %v4709 = vrot.slane %v4401, 5
  %v4710 = vrot.slane %v4709, 4
  %v4711 = vrot.slane %v3568, 5
  %v4712 = vsel %vm2065, %v4710, %v4711
  %v4713 = vrot.slane %v4711, 4
  %v4714 = vrot.slane %v3601, 5
  %v4715 = vsel %vm2065, %v4713, %v4714
  %v4716 = vrot.slane %v4402, 5
  %v4717 = vrot.slane %v4716, 4
  %v4718 = vrot.slane %v3570, 5
  %v4719 = vsel %vm2065, %v4717, %v4718
  %v4720 = vrot.slane %v4718, 4
  %v4721 = vrot.slane %v3602, 5
  %v4722 = vsel %vm2065, %v4720, %v4721
  %v4755 = vunpack.c.l.b16 %v1068
  %v4756 = vunpack.c.l.b16 %v1069
  %v4757 = vunpack.c.l.b16 %v1070
  %v4758 = vunpack.c.l.b16 %v1071
  %v4759 = vunpack.c.l.b16 %v1072
  %v4760 = vunpack.c.l.b16 %v1073
  %v4761 = vunpack.c.l.b16 %v1074
  %v4762 = vunpack.c.l.b16 %v1075
  %v4763 = vunpack.c.l.b16 %v1076
  %v4764 = vunpack.c.l.b16 %v1077
  %v4765 = vunpack.c.l.b16 %v1078
  %v4766 = vunpack.c.l.b16 %v1079
  %v4767 = vunpack.c.l.b16 %v1080
  %v4768 = vunpack.c.l.b16 %v1081
  %v4769 = vunpack.c.l.b16 %v1082
  %v4770 = vunpack.c.l.b16 %v1083
  %v4771 = vunpack.c.l.b16 %v1084
  %v4772 = vunpack.c.l.b16 %v1085
  %v4773 = vunpack.c.l.b16 %v1086
  %v4774 = vunpack.c.l.b16 %v1087
  %v4775 = vunpack.c.l.b16 %v1088
  %v4776 = vunpack.c.l.b16 %v1089
  %v4777 = vunpack.c.l.b16 %v1090
  %v4778 = vunpack.c.l.b16 %v1091
  %v4779 = vunpack.c.l.b16 %v1092
  %v4780 = vunpack.c.l.b16 %v1093
  %v4781 = vunpack.c.l.b16 %v1094
  %v4782 = vunpack.c.l.b16 %v1095
  %v4783 = vunpack.c.l.b16 %v1096
  %v4784 = vunpack.c.l.b16 %v1097
  %v4785 = vunpack.c.l.b16 %v1098
  %v4786 = vunpack.c.l.b16 %v1099
  %v4787 = vunpack.c.l.b16 %v1100
  %v4788 = vunpack.c.l.b16 %v1101
  %v4789 = vunpack.c.l.b16 %v1102
  %v4790 = vunpack.c.l.b16 %v1103
  %v4791 = vunpack.c.l.b16 %v1104
  %v4792 = vunpack.c.l.b16 %v1105
  %v4793 = vunpack.c.l.b16 %v1106
  %v4794 = vunpack.c.l.b16 %v1107
  %v4795 = vunpack.c.l.b16 %v1108
  %v4796 = vunpack.c.l.b16 %v1109
  %v4797 = vunpack.c.l.b16 %v1110
  %v4798 = vunpack.c.l.b16 %v1111
  %v4799 = vunpack.c.l.b16 %v1112
  %v4800 = vunpack.c.l.b16 %v1113
  %v4801 = vunpack.c.l.b16 %v1114
  %v4802 = vunpack.c.l.b16 %v1115
  %v4803 = vunpack.c.l.b16 %v1116
  %v4804 = vunpack.c.l.b16 %v1117
  %v4805 = vunpack.c.l.b16 %v1118
  %v4806 = vunpack.c.l.b16 %v1119
  %v4807 = vunpack.c.l.b16 %v1120
  %v4808 = vunpack.c.l.b16 %v1121
  %v4809 = vunpack.c.l.b16 %v1122
  %v4810 = vunpack.c.l.b16 %v1123
  %v4811 = vunpack.c.l.b16 %v1124
  %v4812 = vunpack.c.l.b16 %v1125
  %v4813 = vunpack.c.l.b16 %v1126
  %v4814 = vunpack.c.l.b16 %v1127
  %v4815 = vunpack.c.l.b16 %v1128
  %v4816 = vunpack.c.l.b16 %v1129
  %v4817 = vunpack.c.l.b16 %v1130
  %v4818 = vunpack.c.l.b16 %v1131
  %v4819 = vpack.c.b16 %v4756, %v4755
  %v4820 = vpack.c.b16 %v4758, %v4757
  %v4821 = vpack.c.b16 %v4760, %v4759
  %v4822 = vpack.c.b16 %v4762, %v4761
  %v4823 = vpack.c.b16 %v4764, %v4763
  %v4824 = vpack.c.b16 %v4766, %v4765
  %v4825 = vpack.c.b16 %v4768, %v4767
  %v4826 = vpack.c.b16 %v4770, %v4769
  %v4827 = vpack.c.b16 %v4772, %v4771
  %v4828 = vpack.c.b16 %v4774, %v4773
  %v4829 = vpack.c.b16 %v4776, %v4775
  %v4830 = vpack.c.b16 %v4778, %v4777
  %v4831 = vpack.c.b16 %v4780, %v4779
  %v4832 = vpack.c.b16 %v4782, %v4781
  %v4833 = vpack.c.b16 %v4784, %v4783
  %v4834 = vpack.c.b16 %v4786, %v4785
  %v4835 = vpack.c.b16 %v4788, %v4787
  %v4836 = vpack.c.b16 %v4790, %v4789
  %v4837 = vpack.c.b16 %v4792, %v4791
  %v4838 = vpack.c.b16 %v4794, %v4793
  %v4839 = vpack.c.b16 %v4796, %v4795
  %v4840 = vpack.c.b16 %v4798, %v4797
  %v4841 = vpack.c.b16 %v4800, %v4799
  %v4842 = vpack.c.b16 %v4802, %v4801
  %v4843 = vpack.c.b16 %v4804, %v4803
  %v4844 = vpack.c.b16 %v4806, %v4805
  %v4845 = vpack.c.b16 %v4808, %v4807
  %v4846 = vpack.c.b16 %v4810, %v4809
  %v4847 = vpack.c.b16 %v4812, %v4811
  %v4848 = vpack.c.b16 %v4814, %v4813
  %v4849 = vpack.c.b16 %v4816, %v4815
  %v4850 = vpack.c.b16 %v4818, %v4817
  %v4851 = vunpack.c.l.b16 %v1180
  %v4852 = vunpack.c.l.b16 %v1190
  %v4853 = vunpack.c.l.b16 %v1204
  %v4854 = vunpack.c.l.b16 %v1214
  %v4855 = vunpack.c.l.b16 %v1228
  %v4856 = vunpack.c.l.b16 %v1238
  %v4857 = vunpack.c.l.b16 %v1252
  %v4858 = vunpack.c.l.b16 %v1262
  %v4859 = vunpack.c.l.b16 %v1276
  %v4860 = vunpack.c.l.b16 %v1286
  %v4861 = vunpack.c.l.b16 %v1300
  %v4862 = vunpack.c.l.b16 %v1310
  %v4863 = vunpack.c.l.b16 %v1324
  %v4864 = vunpack.c.l.b16 %v1334
  %v4865 = vunpack.c.l.b16 %v1348
  %v4866 = vunpack.c.l.b16 %v1358
  %v4867 = vunpack.c.l.b16 %v1372
  %v4868 = vunpack.c.l.b16 %v1382
  %v4869 = vunpack.c.l.b16 %v1396
  %v4870 = vunpack.c.l.b16 %v1406
  %v4871 = vunpack.c.l.b16 %v1420
  %v4872 = vunpack.c.l.b16 %v1430
  %v4873 = vunpack.c.l.b16 %v1444
  %v4874 = vunpack.c.l.b16 %v1454
  %v4875 = vunpack.c.l.b16 %v1468
  %v4876 = vunpack.c.l.b16 %v1478
  %v4877 = vunpack.c.l.b16 %v1492
  %v4878 = vunpack.c.l.b16 %v1502
  %v4879 = vunpack.c.l.b16 %v1516
  %v4880 = vunpack.c.l.b16 %v1526
  %v4881 = vunpack.c.l.b16 %v1540
  %v4882 = vunpack.c.l.b16 %v1550
  %v4883 = vunpack.c.l.b16 %v1564
  %v4884 = vunpack.c.l.b16 %v1574
  %v4885 = vunpack.c.l.b16 %v1588
  %v4886 = vunpack.c.l.b16 %v1598
  %v4887 = vunpack.c.l.b16 %v1612
  %v4888 = vunpack.c.l.b16 %v1622
  %v4889 = vunpack.c.l.b16 %v1636
  %v4890 = vunpack.c.l.b16 %v1646
  %v4891 = vunpack.c.l.b16 %v1660
  %v4892 = vunpack.c.l.b16 %v1670
  %v4893 = vunpack.c.l.b16 %v1684
  %v4894 = vunpack.c.l.b16 %v1694
  %v4895 = vunpack.c.l.b16 %v1708
  %v4896 = vunpack.c.l.b16 %v1718
  %v4897 = vunpack.c.l.b16 %v1732
  %v4898 = vunpack.c.l.b16 %v1742
  %v4899 = vunpack.c.l.b16 %v1756
  %v4900 = vunpack.c.l.b16 %v1766
  %v4901 = vunpack.c.l.b16 %v1780
  %v4902 = vunpack.c.l.b16 %v1790
  %v4903 = vunpack.c.l.b16 %v1804
  %v4904 = vunpack.c.l.b16 %v1814
  %v4905 = vunpack.c.l.b16 %v1828
  %v4906 = vunpack.c.l.b16 %v1838
  %v4907 = vunpack.c.l.b16 %v1852
  %v4908 = vunpack.c.l.b16 %v1862
  %v4909 = vunpack.c.l.b16 %v1876
  %v4910 = vunpack.c.l.b16 %v1886
  %v4911 = vunpack.c.l.b16 %v1900
  %v4912 = vunpack.c.l.b16 %v1910
  %v4913 = vunpack.c.l.b16 %v1924
  %v4914 = vunpack.c.l.b16 %v1934
  %v4915 = vpack.c.b16 %v4852, %v4851
  %v4916 = vpack.c.b16 %v4854, %v4853
  %v4917 = vpack.c.b16 %v4856, %v4855
  %v4918 = vpack.c.b16 %v4858, %v4857
  %v4919 = vpack.c.b16 %v4860, %v4859
  %v4920 = vpack.c.b16 %v4862, %v4861
  %v4921 = vpack.c.b16 %v4864, %v4863
  %v4922 = vpack.c.b16 %v4866, %v4865
  %v4923 = vpack.c.b16 %v4868, %v4867
  %v4924 = vpack.c.b16 %v4870, %v4869
  %v4925 = vpack.c.b16 %v4872, %v4871
  %v4926 = vpack.c.b16 %v4874, %v4873
  %v4927 = vpack.c.b16 %v4876, %v4875
  %v4928 = vpack.c.b16 %v4878, %v4877
  %v4929 = vpack.c.b16 %v4880, %v4879
  %v4930 = vpack.c.b16 %v4882, %v4881
  %v4931 = vpack.c.b16 %v4884, %v4883
  %v4932 = vpack.c.b16 %v4886, %v4885
  %v4933 = vpack.c.b16 %v4888, %v4887
  %v4934 = vpack.c.b16 %v4890, %v4889
  %v4935 = vpack.c.b16 %v4892, %v4891
  %v4936 = vpack.c.b16 %v4894, %v4893
  %v4937 = vpack.c.b16 %v4896, %v4895
  %v4938 = vpack.c.b16 %v4898, %v4897
  %v4939 = vpack.c.b16 %v4900, %v4899
  %v4940 = vpack.c.b16 %v4902, %v4901
  %v4941 = vpack.c.b16 %v4904, %v4903
  %v4942 = vpack.c.b16 %v4906, %v4905
  %v4943 = vpack.c.b16 %v4908, %v4907
  %v4944 = vpack.c.b16 %v4910, %v4909
  %v4945 = vpack.c.b16 %v4912, %v4911
  %v4946 = vpack.c.b16 %v4914, %v4913
  %4947 = vrot.lane.b32.xlu0 %v4915, 4
  %v4948 = vpop.permute.xlu0 %4947
  %4949 = vrot.lane.b32.xlu0 %v4916, 4
  %v4950 = vpop.permute.xlu0 %4949
  %4951 = vrot.lane.b32.xlu0 %v4917, 4
  %v4952 = vpop.permute.xlu0 %4951
  %4953 = vrot.lane.b32.xlu0 %v4918, 4
  %v4954 = vpop.permute.xlu0 %4953
  %4955 = vrot.lane.b32.xlu0 %v4919, 4
  %v4956 = vpop.permute.xlu0 %4955
  %4957 = vrot.lane.b32.xlu0 %v4920, 4
  %v4958 = vpop.permute.xlu0 %4957
  %4959 = vrot.lane.b32.xlu0 %v4921, 4
  %v4960 = vpop.permute.xlu0 %4959
  %4961 = vrot.lane.b32.xlu0 %v4922, 4
  %v4962 = vpop.permute.xlu0 %4961
  %4963 = vrot.lane.b32.xlu0 %v4923, 4
  %v4964 = vpop.permute.xlu0 %4963
  %4965 = vrot.lane.b32.xlu0 %v4924, 4
  %v4966 = vpop.permute.xlu0 %4965
  %4967 = vrot.lane.b32.xlu0 %v4925, 4
  %v4968 = vpop.permute.xlu0 %4967
  %4969 = vrot.lane.b32.xlu0 %v4926, 4
  %v4970 = vpop.permute.xlu0 %4969
  %4971 = vrot.lane.b32.xlu0 %v4927, 4
  %v4972 = vpop.permute.xlu0 %4971
  %4973 = vrot.lane.b32.xlu0 %v4928, 4
  %v4974 = vpop.permute.xlu0 %4973
  %4975 = vrot.lane.b32.xlu0 %v4929, 4
  %v4976 = vpop.permute.xlu0 %4975
  %4977 = vrot.lane.b32.xlu0 %v4930, 4
  %v4978 = vpop.permute.xlu0 %4977
  %4979 = vrot.lane.b32.xlu0 %v4931, 4
  %v4980 = vpop.permute.xlu0 %4979
  %4981 = vrot.lane.b32.xlu0 %v4932, 4
  %v4982 = vpop.permute.xlu0 %4981
  %4983 = vrot.lane.b32.xlu0 %v4933, 4
  %v4984 = vpop.permute.xlu0 %4983
  %4985 = vrot.lane.b32.xlu0 %v4934, 4
  %v4986 = vpop.permute.xlu0 %4985
  %4987 = vrot.lane.b32.xlu0 %v4935, 4
  %v4988 = vpop.permute.xlu0 %4987
  %4989 = vrot.lane.b32.xlu0 %v4936, 4
  %v4990 = vpop.permute.xlu0 %4989
  %4991 = vrot.lane.b32.xlu0 %v4937, 4
  %v4992 = vpop.permute.xlu0 %4991
  %4993 = vrot.lane.b32.xlu0 %v4938, 4
  %v4994 = vpop.permute.xlu0 %4993
  %4995 = vrot.lane.b32.xlu0 %v4939, 4
  %v4996 = vpop.permute.xlu0 %4995
  %4997 = vrot.lane.b32.xlu0 %v4940, 4
  %v4998 = vpop.permute.xlu0 %4997
  %4999 = vrot.lane.b32.xlu0 %v4941, 4
  %v5000 = vpop.permute.xlu0 %4999
  %5001 = vrot.lane.b32.xlu0 %v4942, 4
  %v5002 = vpop.permute.xlu0 %5001
  %5003 = vrot.lane.b32.xlu0 %v4943, 4
  %v5004 = vpop.permute.xlu0 %5003
  %5005 = vrot.lane.b32.xlu0 %v4944, 4
  %v5006 = vpop.permute.xlu0 %5005
  %5007 = vrot.lane.b32.xlu0 %v4945, 4
  %v5008 = vpop.permute.xlu0 %5007
  %5009 = vrot.lane.b32.xlu0 %v4946, 4
  %v5010 = vpop.permute.xlu0 %5009
  %v5011 = vunpack.c.l.b16 %v2069
  %v5012 = vunpack.c.l.b16 %v2072
  %v5013 = vunpack.c.l.b16 %v2076
  %v5014 = vunpack.c.l.b16 %v2079
  %v5015 = vunpack.c.l.b16 %v2083
  %v5016 = vunpack.c.l.b16 %v2086
  %v5017 = vunpack.c.l.b16 %v2090
  %v5018 = vunpack.c.l.b16 %v2093
  %v5019 = vunpack.c.l.b16 %v2097
  %v5020 = vunpack.c.l.b16 %v2100
  %v5021 = vunpack.c.l.b16 %v2104
  %v5022 = vunpack.c.l.b16 %v2107
  %v5023 = vunpack.c.l.b16 %v2111
  %v5024 = vunpack.c.l.b16 %v2114
  %v5025 = vunpack.c.l.b16 %v2118
  %v5026 = vunpack.c.l.b16 %v2121
  %v5027 = vunpack.c.l.b16 %v2125
  %v5028 = vunpack.c.l.b16 %v2128
  %v5029 = vunpack.c.l.b16 %v2132
  %v5030 = vunpack.c.l.b16 %v2135
  %v5031 = vunpack.c.l.b16 %v2139
  %v5032 = vunpack.c.l.b16 %v2142
  %v5033 = vunpack.c.l.b16 %v2146
  %v5034 = vunpack.c.l.b16 %v2149
  %v5035 = vunpack.c.l.b16 %v2153
  %v5036 = vunpack.c.l.b16 %v2156
  %v5037 = vunpack.c.l.b16 %v2160
  %v5038 = vunpack.c.l.b16 %v2163
  %v5039 = vunpack.c.l.b16 %v2167
  %v5040 = vunpack.c.l.b16 %v2170
  %v5041 = vunpack.c.l.b16 %v2174
  %v5042 = vunpack.c.l.b16 %v2177
  %v5043 = vunpack.c.l.b16 %v2181
  %v5044 = vunpack.c.l.b16 %v2184
  %v5045 = vunpack.c.l.b16 %v2188
  %v5046 = vunpack.c.l.b16 %v2191
  %v5047 = vunpack.c.l.b16 %v2195
  %v5048 = vunpack.c.l.b16 %v2198
  %v5049 = vunpack.c.l.b16 %v2202
  %v5050 = vunpack.c.l.b16 %v2205
  %v5051 = vunpack.c.l.b16 %v2209
  %v5052 = vunpack.c.l.b16 %v2212
  %v5053 = vunpack.c.l.b16 %v2216
  %v5054 = vunpack.c.l.b16 %v2219
  %v5055 = vunpack.c.l.b16 %v2223
  %v5056 = vunpack.c.l.b16 %v2226
  %v5057 = vunpack.c.l.b16 %v2230
  %v5058 = vunpack.c.l.b16 %v2233
  %v5059 = vunpack.c.l.b16 %v2237
  %v5060 = vunpack.c.l.b16 %v2240
  %v5061 = vunpack.c.l.b16 %v2244
  %v5062 = vunpack.c.l.b16 %v2247
  %v5063 = vunpack.c.l.b16 %v2251
  %v5064 = vunpack.c.l.b16 %v2254
  %v5065 = vunpack.c.l.b16 %v2258
  %v5066 = vunpack.c.l.b16 %v2261
  %v5067 = vunpack.c.l.b16 %v2265
  %v5068 = vunpack.c.l.b16 %v2268
  %v5069 = vunpack.c.l.b16 %v2272
  %v5070 = vunpack.c.l.b16 %v2275
  %v5071 = vunpack.c.l.b16 %v2279
  %v5072 = vunpack.c.l.b16 %v2282
  %v5073 = vunpack.c.l.b16 %v2286
  %v5074 = vunpack.c.l.b16 %v2289
  %v5075 = vpack.c.b16 %v5012, %v5011
  %v5076 = vpack.c.b16 %v5014, %v5013
  %v5077 = vpack.c.b16 %v5016, %v5015
  %v5078 = vpack.c.b16 %v5018, %v5017
  %v5079 = vpack.c.b16 %v5020, %v5019
  %v5080 = vpack.c.b16 %v5022, %v5021
  %v5081 = vpack.c.b16 %v5024, %v5023
  %v5082 = vpack.c.b16 %v5026, %v5025
  %v5083 = vpack.c.b16 %v5028, %v5027
  %v5084 = vpack.c.b16 %v5030, %v5029
  %v5085 = vpack.c.b16 %v5032, %v5031
  %v5086 = vpack.c.b16 %v5034, %v5033
  %v5087 = vpack.c.b16 %v5036, %v5035
  %v5088 = vpack.c.b16 %v5038, %v5037
  %v5089 = vpack.c.b16 %v5040, %v5039
  %v5090 = vpack.c.b16 %v5042, %v5041
  %v5091 = vpack.c.b16 %v5044, %v5043
  %v5092 = vpack.c.b16 %v5046, %v5045
  %v5093 = vpack.c.b16 %v5048, %v5047
  %v5094 = vpack.c.b16 %v5050, %v5049
  %v5095 = vpack.c.b16 %v5052, %v5051
  %v5096 = vpack.c.b16 %v5054, %v5053
  %v5097 = vpack.c.b16 %v5056, %v5055
  %v5098 = vpack.c.b16 %v5058, %v5057
  %v5099 = vpack.c.b16 %v5060, %v5059
  %v5100 = vpack.c.b16 %v5062, %v5061
  %v5101 = vpack.c.b16 %v5064, %v5063
  %v5102 = vpack.c.b16 %v5066, %v5065
  %v5103 = vpack.c.b16 %v5068, %v5067
  %v5104 = vpack.c.b16 %v5070, %v5069
  %v5105 = vpack.c.b16 %v5072, %v5071
  %v5106 = vpack.c.b16 %v5074, %v5073
  %5107 = vrot.lane.b32.xlu0 %v5075, 8
  %v5108 = vpop.permute.xlu0 %5107
  %5109 = vrot.lane.b32.xlu0 %v5076, 8
  %v5110 = vpop.permute.xlu0 %5109
  %5111 = vrot.lane.b32.xlu0 %v5077, 8
  %v5112 = vpop.permute.xlu0 %5111
  %5113 = vrot.lane.b32.xlu0 %v5078, 8
  %v5114 = vpop.permute.xlu0 %5113
  %5115 = vrot.lane.b32.xlu0 %v5079, 8
  %v5116 = vpop.permute.xlu0 %5115
  %5117 = vrot.lane.b32.xlu0 %v5080, 8
  %v5118 = vpop.permute.xlu0 %5117
  %5119 = vrot.lane.b32.xlu0 %v5081, 8
  %v5120 = vpop.permute.xlu0 %5119
  %5121 = vrot.lane.b32.xlu0 %v5082, 8
  %v5122 = vpop.permute.xlu0 %5121
  %5123 = vrot.lane.b32.xlu0 %v5083, 8
  %v5124 = vpop.permute.xlu0 %5123
  %5125 = vrot.lane.b32.xlu0 %v5084, 8
  %v5126 = vpop.permute.xlu0 %5125
  %5127 = vrot.lane.b32.xlu0 %v5085, 8
  %v5128 = vpop.permute.xlu0 %5127
  %5129 = vrot.lane.b32.xlu0 %v5086, 8
  %v5130 = vpop.permute.xlu0 %5129
  %5131 = vrot.lane.b32.xlu0 %v5087, 8
  %v5132 = vpop.permute.xlu0 %5131
  %5133 = vrot.lane.b32.xlu0 %v5088, 8
  %v5134 = vpop.permute.xlu0 %5133
  %5135 = vrot.lane.b32.xlu0 %v5089, 8
  %v5136 = vpop.permute.xlu0 %5135
  %5137 = vrot.lane.b32.xlu0 %v5090, 8
  %v5138 = vpop.permute.xlu0 %5137
  %5139 = vrot.lane.b32.xlu0 %v5091, 8
  %v5140 = vpop.permute.xlu0 %5139
  %5141 = vrot.lane.b32.xlu0 %v5092, 8
  %v5142 = vpop.permute.xlu0 %5141
  %5143 = vrot.lane.b32.xlu0 %v5093, 8
  %v5144 = vpop.permute.xlu0 %5143
  %5145 = vrot.lane.b32.xlu0 %v5094, 8
  %v5146 = vpop.permute.xlu0 %5145
  %5147 = vrot.lane.b32.xlu0 %v5095, 8
  %v5148 = vpop.permute.xlu0 %5147
  %5149 = vrot.lane.b32.xlu0 %v5096, 8
  %v5150 = vpop.permute.xlu0 %5149
  %5151 = vrot.lane.b32.xlu0 %v5097, 8
  %v5152 = vpop.permute.xlu0 %5151
  %5153 = vrot.lane.b32.xlu0 %v5098, 8
  %v5154 = vpop.permute.xlu0 %5153
  %5155 = vrot.lane.b32.xlu0 %v5099, 8
  %v5156 = vpop.permute.xlu0 %5155
  %5157 = vrot.lane.b32.xlu0 %v5100, 8
  %v5158 = vpop.permute.xlu0 %5157
  %5159 = vrot.lane.b32.xlu0 %v5101, 8
  %v5160 = vpop.permute.xlu0 %5159
  %5161 = vrot.lane.b32.xlu0 %v5102, 8
  %v5162 = vpop.permute.xlu0 %5161
  %5163 = vrot.lane.b32.xlu0 %v5103, 8
  %v5164 = vpop.permute.xlu0 %5163
  %5165 = vrot.lane.b32.xlu0 %v5104, 8
  %v5166 = vpop.permute.xlu0 %5165
  %5167 = vrot.lane.b32.xlu0 %v5105, 8
  %v5168 = vpop.permute.xlu0 %5167
  %5169 = vrot.lane.b32.xlu0 %v5106, 8
  %v5170 = vpop.permute.xlu0 %5169
  %v5203 = vunpack.c.l.b16 %v2290
  %v5204 = vunpack.c.l.b16 %v2291
  %v5205 = vunpack.c.l.b16 %v2292
  %v5206 = vunpack.c.l.b16 %v2293
  %v5207 = vunpack.c.l.b16 %v2294
  %v5208 = vunpack.c.l.b16 %v2295
  %v5209 = vunpack.c.l.b16 %v2296
  %v5210 = vunpack.c.l.b16 %v2297
  %v5211 = vunpack.c.l.b16 %v2298
  %v5212 = vunpack.c.l.b16 %v2299
  %v5213 = vunpack.c.l.b16 %v2300
  %v5214 = vunpack.c.l.b16 %v2301
  %v5215 = vunpack.c.l.b16 %v2302
  %v5216 = vunpack.c.l.b16 %v2303
  %v5217 = vunpack.c.l.b16 %v2304
  %v5218 = vunpack.c.l.b16 %v2305
  %v5219 = vunpack.c.l.b16 %v2306
  %v5220 = vunpack.c.l.b16 %v2307
  %v5221 = vunpack.c.l.b16 %v2308
  %v5222 = vunpack.c.l.b16 %v2309
  %v5223 = vunpack.c.l.b16 %v2310
  %v5224 = vunpack.c.l.b16 %v2311
  %v5225 = vunpack.c.l.b16 %v2312
  %v5226 = vunpack.c.l.b16 %v2313
  %v5227 = vunpack.c.l.b16 %v2314
  %v5228 = vunpack.c.l.b16 %v2315
  %v5229 = vunpack.c.l.b16 %v2316
  %v5230 = vunpack.c.l.b16 %v2317
  %v5231 = vunpack.c.l.b16 %v2318
  %v5232 = vunpack.c.l.b16 %v2319
  %v5233 = vunpack.c.l.b16 %v2320
  %v5234 = vunpack.c.l.b16 %v2321
  %v5235 = vunpack.c.l.b16 %v2322
  %v5236 = vunpack.c.l.b16 %v2323
  %v5237 = vunpack.c.l.b16 %v2324
  %v5238 = vunpack.c.l.b16 %v2325
  %v5239 = vunpack.c.l.b16 %v2326
  %v5240 = vunpack.c.l.b16 %v2327
  %v5241 = vunpack.c.l.b16 %v2328
  %v5242 = vunpack.c.l.b16 %v2329
  %v5243 = vunpack.c.l.b16 %v2330
  %v5244 = vunpack.c.l.b16 %v2331
  %v5245 = vunpack.c.l.b16 %v2332
  %v5246 = vunpack.c.l.b16 %v2333
  %v5247 = vunpack.c.l.b16 %v2334
  %v5248 = vunpack.c.l.b16 %v2335
  %v5249 = vunpack.c.l.b16 %v2336
  %v5250 = vunpack.c.l.b16 %v2337
  %v5251 = vunpack.c.l.b16 %v2338
  %v5252 = vunpack.c.l.b16 %v2339
  %v5253 = vunpack.c.l.b16 %v2340
  %v5254 = vunpack.c.l.b16 %v2341
  %v5255 = vunpack.c.l.b16 %v2342
  %v5256 = vunpack.c.l.b16 %v2343
  %v5257 = vunpack.c.l.b16 %v2344
  %v5258 = vunpack.c.l.b16 %v2345
  %v5259 = vunpack.c.l.b16 %v2346
  %v5260 = vunpack.c.l.b16 %v2347
  %v5261 = vunpack.c.l.b16 %v2348
  %v5262 = vunpack.c.l.b16 %v2349
  %v5263 = vunpack.c.l.b16 %v2350
  %v5264 = vunpack.c.l.b16 %v2351
  %v5265 = vunpack.c.l.b16 %v2352
  %v5266 = vunpack.c.l.b16 %v2353
  %v5267 = vpack.c.b16 %v5204, %v5203
  %v5268 = vpack.c.b16 %v5206, %v5205
  %v5269 = vpack.c.b16 %v5208, %v5207
  %v5270 = vpack.c.b16 %v5210, %v5209
  %v5271 = vpack.c.b16 %v5212, %v5211
  %v5272 = vpack.c.b16 %v5214, %v5213
  %v5273 = vpack.c.b16 %v5216, %v5215
  %v5274 = vpack.c.b16 %v5218, %v5217
  %v5275 = vpack.c.b16 %v5220, %v5219
  %v5276 = vpack.c.b16 %v5222, %v5221
  %v5277 = vpack.c.b16 %v5224, %v5223
  %v5278 = vpack.c.b16 %v5226, %v5225
  %v5279 = vpack.c.b16 %v5228, %v5227
  %v5280 = vpack.c.b16 %v5230, %v5229
  %v5281 = vpack.c.b16 %v5232, %v5231
  %v5282 = vpack.c.b16 %v5234, %v5233
  %v5283 = vpack.c.b16 %v5236, %v5235
  %v5284 = vpack.c.b16 %v5238, %v5237
  %v5285 = vpack.c.b16 %v5240, %v5239
  %v5286 = vpack.c.b16 %v5242, %v5241
  %v5287 = vpack.c.b16 %v5244, %v5243
  %v5288 = vpack.c.b16 %v5246, %v5245
  %v5289 = vpack.c.b16 %v5248, %v5247
  %v5290 = vpack.c.b16 %v5250, %v5249
  %v5291 = vpack.c.b16 %v5252, %v5251
  %v5292 = vpack.c.b16 %v5254, %v5253
  %v5293 = vpack.c.b16 %v5256, %v5255
  %v5294 = vpack.c.b16 %v5258, %v5257
  %v5295 = vpack.c.b16 %v5260, %v5259
  %v5296 = vpack.c.b16 %v5262, %v5261
  %v5297 = vpack.c.b16 %v5264, %v5263
  %v5298 = vpack.c.b16 %v5266, %v5265
  %5299 = vrot.lane.b32.xlu0 %v5267, 12
  %v5300 = vpop.permute.xlu0 %5299
  %5301 = vrot.lane.b32.xlu0 %v5268, 12
  %v5302 = vpop.permute.xlu0 %5301
  %5303 = vrot.lane.b32.xlu0 %v5269, 12
  %v5304 = vpop.permute.xlu0 %5303
  %5305 = vrot.lane.b32.xlu0 %v5270, 12
  %v5306 = vpop.permute.xlu0 %5305
  %5307 = vrot.lane.b32.xlu0 %v5271, 12
  %v5308 = vpop.permute.xlu0 %5307
  %5309 = vrot.lane.b32.xlu0 %v5272, 12
  %v5310 = vpop.permute.xlu0 %5309
  %5311 = vrot.lane.b32.xlu0 %v5273, 12
  %v5312 = vpop.permute.xlu0 %5311
  %5313 = vrot.lane.b32.xlu0 %v5274, 12
  %v5314 = vpop.permute.xlu0 %5313
  %5315 = vrot.lane.b32.xlu0 %v5275, 12
  %v5316 = vpop.permute.xlu0 %5315
  %5317 = vrot.lane.b32.xlu0 %v5276, 12
  %v5318 = vpop.permute.xlu0 %5317
  %5319 = vrot.lane.b32.xlu0 %v5277, 12
  %v5320 = vpop.permute.xlu0 %5319
  %5321 = vrot.lane.b32.xlu0 %v5278, 12
  %v5322 = vpop.permute.xlu0 %5321
  %5323 = vrot.lane.b32.xlu0 %v5279, 12
  %v5324 = vpop.permute.xlu0 %5323
  %5325 = vrot.lane.b32.xlu0 %v5280, 12
  %v5326 = vpop.permute.xlu0 %5325
  %5327 = vrot.lane.b32.xlu0 %v5281, 12
  %v5328 = vpop.permute.xlu0 %5327
  %5329 = vrot.lane.b32.xlu0 %v5282, 12
  %v5330 = vpop.permute.xlu0 %5329
  %5331 = vrot.lane.b32.xlu0 %v5283, 12
  %v5332 = vpop.permute.xlu0 %5331
  %5333 = vrot.lane.b32.xlu0 %v5284, 12
  %v5334 = vpop.permute.xlu0 %5333
  %5335 = vrot.lane.b32.xlu0 %v5285, 12
  %v5336 = vpop.permute.xlu0 %5335
  %5337 = vrot.lane.b32.xlu0 %v5286, 12
  %v5338 = vpop.permute.xlu0 %5337
  %5339 = vrot.lane.b32.xlu0 %v5287, 12
  %v5340 = vpop.permute.xlu0 %5339
  %5341 = vrot.lane.b32.xlu0 %v5288, 12
  %v5342 = vpop.permute.xlu0 %5341
  %5343 = vrot.lane.b32.xlu0 %v5289, 12
  %v5344 = vpop.permute.xlu0 %5343
  %5345 = vrot.lane.b32.xlu0 %v5290, 12
  %v5346 = vpop.permute.xlu0 %5345
  %5347 = vrot.lane.b32.xlu0 %v5291, 12
  %v5348 = vpop.permute.xlu0 %5347
  %5349 = vrot.lane.b32.xlu0 %v5292, 12
  %v5350 = vpop.permute.xlu0 %5349
  %5351 = vrot.lane.b32.xlu0 %v5293, 12
  %v5352 = vpop.permute.xlu0 %5351
  %5353 = vrot.lane.b32.xlu0 %v5294, 12
  %v5354 = vpop.permute.xlu0 %5353
  %5355 = vrot.lane.b32.xlu0 %v5295, 12
  %v5356 = vpop.permute.xlu0 %5355
  %5357 = vrot.lane.b32.xlu0 %v5296, 12
  %v5358 = vpop.permute.xlu0 %5357
  %5359 = vrot.lane.b32.xlu0 %v5297, 12
  %v5360 = vpop.permute.xlu0 %5359
  %5361 = vrot.lane.b32.xlu0 %v5298, 12
  %v5362 = vpop.permute.xlu0 %5361
  %v5363 = vunpack.c.l.b16 %v2399
  %v5364 = vunpack.c.l.b16 %v2409
  %v5365 = vunpack.c.l.b16 %v2423
  %v5366 = vunpack.c.l.b16 %v2433
  %v5367 = vunpack.c.l.b16 %v2447
  %v5368 = vunpack.c.l.b16 %v2457
  %v5369 = vunpack.c.l.b16 %v2471
  %v5370 = vunpack.c.l.b16 %v2481
  %v5371 = vunpack.c.l.b16 %v2495
  %v5372 = vunpack.c.l.b16 %v2505
  %v5373 = vunpack.c.l.b16 %v2519
  %v5374 = vunpack.c.l.b16 %v2529
  %v5375 = vunpack.c.l.b16 %v2543
  %v5376 = vunpack.c.l.b16 %v2553
  %v5377 = vunpack.c.l.b16 %v2567
  %v5378 = vunpack.c.l.b16 %v2577
  %v5379 = vunpack.c.l.b16 %v2591
  %v5380 = vunpack.c.l.b16 %v2601
  %v5381 = vunpack.c.l.b16 %v2615
  %v5382 = vunpack.c.l.b16 %v2625
  %v5383 = vunpack.c.l.b16 %v2639
  %v5384 = vunpack.c.l.b16 %v2649
  %v5385 = vunpack.c.l.b16 %v2663
  %v5386 = vunpack.c.l.b16 %v2673
  %v5387 = vunpack.c.l.b16 %v2687
  %v5388 = vunpack.c.l.b16 %v2697
  %v5389 = vunpack.c.l.b16 %v2711
  %v5390 = vunpack.c.l.b16 %v2721
  %v5391 = vunpack.c.l.b16 %v2735
  %v5392 = vunpack.c.l.b16 %v2745
  %v5393 = vunpack.c.l.b16 %v2759
  %v5394 = vunpack.c.l.b16 %v2769
  %v5395 = vunpack.c.l.b16 %v2783
  %v5396 = vunpack.c.l.b16 %v2793
  %v5397 = vunpack.c.l.b16 %v2807
  %v5398 = vunpack.c.l.b16 %v2817
  %v5399 = vunpack.c.l.b16 %v2831
  %v5400 = vunpack.c.l.b16 %v2841
  %v5401 = vunpack.c.l.b16 %v2855
  %v5402 = vunpack.c.l.b16 %v2865
  %v5403 = vunpack.c.l.b16 %v2879
  %v5404 = vunpack.c.l.b16 %v2889
  %v5405 = vunpack.c.l.b16 %v2903
  %v5406 = vunpack.c.l.b16 %v2913
  %v5407 = vunpack.c.l.b16 %v2927
  %v5408 = vunpack.c.l.b16 %v2937
  %v5409 = vunpack.c.l.b16 %v2951
  %v5410 = vunpack.c.l.b16 %v2961
  %v5411 = vunpack.c.l.b16 %v2975
  %v5412 = vunpack.c.l.b16 %v2985
  %v5413 = vunpack.c.l.b16 %v2999
  %v5414 = vunpack.c.l.b16 %v3009
  %v5415 = vunpack.c.l.b16 %v3023
  %v5416 = vunpack.c.l.b16 %v3033
  %v5417 = vunpack.c.l.b16 %v3047
  %v5418 = vunpack.c.l.b16 %v3057
  %v5419 = vunpack.c.l.b16 %v3071
  %v5420 = vunpack.c.l.b16 %v3081
  %v5421 = vunpack.c.l.b16 %v3095
  %v5422 = vunpack.c.l.b16 %v3105
  %v5423 = vunpack.c.l.b16 %v3119
  %v5424 = vunpack.c.l.b16 %v3129
  %v5425 = vunpack.c.l.b16 %v3143
  %v5426 = vunpack.c.l.b16 %v3153
  %v5427 = vpack.c.b16 %v5364, %v5363
  %v5428 = vpack.c.b16 %v5366, %v5365
  %v5429 = vpack.c.b16 %v5368, %v5367
  %v5430 = vpack.c.b16 %v5370, %v5369
  %v5431 = vpack.c.b16 %v5372, %v5371
  %v5432 = vpack.c.b16 %v5374, %v5373
  %v5433 = vpack.c.b16 %v5376, %v5375
  %v5434 = vpack.c.b16 %v5378, %v5377
  %v5435 = vpack.c.b16 %v5380, %v5379
  %v5436 = vpack.c.b16 %v5382, %v5381
  %v5437 = vpack.c.b16 %v5384, %v5383
  %v5438 = vpack.c.b16 %v5386, %v5385
  %v5439 = vpack.c.b16 %v5388, %v5387
  %v5440 = vpack.c.b16 %v5390, %v5389
  %v5441 = vpack.c.b16 %v5392, %v5391
  %v5442 = vpack.c.b16 %v5394, %v5393
  %v5443 = vpack.c.b16 %v5396, %v5395
  %v5444 = vpack.c.b16 %v5398, %v5397
  %v5445 = vpack.c.b16 %v5400, %v5399
  %v5446 = vpack.c.b16 %v5402, %v5401
  %v5447 = vpack.c.b16 %v5404, %v5403
  %v5448 = vpack.c.b16 %v5406, %v5405
  %v5449 = vpack.c.b16 %v5408, %v5407
  %v5450 = vpack.c.b16 %v5410, %v5409
  %v5451 = vpack.c.b16 %v5412, %v5411
  %v5452 = vpack.c.b16 %v5414, %v5413
  %v5453 = vpack.c.b16 %v5416, %v5415
  %v5454 = vpack.c.b16 %v5418, %v5417
  %v5455 = vpack.c.b16 %v5420, %v5419
  %v5456 = vpack.c.b16 %v5422, %v5421
  %v5457 = vpack.c.b16 %v5424, %v5423
  %v5458 = vpack.c.b16 %v5426, %v5425
  %5459 = vrot.lane.b32.xlu0 %v5427, 16
  %v5460 = vpop.permute.xlu0 %5459
  %5461 = vrot.lane.b32.xlu0 %v5428, 16
  %v5462 = vpop.permute.xlu0 %5461
  %5463 = vrot.lane.b32.xlu0 %v5429, 16
  %v5464 = vpop.permute.xlu0 %5463
  %5465 = vrot.lane.b32.xlu0 %v5430, 16
  %v5466 = vpop.permute.xlu0 %5465
  %5467 = vrot.lane.b32.xlu0 %v5431, 16
  %v5468 = vpop.permute.xlu0 %5467
  %5469 = vrot.lane.b32.xlu0 %v5432, 16
  %v5470 = vpop.permute.xlu0 %5469
  %5471 = vrot.lane.b32.xlu0 %v5433, 16
  %v5472 = vpop.permute.xlu0 %5471
  %5473 = vrot.lane.b32.xlu0 %v5434, 16
  %v5474 = vpop.permute.xlu0 %5473
  %5475 = vrot.lane.b32.xlu0 %v5435, 16
  %v5476 = vpop.permute.xlu0 %5475
  %5477 = vrot.lane.b32.xlu0 %v5436, 16
  %v5478 = vpop.permute.xlu0 %5477
  %5479 = vrot.lane.b32.xlu0 %v5437, 16
  %v5480 = vpop.permute.xlu0 %5479
  %5481 = vrot.lane.b32.xlu0 %v5438, 16
  %v5482 = vpop.permute.xlu0 %5481
  %5483 = vrot.lane.b32.xlu0 %v5439, 16
  %v5484 = vpop.permute.xlu0 %5483
  %5485 = vrot.lane.b32.xlu0 %v5440, 16
  %v5486 = vpop.permute.xlu0 %5485
  %5487 = vrot.lane.b32.xlu0 %v5441, 16
  %v5488 = vpop.permute.xlu0 %5487
  %5489 = vrot.lane.b32.xlu0 %v5442, 16
  %v5490 = vpop.permute.xlu0 %5489
  %5491 = vrot.lane.b32.xlu0 %v5443, 16
  %v5492 = vpop.permute.xlu0 %5491
  %5493 = vrot.lane.b32.xlu0 %v5444, 16
  %v5494 = vpop.permute.xlu0 %5493
  %5495 = vrot.lane.b32.xlu0 %v5445, 16
  %v5496 = vpop.permute.xlu0 %5495
  %5497 = vrot.lane.b32.xlu0 %v5446, 16
  %v5498 = vpop.permute.xlu0 %5497
  %5499 = vrot.lane.b32.xlu0 %v5447, 16
  %v5500 = vpop.permute.xlu0 %5499
  %5501 = vrot.lane.b32.xlu0 %v5448, 16
  %v5502 = vpop.permute.xlu0 %5501
  %5503 = vrot.lane.b32.xlu0 %v5449, 16
  %v5504 = vpop.permute.xlu0 %5503
  %5505 = vrot.lane.b32.xlu0 %v5450, 16
  %v5506 = vpop.permute.xlu0 %5505
  %5507 = vrot.lane.b32.xlu0 %v5451, 16
  %v5508 = vpop.permute.xlu0 %5507
  %5509 = vrot.lane.b32.xlu0 %v5452, 16
  %v5510 = vpop.permute.xlu0 %5509
  %5511 = vrot.lane.b32.xlu0 %v5453, 16
  %v5512 = vpop.permute.xlu0 %5511
  %5513 = vrot.lane.b32.xlu0 %v5454, 16
  %v5514 = vpop.permute.xlu0 %5513
  %5515 = vrot.lane.b32.xlu0 %v5455, 16
  %v5516 = vpop.permute.xlu0 %5515
  %5517 = vrot.lane.b32.xlu0 %v5456, 16
  %v5518 = vpop.permute.xlu0 %5517
  %5519 = vrot.lane.b32.xlu0 %v5457, 16
  %v5520 = vpop.permute.xlu0 %5519
  %5521 = vrot.lane.b32.xlu0 %v5458, 16
  %v5522 = vpop.permute.xlu0 %5521
  %v5523 = vunpack.c.l.b16 %v3285
  %v5524 = vunpack.c.l.b16 %v3288
  %v5525 = vunpack.c.l.b16 %v3292
  %v5526 = vunpack.c.l.b16 %v3295
  %v5527 = vunpack.c.l.b16 %v3299
  %v5528 = vunpack.c.l.b16 %v3302
  %v5529 = vunpack.c.l.b16 %v3306
  %v5530 = vunpack.c.l.b16 %v3309
  %v5531 = vunpack.c.l.b16 %v3313
  %v5532 = vunpack.c.l.b16 %v3316
  %v5533 = vunpack.c.l.b16 %v3320
  %v5534 = vunpack.c.l.b16 %v3323
  %v5535 = vunpack.c.l.b16 %v3327
  %v5536 = vunpack.c.l.b16 %v3330
  %v5537 = vunpack.c.l.b16 %v3334
  %v5538 = vunpack.c.l.b16 %v3337
  %v5539 = vunpack.c.l.b16 %v3341
  %v5540 = vunpack.c.l.b16 %v3344
  %v5541 = vunpack.c.l.b16 %v3348
  %v5542 = vunpack.c.l.b16 %v3351
  %v5543 = vunpack.c.l.b16 %v3355
  %v5544 = vunpack.c.l.b16 %v3358
  %v5545 = vunpack.c.l.b16 %v3362
  %v5546 = vunpack.c.l.b16 %v3365
  %v5547 = vunpack.c.l.b16 %v3369
  %v5548 = vunpack.c.l.b16 %v3372
  %v5549 = vunpack.c.l.b16 %v3376
  %v5550 = vunpack.c.l.b16 %v3379
  %v5551 = vunpack.c.l.b16 %v3383
  %v5552 = vunpack.c.l.b16 %v3386
  %v5553 = vunpack.c.l.b16 %v3390
  %v5554 = vunpack.c.l.b16 %v3393
  %v5555 = vunpack.c.l.b16 %v3397
  %v5556 = vunpack.c.l.b16 %v3400
  %v5557 = vunpack.c.l.b16 %v3404
  %v5558 = vunpack.c.l.b16 %v3407
  %v5559 = vunpack.c.l.b16 %v3411
  %v5560 = vunpack.c.l.b16 %v3414
  %v5561 = vunpack.c.l.b16 %v3418
  %v5562 = vunpack.c.l.b16 %v3421
  %v5563 = vunpack.c.l.b16 %v3425
  %v5564 = vunpack.c.l.b16 %v3428
  %v5565 = vunpack.c.l.b16 %v3432
  %v5566 = vunpack.c.l.b16 %v3435
  %v5567 = vunpack.c.l.b16 %v3439
  %v5568 = vunpack.c.l.b16 %v3442
  %v5569 = vunpack.c.l.b16 %v3446
  %v5570 = vunpack.c.l.b16 %v3449
  %v5571 = vunpack.c.l.b16 %v3453
  %v5572 = vunpack.c.l.b16 %v3456
  %v5573 = vunpack.c.l.b16 %v3460
  %v5574 = vunpack.c.l.b16 %v3463
  %v5575 = vunpack.c.l.b16 %v3467
  %v5576 = vunpack.c.l.b16 %v3470
  %v5577 = vunpack.c.l.b16 %v3474
  %v5578 = vunpack.c.l.b16 %v3477
  %v5579 = vunpack.c.l.b16 %v3481
  %v5580 = vunpack.c.l.b16 %v3484
  %v5581 = vunpack.c.l.b16 %v3488
  %v5582 = vunpack.c.l.b16 %v3491
  %v5583 = vunpack.c.l.b16 %v3495
  %v5584 = vunpack.c.l.b16 %v3498
  %v5585 = vunpack.c.l.b16 %v3502
  %v5586 = vunpack.c.l.b16 %v3505
  %v5587 = vpack.c.b16 %v5524, %v5523
  %v5588 = vpack.c.b16 %v5526, %v5525
  %v5589 = vpack.c.b16 %v5528, %v5527
  %v5590 = vpack.c.b16 %v5530, %v5529
  %v5591 = vpack.c.b16 %v5532, %v5531
  %v5592 = vpack.c.b16 %v5534, %v5533
  %v5593 = vpack.c.b16 %v5536, %v5535
  %v5594 = vpack.c.b16 %v5538, %v5537
  %v5595 = vpack.c.b16 %v5540, %v5539
  %v5596 = vpack.c.b16 %v5542, %v5541
  %v5597 = vpack.c.b16 %v5544, %v5543
  %v5598 = vpack.c.b16 %v5546, %v5545
  %v5599 = vpack.c.b16 %v5548, %v5547
  %v5600 = vpack.c.b16 %v5550, %v5549
  %v5601 = vpack.c.b16 %v5552, %v5551
  %v5602 = vpack.c.b16 %v5554, %v5553
  %v5603 = vpack.c.b16 %v5556, %v5555
  %v5604 = vpack.c.b16 %v5558, %v5557
  %v5605 = vpack.c.b16 %v5560, %v5559
  %v5606 = vpack.c.b16 %v5562, %v5561
  %v5607 = vpack.c.b16 %v5564, %v5563
  %v5608 = vpack.c.b16 %v5566, %v5565
  %v5609 = vpack.c.b16 %v5568, %v5567
  %v5610 = vpack.c.b16 %v5570, %v5569
  %v5611 = vpack.c.b16 %v5572, %v5571
  %v5612 = vpack.c.b16 %v5574, %v5573
  %v5613 = vpack.c.b16 %v5576, %v5575
  %v5614 = vpack.c.b16 %v5578, %v5577
  %v5615 = vpack.c.b16 %v5580, %v5579
  %v5616 = vpack.c.b16 %v5582, %v5581
  %v5617 = vpack.c.b16 %v5584, %v5583
  %v5618 = vpack.c.b16 %v5586, %v5585
  %5619 = vrot.lane.b32.xlu0 %v5587, 20
  %v5620 = vpop.permute.xlu0 %5619
  %5621 = vrot.lane.b32.xlu0 %v5588, 20
  %v5622 = vpop.permute.xlu0 %5621
  %5623 = vrot.lane.b32.xlu0 %v5589, 20
  %v5624 = vpop.permute.xlu0 %5623
  %5625 = vrot.lane.b32.xlu0 %v5590, 20
  %v5626 = vpop.permute.xlu0 %5625
  %5627 = vrot.lane.b32.xlu0 %v5591, 20
  %v5628 = vpop.permute.xlu0 %5627
  %5629 = vrot.lane.b32.xlu0 %v5592, 20
  %v5630 = vpop.permute.xlu0 %5629
  %5631 = vrot.lane.b32.xlu0 %v5593, 20
  %v5632 = vpop.permute.xlu0 %5631
  %5633 = vrot.lane.b32.xlu0 %v5594, 20
  %v5634 = vpop.permute.xlu0 %5633
  %5635 = vrot.lane.b32.xlu0 %v5595, 20
  %v5636 = vpop.permute.xlu0 %5635
  %5637 = vrot.lane.b32.xlu0 %v5596, 20
  %v5638 = vpop.permute.xlu0 %5637
  %5639 = vrot.lane.b32.xlu0 %v5597, 20
  %v5640 = vpop.permute.xlu0 %5639
  %5641 = vrot.lane.b32.xlu0 %v5598, 20
  %v5642 = vpop.permute.xlu0 %5641
  %5643 = vrot.lane.b32.xlu0 %v5599, 20
  %v5644 = vpop.permute.xlu0 %5643
  %5645 = vrot.lane.b32.xlu0 %v5600, 20
  %v5646 = vpop.permute.xlu0 %5645
  %5647 = vrot.lane.b32.xlu0 %v5601, 20
  %v5648 = vpop.permute.xlu0 %5647
  %5649 = vrot.lane.b32.xlu0 %v5602, 20
  %v5650 = vpop.permute.xlu0 %5649
  %5651 = vrot.lane.b32.xlu0 %v5603, 20
  %v5652 = vpop.permute.xlu0 %5651
  %5653 = vrot.lane.b32.xlu0 %v5604, 20
  %v5654 = vpop.permute.xlu0 %5653
  %5655 = vrot.lane.b32.xlu0 %v5605, 20
  %v5656 = vpop.permute.xlu0 %5655
  %5657 = vrot.lane.b32.xlu0 %v5606, 20
  %v5658 = vpop.permute.xlu0 %5657
  %5659 = vrot.lane.b32.xlu0 %v5607, 20
  %v5660 = vpop.permute.xlu0 %5659
  %5661 = vrot.lane.b32.xlu0 %v5608, 20
  %v5662 = vpop.permute.xlu0 %5661
  %5663 = vrot.lane.b32.xlu0 %v5609, 20
  %v5664 = vpop.permute.xlu0 %5663
  %5665 = vrot.lane.b32.xlu0 %v5610, 20
  %v5666 = vpop.permute.xlu0 %5665
  %5667 = vrot.lane.b32.xlu0 %v5611, 20
  %v5668 = vpop.permute.xlu0 %5667
  %5669 = vrot.lane.b32.xlu0 %v5612, 20
  %v5670 = vpop.permute.xlu0 %5669
  %5671 = vrot.lane.b32.xlu0 %v5613, 20
  %v5672 = vpop.permute.xlu0 %5671
  %5673 = vrot.lane.b32.xlu0 %v5614, 20
  %v5674 = vpop.permute.xlu0 %5673
  %5675 = vrot.lane.b32.xlu0 %v5615, 20
  %v5676 = vpop.permute.xlu0 %5675
  %5677 = vrot.lane.b32.xlu0 %v5616, 20
  %v5678 = vpop.permute.xlu0 %5677
  %5679 = vrot.lane.b32.xlu0 %v5617, 20
  %v5680 = vpop.permute.xlu0 %5679
  %5681 = vrot.lane.b32.xlu0 %v5618, 20
  %v5682 = vpop.permute.xlu0 %5681
  %v5715 = vunpack.c.l.b16 %v3507
  %v5716 = vunpack.c.l.b16 %v3508
  %v5717 = vunpack.c.l.b16 %v3509
  %v5718 = vunpack.c.l.b16 %v3510
  %v5719 = vunpack.c.l.b16 %v3511
  %v5720 = vunpack.c.l.b16 %v3512
  %v5721 = vunpack.c.l.b16 %v3513
  %v5722 = vunpack.c.l.b16 %v3514
  %v5723 = vunpack.c.l.b16 %v3515
  %v5724 = vunpack.c.l.b16 %v3516
  %v5725 = vunpack.c.l.b16 %v3517
  %v5726 = vunpack.c.l.b16 %v3518
  %v5727 = vunpack.c.l.b16 %v3519
  %v5728 = vunpack.c.l.b16 %v3520
  %v5729 = vunpack.c.l.b16 %v3521
  %v5730 = vunpack.c.l.b16 %v3522
  %v5731 = vunpack.c.l.b16 %v3523
  %v5732 = vunpack.c.l.b16 %v3524
  %v5733 = vunpack.c.l.b16 %v3525
  %v5734 = vunpack.c.l.b16 %v3526
  %v5735 = vunpack.c.l.b16 %v3527
  %v5736 = vunpack.c.l.b16 %v3528
  %v5737 = vunpack.c.l.b16 %v3529
  %v5738 = vunpack.c.l.b16 %v3530
  %v5739 = vunpack.c.l.b16 %v3531
  %v5740 = vunpack.c.l.b16 %v3532
  %v5741 = vunpack.c.l.b16 %v3533
  %v5742 = vunpack.c.l.b16 %v3534
  %v5743 = vunpack.c.l.b16 %v3535
  %v5744 = vunpack.c.l.b16 %v3536
  %v5745 = vunpack.c.l.b16 %v3537
  %v5746 = vunpack.c.l.b16 %v3538
  %v5747 = vunpack.c.l.b16 %v3539
  %v5748 = vunpack.c.l.b16 %v3540
  %v5749 = vunpack.c.l.b16 %v3541
  %v5750 = vunpack.c.l.b16 %v3542
  %v5751 = vunpack.c.l.b16 %v3543
  %v5752 = vunpack.c.l.b16 %v3544
  %v5753 = vunpack.c.l.b16 %v3545
  %v5754 = vunpack.c.l.b16 %v3546
  %v5755 = vunpack.c.l.b16 %v3547
  %v5756 = vunpack.c.l.b16 %v3548
  %v5757 = vunpack.c.l.b16 %v3549
  %v5758 = vunpack.c.l.b16 %v3550
  %v5759 = vunpack.c.l.b16 %v3551
  %v5760 = vunpack.c.l.b16 %v3552
  %v5761 = vunpack.c.l.b16 %v3553
  %v5762 = vunpack.c.l.b16 %v3554
  %v5763 = vunpack.c.l.b16 %v3555
  %v5764 = vunpack.c.l.b16 %v3556
  %v5765 = vunpack.c.l.b16 %v3557
  %v5766 = vunpack.c.l.b16 %v3558
  %v5767 = vunpack.c.l.b16 %v3559
  %v5768 = vunpack.c.l.b16 %v3560
  %v5769 = vunpack.c.l.b16 %v3561
  %v5770 = vunpack.c.l.b16 %v3562
  %v5771 = vunpack.c.l.b16 %v3563
  %v5772 = vunpack.c.l.b16 %v3564
  %v5773 = vunpack.c.l.b16 %v3565
  %v5774 = vunpack.c.l.b16 %v3566
  %v5775 = vunpack.c.l.b16 %v3567
  %v5776 = vunpack.c.l.b16 %v3568
  %v5777 = vunpack.c.l.b16 %v3569
  %v5778 = vunpack.c.l.b16 %v3570
  %v5779 = vpack.c.b16 %v5716, %v5715
  %v5780 = vpack.c.b16 %v5718, %v5717
  %v5781 = vpack.c.b16 %v5720, %v5719
  %v5782 = vpack.c.b16 %v5722, %v5721
  %v5783 = vpack.c.b16 %v5724, %v5723
  %v5784 = vpack.c.b16 %v5726, %v5725
  %v5785 = vpack.c.b16 %v5728, %v5727
  %v5786 = vpack.c.b16 %v5730, %v5729
  %v5787 = vpack.c.b16 %v5732, %v5731
  %v5788 = vpack.c.b16 %v5734, %v5733
  %v5789 = vpack.c.b16 %v5736, %v5735
  %v5790 = vpack.c.b16 %v5738, %v5737
  %v5791 = vpack.c.b16 %v5740, %v5739
  %v5792 = vpack.c.b16 %v5742, %v5741
  %v5793 = vpack.c.b16 %v5744, %v5743
  %v5794 = vpack.c.b16 %v5746, %v5745
  %v5795 = vpack.c.b16 %v5748, %v5747
  %v5796 = vpack.c.b16 %v5750, %v5749
  %v5797 = vpack.c.b16 %v5752, %v5751
  %v5798 = vpack.c.b16 %v5754, %v5753
  %v5799 = vpack.c.b16 %v5756, %v5755
  %v5800 = vpack.c.b16 %v5758, %v5757
  %v5801 = vpack.c.b16 %v5760, %v5759
  %v5802 = vpack.c.b16 %v5762, %v5761
  %v5803 = vpack.c.b16 %v5764, %v5763
  %v5804 = vpack.c.b16 %v5766, %v5765
  %v5805 = vpack.c.b16 %v5768, %v5767
  %v5806 = vpack.c.b16 %v5770, %v5769
  %v5807 = vpack.c.b16 %v5772, %v5771
  %v5808 = vpack.c.b16 %v5774, %v5773
  %v5809 = vpack.c.b16 %v5776, %v5775
  %v5810 = vpack.c.b16 %v5778, %v5777
  %5811 = vrot.lane.b32.xlu0 %v5779, 24
  %v5812 = vpop.permute.xlu0 %5811
  %5813 = vrot.lane.b32.xlu0 %v5780, 24
  %v5814 = vpop.permute.xlu0 %5813
  %5815 = vrot.lane.b32.xlu0 %v5781, 24
  %v5816 = vpop.permute.xlu0 %5815
  %5817 = vrot.lane.b32.xlu0 %v5782, 24
  %v5818 = vpop.permute.xlu0 %5817
  %5819 = vrot.lane.b32.xlu0 %v5783, 24
  %v5820 = vpop.permute.xlu0 %5819
  %5821 = vrot.lane.b32.xlu0 %v5784, 24
  %v5822 = vpop.permute.xlu0 %5821
  %5823 = vrot.lane.b32.xlu0 %v5785, 24
  %v5824 = vpop.permute.xlu0 %5823
  %5825 = vrot.lane.b32.xlu0 %v5786, 24
  %v5826 = vpop.permute.xlu0 %5825
  %5827 = vrot.lane.b32.xlu0 %v5787, 24
  %v5828 = vpop.permute.xlu0 %5827
  %5829 = vrot.lane.b32.xlu0 %v5788, 24
  %v5830 = vpop.permute.xlu0 %5829
  %5831 = vrot.lane.b32.xlu0 %v5789, 24
  %v5832 = vpop.permute.xlu0 %5831
  %5833 = vrot.lane.b32.xlu0 %v5790, 24
  %v5834 = vpop.permute.xlu0 %5833
  %5835 = vrot.lane.b32.xlu0 %v5791, 24
  %v5836 = vpop.permute.xlu0 %5835
  %5837 = vrot.lane.b32.xlu0 %v5792, 24
  %v5838 = vpop.permute.xlu0 %5837
  %5839 = vrot.lane.b32.xlu0 %v5793, 24
  %v5840 = vpop.permute.xlu0 %5839
  %5841 = vrot.lane.b32.xlu0 %v5794, 24
  %v5842 = vpop.permute.xlu0 %5841
  %5843 = vrot.lane.b32.xlu0 %v5795, 24
  %v5844 = vpop.permute.xlu0 %5843
  %5845 = vrot.lane.b32.xlu0 %v5796, 24
  %v5846 = vpop.permute.xlu0 %5845
  %5847 = vrot.lane.b32.xlu0 %v5797, 24
  %v5848 = vpop.permute.xlu0 %5847
  %5849 = vrot.lane.b32.xlu0 %v5798, 24
  %v5850 = vpop.permute.xlu0 %5849
  %5851 = vrot.lane.b32.xlu0 %v5799, 24
  %v5852 = vpop.permute.xlu0 %5851
  %5853 = vrot.lane.b32.xlu0 %v5800, 24
  %v5854 = vpop.permute.xlu0 %5853
  %5855 = vrot.lane.b32.xlu0 %v5801, 24
  %v5856 = vpop.permute.xlu0 %5855
  %5857 = vrot.lane.b32.xlu0 %v5802, 24
  %v5858 = vpop.permute.xlu0 %5857
  %5859 = vrot.lane.b32.xlu0 %v5803, 24
  %v5860 = vpop.permute.xlu0 %5859
  %5861 = vrot.lane.b32.xlu0 %v5804, 24
  %v5862 = vpop.permute.xlu0 %5861
  %5863 = vrot.lane.b32.xlu0 %v5805, 24
  %v5864 = vpop.permute.xlu0 %5863
  %5865 = vrot.lane.b32.xlu0 %v5806, 24
  %v5866 = vpop.permute.xlu0 %5865
  %5867 = vrot.lane.b32.xlu0 %v5807, 24
  %v5868 = vpop.permute.xlu0 %5867
  %5869 = vrot.lane.b32.xlu0 %v5808, 24
  %v5870 = vpop.permute.xlu0 %5869
  %5871 = vrot.lane.b32.xlu0 %v5809, 24
  %v5872 = vpop.permute.xlu0 %5871
  %5873 = vrot.lane.b32.xlu0 %v5810, 24
  %v5874 = vpop.permute.xlu0 %5873
  %v5875 = vunpack.c.l.b16 %v3616
  %v5876 = vunpack.c.l.b16 %v3626
  %v5877 = vunpack.c.l.b16 %v3640
  %v5878 = vunpack.c.l.b16 %v3650
  %v5879 = vunpack.c.l.b16 %v3664
  %v5880 = vunpack.c.l.b16 %v3674
  %v5881 = vunpack.c.l.b16 %v3688
  %v5882 = vunpack.c.l.b16 %v3698
  %v5883 = vunpack.c.l.b16 %v3712
  %v5884 = vunpack.c.l.b16 %v3722
  %v5885 = vunpack.c.l.b16 %v3736
  %v5886 = vunpack.c.l.b16 %v3746
  %v5887 = vunpack.c.l.b16 %v3760
  %v5888 = vunpack.c.l.b16 %v3770
  %v5889 = vunpack.c.l.b16 %v3784
  %v5890 = vunpack.c.l.b16 %v3794
  %v5891 = vunpack.c.l.b16 %v3808
  %v5892 = vunpack.c.l.b16 %v3818
  %v5893 = vunpack.c.l.b16 %v3832
  %v5894 = vunpack.c.l.b16 %v3842
  %v5895 = vunpack.c.l.b16 %v3856
  %v5896 = vunpack.c.l.b16 %v3866
  %v5897 = vunpack.c.l.b16 %v3880
  %v5898 = vunpack.c.l.b16 %v3890
  %v5899 = vunpack.c.l.b16 %v3904
  %v5900 = vunpack.c.l.b16 %v3914
  %v5901 = vunpack.c.l.b16 %v3928
  %v5902 = vunpack.c.l.b16 %v3938
  %v5903 = vunpack.c.l.b16 %v3952
  %v5904 = vunpack.c.l.b16 %v3962
  %v5905 = vunpack.c.l.b16 %v3976
  %v5906 = vunpack.c.l.b16 %v3986
  %v5907 = vunpack.c.l.b16 %v4000
  %v5908 = vunpack.c.l.b16 %v4010
  %v5909 = vunpack.c.l.b16 %v4024
  %v5910 = vunpack.c.l.b16 %v4034
  %v5911 = vunpack.c.l.b16 %v4048
  %v5912 = vunpack.c.l.b16 %v4058
  %v5913 = vunpack.c.l.b16 %v4072
  %v5914 = vunpack.c.l.b16 %v4082
  %v5915 = vunpack.c.l.b16 %v4096
  %v5916 = vunpack.c.l.b16 %v4106
  %v5917 = vunpack.c.l.b16 %v4120
  %v5918 = vunpack.c.l.b16 %v4130
  %v5919 = vunpack.c.l.b16 %v4144
  %v5920 = vunpack.c.l.b16 %v4154
  %v5921 = vunpack.c.l.b16 %v4168
  %v5922 = vunpack.c.l.b16 %v4178
  %v5923 = vunpack.c.l.b16 %v4192
  %v5924 = vunpack.c.l.b16 %v4202
  %v5925 = vunpack.c.l.b16 %v4216
  %v5926 = vunpack.c.l.b16 %v4226
  %v5927 = vunpack.c.l.b16 %v4240
  %v5928 = vunpack.c.l.b16 %v4250
  %v5929 = vunpack.c.l.b16 %v4264
  %v5930 = vunpack.c.l.b16 %v4274
  %v5931 = vunpack.c.l.b16 %v4288
  %v5932 = vunpack.c.l.b16 %v4298
  %v5933 = vunpack.c.l.b16 %v4312
  %v5934 = vunpack.c.l.b16 %v4322
  %v5935 = vunpack.c.l.b16 %v4336
  %v5936 = vunpack.c.l.b16 %v4346
  %v5937 = vunpack.c.l.b16 %v4360
  %v5938 = vunpack.c.l.b16 %v4370
  %v5939 = vpack.c.b16 %v5876, %v5875
  %v5940 = vpack.c.b16 %v5878, %v5877
  %v5941 = vpack.c.b16 %v5880, %v5879
  %v5942 = vpack.c.b16 %v5882, %v5881
  %v5943 = vpack.c.b16 %v5884, %v5883
  %v5944 = vpack.c.b16 %v5886, %v5885
  %v5945 = vpack.c.b16 %v5888, %v5887
  %v5946 = vpack.c.b16 %v5890, %v5889
  %v5947 = vpack.c.b16 %v5892, %v5891
  %v5948 = vpack.c.b16 %v5894, %v5893
  %v5949 = vpack.c.b16 %v5896, %v5895
  %v5950 = vpack.c.b16 %v5898, %v5897
  %v5951 = vpack.c.b16 %v5900, %v5899
  %v5952 = vpack.c.b16 %v5902, %v5901
  %v5953 = vpack.c.b16 %v5904, %v5903
  %v5954 = vpack.c.b16 %v5906, %v5905
  %v5955 = vpack.c.b16 %v5908, %v5907
  %v5956 = vpack.c.b16 %v5910, %v5909
  %v5957 = vpack.c.b16 %v5912, %v5911
  %v5958 = vpack.c.b16 %v5914, %v5913
  %v5959 = vpack.c.b16 %v5916, %v5915
  %v5960 = vpack.c.b16 %v5918, %v5917
  %v5961 = vpack.c.b16 %v5920, %v5919
  %v5962 = vpack.c.b16 %v5922, %v5921
  %v5963 = vpack.c.b16 %v5924, %v5923
  %v5964 = vpack.c.b16 %v5926, %v5925
  %v5965 = vpack.c.b16 %v5928, %v5927
  %v5966 = vpack.c.b16 %v5930, %v5929
  %v5967 = vpack.c.b16 %v5932, %v5931
  %v5968 = vpack.c.b16 %v5934, %v5933
  %v5969 = vpack.c.b16 %v5936, %v5935
  %v5970 = vpack.c.b16 %v5938, %v5937
  %5971 = vrot.lane.b32.xlu0 %v5939, 28
  %v5972 = vpop.permute.xlu0 %5971
  %5973 = vrot.lane.b32.xlu0 %v5940, 28
  %v5974 = vpop.permute.xlu0 %5973
  %5975 = vrot.lane.b32.xlu0 %v5941, 28
  %v5976 = vpop.permute.xlu0 %5975
  %5977 = vrot.lane.b32.xlu0 %v5942, 28
  %v5978 = vpop.permute.xlu0 %5977
  %5979 = vrot.lane.b32.xlu0 %v5943, 28
  %v5980 = vpop.permute.xlu0 %5979
  %5981 = vrot.lane.b32.xlu0 %v5944, 28
  %v5982 = vpop.permute.xlu0 %5981
  %5983 = vrot.lane.b32.xlu0 %v5945, 28
  %v5984 = vpop.permute.xlu0 %5983
  %5985 = vrot.lane.b32.xlu0 %v5946, 28
  %v5986 = vpop.permute.xlu0 %5985
  %5987 = vrot.lane.b32.xlu0 %v5947, 28
  %v5988 = vpop.permute.xlu0 %5987
  %5989 = vrot.lane.b32.xlu0 %v5948, 28
  %v5990 = vpop.permute.xlu0 %5989
  %5991 = vrot.lane.b32.xlu0 %v5949, 28
  %v5992 = vpop.permute.xlu0 %5991
  %5993 = vrot.lane.b32.xlu0 %v5950, 28
  %v5994 = vpop.permute.xlu0 %5993
  %5995 = vrot.lane.b32.xlu0 %v5951, 28
  %v5996 = vpop.permute.xlu0 %5995
  %5997 = vrot.lane.b32.xlu0 %v5952, 28
  %v5998 = vpop.permute.xlu0 %5997
  %5999 = vrot.lane.b32.xlu0 %v5953, 28
  %v6000 = vpop.permute.xlu0 %5999
  %6001 = vrot.lane.b32.xlu0 %v5954, 28
  %v6002 = vpop.permute.xlu0 %6001
  %6003 = vrot.lane.b32.xlu0 %v5955, 28
  %v6004 = vpop.permute.xlu0 %6003
  %6005 = vrot.lane.b32.xlu0 %v5956, 28
  %v6006 = vpop.permute.xlu0 %6005
  %6007 = vrot.lane.b32.xlu0 %v5957, 28
  %v6008 = vpop.permute.xlu0 %6007
  %6009 = vrot.lane.b32.xlu0 %v5958, 28
  %v6010 = vpop.permute.xlu0 %6009
  %6011 = vrot.lane.b32.xlu0 %v5959, 28
  %v6012 = vpop.permute.xlu0 %6011
  %6013 = vrot.lane.b32.xlu0 %v5960, 28
  %v6014 = vpop.permute.xlu0 %6013
  %6015 = vrot.lane.b32.xlu0 %v5961, 28
  %v6016 = vpop.permute.xlu0 %6015
  %6017 = vrot.lane.b32.xlu0 %v5962, 28
  %v6018 = vpop.permute.xlu0 %6017
  %6019 = vrot.lane.b32.xlu0 %v5963, 28
  %v6020 = vpop.permute.xlu0 %6019
  %6021 = vrot.lane.b32.xlu0 %v5964, 28
  %v6022 = vpop.permute.xlu0 %6021
  %6023 = vrot.lane.b32.xlu0 %v5965, 28
  %v6024 = vpop.permute.xlu0 %6023
  %6025 = vrot.lane.b32.xlu0 %v5966, 28
  %v6026 = vpop.permute.xlu0 %6025
  %6027 = vrot.lane.b32.xlu0 %v5967, 28
  %v6028 = vpop.permute.xlu0 %6027
  %6029 = vrot.lane.b32.xlu0 %v5968, 28
  %v6030 = vpop.permute.xlu0 %6029
  %6031 = vrot.lane.b32.xlu0 %v5969, 28
  %v6032 = vpop.permute.xlu0 %6031
  %6033 = vrot.lane.b32.xlu0 %v5970, 28
  %v6034 = vpop.permute.xlu0 %6033
  %v6035 = vunpack.c.l.b16 %v4502
  %v6036 = vunpack.c.l.b16 %v4505
  %v6037 = vunpack.c.l.b16 %v4509
  %v6038 = vunpack.c.l.b16 %v4512
  %v6039 = vunpack.c.l.b16 %v4516
  %v6040 = vunpack.c.l.b16 %v4519
  %v6041 = vunpack.c.l.b16 %v4523
  %v6042 = vunpack.c.l.b16 %v4526
  %v6043 = vunpack.c.l.b16 %v4530
  %v6044 = vunpack.c.l.b16 %v4533
  %v6045 = vunpack.c.l.b16 %v4537
  %v6046 = vunpack.c.l.b16 %v4540
  %v6047 = vunpack.c.l.b16 %v4544
  %v6048 = vunpack.c.l.b16 %v4547
  %v6049 = vunpack.c.l.b16 %v4551
  %v6050 = vunpack.c.l.b16 %v4554
  %v6051 = vunpack.c.l.b16 %v4558
  %v6052 = vunpack.c.l.b16 %v4561
  %v6053 = vunpack.c.l.b16 %v4565
  %v6054 = vunpack.c.l.b16 %v4568
  %v6055 = vunpack.c.l.b16 %v4572
  %v6056 = vunpack.c.l.b16 %v4575
  %v6057 = vunpack.c.l.b16 %v4579
  %v6058 = vunpack.c.l.b16 %v4582
  %v6059 = vunpack.c.l.b16 %v4586
  %v6060 = vunpack.c.l.b16 %v4589
  %v6061 = vunpack.c.l.b16 %v4593
  %v6062 = vunpack.c.l.b16 %v4596
  %v6063 = vunpack.c.l.b16 %v4600
  %v6064 = vunpack.c.l.b16 %v4603
  %v6065 = vunpack.c.l.b16 %v4607
  %v6066 = vunpack.c.l.b16 %v4610
  %v6067 = vunpack.c.l.b16 %v4614
  %v6068 = vunpack.c.l.b16 %v4617
  %v6069 = vunpack.c.l.b16 %v4621
  %v6070 = vunpack.c.l.b16 %v4624
  %v6071 = vunpack.c.l.b16 %v4628
  %v6072 = vunpack.c.l.b16 %v4631
  %v6073 = vunpack.c.l.b16 %v4635
  %v6074 = vunpack.c.l.b16 %v4638
  %v6075 = vunpack.c.l.b16 %v4642
  %v6076 = vunpack.c.l.b16 %v4645
  %v6077 = vunpack.c.l.b16 %v4649
  %v6078 = vunpack.c.l.b16 %v4652
  %v6079 = vunpack.c.l.b16 %v4656
  %v6080 = vunpack.c.l.b16 %v4659
  %v6081 = vunpack.c.l.b16 %v4663
  %v6082 = vunpack.c.l.b16 %v4666
  %v6083 = vunpack.c.l.b16 %v4670
  %v6084 = vunpack.c.l.b16 %v4673
  %v6085 = vunpack.c.l.b16 %v4677
  %v6086 = vunpack.c.l.b16 %v4680
  %v6087 = vunpack.c.l.b16 %v4684
  %v6088 = vunpack.c.l.b16 %v4687
  %v6089 = vunpack.c.l.b16 %v4691
  %v6090 = vunpack.c.l.b16 %v4694
  %v6091 = vunpack.c.l.b16 %v4698
  %v6092 = vunpack.c.l.b16 %v4701
  %v6093 = vunpack.c.l.b16 %v4705
  %v6094 = vunpack.c.l.b16 %v4708
  %v6095 = vunpack.c.l.b16 %v4712
  %v6096 = vunpack.c.l.b16 %v4715
  %v6097 = vunpack.c.l.b16 %v4719
  %v6098 = vunpack.c.l.b16 %v4722
  %v6099 = vpack.c.b16 %v6036, %v6035
  %v6100 = vpack.c.b16 %v6038, %v6037
  %v6101 = vpack.c.b16 %v6040, %v6039
  %v6102 = vpack.c.b16 %v6042, %v6041
  %v6103 = vpack.c.b16 %v6044, %v6043
  %v6104 = vpack.c.b16 %v6046, %v6045
  %v6105 = vpack.c.b16 %v6048, %v6047
  %v6106 = vpack.c.b16 %v6050, %v6049
  %v6107 = vpack.c.b16 %v6052, %v6051
  %v6108 = vpack.c.b16 %v6054, %v6053
  %v6109 = vpack.c.b16 %v6056, %v6055
  %v6110 = vpack.c.b16 %v6058, %v6057
  %v6111 = vpack.c.b16 %v6060, %v6059
  %v6112 = vpack.c.b16 %v6062, %v6061
  %v6113 = vpack.c.b16 %v6064, %v6063
  %v6114 = vpack.c.b16 %v6066, %v6065
  %v6115 = vpack.c.b16 %v6068, %v6067
  %v6116 = vpack.c.b16 %v6070, %v6069
  %v6117 = vpack.c.b16 %v6072, %v6071
  %v6118 = vpack.c.b16 %v6074, %v6073
  %v6119 = vpack.c.b16 %v6076, %v6075
  %v6120 = vpack.c.b16 %v6078, %v6077
  %v6121 = vpack.c.b16 %v6080, %v6079
  %v6122 = vpack.c.b16 %v6082, %v6081
  %v6123 = vpack.c.b16 %v6084, %v6083
  %v6124 = vpack.c.b16 %v6086, %v6085
  %v6125 = vpack.c.b16 %v6088, %v6087
  %v6126 = vpack.c.b16 %v6090, %v6089
  %v6127 = vpack.c.b16 %v6092, %v6091
  %v6128 = vpack.c.b16 %v6094, %v6093
  %v6129 = vpack.c.b16 %v6096, %v6095
  %v6130 = vpack.c.b16 %v6098, %v6097
  %6131 = vrot.lane.b32.xlu0 %v6099, 32
  %v6132 = vpop.permute.xlu0 %6131
  %6133 = vrot.lane.b32.xlu0 %v6100, 32
  %v6134 = vpop.permute.xlu0 %6133
  %6135 = vrot.lane.b32.xlu0 %v6101, 32
  %v6136 = vpop.permute.xlu0 %6135
  %6137 = vrot.lane.b32.xlu0 %v6102, 32
  %v6138 = vpop.permute.xlu0 %6137
  %6139 = vrot.lane.b32.xlu0 %v6103, 32
  %v6140 = vpop.permute.xlu0 %6139
  %6141 = vrot.lane.b32.xlu0 %v6104, 32
  %v6142 = vpop.permute.xlu0 %6141
  %6143 = vrot.lane.b32.xlu0 %v6105, 32
  %v6144 = vpop.permute.xlu0 %6143
  %6145 = vrot.lane.b32.xlu0 %v6106, 32
  %v6146 = vpop.permute.xlu0 %6145
  %6147 = vrot.lane.b32.xlu0 %v6107, 32
  %v6148 = vpop.permute.xlu0 %6147
  %6149 = vrot.lane.b32.xlu0 %v6108, 32
  %v6150 = vpop.permute.xlu0 %6149
  %6151 = vrot.lane.b32.xlu0 %v6109, 32
  %v6152 = vpop.permute.xlu0 %6151
  %6153 = vrot.lane.b32.xlu0 %v6110, 32
  %v6154 = vpop.permute.xlu0 %6153
  %6155 = vrot.lane.b32.xlu0 %v6111, 32
  %v6156 = vpop.permute.xlu0 %6155
  %6157 = vrot.lane.b32.xlu0 %v6112, 32
  %v6158 = vpop.permute.xlu0 %6157
  %6159 = vrot.lane.b32.xlu0 %v6113, 32
  %v6160 = vpop.permute.xlu0 %6159
  %6161 = vrot.lane.b32.xlu0 %v6114, 32
  %v6162 = vpop.permute.xlu0 %6161
  %6163 = vrot.lane.b32.xlu0 %v6115, 32
  %v6164 = vpop.permute.xlu0 %6163
  %6165 = vrot.lane.b32.xlu0 %v6116, 32
  %v6166 = vpop.permute.xlu0 %6165
  %6167 = vrot.lane.b32.xlu0 %v6117, 32
  %v6168 = vpop.permute.xlu0 %6167
  %6169 = vrot.lane.b32.xlu0 %v6118, 32
  %v6170 = vpop.permute.xlu0 %6169
  %6171 = vrot.lane.b32.xlu0 %v6119, 32
  %v6172 = vpop.permute.xlu0 %6171
  %6173 = vrot.lane.b32.xlu0 %v6120, 32
  %v6174 = vpop.permute.xlu0 %6173
  %6175 = vrot.lane.b32.xlu0 %v6121, 32
  %v6176 = vpop.permute.xlu0 %6175
  %6177 = vrot.lane.b32.xlu0 %v6122, 32
  %v6178 = vpop.permute.xlu0 %6177
  %6179 = vrot.lane.b32.xlu0 %v6123, 32
  %v6180 = vpop.permute.xlu0 %6179
  %6181 = vrot.lane.b32.xlu0 %v6124, 32
  %v6182 = vpop.permute.xlu0 %6181
  %6183 = vrot.lane.b32.xlu0 %v6125, 32
  %v6184 = vpop.permute.xlu0 %6183
  %6185 = vrot.lane.b32.xlu0 %v6126, 32
  %v6186 = vpop.permute.xlu0 %6185
  %6187 = vrot.lane.b32.xlu0 %v6127, 32
  %v6188 = vpop.permute.xlu0 %6187
  %6189 = vrot.lane.b32.xlu0 %v6128, 32
  %v6190 = vpop.permute.xlu0 %6189
  %6191 = vrot.lane.b32.xlu0 %v6129, 32
  %v6192 = vpop.permute.xlu0 %6191
  %6193 = vrot.lane.b32.xlu0 %v6130, 32
  %v6194 = vpop.permute.xlu0 %6193
  %vm6195 = vcmask 31744
  %v6198 = vsel %vm6195, %v4819, %v4948
  %v6201 = vsel %vm6195, %v4820, %v4950
  %v6204 = vsel %vm6195, %v4821, %v4952
  %v6207 = vsel %vm6195, %v4822, %v4954
  %v6210 = vsel %vm6195, %v4823, %v4956
  %v6213 = vsel %vm6195, %v4824, %v4958
  %v6216 = vsel %vm6195, %v4825, %v4960
  %v6219 = vsel %vm6195, %v4826, %v4962
  %v6222 = vsel %vm6195, %v4827, %v4964
  %v6225 = vsel %vm6195, %v4828, %v4966
  %v6228 = vsel %vm6195, %v4829, %v4968
  %v6231 = vsel %vm6195, %v4830, %v4970
  %v6234 = vsel %vm6195, %v4831, %v4972
  %v6237 = vsel %vm6195, %v4832, %v4974
  %v6240 = vsel %vm6195, %v4833, %v4976
  %v6243 = vsel %vm6195, %v4834, %v4978
  %v6246 = vsel %vm6195, %v4835, %v4980
  %v6249 = vsel %vm6195, %v4836, %v4982
  %v6252 = vsel %vm6195, %v4837, %v4984
  %v6255 = vsel %vm6195, %v4838, %v4986
  %v6258 = vsel %vm6195, %v4839, %v4988
  %v6261 = vsel %vm6195, %v4840, %v4990
  %v6264 = vsel %vm6195, %v4841, %v4992
  %v6267 = vsel %vm6195, %v4842, %v4994
  %v6270 = vsel %vm6195, %v4843, %v4996
  %v6273 = vsel %vm6195, %v4844, %v4998
  %v6276 = vsel %vm6195, %v4845, %v5000
  %v6279 = vsel %vm6195, %v4846, %v5002
  %v6282 = vsel %vm6195, %v4847, %v5004
  %v6285 = vsel %vm6195, %v4848, %v5006
  %v6288 = vsel %vm6195, %v4849, %v5008
  %v6291 = vsel %vm6195, %v4850, %v5010
  %vm6292 = vcmask 64512
  %v6294 = vsel %vm6292, %v6198, %v5108
  %v6296 = vsel %vm6292, %v6201, %v5110
  %v6298 = vsel %vm6292, %v6204, %v5112
  %v6300 = vsel %vm6292, %v6207, %v5114
  %v6302 = vsel %vm6292, %v6210, %v5116
  %v6304 = vsel %vm6292, %v6213, %v5118
  %v6306 = vsel %vm6292, %v6216, %v5120
  %v6308 = vsel %vm6292, %v6219, %v5122
  %v6310 = vsel %vm6292, %v6222, %v5124
  %v6312 = vsel %vm6292, %v6225, %v5126
  %v6314 = vsel %vm6292, %v6228, %v5128
  %v6316 = vsel %vm6292, %v6231, %v5130
  %v6318 = vsel %vm6292, %v6234, %v5132
  %v6320 = vsel %vm6292, %v6237, %v5134
  %v6322 = vsel %vm6292, %v6240, %v5136
  %v6324 = vsel %vm6292, %v6243, %v5138
  %v6326 = vsel %vm6292, %v6246, %v5140
  %v6328 = vsel %vm6292, %v6249, %v5142
  %v6330 = vsel %vm6292, %v6252, %v5144
  %v6332 = vsel %vm6292, %v6255, %v5146
  %v6334 = vsel %vm6292, %v6258, %v5148
  %v6336 = vsel %vm6292, %v6261, %v5150
  %v6338 = vsel %vm6292, %v6264, %v5152
  %v6340 = vsel %vm6292, %v6267, %v5154
  %v6342 = vsel %vm6292, %v6270, %v5156
  %v6344 = vsel %vm6292, %v6273, %v5158
  %v6346 = vsel %vm6292, %v6276, %v5160
  %v6348 = vsel %vm6292, %v6279, %v5162
  %v6350 = vsel %vm6292, %v6282, %v5164
  %v6352 = vsel %vm6292, %v6285, %v5166
  %v6354 = vsel %vm6292, %v6288, %v5168
  %v6356 = vsel %vm6292, %v6291, %v5170
  %vm6357 = vcmask 97280
  %v6359 = vsel %vm6357, %v6294, %v5300
  %v6361 = vsel %vm6357, %v6296, %v5302
  %v6363 = vsel %vm6357, %v6298, %v5304
  %v6365 = vsel %vm6357, %v6300, %v5306
  %v6367 = vsel %vm6357, %v6302, %v5308
  %v6369 = vsel %vm6357, %v6304, %v5310
  %v6371 = vsel %vm6357, %v6306, %v5312
  %v6373 = vsel %vm6357, %v6308, %v5314
  %v6375 = vsel %vm6357, %v6310, %v5316
  %v6377 = vsel %vm6357, %v6312, %v5318
  %v6379 = vsel %vm6357, %v6314, %v5320
  %v6381 = vsel %vm6357, %v6316, %v5322
  %v6383 = vsel %vm6357, %v6318, %v5324
  %v6385 = vsel %vm6357, %v6320, %v5326
  %v6387 = vsel %vm6357, %v6322, %v5328
  %v6389 = vsel %vm6357, %v6324, %v5330
  %v6391 = vsel %vm6357, %v6326, %v5332
  %v6393 = vsel %vm6357, %v6328, %v5334
  %v6395 = vsel %vm6357, %v6330, %v5336
  %v6397 = vsel %vm6357, %v6332, %v5338
  %v6399 = vsel %vm6357, %v6334, %v5340
  %v6401 = vsel %vm6357, %v6336, %v5342
  %v6403 = vsel %vm6357, %v6338, %v5344
  %v6405 = vsel %vm6357, %v6340, %v5346
  %v6407 = vsel %vm6357, %v6342, %v5348
  %v6409 = vsel %vm6357, %v6344, %v5350
  %v6411 = vsel %vm6357, %v6346, %v5352
  %v6413 = vsel %vm6357, %v6348, %v5354
  %v6415 = vsel %vm6357, %v6350, %v5356
  %v6417 = vsel %vm6357, %v6352, %v5358
  %v6419 = vsel %vm6357, %v6354, %v5360
  %v6421 = vsel %vm6357, %v6356, %v5362
  %vm6422 = vcmask 130048
  %v6424 = vsel %vm6422, %v6359, %v5460
  %v6426 = vsel %vm6422, %v6361, %v5462
  %v6428 = vsel %vm6422, %v6363, %v5464
  %v6430 = vsel %vm6422, %v6365, %v5466
  %v6432 = vsel %vm6422, %v6367, %v5468
  %v6434 = vsel %vm6422, %v6369, %v5470
  %v6436 = vsel %vm6422, %v6371, %v5472
  %v6438 = vsel %vm6422, %v6373, %v5474
  %v6440 = vsel %vm6422, %v6375, %v5476
  %v6442 = vsel %vm6422, %v6377, %v5478
  %v6444 = vsel %vm6422, %v6379, %v5480
  %v6446 = vsel %vm6422, %v6381, %v5482
  %v6448 = vsel %vm6422, %v6383, %v5484
  %v6450 = vsel %vm6422, %v6385, %v5486
  %v6452 = vsel %vm6422, %v6387, %v5488
  %v6454 = vsel %vm6422, %v6389, %v5490
  %v6456 = vsel %vm6422, %v6391, %v5492
  %v6458 = vsel %vm6422, %v6393, %v5494
  %v6460 = vsel %vm6422, %v6395, %v5496
  %v6462 = vsel %vm6422, %v6397, %v5498
  %v6464 = vsel %vm6422, %v6399, %v5500
  %v6466 = vsel %vm6422, %v6401, %v5502
  %v6468 = vsel %vm6422, %v6403, %v5504
  %v6470 = vsel %vm6422, %v6405, %v5506
  %v6472 = vsel %vm6422, %v6407, %v5508
  %v6474 = vsel %vm6422, %v6409, %v5510
  %v6476 = vsel %vm6422, %v6411, %v5512
  %v6478 = vsel %vm6422, %v6413, %v5514
  %v6480 = vsel %vm6422, %v6415, %v5516
  %v6482 = vsel %vm6422, %v6417, %v5518
  %v6484 = vsel %vm6422, %v6419, %v5520
  %v6486 = vsel %vm6422, %v6421, %v5522
  %vm6487 = vcmask 162816
  %v6489 = vsel %vm6487, %v6424, %v5620
  %v6491 = vsel %vm6487, %v6426, %v5622
  %v6493 = vsel %vm6487, %v6428, %v5624
  %v6495 = vsel %vm6487, %v6430, %v5626
  %v6497 = vsel %vm6487, %v6432, %v5628
  %v6499 = vsel %vm6487, %v6434, %v5630
  %v6501 = vsel %vm6487, %v6436, %v5632
  %v6503 = vsel %vm6487, %v6438, %v5634
  %v6505 = vsel %vm6487, %v6440, %v5636
  %v6507 = vsel %vm6487, %v6442, %v5638
  %v6509 = vsel %vm6487, %v6444, %v5640
  %v6511 = vsel %vm6487, %v6446, %v5642
  %v6513 = vsel %vm6487, %v6448, %v5644
  %v6515 = vsel %vm6487, %v6450, %v5646
  %v6517 = vsel %vm6487, %v6452, %v5648
  %v6519 = vsel %vm6487, %v6454, %v5650
  %v6521 = vsel %vm6487, %v6456, %v5652
  %v6523 = vsel %vm6487, %v6458, %v5654
  %v6525 = vsel %vm6487, %v6460, %v5656
  %v6527 = vsel %vm6487, %v6462, %v5658
  %v6529 = vsel %vm6487, %v6464, %v5660
  %v6531 = vsel %vm6487, %v6466, %v5662
  %v6533 = vsel %vm6487, %v6468, %v5664
  %v6535 = vsel %vm6487, %v6470, %v5666
  %v6537 = vsel %vm6487, %v6472, %v5668
  %v6539 = vsel %vm6487, %v6474, %v5670
  %v6541 = vsel %vm6487, %v6476, %v5672
  %v6543 = vsel %vm6487, %v6478, %v5674
  %v6545 = vsel %vm6487, %v6480, %v5676
  %v6547 = vsel %vm6487, %v6482, %v5678
  %v6549 = vsel %vm6487, %v6484, %v5680
  %v6551 = vsel %vm6487, %v6486, %v5682
  %vm6552 = vcmask 195584
  %v6554 = vsel %vm6552, %v6489, %v5812
  %v6556 = vsel %vm6552, %v6491, %v5814
  %v6558 = vsel %vm6552, %v6493, %v5816
  %v6560 = vsel %vm6552, %v6495, %v5818
  %v6562 = vsel %vm6552, %v6497, %v5820
  %v6564 = vsel %vm6552, %v6499, %v5822
  %v6566 = vsel %vm6552, %v6501, %v5824
  %v6568 = vsel %vm6552, %v6503, %v5826
  %v6570 = vsel %vm6552, %v6505, %v5828
  %v6572 = vsel %vm6552, %v6507, %v5830
  %v6574 = vsel %vm6552, %v6509, %v5832
  %v6576 = vsel %vm6552, %v6511, %v5834
  %v6578 = vsel %vm6552, %v6513, %v5836
  %v6580 = vsel %vm6552, %v6515, %v5838
  %v6582 = vsel %vm6552, %v6517, %v5840
  %v6584 = vsel %vm6552, %v6519, %v5842
  %v6586 = vsel %vm6552, %v6521, %v5844
  %v6588 = vsel %vm6552, %v6523, %v5846
  %v6590 = vsel %vm6552, %v6525, %v5848
  %v6592 = vsel %vm6552, %v6527, %v5850
  %v6594 = vsel %vm6552, %v6529, %v5852
  %v6596 = vsel %vm6552, %v6531, %v5854
  %v6598 = vsel %vm6552, %v6533, %v5856
  %v6600 = vsel %vm6552, %v6535, %v5858
  %v6602 = vsel %vm6552, %v6537, %v5860
  %v6604 = vsel %vm6552, %v6539, %v5862
  %v6606 = vsel %vm6552, %v6541, %v5864
  %v6608 = vsel %vm6552, %v6543, %v5866
  %v6610 = vsel %vm6552, %v6545, %v5868
  %v6612 = vsel %vm6552, %v6547, %v5870
  %v6614 = vsel %vm6552, %v6549, %v5872
  %v6616 = vsel %vm6552, %v6551, %v5874
  %vm6617 = vcmask 228352
  %v6619 = vsel %vm6617, %v6554, %v5972
  %v6621 = vsel %vm6617, %v6556, %v5974
  %v6623 = vsel %vm6617, %v6558, %v5976
  %v6625 = vsel %vm6617, %v6560, %v5978
  %v6627 = vsel %vm6617, %v6562, %v5980
  %v6629 = vsel %vm6617, %v6564, %v5982
  %v6631 = vsel %vm6617, %v6566, %v5984
  %v6633 = vsel %vm6617, %v6568, %v5986
  %v6635 = vsel %vm6617, %v6570, %v5988
  %v6637 = vsel %vm6617, %v6572, %v5990
  %v6639 = vsel %vm6617, %v6574, %v5992
  %v6641 = vsel %vm6617, %v6576, %v5994
  %v6643 = vsel %vm6617, %v6578, %v5996
  %v6645 = vsel %vm6617, %v6580, %v5998
  %v6647 = vsel %vm6617, %v6582, %v6000
  %v6649 = vsel %vm6617, %v6584, %v6002
  %v6651 = vsel %vm6617, %v6586, %v6004
  %v6653 = vsel %vm6617, %v6588, %v6006
  %v6655 = vsel %vm6617, %v6590, %v6008
  %v6657 = vsel %vm6617, %v6592, %v6010
  %v6659 = vsel %vm6617, %v6594, %v6012
  %v6661 = vsel %vm6617, %v6596, %v6014
  %v6663 = vsel %vm6617, %v6598, %v6016
  %v6665 = vsel %vm6617, %v6600, %v6018
  %v6667 = vsel %vm6617, %v6602, %v6020
  %v6669 = vsel %vm6617, %v6604, %v6022
  %v6671 = vsel %vm6617, %v6606, %v6024
  %v6673 = vsel %vm6617, %v6608, %v6026
  %v6675 = vsel %vm6617, %v6610, %v6028
  %v6677 = vsel %vm6617, %v6612, %v6030
  %v6679 = vsel %vm6617, %v6614, %v6032
  %v6681 = vsel %vm6617, %v6616, %v6034
  %vm6682 = vcmask 261120
  %v6684 = vsel %vm6682, %v6619, %v6132
  %v6686 = vsel %vm6682, %v6621, %v6134
  %v6688 = vsel %vm6682, %v6623, %v6136
  %v6690 = vsel %vm6682, %v6625, %v6138
  %v6692 = vsel %vm6682, %v6627, %v6140
  %v6694 = vsel %vm6682, %v6629, %v6142
  %v6696 = vsel %vm6682, %v6631, %v6144
  %v6698 = vsel %vm6682, %v6633, %v6146
  %v6700 = vsel %vm6682, %v6635, %v6148
  %v6702 = vsel %vm6682, %v6637, %v6150
  %v6704 = vsel %vm6682, %v6639, %v6152
  %v6706 = vsel %vm6682, %v6641, %v6154
  %v6708 = vsel %vm6682, %v6643, %v6156
  %v6710 = vsel %vm6682, %v6645, %v6158
  %v6712 = vsel %vm6682, %v6647, %v6160
  %v6714 = vsel %vm6682, %v6649, %v6162
  %v6716 = vsel %vm6682, %v6651, %v6164
  %v6718 = vsel %vm6682, %v6653, %v6166
  %v6720 = vsel %vm6682, %v6655, %v6168
  %v6722 = vsel %vm6682, %v6657, %v6170
  %v6724 = vsel %vm6682, %v6659, %v6172
  %v6726 = vsel %vm6682, %v6661, %v6174
  %v6728 = vsel %vm6682, %v6663, %v6176
  %v6730 = vsel %vm6682, %v6665, %v6178
  %v6732 = vsel %vm6682, %v6667, %v6180
  %v6734 = vsel %vm6682, %v6669, %v6182
  %v6736 = vsel %vm6682, %v6671, %v6184
  %v6738 = vsel %vm6682, %v6673, %v6186
  %v6740 = vsel %vm6682, %v6675, %v6188
  %v6742 = vsel %vm6682, %v6677, %v6190
  %v6744 = vsel %vm6682, %v6679, %v6192
  %v6746 = vsel %vm6682, %v6681, %v6194
  %v6747 = vld [vmem:[%s1] sm:$0xf]
  %v6748 = vld [vmem:[%s1 + $0x4] sm:$0xf]
  %v6749 = vld [vmem:[%s1 + $0x8] sm:$0xf]
  %v6750 = vld [vmem:[%s1 + $0xc] sm:$0xf]
  %v6751 = vld [vmem:[%s1 + $0x10] sm:$0x3]
  %v6752 = vld [vmem:[%s2] sm:$0x1]
  %v6754 = vperm.slane %v6752, 0
  %v6761 = vunpack.c.l.b16 %v6747
  %v6762 = vunpack.c.l.b16 %v6748
  %v6763 = vunpack.c.l.b16 %v6749
  %v6764 = vunpack.c.l.b16 %v6750
  %v6765 = vunpack.c.l.b16 %v6751
  %v6766 = vpack.c.b16 %v6762, %v6761
  %v6767 = vpack.c.b16 %v6764, %v6763
  %v6768 = vpack.c.b16 %v6765, %v6765
  %vm6771 = vcmask 293888
  %v6772 = vsel %vm6771, %v6684, 0
  %v6774 = vsel %vm6771, %v6686, 0
  %v6776 = vsel %vm6771, %v6688, 0
  %v6778 = vsel %vm6771, %v6690, 0
  %v6780 = vsel %vm6771, %v6692, 0
  %v6782 = vsel %vm6771, %v6694, 0
  %v6784 = vsel %vm6771, %v6696, 0
  %v6786 = vsel %vm6771, %v6698, 0
  %v6788 = vsel %vm6771, %v6700, 0
  %v6790 = vsel %vm6771, %v6702, 0
  %v6792 = vsel %vm6771, %v6704, 0
  %v6794 = vsel %vm6771, %v6706, 0
  %v6796 = vsel %vm6771, %v6708, 0
  %v6798 = vsel %vm6771, %v6710, 0
  %v6800 = vsel %vm6771, %v6712, 0
  %v6802 = vsel %vm6771, %v6714, 0
  %v6804 = vsel %vm6771, %v6716, 0
  %v6806 = vsel %vm6771, %v6718, 0
  %v6808 = vsel %vm6771, %v6720, 0
  %v6810 = vsel %vm6771, %v6722, 0
  %v6812 = vsel %vm6771, %v6724, 0
  %v6814 = vsel %vm6771, %v6726, 0
  %v6816 = vsel %vm6771, %v6728, 0
  %v6818 = vsel %vm6771, %v6730, 0
  %v6820 = vsel %vm6771, %v6732, 0
  %v6822 = vsel %vm6771, %v6734, 0
  %v6824 = vsel %vm6771, %v6736, 0
  %v6826 = vsel %vm6771, %v6738, 0
  %v6828 = vsel %vm6771, %v6740, 0
  %v6830 = vsel %vm6771, %v6742, 0
  %v6832 = vsel %vm6771, %v6744, 0
  %v6834 = vsel %vm6771, %v6746, 0
  %vm6836 = vcmask 1041408
  %v6838 = vsel %vm6836, %v6768, 0
  %6840 = vmatpush.bf16.msra.mxu0 0
  %6841 = vmatpush.bf16.msra.mxu0 0
  %6842 = vmatpush.bf16.msra.mxu0 0
  %6843 = vmatpush.bf16.msra.mxu0 0
  %6844 = vmatpush.bf16.msra.mxu0 0
  %6845 = vmatpush.bf16.msra.mxu0 %v6838
  %6846 = vmatpush.bf16.msra.mxu0 %v6767
  %6847 = vmatpush.bf16.msra.mxu0 %v6766
  %6848 = vmatmul.bf16.gmra.mxu0 %v6772
  %v6849 = vpop.f32.mrf.mxu0
  %v6850 = vadd.f32 %v6754, %v6849
  %v6851 = vpop.f32.mrf.mxu0
  %v6852 = vadd.f32 %v6754, %v6851
  %6853 = vmatmul.bf16.gmra.mxu0 %v6774
  %v6854 = vpop.f32.mrf.mxu0
  %v6855 = vadd.f32 %v6754, %v6854
  %v6856 = vpop.f32.mrf.mxu0
  %v6857 = vadd.f32 %v6754, %v6856
  %6858 = vmatmul.bf16.gmra.mxu0 %v6776
  %v6859 = vpop.f32.mrf.mxu0
  %v6860 = vadd.f32 %v6754, %v6859
  %v6861 = vpop.f32.mrf.mxu0
  %v6862 = vadd.f32 %v6754, %v6861
  %6863 = vmatmul.bf16.gmra.mxu0 %v6778
  %v6864 = vpop.f32.mrf.mxu0
  %v6865 = vadd.f32 %v6754, %v6864
  %v6866 = vpop.f32.mrf.mxu0
  %v6867 = vadd.f32 %v6754, %v6866
  %6868 = vmatmul.bf16.gmra.mxu0 %v6780
  %v6869 = vpop.f32.mrf.mxu0
  %v6870 = vadd.f32 %v6754, %v6869
  %v6871 = vpop.f32.mrf.mxu0
  %v6872 = vadd.f32 %v6754, %v6871
  %6873 = vmatmul.bf16.gmra.mxu0 %v6782
  %v6874 = vpop.f32.mrf.mxu0
  %v6875 = vadd.f32 %v6754, %v6874
  %v6876 = vpop.f32.mrf.mxu0
  %v6877 = vadd.f32 %v6754, %v6876
  %6878 = vmatmul.bf16.gmra.mxu0 %v6784
  %v6879 = vpop.f32.mrf.mxu0
  %v6880 = vadd.f32 %v6754, %v6879
  %v6881 = vpop.f32.mrf.mxu0
  %v6882 = vadd.f32 %v6754, %v6881
  %6883 = vmatmul.bf16.gmra.mxu0 %v6786
  %v6884 = vpop.f32.mrf.mxu0
  %v6885 = vadd.f32 %v6754, %v6884
  %v6886 = vpop.f32.mrf.mxu0
  %v6887 = vadd.f32 %v6754, %v6886
  %6888 = vmatmul.bf16.gmra.mxu0 %v6788
  %v6889 = vpop.f32.mrf.mxu0
  %v6890 = vadd.f32 %v6754, %v6889
  %v6891 = vpop.f32.mrf.mxu0
  %v6892 = vadd.f32 %v6754, %v6891
  %6893 = vmatmul.bf16.gmra.mxu0 %v6790
  %v6894 = vpop.f32.mrf.mxu0
  %v6895 = vadd.f32 %v6754, %v6894
  %v6896 = vpop.f32.mrf.mxu0
  %v6897 = vadd.f32 %v6754, %v6896
  %6898 = vmatmul.bf16.gmra.mxu0 %v6792
  %v6899 = vpop.f32.mrf.mxu0
  %v6900 = vadd.f32 %v6754, %v6899
  %v6901 = vpop.f32.mrf.mxu0
  %v6902 = vadd.f32 %v6754, %v6901
  %6903 = vmatmul.bf16.gmra.mxu0 %v6794
  %v6904 = vpop.f32.mrf.mxu0
  %v6905 = vadd.f32 %v6754, %v6904
  %v6906 = vpop.f32.mrf.mxu0
  %v6907 = vadd.f32 %v6754, %v6906
  %6908 = vmatmul.bf16.gmra.mxu0 %v6796
  %v6909 = vpop.f32.mrf.mxu0
  %v6910 = vadd.f32 %v6754, %v6909
  %v6911 = vpop.f32.mrf.mxu0
  %v6912 = vadd.f32 %v6754, %v6911
  %6913 = vmatmul.bf16.gmra.mxu0 %v6798
  %v6914 = vpop.f32.mrf.mxu0
  %v6915 = vadd.f32 %v6754, %v6914
  %v6916 = vpop.f32.mrf.mxu0
  %v6917 = vadd.f32 %v6754, %v6916
  %6918 = vmatmul.bf16.gmra.mxu0 %v6800
  %v6919 = vpop.f32.mrf.mxu0
  %v6920 = vadd.f32 %v6754, %v6919
  %v6921 = vpop.f32.mrf.mxu0
  %v6922 = vadd.f32 %v6754, %v6921
  %6923 = vmatmul.bf16.gmra.mxu0 %v6802
  %v6924 = vpop.f32.mrf.mxu0
  %v6925 = vadd.f32 %v6754, %v6924
  %v6926 = vpop.f32.mrf.mxu0
  %v6927 = vadd.f32 %v6754, %v6926
  %6928 = vmatmul.bf16.gmra.mxu0 %v6804
  %v6929 = vpop.f32.mrf.mxu0
  %v6930 = vadd.f32 %v6754, %v6929
  %v6931 = vpop.f32.mrf.mxu0
  %v6932 = vadd.f32 %v6754, %v6931
  %6933 = vmatmul.bf16.gmra.mxu0 %v6806
  %v6934 = vpop.f32.mrf.mxu0
  %v6935 = vadd.f32 %v6754, %v6934
  %v6936 = vpop.f32.mrf.mxu0
  %v6937 = vadd.f32 %v6754, %v6936
  %6938 = vmatmul.bf16.gmra.mxu0 %v6808
  %v6939 = vpop.f32.mrf.mxu0
  %v6940 = vadd.f32 %v6754, %v6939
  %v6941 = vpop.f32.mrf.mxu0
  %v6942 = vadd.f32 %v6754, %v6941
  %6943 = vmatmul.bf16.gmra.mxu0 %v6810
  %v6944 = vpop.f32.mrf.mxu0
  %v6945 = vadd.f32 %v6754, %v6944
  %v6946 = vpop.f32.mrf.mxu0
  %v6947 = vadd.f32 %v6754, %v6946
  %6948 = vmatmul.bf16.gmra.mxu0 %v6812
  %v6949 = vpop.f32.mrf.mxu0
  %v6950 = vadd.f32 %v6754, %v6949
  %v6951 = vpop.f32.mrf.mxu0
  %v6952 = vadd.f32 %v6754, %v6951
  %6953 = vmatmul.bf16.gmra.mxu0 %v6814
  %v6954 = vpop.f32.mrf.mxu0
  %v6955 = vadd.f32 %v6754, %v6954
  %v6956 = vpop.f32.mrf.mxu0
  %v6957 = vadd.f32 %v6754, %v6956
  %6958 = vmatmul.bf16.gmra.mxu0 %v6816
  %v6959 = vpop.f32.mrf.mxu0
  %v6960 = vadd.f32 %v6754, %v6959
  %v6961 = vpop.f32.mrf.mxu0
  %v6962 = vadd.f32 %v6754, %v6961
  %6963 = vmatmul.bf16.gmra.mxu0 %v6818
  %v6964 = vpop.f32.mrf.mxu0
  %v6965 = vadd.f32 %v6754, %v6964
  %v6966 = vpop.f32.mrf.mxu0
  %v6967 = vadd.f32 %v6754, %v6966
  %6968 = vmatmul.bf16.gmra.mxu0 %v6820
  %v6969 = vpop.f32.mrf.mxu0
  %v6970 = vadd.f32 %v6754, %v6969
  %v6971 = vpop.f32.mrf.mxu0
  %v6972 = vadd.f32 %v6754, %v6971
  %6973 = vmatmul.bf16.gmra.mxu0 %v6822
  %v6974 = vpop.f32.mrf.mxu0
  %v6975 = vadd.f32 %v6754, %v6974
  %v6976 = vpop.f32.mrf.mxu0
  %v6977 = vadd.f32 %v6754, %v6976
  %6978 = vmatmul.bf16.gmra.mxu0 %v6824
  %v6979 = vpop.f32.mrf.mxu0
  %v6980 = vadd.f32 %v6754, %v6979
  %v6981 = vpop.f32.mrf.mxu0
  %v6982 = vadd.f32 %v6754, %v6981
  %6983 = vmatmul.bf16.gmra.mxu0 %v6826
  %v6984 = vpop.f32.mrf.mxu0
  %v6985 = vadd.f32 %v6754, %v6984
  %v6986 = vpop.f32.mrf.mxu0
  %v6987 = vadd.f32 %v6754, %v6986
  %6988 = vmatmul.bf16.gmra.mxu0 %v6828
  %v6989 = vpop.f32.mrf.mxu0
  %v6990 = vadd.f32 %v6754, %v6989
  %v6991 = vpop.f32.mrf.mxu0
  %v6992 = vadd.f32 %v6754, %v6991
  %6993 = vmatmul.bf16.gmra.mxu0 %v6830
  %v6994 = vpop.f32.mrf.mxu0
  %v6995 = vadd.f32 %v6754, %v6994
  %v6996 = vpop.f32.mrf.mxu0
  %v6997 = vadd.f32 %v6754, %v6996
  %6998 = vmatmul.bf16.gmra.mxu0 %v6832
  %v6999 = vpop.f32.mrf.mxu0
  %v7000 = vadd.f32 %v6754, %v6999
  %v7001 = vpop.f32.mrf.mxu0
  %v7002 = vadd.f32 %v6754, %v7001
  %7003 = vmatmul.bf16.gmra.mxu0 %v6834
  %v7004 = vpop.f32.mrf.mxu0
  %v7005 = vadd.f32 %v6754, %v7004
  %v7006 = vpop.f32.mrf.mxu0
  %v7007 = vadd.f32 %v6754, %v7006
  %7008 = vdwg.mxu0
  %v7009 = vmax.f32 %v6850, 0.0
  %v7010 = vmax.f32 %v6852, 0.0
  %v7011 = vmax.f32 %v6855, 0.0
  %v7012 = vmax.f32 %v6857, 0.0
  %v7013 = vmax.f32 %v6860, 0.0
  %v7014 = vmax.f32 %v6862, 0.0
  %v7015 = vmax.f32 %v6865, 0.0
  %v7016 = vmax.f32 %v6867, 0.0
  %v7017 = vmax.f32 %v6870, 0.0
  %v7018 = vmax.f32 %v6872, 0.0
  %v7019 = vmax.f32 %v6875, 0.0
  %v7020 = vmax.f32 %v6877, 0.0
  %v7021 = vmax.f32 %v6880, 0.0
  %v7022 = vmax.f32 %v6882, 0.0
  %v7023 = vmax.f32 %v6885, 0.0
  %v7024 = vmax.f32 %v6887, 0.0
  %v7025 = vmax.f32 %v6890, 0.0
  %v7026 = vmax.f32 %v6892, 0.0
  %v7027 = vmax.f32 %v6895, 0.0
  %v7028 = vmax.f32 %v6897, 0.0
  %v7029 = vmax.f32 %v6900, 0.0
  %v7030 = vmax.f32 %v6902, 0.0
  %v7031 = vmax.f32 %v6905, 0.0
  %v7032 = vmax.f32 %v6907, 0.0
  %v7033 = vmax.f32 %v6910, 0.0
  %v7034 = vmax.f32 %v6912, 0.0
  %v7035 = vmax.f32 %v6915, 0.0
  %v7036 = vmax.f32 %v6917, 0.0
  %v7037 = vmax.f32 %v6920, 0.0
  %v7038 = vmax.f32 %v6922, 0.0
  %v7039 = vmax.f32 %v6925, 0.0
  %v7040 = vmax.f32 %v6927, 0.0
  %v7041 = vmax.f32 %v6930, 0.0
  %v7042 = vmax.f32 %v6932, 0.0
  %v7043 = vmax.f32 %v6935, 0.0
  %v7044 = vmax.f32 %v6937, 0.0
  %v7045 = vmax.f32 %v6940, 0.0
  %v7046 = vmax.f32 %v6942, 0.0
  %v7047 = vmax.f32 %v6945, 0.0
  %v7048 = vmax.f32 %v6947, 0.0
  %v7049 = vmax.f32 %v6950, 0.0
  %v7050 = vmax.f32 %v6952, 0.0
  %v7051 = vmax.f32 %v6955, 0.0
  %v7052 = vmax.f32 %v6957, 0.0
  %v7053 = vmax.f32 %v6960, 0.0
  %v7054 = vmax.f32 %v6962, 0.0
  %v7055 = vmax.f32 %v6965, 0.0
  %v7056 = vmax.f32 %v6967, 0.0
  %v7057 = vmax.f32 %v6970, 0.0
  %v7058 = vmax.f32 %v6972, 0.0
  %v7059 = vmax.f32 %v6975, 0.0
  %v7060 = vmax.f32 %v6977, 0.0
  %v7061 = vmax.f32 %v6980, 0.0
  %v7062 = vmax.f32 %v6982, 0.0
  %v7063 = vmax.f32 %v6985, 0.0
  %v7064 = vmax.f32 %v6987, 0.0
  %v7065 = vmax.f32 %v6990, 0.0
  %v7066 = vmax.f32 %v6992, 0.0
  %v7067 = vmax.f32 %v6995, 0.0
  %v7068 = vmax.f32 %v6997, 0.0
  %v7069 = vmax.f32 %v7000, 0.0
  %v7070 = vmax.f32 %v7002, 0.0
  %v7071 = vmax.f32 %v7005, 0.0
  %v7072 = vmax.f32 %v7007, 0.0
  %v7073 = vpack.c.bf16 %v7009, %v7009
  %v7074 = vpack.c.bf16 %v7010, %v7010
  %v7075 = vpack.c.bf16 %v7011, %v7011
  %v7076 = vpack.c.bf16 %v7012, %v7012
  %v7077 = vpack.c.bf16 %v7013, %v7013
  %v7078 = vpack.c.bf16 %v7014, %v7014
  %v7079 = vpack.c.bf16 %v7015, %v7015
  %v7080 = vpack.c.bf16 %v7016, %v7016
  %v7081 = vpack.c.bf16 %v7017, %v7017
  %v7082 = vpack.c.bf16 %v7018, %v7018
  %v7083 = vpack.c.bf16 %v7019, %v7019
  %v7084 = vpack.c.bf16 %v7020, %v7020
  %v7085 = vpack.c.bf16 %v7021, %v7021
  %v7086 = vpack.c.bf16 %v7022, %v7022
  %v7087 = vpack.c.bf16 %v7023, %v7023
  %v7088 = vpack.c.bf16 %v7024, %v7024
  %v7089 = vpack.c.bf16 %v7025, %v7025
  %v7090 = vpack.c.bf16 %v7026, %v7026
  %v7091 = vpack.c.bf16 %v7027, %v7027
  %v7092 = vpack.c.bf16 %v7028, %v7028
  %v7093 = vpack.c.bf16 %v7029, %v7029
  %v7094 = vpack.c.bf16 %v7030, %v7030
  %v7095 = vpack.c.bf16 %v7031, %v7031
  %v7096 = vpack.c.bf16 %v7032, %v7032
  %v7097 = vpack.c.bf16 %v7033, %v7033
  %v7098 = vpack.c.bf16 %v7034, %v7034
  %v7099 = vpack.c.bf16 %v7035, %v7035
  %v7100 = vpack.c.bf16 %v7036, %v7036
  %v7101 = vpack.c.bf16 %v7037, %v7037
  %v7102 = vpack.c.bf16 %v7038, %v7038
  %v7103 = vpack.c.bf16 %v7039, %v7039
  %v7104 = vpack.c.bf16 %v7040, %v7040
  %v7105 = vpack.c.bf16 %v7041, %v7041
  %v7106 = vpack.c.bf16 %v7042, %v7042
  %v7107 = vpack.c.bf16 %v7043, %v7043
  %v7108 = vpack.c.bf16 %v7044, %v7044
  %v7109 = vpack.c.bf16 %v7045, %v7045
  %v7110 = vpack.c.bf16 %v7046, %v7046
  %v7111 = vpack.c.bf16 %v7047, %v7047
  %v7112 = vpack.c.bf16 %v7048, %v7048
  %v7113 = vpack.c.bf16 %v7049, %v7049
  %v7114 = vpack.c.bf16 %v7050, %v7050
  %v7115 = vpack.c.bf16 %v7051, %v7051
  %v7116 = vpack.c.bf16 %v7052, %v7052
  %v7117 = vpack.c.bf16 %v7053, %v7053
  %v7118 = vpack.c.bf16 %v7054, %v7054
  %v7119 = vpack.c.bf16 %v7055, %v7055
  %v7120 = vpack.c.bf16 %v7056, %v7056
  %v7121 = vpack.c.bf16 %v7057, %v7057
  %v7122 = vpack.c.bf16 %v7058, %v7058
  %v7123 = vpack.c.bf16 %v7059, %v7059
  %v7124 = vpack.c.bf16 %v7060, %v7060
  %v7125 = vpack.c.bf16 %v7061, %v7061
  %v7126 = vpack.c.bf16 %v7062, %v7062
  %v7127 = vpack.c.bf16 %v7063, %v7063
  %v7128 = vpack.c.bf16 %v7064, %v7064
  %v7129 = vpack.c.bf16 %v7065, %v7065
  %v7130 = vpack.c.bf16 %v7066, %v7066
  %v7131 = vpack.c.bf16 %v7067, %v7067
  %v7132 = vpack.c.bf16 %v7068, %v7068
  %v7133 = vpack.c.bf16 %v7069, %v7069
  %v7134 = vpack.c.bf16 %v7070, %v7070
  %v7135 = vpack.c.bf16 %v7071, %v7071
  %v7136 = vpack.c.bf16 %v7072, %v7072
  %v7138 = vshrl.u32 %v7073, 16
  %v7140 = vrot.slane %v7138, 7
  %v7141 = vshll.u32 %v7073, 16
  %v7143 = vor.u32 %v7140, %v7141
  %v7144 = vrot.slane %v7140, 4
  %v7146 = vshrl.u32 %v7074, 16
  %v7148 = vrot.slane %v7146, 7
  %v7149 = vshll.u32 %v7074, 16
  %v7151 = vor.u32 %v7148, %v7149
  %v7152 = vsel %vm197, %v7144, %v7151
  %v7153 = vrot.slane %v7148, 4
  %v7155 = vshrl.u32 %v7075, 16
  %v7157 = vrot.slane %v7155, 7
  %v7158 = vshll.u32 %v7075, 16
  %v7160 = vor.u32 %v7157, %v7158
  %v7161 = vrot.slane %v7157, 4
  %v7163 = vshrl.u32 %v7076, 16
  %v7165 = vrot.slane %v7163, 7
  %v7166 = vshll.u32 %v7076, 16
  %v7168 = vor.u32 %v7165, %v7166
  %v7169 = vsel %vm197, %v7161, %v7168
  %v7170 = vrot.slane %v7165, 4
  %v7172 = vshrl.u32 %v7077, 16
  %v7174 = vrot.slane %v7172, 7
  %v7175 = vshll.u32 %v7077, 16
  %v7177 = vor.u32 %v7174, %v7175
  %v7178 = vrot.slane %v7174, 4
  %v7180 = vshrl.u32 %v7078, 16
  %v7182 = vrot.slane %v7180, 7
  %v7183 = vshll.u32 %v7078, 16
  %v7185 = vor.u32 %v7182, %v7183
  %v7186 = vsel %vm197, %v7178, %v7185
  %v7187 = vrot.slane %v7182, 4
  %v7189 = vshrl.u32 %v7079, 16
  %v7191 = vrot.slane %v7189, 7
  %v7192 = vshll.u32 %v7079, 16
  %v7194 = vor.u32 %v7191, %v7192
  %v7195 = vrot.slane %v7191, 4
  %v7197 = vshrl.u32 %v7080, 16
  %v7199 = vrot.slane %v7197, 7
  %v7200 = vshll.u32 %v7080, 16
  %v7202 = vor.u32 %v7199, %v7200
  %v7203 = vsel %vm197, %v7195, %v7202
  %v7204 = vrot.slane %v7199, 4
  %v7206 = vshrl.u32 %v7081, 16
  %v7208 = vrot.slane %v7206, 7
  %v7209 = vshll.u32 %v7081, 16
  %v7211 = vor.u32 %v7208, %v7209
  %v7212 = vrot.slane %v7208, 4
  %v7214 = vshrl.u32 %v7082, 16
  %v7216 = vrot.slane %v7214, 7
  %v7217 = vshll.u32 %v7082, 16
  %v7219 = vor.u32 %v7216, %v7217
  %v7220 = vsel %vm197, %v7212, %v7219
  %v7221 = vrot.slane %v7216, 4
  %v7223 = vshrl.u32 %v7083, 16
  %v7225 = vrot.slane %v7223, 7
  %v7226 = vshll.u32 %v7083, 16
  %v7228 = vor.u32 %v7225, %v7226
  %v7229 = vrot.slane %v7225, 4
  %v7231 = vshrl.u32 %v7084, 16
  %v7233 = vrot.slane %v7231, 7
  %v7234 = vshll.u32 %v7084, 16
  %v7236 = vor.u32 %v7233, %v7234
  %v7237 = vsel %vm197, %v7229, %v7236
  %v7238 = vrot.slane %v7233, 4
  %v7240 = vshrl.u32 %v7085, 16
  %v7242 = vrot.slane %v7240, 7
  %v7243 = vshll.u32 %v7085, 16
  %v7245 = vor.u32 %v7242, %v7243
  %v7246 = vrot.slane %v7242, 4
  %v7248 = vshrl.u32 %v7086, 16
  %v7250 = vrot.slane %v7248, 7
  %v7251 = vshll.u32 %v7086, 16
  %v7253 = vor.u32 %v7250, %v7251
  %v7254 = vsel %vm197, %v7246, %v7253
  %v7255 = vrot.slane %v7250, 4
  %v7257 = vshrl.u32 %v7087, 16
  %v7259 = vrot.slane %v7257, 7
  %v7260 = vshll.u32 %v7087, 16
  %v7262 = vor.u32 %v7259, %v7260
  %v7263 = vrot.slane %v7259, 4
  %v7265 = vshrl.u32 %v7088, 16
  %v7267 = vrot.slane %v7265, 7
  %v7268 = vshll.u32 %v7088, 16
  %v7270 = vor.u32 %v7267, %v7268
  %v7271 = vsel %vm197, %v7263, %v7270
  %v7272 = vrot.slane %v7267, 4
  %v7274 = vshrl.u32 %v7089, 16
  %v7276 = vrot.slane %v7274, 7
  %v7277 = vshll.u32 %v7089, 16
  %v7279 = vor.u32 %v7276, %v7277
  %v7280 = vrot.slane %v7276, 4
  %v7282 = vshrl.u32 %v7090, 16
  %v7284 = vrot.slane %v7282, 7
  %v7285 = vshll.u32 %v7090, 16
  %v7287 = vor.u32 %v7284, %v7285
  %v7288 = vsel %vm197, %v7280, %v7287
  %v7289 = vrot.slane %v7284, 4
  %v7291 = vshrl.u32 %v7091, 16
  %v7293 = vrot.slane %v7291, 7
  %v7294 = vshll.u32 %v7091, 16
  %v7296 = vor.u32 %v7293, %v7294
  %v7297 = vrot.slane %v7293, 4
  %v7299 = vshrl.u32 %v7092, 16
  %v7301 = vrot.slane %v7299, 7
  %v7302 = vshll.u32 %v7092, 16
  %v7304 = vor.u32 %v7301, %v7302
  %v7305 = vsel %vm197, %v7297, %v7304
  %v7306 = vrot.slane %v7301, 4
  %v7308 = vshrl.u32 %v7093, 16
  %v7310 = vrot.slane %v7308, 7
  %v7311 = vshll.u32 %v7093, 16
  %v7313 = vor.u32 %v7310, %v7311
  %v7314 = vrot.slane %v7310, 4
  %v7316 = vshrl.u32 %v7094, 16
  %v7318 = vrot.slane %v7316, 7
  %v7319 = vshll.u32 %v7094, 16
  %v7321 = vor.u32 %v7318, %v7319
  %v7322 = vsel %vm197, %v7314, %v7321
  %v7323 = vrot.slane %v7318, 4
  %v7325 = vshrl.u32 %v7095, 16
  %v7327 = vrot.slane %v7325, 7
  %v7328 = vshll.u32 %v7095, 16
  %v7330 = vor.u32 %v7327, %v7328
  %v7331 = vrot.slane %v7327, 4
  %v7333 = vshrl.u32 %v7096, 16
  %v7335 = vrot.slane %v7333, 7
  %v7336 = vshll.u32 %v7096, 16
  %v7338 = vor.u32 %v7335, %v7336
  %v7339 = vsel %vm197, %v7331, %v7338
  %v7340 = vrot.slane %v7335, 4
  %v7342 = vshrl.u32 %v7097, 16
  %v7344 = vrot.slane %v7342, 7
  %v7345 = vshll.u32 %v7097, 16
  %v7347 = vor.u32 %v7344, %v7345
  %v7348 = vrot.slane %v7344, 4
  %v7350 = vshrl.u32 %v7098, 16
  %v7352 = vrot.slane %v7350, 7
  %v7353 = vshll.u32 %v7098, 16
  %v7355 = vor.u32 %v7352, %v7353
  %v7356 = vsel %vm197, %v7348, %v7355
  %v7357 = vrot.slane %v7352, 4
  %v7359 = vshrl.u32 %v7099, 16
  %v7361 = vrot.slane %v7359, 7
  %v7362 = vshll.u32 %v7099, 16
  %v7364 = vor.u32 %v7361, %v7362
  %v7365 = vrot.slane %v7361, 4
  %v7367 = vshrl.u32 %v7100, 16
  %v7369 = vrot.slane %v7367, 7
  %v7370 = vshll.u32 %v7100, 16
  %v7372 = vor.u32 %v7369, %v7370
  %v7373 = vsel %vm197, %v7365, %v7372
  %v7374 = vrot.slane %v7369, 4
  %v7376 = vshrl.u32 %v7101, 16
  %v7378 = vrot.slane %v7376, 7
  %v7379 = vshll.u32 %v7101, 16
  %v7381 = vor.u32 %v7378, %v7379
  %v7382 = vrot.slane %v7378, 4
  %v7384 = vshrl.u32 %v7102, 16
  %v7386 = vrot.slane %v7384, 7
  %v7387 = vshll.u32 %v7102, 16
  %v7389 = vor.u32 %v7386, %v7387
  %v7390 = vsel %vm197, %v7382, %v7389
  %v7391 = vrot.slane %v7386, 4
  %v7393 = vshrl.u32 %v7103, 16
  %v7395 = vrot.slane %v7393, 7
  %v7396 = vshll.u32 %v7103, 16
  %v7398 = vor.u32 %v7395, %v7396
  %v7399 = vrot.slane %v7395, 4
  %v7401 = vshrl.u32 %v7104, 16
  %v7403 = vrot.slane %v7401, 7
  %v7404 = vshll.u32 %v7104, 16
  %v7406 = vor.u32 %v7403, %v7404
  %v7407 = vsel %vm197, %v7399, %v7406
  %v7408 = vrot.slane %v7403, 4
  %v7410 = vshrl.u32 %v7105, 16
  %v7412 = vrot.slane %v7410, 7
  %v7413 = vshll.u32 %v7105, 16
  %v7415 = vor.u32 %v7412, %v7413
  %v7416 = vrot.slane %v7412, 4
  %v7418 = vshrl.u32 %v7106, 16
  %v7420 = vrot.slane %v7418, 7
  %v7421 = vshll.u32 %v7106, 16
  %v7423 = vor.u32 %v7420, %v7421
  %v7424 = vsel %vm197, %v7416, %v7423
  %v7425 = vrot.slane %v7420, 4
  %v7427 = vshrl.u32 %v7107, 16
  %v7429 = vrot.slane %v7427, 7
  %v7430 = vshll.u32 %v7107, 16
  %v7432 = vor.u32 %v7429, %v7430
  %v7433 = vrot.slane %v7429, 4
  %v7435 = vshrl.u32 %v7108, 16
  %v7437 = vrot.slane %v7435, 7
  %v7438 = vshll.u32 %v7108, 16
  %v7440 = vor.u32 %v7437, %v7438
  %v7441 = vsel %vm197, %v7433, %v7440
  %v7442 = vrot.slane %v7437, 4
  %v7444 = vshrl.u32 %v7109, 16
  %v7446 = vrot.slane %v7444, 7
  %v7447 = vshll.u32 %v7109, 16
  %v7449 = vor.u32 %v7446, %v7447
  %v7450 = vrot.slane %v7446, 4
  %v7452 = vshrl.u32 %v7110, 16
  %v7454 = vrot.slane %v7452, 7
  %v7455 = vshll.u32 %v7110, 16
  %v7457 = vor.u32 %v7454, %v7455
  %v7458 = vsel %vm197, %v7450, %v7457
  %v7459 = vrot.slane %v7454, 4
  %v7461 = vshrl.u32 %v7111, 16
  %v7463 = vrot.slane %v7461, 7
  %v7464 = vshll.u32 %v7111, 16
  %v7466 = vor.u32 %v7463, %v7464
  %v7467 = vrot.slane %v7463, 4
  %v7469 = vshrl.u32 %v7112, 16
  %v7471 = vrot.slane %v7469, 7
  %v7472 = vshll.u32 %v7112, 16
  %v7474 = vor.u32 %v7471, %v7472
  %v7475 = vsel %vm197, %v7467, %v7474
  %v7476 = vrot.slane %v7471, 4
  %v7478 = vshrl.u32 %v7113, 16
  %v7480 = vrot.slane %v7478, 7
  %v7481 = vshll.u32 %v7113, 16
  %v7483 = vor.u32 %v7480, %v7481
  %v7484 = vrot.slane %v7480, 4
  %v7486 = vshrl.u32 %v7114, 16
  %v7488 = vrot.slane %v7486, 7
  %v7489 = vshll.u32 %v7114, 16
  %v7491 = vor.u32 %v7488, %v7489
  %v7492 = vsel %vm197, %v7484, %v7491
  %v7493 = vrot.slane %v7488, 4
  %v7495 = vshrl.u32 %v7115, 16
  %v7497 = vrot.slane %v7495, 7
  %v7498 = vshll.u32 %v7115, 16
  %v7500 = vor.u32 %v7497, %v7498
  %v7501 = vrot.slane %v7497, 4
  %v7503 = vshrl.u32 %v7116, 16
  %v7505 = vrot.slane %v7503, 7
  %v7506 = vshll.u32 %v7116, 16
  %v7508 = vor.u32 %v7505, %v7506
  %v7509 = vsel %vm197, %v7501, %v7508
  %v7510 = vrot.slane %v7505, 4
  %v7512 = vshrl.u32 %v7117, 16
  %v7514 = vrot.slane %v7512, 7
  %v7515 = vshll.u32 %v7117, 16
  %v7517 = vor.u32 %v7514, %v7515
  %v7518 = vrot.slane %v7514, 4
  %v7520 = vshrl.u32 %v7118, 16
  %v7522 = vrot.slane %v7520, 7
  %v7523 = vshll.u32 %v7118, 16
  %v7525 = vor.u32 %v7522, %v7523
  %v7526 = vsel %vm197, %v7518, %v7525
  %v7527 = vrot.slane %v7522, 4
  %v7529 = vshrl.u32 %v7119, 16
  %v7531 = vrot.slane %v7529, 7
  %v7532 = vshll.u32 %v7119, 16
  %v7534 = vor.u32 %v7531, %v7532
  %v7535 = vrot.slane %v7531, 4
  %v7537 = vshrl.u32 %v7120, 16
  %v7539 = vrot.slane %v7537, 7
  %v7540 = vshll.u32 %v7120, 16
  %v7542 = vor.u32 %v7539, %v7540
  %v7543 = vsel %vm197, %v7535, %v7542
  %v7544 = vrot.slane %v7539, 4
  %v7546 = vshrl.u32 %v7121, 16
  %v7548 = vrot.slane %v7546, 7
  %v7549 = vshll.u32 %v7121, 16
  %v7551 = vor.u32 %v7548, %v7549
  %v7552 = vrot.slane %v7548, 4
  %v7554 = vshrl.u32 %v7122, 16
  %v7556 = vrot.slane %v7554, 7
  %v7557 = vshll.u32 %v7122, 16
  %v7559 = vor.u32 %v7556, %v7557
  %v7560 = vsel %vm197, %v7552, %v7559
  %v7561 = vrot.slane %v7556, 4
  %v7563 = vshrl.u32 %v7123, 16
  %v7565 = vrot.slane %v7563, 7
  %v7566 = vshll.u32 %v7123, 16
  %v7568 = vor.u32 %v7565, %v7566
  %v7569 = vrot.slane %v7565, 4
  %v7571 = vshrl.u32 %v7124, 16
  %v7573 = vrot.slane %v7571, 7
  %v7574 = vshll.u32 %v7124, 16
  %v7576 = vor.u32 %v7573, %v7574
  %v7577 = vsel %vm197, %v7569, %v7576
  %v7578 = vrot.slane %v7573, 4
  %v7580 = vshrl.u32 %v7125, 16
  %v7582 = vrot.slane %v7580, 7
  %v7583 = vshll.u32 %v7125, 16
  %v7585 = vor.u32 %v7582, %v7583
  %v7586 = vrot.slane %v7582, 4
  %v7588 = vshrl.u32 %v7126, 16
  %v7590 = vrot.slane %v7588, 7
  %v7591 = vshll.u32 %v7126, 16
  %v7593 = vor.u32 %v7590, %v7591
  %v7594 = vsel %vm197, %v7586, %v7593
  %v7595 = vrot.slane %v7590, 4
  %v7597 = vshrl.u32 %v7127, 16
  %v7599 = vrot.slane %v7597, 7
  %v7600 = vshll.u32 %v7127, 16
  %v7602 = vor.u32 %v7599, %v7600
  %v7603 = vrot.slane %v7599, 4
  %v7605 = vshrl.u32 %v7128, 16
  %v7607 = vrot.slane %v7605, 7
  %v7608 = vshll.u32 %v7128, 16
  %v7610 = vor.u32 %v7607, %v7608
  %v7611 = vsel %vm197, %v7603, %v7610
  %v7612 = vrot.slane %v7607, 4
  %v7614 = vshrl.u32 %v7129, 16
  %v7616 = vrot.slane %v7614, 7
  %v7617 = vshll.u32 %v7129, 16
  %v7619 = vor.u32 %v7616, %v7617
  %v7620 = vrot.slane %v7616, 4
  %v7622 = vshrl.u32 %v7130, 16
  %v7624 = vrot.slane %v7622, 7
  %v7625 = vshll.u32 %v7130, 16
  %v7627 = vor.u32 %v7624, %v7625
  %v7628 = vsel %vm197, %v7620, %v7627
  %v7629 = vrot.slane %v7624, 4
  %v7631 = vshrl.u32 %v7131, 16
  %v7633 = vrot.slane %v7631, 7
  %v7634 = vshll.u32 %v7131, 16
  %v7636 = vor.u32 %v7633, %v7634
  %v7637 = vrot.slane %v7633, 4
  %v7639 = vshrl.u32 %v7132, 16
  %v7641 = vrot.slane %v7639, 7
  %v7642 = vshll.u32 %v7132, 16
  %v7644 = vor.u32 %v7641, %v7642
  %v7645 = vsel %vm197, %v7637, %v7644
  %v7646 = vrot.slane %v7641, 4
  %v7648 = vshrl.u32 %v7133, 16
  %v7650 = vrot.slane %v7648, 7
  %v7651 = vshll.u32 %v7133, 16
  %v7653 = vor.u32 %v7650, %v7651
  %v7654 = vrot.slane %v7650, 4
  %v7656 = vshrl.u32 %v7134, 16
  %v7658 = vrot.slane %v7656, 7
  %v7659 = vshll.u32 %v7134, 16
  %v7661 = vor.u32 %v7658, %v7659
  %v7662 = vsel %vm197, %v7654, %v7661
  %v7663 = vrot.slane %v7658, 4
  %v7665 = vshrl.u32 %v7135, 16
  %v7667 = vrot.slane %v7665, 7
  %v7668 = vshll.u32 %v7135, 16
  %v7670 = vor.u32 %v7667, %v7668
  %v7671 = vrot.slane %v7667, 4
  %v7673 = vshrl.u32 %v7136, 16
  %v7675 = vrot.slane %v7673, 7
  %v7676 = vshll.u32 %v7136, 16
  %v7678 = vor.u32 %v7675, %v7676
  %v7679 = vsel %vm197, %v7671, %v7678
  %v7680 = vrot.slane %v7675, 4
  %v7777 = vsel %vm841, %v7143, %v2290
  %7778 = vst [vmem:[%s838] sm:$0xf] %v7777
  %7779 = vst.msk [vmem:[%s838 + $0x4] sm:$0xf] %vm85, %v7152
  %v7780 = vld [vmem:[%s838 + $0x8] sm:$0x1]
  %v7781 = vsel %vm847, %v7153, %v7780
  %7782 = vst [vmem:[%s838 + $0x8] sm:$0x1] %v7781
  %v7783 = vld [vmem:[%s838 + $0xc] sm:$0xf]
  %v7784 = vsel %vm841, %v7160, %v7783
  %7785 = vst [vmem:[%s838 + $0xc] sm:$0xf] %v7784
  %7786 = vst.msk [vmem:[%s838 + $0x10] sm:$0xf] %vm85, %v7169
  %v7787 = vld [vmem:[%s838 + $0x14] sm:$0x1]
  %v7788 = vsel %vm847, %v7170, %v7787
  %7789 = vst [vmem:[%s838 + $0x14] sm:$0x1] %v7788
  %v7790 = vld [vmem:[%s838 + $0x18] sm:$0xf]
  %v7791 = vsel %vm841, %v7177, %v7790
  %7792 = vst [vmem:[%s838 + $0x18] sm:$0xf] %v7791
  %7793 = vst.msk [vmem:[%s838 + $0x1c] sm:$0xf] %vm85, %v7186
  %v7794 = vld [vmem:[%s838 + $0x20] sm:$0x1]
  %v7795 = vsel %vm847, %v7187, %v7794
  %7796 = vst [vmem:[%s838 + $0x20] sm:$0x1] %v7795
  %v7797 = vld [vmem:[%s838 + $0x24] sm:$0xf]
  %v7798 = vsel %vm841, %v7194, %v7797
  %7799 = vst [vmem:[%s838 + $0x24] sm:$0xf] %v7798
  %7800 = vst.msk [vmem:[%s838 + $0x28] sm:$0xf] %vm85, %v7203
  %v7801 = vld [vmem:[%s838 + $0x2c] sm:$0x1]
  %v7802 = vsel %vm847, %v7204, %v7801
  %7803 = vst [vmem:[%s838 + $0x2c] sm:$0x1] %v7802
  %v7804 = vld [vmem:[%s838 + $0x30] sm:$0xf]
  %v7805 = vsel %vm841, %v7211, %v7804
  %7806 = vst [vmem:[%s838 + $0x30] sm:$0xf] %v7805
  %7807 = vst.msk [vmem:[%s838 + $0x34] sm:$0xf] %vm85, %v7220
  %v7808 = vld [vmem:[%s838 + $0x38] sm:$0x1]
  %v7809 = vsel %vm847, %v7221, %v7808
  %7810 = vst [vmem:[%s838 + $0x38] sm:$0x1] %v7809
  %v7811 = vld [vmem:[%s838 + $0x3c] sm:$0xf]
  %v7812 = vsel %vm841, %v7228, %v7811
  %7813 = vst [vmem:[%s838 + $0x3c] sm:$0xf] %v7812
  %7814 = vst.msk [vmem:[%s838 + $0x40] sm:$0xf] %vm85, %v7237
  %v7815 = vld [vmem:[%s838 + $0x44] sm:$0x1]
  %v7816 = vsel %vm847, %v7238, %v7815
  %7817 = vst [vmem:[%s838 + $0x44] sm:$0x1] %v7816
  %v7818 = vld [vmem:[%s838 + $0x48] sm:$0xf]
  %v7819 = vsel %vm841, %v7245, %v7818
  %7820 = vst [vmem:[%s838 + $0x48] sm:$0xf] %v7819
  %7821 = vst.msk [vmem:[%s838 + $0x4c] sm:$0xf] %vm85, %v7254
  %v7822 = vld [vmem:[%s838 + $0x50] sm:$0x1]
  %v7823 = vsel %vm847, %v7255, %v7822
  %7824 = vst [vmem:[%s838 + $0x50] sm:$0x1] %v7823
  %v7825 = vld [vmem:[%s838 + $0x54] sm:$0xf]
  %v7826 = vsel %vm841, %v7262, %v7825
  %7827 = vst [vmem:[%s838 + $0x54] sm:$0xf] %v7826
  %7828 = vst.msk [vmem:[%s838 + $0x58] sm:$0xf] %vm85, %v7271
  %v7829 = vld [vmem:[%s838 + $0x5c] sm:$0x1]
  %v7830 = vsel %vm847, %v7272, %v7829
  %7831 = vst [vmem:[%s838 + $0x5c] sm:$0x1] %v7830
  %v7832 = vld [vmem:[%s838 + $0x60] sm:$0xf]
  %v7833 = vsel %vm841, %v7279, %v7832
  %7834 = vst [vmem:[%s838 + $0x60] sm:$0xf] %v7833
  %7835 = vst.msk [vmem:[%s838 + $0x64] sm:$0xf] %vm85, %v7288
  %v7836 = vld [vmem:[%s838 + $0x68] sm:$0x1]
  %v7837 = vsel %vm847, %v7289, %v7836
  %7838 = vst [vmem:[%s838 + $0x68] sm:$0x1] %v7837
  %v7839 = vld [vmem:[%s838 + $0x6c] sm:$0xf]
  %v7840 = vsel %vm841, %v7296, %v7839
  %7841 = vst [vmem:[%s838 + $0x6c] sm:$0xf] %v7840
  %7842 = vst.msk [vmem:[%s838 + $0x70] sm:$0xf] %vm85, %v7305
  %v7843 = vld [vmem:[%s838 + $0x74] sm:$0x1]
  %v7844 = vsel %vm847, %v7306, %v7843
  %7845 = vst [vmem:[%s838 + $0x74] sm:$0x1] %v7844
  %v7846 = vld [vmem:[%s838 + $0x78] sm:$0xf]
  %v7847 = vsel %vm841, %v7313, %v7846
  %7848 = vst [vmem:[%s838 + $0x78] sm:$0xf] %v7847
  %7849 = vst.msk [vmem:[%s838 + $0x7c] sm:$0xf] %vm85, %v7322
  %v7850 = vld [vmem:[%s838 + $0x80] sm:$0x1]
  %v7851 = vsel %vm847, %v7323, %v7850
  %7852 = vst [vmem:[%s838 + $0x80] sm:$0x1] %v7851
  %v7853 = vld [vmem:[%s838 + $0x84] sm:$0xf]
  %v7854 = vsel %vm841, %v7330, %v7853
  %7855 = vst [vmem:[%s838 + $0x84] sm:$0xf] %v7854
  %7856 = vst.msk [vmem:[%s838 + $0x88] sm:$0xf] %vm85, %v7339
  %v7857 = vld [vmem:[%s838 + $0x8c] sm:$0x1]
  %v7858 = vsel %vm847, %v7340, %v7857
  %7859 = vst [vmem:[%s838 + $0x8c] sm:$0x1] %v7858
  %v7860 = vld [vmem:[%s838 + $0x90] sm:$0xf]
  %v7861 = vsel %vm841, %v7347, %v7860
  %7862 = vst [vmem:[%s838 + $0x90] sm:$0xf] %v7861
  %7863 = vst.msk [vmem:[%s838 + $0x94] sm:$0xf] %vm85, %v7356
  %v7864 = vld [vmem:[%s838 + $0x98] sm:$0x1]
  %v7865 = vsel %vm847, %v7357, %v7864
  %7866 = vst [vmem:[%s838 + $0x98] sm:$0x1] %v7865
  %v7867 = vld [vmem:[%s838 + $0x9c] sm:$0xf]
  %v7868 = vsel %vm841, %v7364, %v7867
  %7869 = vst [vmem:[%s838 + $0x9c] sm:$0xf] %v7868
  %7870 = vst.msk [vmem:[%s838 + $0xa0] sm:$0xf] %vm85, %v7373
  %v7871 = vld [vmem:[%s838 + $0xa4] sm:$0x1]
  %v7872 = vsel %vm847, %v7374, %v7871
  %7873 = vst [vmem:[%s838 + $0xa4] sm:$0x1] %v7872
  %v7874 = vld [vmem:[%s838 + $0xa8] sm:$0xf]
  %v7875 = vsel %vm841, %v7381, %v7874
  %7876 = vst [vmem:[%s838 + $0xa8] sm:$0xf] %v7875
  %7877 = vst.msk [vmem:[%s838 + $0xac] sm:$0xf] %vm85, %v7390
  %v7878 = vld [vmem:[%s838 + $0xb0] sm:$0x1]
  %v7879 = vsel %vm847, %v7391, %v7878
  %7880 = vst [vmem:[%s838 + $0xb0] sm:$0x1] %v7879
  %v7881 = vld [vmem:[%s838 + $0xb4] sm:$0xf]
  %v7882 = vsel %vm841, %v7398, %v7881
  %7883 = vst [vmem:[%s838 + $0xb4] sm:$0xf] %v7882
  %7884 = vst.msk [vmem:[%s838 + $0xb8] sm:$0xf] %vm85, %v7407
  %v7885 = vld [vmem:[%s838 + $0xbc] sm:$0x1]
  %v7886 = vsel %vm847, %v7408, %v7885
  %7887 = vst [vmem:[%s838 + $0xbc] sm:$0x1] %v7886
  %v7888 = vld [vmem:[%s838 + $0xd8] sm:$0xf]
  %v7889 = vsel %vm841, %v7415, %v7888
  %7890 = vst [vmem:[%s838 + $0xd8] sm:$0xf] %v7889
  %7891 = vst.msk [vmem:[%s838 + $0xdc] sm:$0xf] %vm85, %v7424
  %v7892 = vld [vmem:[%s838 + $0xe0] sm:$0x1]
  %v7893 = vsel %vm847, %v7425, %v7892
  %7894 = vst [vmem:[%s838 + $0xe0] sm:$0x1] %v7893
  %v7895 = vld [vmem:[%s838 + $0xe4] sm:$0xf]
  %v7896 = vsel %vm841, %v7432, %v7895
  %7897 = vst [vmem:[%s838 + $0xe4] sm:$0xf] %v7896
  %7898 = vst.msk [vmem:[%s838 + $0xe8] sm:$0xf] %vm85, %v7441
  %v7899 = vld [vmem:[%s838 + $0xec] sm:$0x1]
  %v7900 = vsel %vm847, %v7442, %v7899
  %7901 = vst [vmem:[%s838 + $0xec] sm:$0x1] %v7900
  %v7902 = vld [vmem:[%s838 + $0xf0] sm:$0xf]
  %v7903 = vsel %vm841, %v7449, %v7902
  %7904 = vst [vmem:[%s838 + $0xf0] sm:$0xf] %v7903
  %7905 = vst.msk [vmem:[%s838 + $0xf4] sm:$0xf] %vm85, %v7458
  %v7906 = vld [vmem:[%s838 + $0xf8] sm:$0x1]
  %v7907 = vsel %vm847, %v7459, %v7906
  %7908 = vst [vmem:[%s838 + $0xf8] sm:$0x1] %v7907
  %v7909 = vld [vmem:[%s838 + $0xfc] sm:$0xf]
  %v7910 = vsel %vm841, %v7466, %v7909
  %7911 = vst [vmem:[%s838 + $0xfc] sm:$0xf] %v7910
  %7912 = vst.msk [vmem:[%s838 + $0x100] sm:$0xf] %vm85, %v7475
  %v7913 = vld [vmem:[%s838 + $0x104] sm:$0x1]
  %v7914 = vsel %vm847, %v7476, %v7913
  %7915 = vst [vmem:[%s838 + $0x104] sm:$0x1] %v7914
  %v7916 = vld [vmem:[%s838 + $0x108] sm:$0xf]
  %v7917 = vsel %vm841, %v7483, %v7916
  %7918 = vst [vmem:[%s838 + $0x108] sm:$0xf] %v7917
  %7919 = vst.msk [vmem:[%s838 + $0x10c] sm:$0xf] %vm85, %v7492
  %v7920 = vld [vmem:[%s838 + $0x110] sm:$0x1]
  %v7921 = vsel %vm847, %v7493, %v7920
  %7922 = vst [vmem:[%s838 + $0x110] sm:$0x1] %v7921
  %v7923 = vld [vmem:[%s838 + $0x114] sm:$0xf]
  %v7924 = vsel %vm841, %v7500, %v7923
  %7925 = vst [vmem:[%s838 + $0x114] sm:$0xf] %v7924
  %7926 = vst.msk [vmem:[%s838 + $0x118] sm:$0xf] %vm85, %v7509
  %v7927 = vld [vmem:[%s838 + $0x11c] sm:$0x1]
  %v7928 = vsel %vm847, %v7510, %v7927
  %7929 = vst [vmem:[%s838 + $0x11c] sm:$0x1] %v7928
  %v7930 = vld [vmem:[%s838 + $0x120] sm:$0xf]
  %v7931 = vsel %vm841, %v7517, %v7930
  %7932 = vst [vmem:[%s838 + $0x120] sm:$0xf] %v7931
  %7933 = vst.msk [vmem:[%s838 + $0x124] sm:$0xf] %vm85, %v7526
  %v7934 = vld [vmem:[%s838 + $0x128] sm:$0x1]
  %v7935 = vsel %vm847, %v7527, %v7934
  %7936 = vst [vmem:[%s838 + $0x128] sm:$0x1] %v7935
  %v7937 = vld [vmem:[%s838 + $0x12c] sm:$0xf]
  %v7938 = vsel %vm841, %v7534, %v7937
  %7939 = vst [vmem:[%s838 + $0x12c] sm:$0xf] %v7938
  %7940 = vst.msk [vmem:[%s838 + $0x130] sm:$0xf] %vm85, %v7543
  %v7941 = vld [vmem:[%s838 + $0x134] sm:$0x1]
  %v7942 = vsel %vm847, %v7544, %v7941
  %7943 = vst [vmem:[%s838 + $0x134] sm:$0x1] %v7942
  %v7944 = vld [vmem:[%s838 + $0x138] sm:$0xf]
  %v7945 = vsel %vm841, %v7551, %v7944
  %7946 = vst [vmem:[%s838 + $0x138] sm:$0xf] %v7945
  %7947 = vst.msk [vmem:[%s838 + $0x13c] sm:$0xf] %vm85, %v7560
  %v7948 = vld [vmem:[%s838 + $0x140] sm:$0x1]
  %v7949 = vsel %vm847, %v7561, %v7948
  %7950 = vst [vmem:[%s838 + $0x140] sm:$0x1] %v7949
  %v7951 = vld [vmem:[%s838 + $0x144] sm:$0xf]
  %v7952 = vsel %vm841, %v7568, %v7951
  %7953 = vst [vmem:[%s838 + $0x144] sm:$0xf] %v7952
  %7954 = vst.msk [vmem:[%s838 + $0x148] sm:$0xf] %vm85, %v7577
  %v7955 = vld [vmem:[%s838 + $0x14c] sm:$0x1]
  %v7956 = vsel %vm847, %v7578, %v7955
  %7957 = vst [vmem:[%s838 + $0x14c] sm:$0x1] %v7956
  %v7958 = vld [vmem:[%s838 + $0x150] sm:$0xf]
  %v7959 = vsel %vm841, %v7585, %v7958
  %7960 = vst [vmem:[%s838 + $0x150] sm:$0xf] %v7959
  %7961 = vst.msk [vmem:[%s838 + $0x154] sm:$0xf] %vm85, %v7594
  %v7962 = vld [vmem:[%s838 + $0x158] sm:$0x1]
  %v7963 = vsel %vm847, %v7595, %v7962
  %7964 = vst [vmem:[%s838 + $0x158] sm:$0x1] %v7963
  %v7965 = vld [vmem:[%s838 + $0x15c] sm:$0xf]
  %v7966 = vsel %vm841, %v7602, %v7965
  %7967 = vst [vmem:[%s838 + $0x15c] sm:$0xf] %v7966
  %7968 = vst.msk [vmem:[%s838 + $0x160] sm:$0xf] %vm85, %v7611
  %v7969 = vld [vmem:[%s838 + $0x164] sm:$0x1]
  %v7970 = vsel %vm847, %v7612, %v7969
  %7971 = vst [vmem:[%s838 + $0x164] sm:$0x1] %v7970
  %v7972 = vld [vmem:[%s838 + $0x168] sm:$0xf]
  %v7973 = vsel %vm841, %v7619, %v7972
  %7974 = vst [vmem:[%s838 + $0x168] sm:$0xf] %v7973
  %7975 = vst.msk [vmem:[%s838 + $0x16c] sm:$0xf] %vm85, %v7628
  %v7976 = vld [vmem:[%s838 + $0x170] sm:$0x1]
  %v7977 = vsel %vm847, %v7629, %v7976
  %7978 = vst [vmem:[%s838 + $0x170] sm:$0x1] %v7977
  %v7979 = vld [vmem:[%s838 + $0x174] sm:$0xf]
  %v7980 = vsel %vm841, %v7636, %v7979
  %7981 = vst [vmem:[%s838 + $0x174] sm:$0xf] %v7980
  %7982 = vst.msk [vmem:[%s838 + $0x178] sm:$0xf] %vm85, %v7645
  %v7983 = vld [vmem:[%s838 + $0x17c] sm:$0x1]
  %v7984 = vsel %vm847, %v7646, %v7983
  %7985 = vst [vmem:[%s838 + $0x17c] sm:$0x1] %v7984
  %v7986 = vld [vmem:[%s838 + $0x180] sm:$0xf]
  %v7987 = vsel %vm841, %v7653, %v7986
  %7988 = vst [vmem:[%s838 + $0x180] sm:$0xf] %v7987
  %7989 = vst.msk [vmem:[%s838 + $0x184] sm:$0xf] %vm85, %v7662
  %v7990 = vld [vmem:[%s838 + $0x188] sm:$0x1]
  %v7991 = vsel %vm847, %v7663, %v7990
  %7992 = vst [vmem:[%s838 + $0x188] sm:$0x1] %v7991
  %v7993 = vld [vmem:[%s838 + $0x18c] sm:$0xf]
  %v7994 = vsel %vm841, %v7670, %v7993
  %7995 = vst [vmem:[%s838 + $0x18c] sm:$0xf] %v7994
  %7996 = vst.msk [vmem:[%s838 + $0x190] sm:$0xf] %vm85, %v7679
  %v7997 = vld [vmem:[%s838 + $0x194] sm:$0x1]
  %v7998 = vsel %vm847, %v7680, %v7997
  %7999 = vst [vmem:[%s838 + $0x194] sm:$0x1] %v7998
  %v8000 = vld [vmem:[#allocation2] sm:$0xf]
  %v8001 = vld [vmem:[#allocation2 + $0x4] sm:$0xf]
  %v8002 = vld [vmem:[#allocation2 + $0xc] sm:$0xf]
  %v8003 = vld [vmem:[#allocation2 + $0x10] sm:$0xf]
  %v8004 = vld [vmem:[#allocation2 + $0x18] sm:$0xf]
  %v8005 = vld [vmem:[#allocation2 + $0x1c] sm:$0xf]
  %v8006 = vld [vmem:[#allocation2 + $0x24] sm:$0xf]
  %v8007 = vld [vmem:[#allocation2 + $0x28] sm:$0xf]
  %v8008 = vld [vmem:[#allocation2 + $0x30] sm:$0xf]
  %v8009 = vld [vmem:[#allocation2 + $0x34] sm:$0xf]
  %v8010 = vld [vmem:[#allocation2 + $0x3c] sm:$0xf]
  %v8011 = vld [vmem:[#allocation2 + $0x40] sm:$0xf]
  %v8012 = vld [vmem:[#allocation2 + $0x48] sm:$0xf]
  %v8013 = vld [vmem:[#allocation2 + $0x4c] sm:$0xf]
  %v8014 = vld [vmem:[#allocation2 + $0x54] sm:$0xf]
  %v8015 = vld [vmem:[#allocation2 + $0x58] sm:$0xf]
  %v8016 = vld [vmem:[#allocation2 + $0x60] sm:$0xf]
  %v8017 = vld [vmem:[#allocation2 + $0x64] sm:$0xf]
  %v8018 = vld [vmem:[#allocation2 + $0x6c] sm:$0xf]
  %v8019 = vld [vmem:[#allocation2 + $0x70] sm:$0xf]
  %v8020 = vld [vmem:[#allocation2 + $0x78] sm:$0xf]
  %v8021 = vld [vmem:[#allocation2 + $0x7c] sm:$0xf]
  %v8022 = vld [vmem:[#allocation2 + $0x84] sm:$0xf]
  %v8023 = vld [vmem:[#allocation2 + $0x88] sm:$0xf]
  %v8024 = vld [vmem:[#allocation2 + $0x90] sm:$0xf]
  %v8025 = vld [vmem:[#allocation2 + $0x94] sm:$0xf]
  %v8026 = vld [vmem:[#allocation2 + $0x9c] sm:$0xf]
  %v8027 = vld [vmem:[#allocation2 + $0xa0] sm:$0xf]
  %v8028 = vld [vmem:[#allocation2 + $0xa8] sm:$0xf]
  %v8029 = vld [vmem:[#allocation2 + $0xac] sm:$0xf]
  %v8030 = vld [vmem:[#allocation2 + $0xb4] sm:$0xf]
  %v8031 = vld [vmem:[#allocation2 + $0xb8] sm:$0xf]
  %v8032 = vld [vmem:[#allocation2 + $0xd8] sm:$0xf]
  %v8033 = vld [vmem:[#allocation2 + $0xdc] sm:$0xf]
  %v8034 = vld [vmem:[#allocation2 + $0xe4] sm:$0xf]
  %v8035 = vld [vmem:[#allocation2 + $0xe8] sm:$0xf]
  %v8036 = vld [vmem:[#allocation2 + $0xf0] sm:$0xf]
  %v8037 = vld [vmem:[#allocation2 + $0xf4] sm:$0xf]
  %v8038 = vld [vmem:[#allocation2 + $0xfc] sm:$0xf]
  %v8039 = vld [vmem:[#allocation2 + $0x100] sm:$0xf]
  %v8040 = vld [vmem:[#allocation2 + $0x108] sm:$0xf]
  %v8041 = vld [vmem:[#allocation2 + $0x10c] sm:$0xf]
  %v8042 = vld [vmem:[#allocation2 + $0x114] sm:$0xf]
  %v8043 = vld [vmem:[#allocation2 + $0x118] sm:$0xf]
  %v8044 = vld [vmem:[#allocation2 + $0x120] sm:$0xf]
  %v8045 = vld [vmem:[#allocation2 + $0x124] sm:$0xf]
  %v8046 = vld [vmem:[#allocation2 + $0x12c] sm:$0xf]
  %v8047 = vld [vmem:[#allocation2 + $0x130] sm:$0xf]
  %v8048 = vld [vmem:[#allocation2 + $0x138] sm:$0xf]
  %v8049 = vld [vmem:[#allocation2 + $0x13c] sm:$0xf]
  %v8050 = vld [vmem:[#allocation2 + $0x144] sm:$0xf]
  %v8051 = vld [vmem:[#allocation2 + $0x148] sm:$0xf]
  %v8052 = vld [vmem:[#allocation2 + $0x150] sm:$0xf]
  %v8053 = vld [vmem:[#allocation2 + $0x154] sm:$0xf]
  %v8054 = vld [vmem:[#allocation2 + $0x15c] sm:$0xf]
  %v8055 = vld [vmem:[#allocation2 + $0x160] sm:$0xf]
  %v8056 = vld [vmem:[#allocation2 + $0x168] sm:$0xf]
  %v8057 = vld [vmem:[#allocation2 + $0x16c] sm:$0xf]
  %v8058 = vld [vmem:[#allocation2 + $0x174] sm:$0xf]
  %v8059 = vld [vmem:[#allocation2 + $0x178] sm:$0xf]
  %v8060 = vld [vmem:[#allocation2 + $0x180] sm:$0xf]
  %v8061 = vld [vmem:[#allocation2 + $0x184] sm:$0xf]
  %v8062 = vld [vmem:[#allocation2 + $0x18c] sm:$0xf]
  %v8063 = vld [vmem:[#allocation2 + $0x190] sm:$0xf]
  %v8064 = vld [vmem:[#allocation2 + $0x8] sm:$0x1]
  %v8065 = vld [vmem:[#allocation2 + $0x14] sm:$0x1]
  %v8066 = vld [vmem:[#allocation2 + $0x20] sm:$0x1]
  %v8067 = vld [vmem:[#allocation2 + $0x2c] sm:$0x1]
  %v8068 = vld [vmem:[#allocation2 + $0x38] sm:$0x1]
  %v8069 = vld [vmem:[#allocation2 + $0x44] sm:$0x1]
  %v8070 = vld [vmem:[#allocation2 + $0x50] sm:$0x1]
  %v8071 = vld [vmem:[#allocation2 + $0x5c] sm:$0x1]
  %v8072 = vld [vmem:[#allocation2 + $0x68] sm:$0x1]
  %v8073 = vld [vmem:[#allocation2 + $0x74] sm:$0x1]
  %v8074 = vld [vmem:[#allocation2 + $0x80] sm:$0x1]
  %v8075 = vld [vmem:[#allocation2 + $0x8c] sm:$0x1]
  %v8076 = vld [vmem:[#allocation2 + $0x98] sm:$0x1]
  %v8077 = vld [vmem:[#allocation2 + $0xa4] sm:$0x1]
  %v8078 = vld [vmem:[#allocation2 + $0xb0] sm:$0x1]
  %v8079 = vld [vmem:[#allocation2 + $0xbc] sm:$0x1]
  %v8080 = vld [vmem:[#allocation2 + $0xe0] sm:$0x1]
  %v8081 = vld [vmem:[#allocation2 + $0xec] sm:$0x1]
  %v8082 = vld [vmem:[#allocation2 + $0xf8] sm:$0x1]
  %v8083 = vld [vmem:[#allocation2 + $0x104] sm:$0x1]
  %v8084 = vld [vmem:[#allocation2 + $0x110] sm:$0x1]
  %v8085 = vld [vmem:[#allocation2 + $0x11c] sm:$0x1]
  %v8086 = vld [vmem:[#allocation2 + $0x128] sm:$0x1]
  %v8087 = vld [vmem:[#allocation2 + $0x134] sm:$0x1]
  %v8088 = vld [vmem:[#allocation2 + $0x140] sm:$0x1]
  %v8089 = vld [vmem:[#allocation2 + $0x14c] sm:$0x1]
  %v8090 = vld [vmem:[#allocation2 + $0x158] sm:$0x1]
  %v8091 = vld [vmem:[#allocation2 + $0x164] sm:$0x1]
  %v8092 = vld [vmem:[#allocation2 + $0x170] sm:$0x1]
  %v8093 = vld [vmem:[#allocation2 + $0x17c] sm:$0x1]
  %v8094 = vld [vmem:[#allocation2 + $0x188] sm:$0x1]
  %v8095 = vld [vmem:[#allocation2 + $0x194] sm:$0x1]
  %v8097 = vshrl.u32 %v8000, 16
  %v8099 = vrot.slane %v8097, 4
  %v8100 = vshll.u32 %v8000, 16
  %v8102 = vrot.slane %v8100, 5
  %v8103 = vor.u32 %v8099, %v8102
  %v8104 = vrot.slane %v8103, 4
  %v8106 = vshll.u32 %v8001, 16
  %v8108 = vrot.slane %v8106, 5
  %v8109 = vsel %vm1166, %v8104, %v8108
  %v8110 = vshrl.u32 %v8001, 16
  %v8112 = vrot.slane %v8110, 4
  %v8113 = vor.u32 %v8112, %v8108
  %v8114 = vrot.slane %v8113, 4
  %v8116 = vshll.u32 %v8064, 16
  %v8118 = vrot.slane %v8116, 5
  %v8119 = vsel %vm1166, %v8114, %v8118
  %v8121 = vshrl.u32 %v8002, 16
  %v8123 = vrot.slane %v8121, 4
  %v8124 = vshll.u32 %v8002, 16
  %v8126 = vrot.slane %v8124, 5
  %v8127 = vor.u32 %v8123, %v8126
  %v8128 = vrot.slane %v8127, 4
  %v8130 = vshll.u32 %v8003, 16
  %v8132 = vrot.slane %v8130, 5
  %v8133 = vsel %vm1166, %v8128, %v8132
  %v8134 = vshrl.u32 %v8003, 16
  %v8136 = vrot.slane %v8134, 4
  %v8137 = vor.u32 %v8136, %v8132
  %v8138 = vrot.slane %v8137, 4
  %v8140 = vshll.u32 %v8065, 16
  %v8142 = vrot.slane %v8140, 5
  %v8143 = vsel %vm1166, %v8138, %v8142
  %v8145 = vshrl.u32 %v8004, 16
  %v8147 = vrot.slane %v8145, 4
  %v8148 = vshll.u32 %v8004, 16
  %v8150 = vrot.slane %v8148, 5
  %v8151 = vor.u32 %v8147, %v8150
  %v8152 = vrot.slane %v8151, 4
  %v8154 = vshll.u32 %v8005, 16
  %v8156 = vrot.slane %v8154, 5
  %v8157 = vsel %vm1166, %v8152, %v8156
  %v8158 = vshrl.u32 %v8005, 16
  %v8160 = vrot.slane %v8158, 4
  %v8161 = vor.u32 %v8160, %v8156
  %v8162 = vrot.slane %v8161, 4
  %v8164 = vshll.u32 %v8066, 16
  %v8166 = vrot.slane %v8164, 5
  %v8167 = vsel %vm1166, %v8162, %v8166
  %v8169 = vshrl.u32 %v8006, 16
  %v8171 = vrot.slane %v8169, 4
  %v8172 = vshll.u32 %v8006, 16
  %v8174 = vrot.slane %v8172, 5
  %v8175 = vor.u32 %v8171, %v8174
  %v8176 = vrot.slane %v8175, 4
  %v8178 = vshll.u32 %v8007, 16
  %v8180 = vrot.slane %v8178, 5
  %v8181 = vsel %vm1166, %v8176, %v8180
  %v8182 = vshrl.u32 %v8007, 16
  %v8184 = vrot.slane %v8182, 4
  %v8185 = vor.u32 %v8184, %v8180
  %v8186 = vrot.slane %v8185, 4
  %v8188 = vshll.u32 %v8067, 16
  %v8190 = vrot.slane %v8188, 5
  %v8191 = vsel %vm1166, %v8186, %v8190
  %v8193 = vshrl.u32 %v8008, 16
  %v8195 = vrot.slane %v8193, 4
  %v8196 = vshll.u32 %v8008, 16
  %v8198 = vrot.slane %v8196, 5
  %v8199 = vor.u32 %v8195, %v8198
  %v8200 = vrot.slane %v8199, 4
  %v8202 = vshll.u32 %v8009, 16
  %v8204 = vrot.slane %v8202, 5
  %v8205 = vsel %vm1166, %v8200, %v8204
  %v8206 = vshrl.u32 %v8009, 16
  %v8208 = vrot.slane %v8206, 4
  %v8209 = vor.u32 %v8208, %v8204
  %v8210 = vrot.slane %v8209, 4
  %v8212 = vshll.u32 %v8068, 16
  %v8214 = vrot.slane %v8212, 5
  %v8215 = vsel %vm1166, %v8210, %v8214
  %v8217 = vshrl.u32 %v8010, 16
  %v8219 = vrot.slane %v8217, 4
  %v8220 = vshll.u32 %v8010, 16
  %v8222 = vrot.slane %v8220, 5
  %v8223 = vor.u32 %v8219, %v8222
  %v8224 = vrot.slane %v8223, 4
  %v8226 = vshll.u32 %v8011, 16
  %v8228 = vrot.slane %v8226, 5
  %v8229 = vsel %vm1166, %v8224, %v8228
  %v8230 = vshrl.u32 %v8011, 16
  %v8232 = vrot.slane %v8230, 4
  %v8233 = vor.u32 %v8232, %v8228
  %v8234 = vrot.slane %v8233, 4
  %v8236 = vshll.u32 %v8069, 16
  %v8238 = vrot.slane %v8236, 5
  %v8239 = vsel %vm1166, %v8234, %v8238
  %v8241 = vshrl.u32 %v8012, 16
  %v8243 = vrot.slane %v8241, 4
  %v8244 = vshll.u32 %v8012, 16
  %v8246 = vrot.slane %v8244, 5
  %v8247 = vor.u32 %v8243, %v8246
  %v8248 = vrot.slane %v8247, 4
  %v8250 = vshll.u32 %v8013, 16
  %v8252 = vrot.slane %v8250, 5
  %v8253 = vsel %vm1166, %v8248, %v8252
  %v8254 = vshrl.u32 %v8013, 16
  %v8256 = vrot.slane %v8254, 4
  %v8257 = vor.u32 %v8256, %v8252
  %v8258 = vrot.slane %v8257, 4
  %v8260 = vshll.u32 %v8070, 16
  %v8262 = vrot.slane %v8260, 5
  %v8263 = vsel %vm1166, %v8258, %v8262
  %v8265 = vshrl.u32 %v8014, 16
  %v8267 = vrot.slane %v8265, 4
  %v8268 = vshll.u32 %v8014, 16
  %v8270 = vrot.slane %v8268, 5
  %v8271 = vor.u32 %v8267, %v8270
  %v8272 = vrot.slane %v8271, 4
  %v8274 = vshll.u32 %v8015, 16
  %v8276 = vrot.slane %v8274, 5
  %v8277 = vsel %vm1166, %v8272, %v8276
  %v8278 = vshrl.u32 %v8015, 16
  %v8280 = vrot.slane %v8278, 4
  %v8281 = vor.u32 %v8280, %v8276
  %v8282 = vrot.slane %v8281, 4
  %v8284 = vshll.u32 %v8071, 16
  %v8286 = vrot.slane %v8284, 5
  %v8287 = vsel %vm1166, %v8282, %v8286
  %v8289 = vshrl.u32 %v8016, 16
  %v8291 = vrot.slane %v8289, 4
  %v8292 = vshll.u32 %v8016, 16
  %v8294 = vrot.slane %v8292, 5
  %v8295 = vor.u32 %v8291, %v8294
  %v8296 = vrot.slane %v8295, 4
  %v8298 = vshll.u32 %v8017, 16
  %v8300 = vrot.slane %v8298, 5
  %v8301 = vsel %vm1166, %v8296, %v8300
  %v8302 = vshrl.u32 %v8017, 16
  %v8304 = vrot.slane %v8302, 4
  %v8305 = vor.u32 %v8304, %v8300
  %v8306 = vrot.slane %v8305, 4
  %v8308 = vshll.u32 %v8072, 16
  %v8310 = vrot.slane %v8308, 5
  %v8311 = vsel %vm1166, %v8306, %v8310
  %v8313 = vshrl.u32 %v8018, 16
  %v8315 = vrot.slane %v8313, 4
  %v8316 = vshll.u32 %v8018, 16
  %v8318 = vrot.slane %v8316, 5
  %v8319 = vor.u32 %v8315, %v8318
  %v8320 = vrot.slane %v8319, 4
  %v8322 = vshll.u32 %v8019, 16
  %v8324 = vrot.slane %v8322, 5
  %v8325 = vsel %vm1166, %v8320, %v8324
  %v8326 = vshrl.u32 %v8019, 16
  %v8328 = vrot.slane %v8326, 4
  %v8329 = vor.u32 %v8328, %v8324
  %v8330 = vrot.slane %v8329, 4
  %v8332 = vshll.u32 %v8073, 16
  %v8334 = vrot.slane %v8332, 5
  %v8335 = vsel %vm1166, %v8330, %v8334
  %v8337 = vshrl.u32 %v8020, 16
  %v8339 = vrot.slane %v8337, 4
  %v8340 = vshll.u32 %v8020, 16
  %v8342 = vrot.slane %v8340, 5
  %v8343 = vor.u32 %v8339, %v8342
  %v8344 = vrot.slane %v8343, 4
  %v8346 = vshll.u32 %v8021, 16
  %v8348 = vrot.slane %v8346, 5
  %v8349 = vsel %vm1166, %v8344, %v8348
  %v8350 = vshrl.u32 %v8021, 16
  %v8352 = vrot.slane %v8350, 4
  %v8353 = vor.u32 %v8352, %v8348
  %v8354 = vrot.slane %v8353, 4
  %v8356 = vshll.u32 %v8074, 16
  %v8358 = vrot.slane %v8356, 5
  %v8359 = vsel %vm1166, %v8354, %v8358
  %v8361 = vshrl.u32 %v8022, 16
  %v8363 = vrot.slane %v8361, 4
  %v8364 = vshll.u32 %v8022, 16
  %v8366 = vrot.slane %v8364, 5
  %v8367 = vor.u32 %v8363, %v8366
  %v8368 = vrot.slane %v8367, 4
  %v8370 = vshll.u32 %v8023, 16
  %v8372 = vrot.slane %v8370, 5
  %v8373 = vsel %vm1166, %v8368, %v8372
  %v8374 = vshrl.u32 %v8023, 16
  %v8376 = vrot.slane %v8374, 4
  %v8377 = vor.u32 %v8376, %v8372
  %v8378 = vrot.slane %v8377, 4
  %v8380 = vshll.u32 %v8075, 16
  %v8382 = vrot.slane %v8380, 5
  %v8383 = vsel %vm1166, %v8378, %v8382
  %v8385 = vshrl.u32 %v8024, 16
  %v8387 = vrot.slane %v8385, 4
  %v8388 = vshll.u32 %v8024, 16
  %v8390 = vrot.slane %v8388, 5
  %v8391 = vor.u32 %v8387, %v8390
  %v8392 = vrot.slane %v8391, 4
  %v8394 = vshll.u32 %v8025, 16
  %v8396 = vrot.slane %v8394, 5
  %v8397 = vsel %vm1166, %v8392, %v8396
  %v8398 = vshrl.u32 %v8025, 16
  %v8400 = vrot.slane %v8398, 4
  %v8401 = vor.u32 %v8400, %v8396
  %v8402 = vrot.slane %v8401, 4
  %v8404 = vshll.u32 %v8076, 16
  %v8406 = vrot.slane %v8404, 5
  %v8407 = vsel %vm1166, %v8402, %v8406
  %v8409 = vshrl.u32 %v8026, 16
  %v8411 = vrot.slane %v8409, 4
  %v8412 = vshll.u32 %v8026, 16
  %v8414 = vrot.slane %v8412, 5
  %v8415 = vor.u32 %v8411, %v8414
  %v8416 = vrot.slane %v8415, 4
  %v8418 = vshll.u32 %v8027, 16
  %v8420 = vrot.slane %v8418, 5
  %v8421 = vsel %vm1166, %v8416, %v8420
  %v8422 = vshrl.u32 %v8027, 16
  %v8424 = vrot.slane %v8422, 4
  %v8425 = vor.u32 %v8424, %v8420
  %v8426 = vrot.slane %v8425, 4
  %v8428 = vshll.u32 %v8077, 16
  %v8430 = vrot.slane %v8428, 5
  %v8431 = vsel %vm1166, %v8426, %v8430
  %v8433 = vshrl.u32 %v8028, 16
  %v8435 = vrot.slane %v8433, 4
  %v8436 = vshll.u32 %v8028, 16
  %v8438 = vrot.slane %v8436, 5
  %v8439 = vor.u32 %v8435, %v8438
  %v8440 = vrot.slane %v8439, 4
  %v8442 = vshll.u32 %v8029, 16
  %v8444 = vrot.slane %v8442, 5
  %v8445 = vsel %vm1166, %v8440, %v8444
  %v8446 = vshrl.u32 %v8029, 16
  %v8448 = vrot.slane %v8446, 4
  %v8449 = vor.u32 %v8448, %v8444
  %v8450 = vrot.slane %v8449, 4
  %v8452 = vshll.u32 %v8078, 16
  %v8454 = vrot.slane %v8452, 5
  %v8455 = vsel %vm1166, %v8450, %v8454
  %v8457 = vshrl.u32 %v8030, 16
  %v8459 = vrot.slane %v8457, 4
  %v8460 = vshll.u32 %v8030, 16
  %v8462 = vrot.slane %v8460, 5
  %v8463 = vor.u32 %v8459, %v8462
  %v8464 = vrot.slane %v8463, 4
  %v8466 = vshll.u32 %v8031, 16
  %v8468 = vrot.slane %v8466, 5
  %v8469 = vsel %vm1166, %v8464, %v8468
  %v8470 = vshrl.u32 %v8031, 16
  %v8472 = vrot.slane %v8470, 4
  %v8473 = vor.u32 %v8472, %v8468
  %v8474 = vrot.slane %v8473, 4
  %v8476 = vshll.u32 %v8079, 16
  %v8478 = vrot.slane %v8476, 5
  %v8479 = vsel %vm1166, %v8474, %v8478
  %v8481 = vshrl.u32 %v8032, 16
  %v8483 = vrot.slane %v8481, 4
  %v8484 = vshll.u32 %v8032, 16
  %v8486 = vrot.slane %v8484, 5
  %v8487 = vor.u32 %v8483, %v8486
  %v8488 = vrot.slane %v8487, 4
  %v8490 = vshll.u32 %v8033, 16
  %v8492 = vrot.slane %v8490, 5
  %v8493 = vsel %vm1166, %v8488, %v8492
  %v8494 = vshrl.u32 %v8033, 16
  %v8496 = vrot.slane %v8494, 4
  %v8497 = vor.u32 %v8496, %v8492
  %v8498 = vrot.slane %v8497, 4
  %v8500 = vshll.u32 %v8080, 16
  %v8502 = vrot.slane %v8500, 5
  %v8503 = vsel %vm1166, %v8498, %v8502
  %v8505 = vshrl.u32 %v8034, 16
  %v8507 = vrot.slane %v8505, 4
  %v8508 = vshll.u32 %v8034, 16
  %v8510 = vrot.slane %v8508, 5
  %v8511 = vor.u32 %v8507, %v8510
  %v8512 = vrot.slane %v8511, 4
  %v8514 = vshll.u32 %v8035, 16
  %v8516 = vrot.slane %v8514, 5
  %v8517 = vsel %vm1166, %v8512, %v8516
  %v8518 = vshrl.u32 %v8035, 16
  %v8520 = vrot.slane %v8518, 4
  %v8521 = vor.u32 %v8520, %v8516
  %v8522 = vrot.slane %v8521, 4
  %v8524 = vshll.u32 %v8081, 16
  %v8526 = vrot.slane %v8524, 5
  %v8527 = vsel %vm1166, %v8522, %v8526
  %v8529 = vshrl.u32 %v8036, 16
  %v8531 = vrot.slane %v8529, 4
  %v8532 = vshll.u32 %v8036, 16
  %v8534 = vrot.slane %v8532, 5
  %v8535 = vor.u32 %v8531, %v8534
  %v8536 = vrot.slane %v8535, 4
  %v8538 = vshll.u32 %v8037, 16
  %v8540 = vrot.slane %v8538, 5
  %v8541 = vsel %vm1166, %v8536, %v8540
  %v8542 = vshrl.u32 %v8037, 16
  %v8544 = vrot.slane %v8542, 4
  %v8545 = vor.u32 %v8544, %v8540
  %v8546 = vrot.slane %v8545, 4
  %v8548 = vshll.u32 %v8082, 16
  %v8550 = vrot.slane %v8548, 5
  %v8551 = vsel %vm1166, %v8546, %v8550
  %v8553 = vshrl.u32 %v8038, 16
  %v8555 = vrot.slane %v8553, 4
  %v8556 = vshll.u32 %v8038, 16
  %v8558 = vrot.slane %v8556, 5
  %v8559 = vor.u32 %v8555, %v8558
  %v8560 = vrot.slane %v8559, 4
  %v8562 = vshll.u32 %v8039, 16
  %v8564 = vrot.slane %v8562, 5
  %v8565 = vsel %vm1166, %v8560, %v8564
  %v8566 = vshrl.u32 %v8039, 16
  %v8568 = vrot.slane %v8566, 4
  %v8569 = vor.u32 %v8568, %v8564
  %v8570 = vrot.slane %v8569, 4
  %v8572 = vshll.u32 %v8083, 16
  %v8574 = vrot.slane %v8572, 5
  %v8575 = vsel %vm1166, %v8570, %v8574
  %v8577 = vshrl.u32 %v8040, 16
  %v8579 = vrot.slane %v8577, 4
  %v8580 = vshll.u32 %v8040, 16
  %v8582 = vrot.slane %v8580, 5
  %v8583 = vor.u32 %v8579, %v8582
  %v8584 = vrot.slane %v8583, 4
  %v8586 = vshll.u32 %v8041, 16
  %v8588 = vrot.slane %v8586, 5
  %v8589 = vsel %vm1166, %v8584, %v8588
  %v8590 = vshrl.u32 %v8041, 16
  %v8592 = vrot.slane %v8590, 4
  %v8593 = vor.u32 %v8592, %v8588
  %v8594 = vrot.slane %v8593, 4
  %v8596 = vshll.u32 %v8084, 16
  %v8598 = vrot.slane %v8596, 5
  %v8599 = vsel %vm1166, %v8594, %v8598
  %v8601 = vshrl.u32 %v8042, 16
  %v8603 = vrot.slane %v8601, 4
  %v8604 = vshll.u32 %v8042, 16
  %v8606 = vrot.slane %v8604, 5
  %v8607 = vor.u32 %v8603, %v8606
  %v8608 = vrot.slane %v8607, 4
  %v8610 = vshll.u32 %v8043, 16
  %v8612 = vrot.slane %v8610, 5
  %v8613 = vsel %vm1166, %v8608, %v8612
  %v8614 = vshrl.u32 %v8043, 16
  %v8616 = vrot.slane %v8614, 4
  %v8617 = vor.u32 %v8616, %v8612
  %v8618 = vrot.slane %v8617, 4
  %v8620 = vshll.u32 %v8085, 16
  %v8622 = vrot.slane %v8620, 5
  %v8623 = vsel %vm1166, %v8618, %v8622
  %v8625 = vshrl.u32 %v8044, 16
  %v8627 = vrot.slane %v8625, 4
  %v8628 = vshll.u32 %v8044, 16
  %v8630 = vrot.slane %v8628, 5
  %v8631 = vor.u32 %v8627, %v8630
  %v8632 = vrot.slane %v8631, 4
  %v8634 = vshll.u32 %v8045, 16
  %v8636 = vrot.slane %v8634, 5
  %v8637 = vsel %vm1166, %v8632, %v8636
  %v8638 = vshrl.u32 %v8045, 16
  %v8640 = vrot.slane %v8638, 4
  %v8641 = vor.u32 %v8640, %v8636
  %v8642 = vrot.slane %v8641, 4
  %v8644 = vshll.u32 %v8086, 16
  %v8646 = vrot.slane %v8644, 5
  %v8647 = vsel %vm1166, %v8642, %v8646
  %v8649 = vshrl.u32 %v8046, 16
  %v8651 = vrot.slane %v8649, 4
  %v8652 = vshll.u32 %v8046, 16
  %v8654 = vrot.slane %v8652, 5
  %v8655 = vor.u32 %v8651, %v8654
  %v8656 = vrot.slane %v8655, 4
  %v8658 = vshll.u32 %v8047, 16
  %v8660 = vrot.slane %v8658, 5
  %v8661 = vsel %vm1166, %v8656, %v8660
  %v8662 = vshrl.u32 %v8047, 16
  %v8664 = vrot.slane %v8662, 4
  %v8665 = vor.u32 %v8664, %v8660
  %v8666 = vrot.slane %v8665, 4
  %v8668 = vshll.u32 %v8087, 16
  %v8670 = vrot.slane %v8668, 5
  %v8671 = vsel %vm1166, %v8666, %v8670
  %v8673 = vshrl.u32 %v8048, 16
  %v8675 = vrot.slane %v8673, 4
  %v8676 = vshll.u32 %v8048, 16
  %v8678 = vrot.slane %v8676, 5
  %v8679 = vor.u32 %v8675, %v8678
  %v8680 = vrot.slane %v8679, 4
  %v8682 = vshll.u32 %v8049, 16
  %v8684 = vrot.slane %v8682, 5
  %v8685 = vsel %vm1166, %v8680, %v8684
  %v8686 = vshrl.u32 %v8049, 16
  %v8688 = vrot.slane %v8686, 4
  %v8689 = vor.u32 %v8688, %v8684
  %v8690 = vrot.slane %v8689, 4
  %v8692 = vshll.u32 %v8088, 16
  %v8694 = vrot.slane %v8692, 5
  %v8695 = vsel %vm1166, %v8690, %v8694
  %v8697 = vshrl.u32 %v8050, 16
  %v8699 = vrot.slane %v8697, 4
  %v8700 = vshll.u32 %v8050, 16
  %v8702 = vrot.slane %v8700, 5
  %v8703 = vor.u32 %v8699, %v8702
  %v8704 = vrot.slane %v8703, 4
  %v8706 = vshll.u32 %v8051, 16
  %v8708 = vrot.slane %v8706, 5
  %v8709 = vsel %vm1166, %v8704, %v8708
  %v8710 = vshrl.u32 %v8051, 16
  %v8712 = vrot.slane %v8710, 4
  %v8713 = vor.u32 %v8712, %v8708
  %v8714 = vrot.slane %v8713, 4
  %v8716 = vshll.u32 %v8089, 16
  %v8718 = vrot.slane %v8716, 5
  %v8719 = vsel %vm1166, %v8714, %v8718
  %v8721 = vshrl.u32 %v8052, 16
  %v8723 = vrot.slane %v8721, 4
  %v8724 = vshll.u32 %v8052, 16
  %v8726 = vrot.slane %v8724, 5
  %v8727 = vor.u32 %v8723, %v8726
  %v8728 = vrot.slane %v8727, 4
  %v8730 = vshll.u32 %v8053, 16
  %v8732 = vrot.slane %v8730, 5
  %v8733 = vsel %vm1166, %v8728, %v8732
  %v8734 = vshrl.u32 %v8053, 16
  %v8736 = vrot.slane %v8734, 4
  %v8737 = vor.u32 %v8736, %v8732
  %v8738 = vrot.slane %v8737, 4
  %v8740 = vshll.u32 %v8090, 16
  %v8742 = vrot.slane %v8740, 5
  %v8743 = vsel %vm1166, %v8738, %v8742
  %v8745 = vshrl.u32 %v8054, 16
  %v8747 = vrot.slane %v8745, 4
  %v8748 = vshll.u32 %v8054, 16
  %v8750 = vrot.slane %v8748, 5
  %v8751 = vor.u32 %v8747, %v8750
  %v8752 = vrot.slane %v8751, 4
  %v8754 = vshll.u32 %v8055, 16
  %v8756 = vrot.slane %v8754, 5
  %v8757 = vsel %vm1166, %v8752, %v8756
  %v8758 = vshrl.u32 %v8055, 16
  %v8760 = vrot.slane %v8758, 4
  %v8761 = vor.u32 %v8760, %v8756
  %v8762 = vrot.slane %v8761, 4
  %v8764 = vshll.u32 %v8091, 16
  %v8766 = vrot.slane %v8764, 5
  %v8767 = vsel %vm1166, %v8762, %v8766
  %v8769 = vshrl.u32 %v8056, 16
  %v8771 = vrot.slane %v8769, 4
  %v8772 = vshll.u32 %v8056, 16
  %v8774 = vrot.slane %v8772, 5
  %v8775 = vor.u32 %v8771, %v8774
  %v8776 = vrot.slane %v8775, 4
  %v8778 = vshll.u32 %v8057, 16
  %v8780 = vrot.slane %v8778, 5
  %v8781 = vsel %vm1166, %v8776, %v8780
  %v8782 = vshrl.u32 %v8057, 16
  %v8784 = vrot.slane %v8782, 4
  %v8785 = vor.u32 %v8784, %v8780
  %v8786 = vrot.slane %v8785, 4
  %v8788 = vshll.u32 %v8092, 16
  %v8790 = vrot.slane %v8788, 5
  %v8791 = vsel %vm1166, %v8786, %v8790
  %v8793 = vshrl.u32 %v8058, 16
  %v8795 = vrot.slane %v8793, 4
  %v8796 = vshll.u32 %v8058, 16
  %v8798 = vrot.slane %v8796, 5
  %v8799 = vor.u32 %v8795, %v8798
  %v8800 = vrot.slane %v8799, 4
  %v8802 = vshll.u32 %v8059, 16
  %v8804 = vrot.slane %v8802, 5
  %v8805 = vsel %vm1166, %v8800, %v8804
  %v8806 = vshrl.u32 %v8059, 16
  %v8808 = vrot.slane %v8806, 4
  %v8809 = vor.u32 %v8808, %v8804
  %v8810 = vrot.slane %v8809, 4
  %v8812 = vshll.u32 %v8093, 16
  %v8814 = vrot.slane %v8812, 5
  %v8815 = vsel %vm1166, %v8810, %v8814
  %v8817 = vshrl.u32 %v8060, 16
  %v8819 = vrot.slane %v8817, 4
  %v8820 = vshll.u32 %v8060, 16
  %v8822 = vrot.slane %v8820, 5
  %v8823 = vor.u32 %v8819, %v8822
  %v8824 = vrot.slane %v8823, 4
  %v8826 = vshll.u32 %v8061, 16
  %v8828 = vrot.slane %v8826, 5
  %v8829 = vsel %vm1166, %v8824, %v8828
  %v8830 = vshrl.u32 %v8061, 16
  %v8832 = vrot.slane %v8830, 4
  %v8833 = vor.u32 %v8832, %v8828
  %v8834 = vrot.slane %v8833, 4
  %v8836 = vshll.u32 %v8094, 16
  %v8838 = vrot.slane %v8836, 5
  %v8839 = vsel %vm1166, %v8834, %v8838
  %v8841 = vshrl.u32 %v8062, 16
  %v8843 = vrot.slane %v8841, 4
  %v8844 = vshll.u32 %v8062, 16
  %v8846 = vrot.slane %v8844, 5
  %v8847 = vor.u32 %v8843, %v8846
  %v8848 = vrot.slane %v8847, 4
  %v8850 = vshll.u32 %v8063, 16
  %v8852 = vrot.slane %v8850, 5
  %v8853 = vsel %vm1166, %v8848, %v8852
  %v8854 = vshrl.u32 %v8063, 16
  %v8856 = vrot.slane %v8854, 4
  %v8857 = vor.u32 %v8856, %v8852
  %v8858 = vrot.slane %v8857, 4
  %v8860 = vshll.u32 %v8095, 16
  %v8862 = vrot.slane %v8860, 5
  %v8863 = vsel %vm1166, %v8858, %v8862
  %v8864 = vld [vmem:[#allocation2] sm:$0xe]
  %v8865 = vld [vmem:[#allocation2 + $0xc] sm:$0xe]
  %v8866 = vld [vmem:[#allocation2 + $0x18] sm:$0xe]
  %v8867 = vld [vmem:[#allocation2 + $0x24] sm:$0xe]
  %v8868 = vld [vmem:[#allocation2 + $0x30] sm:$0xe]
  %v8869 = vld [vmem:[#allocation2 + $0x3c] sm:$0xe]
  %v8870 = vld [vmem:[#allocation2 + $0x48] sm:$0xe]
  %v8871 = vld [vmem:[#allocation2 + $0x54] sm:$0xe]
  %v8872 = vld [vmem:[#allocation2 + $0x60] sm:$0xe]
  %v8873 = vld [vmem:[#allocation2 + $0x6c] sm:$0xe]
  %v8874 = vld [vmem:[#allocation2 + $0x78] sm:$0xe]
  %v8875 = vld [vmem:[#allocation2 + $0x84] sm:$0xe]
  %v8876 = vld [vmem:[#allocation2 + $0x90] sm:$0xe]
  %v8877 = vld [vmem:[#allocation2 + $0x9c] sm:$0xe]
  %v8878 = vld [vmem:[#allocation2 + $0xa8] sm:$0xe]
  %v8879 = vld [vmem:[#allocation2 + $0xb4] sm:$0xe]
  %v8880 = vld [vmem:[#allocation2 + $0xd8] sm:$0xe]
  %v8881 = vld [vmem:[#allocation2 + $0xe4] sm:$0xe]
  %v8882 = vld [vmem:[#allocation2 + $0xf0] sm:$0xe]
  %v8883 = vld [vmem:[#allocation2 + $0xfc] sm:$0xe]
  %v8884 = vld [vmem:[#allocation2 + $0x108] sm:$0xe]
  %v8885 = vld [vmem:[#allocation2 + $0x114] sm:$0xe]
  %v8886 = vld [vmem:[#allocation2 + $0x120] sm:$0xe]
  %v8887 = vld [vmem:[#allocation2 + $0x12c] sm:$0xe]
  %v8888 = vld [vmem:[#allocation2 + $0x138] sm:$0xe]
  %v8889 = vld [vmem:[#allocation2 + $0x144] sm:$0xe]
  %v8890 = vld [vmem:[#allocation2 + $0x150] sm:$0xe]
  %v8891 = vld [vmem:[#allocation2 + $0x15c] sm:$0xe]
  %v8892 = vld [vmem:[#allocation2 + $0x168] sm:$0xe]
  %v8893 = vld [vmem:[#allocation2 + $0x174] sm:$0xe]
  %v8894 = vld [vmem:[#allocation2 + $0x180] sm:$0xe]
  %v8895 = vld [vmem:[#allocation2 + $0x18c] sm:$0xe]
  %v8992 = vrot.slane %v8864, 5
  %v8993 = vrot.slane %v8992, 4
  %v8994 = vrot.slane %v8001, 5
  %v8995 = vsel %vm2065, %v8993, %v8994
  %v8996 = vrot.slane %v8994, 4
  %v8997 = vrot.slane %v8064, 5
  %v8998 = vsel %vm2065, %v8996, %v8997
  %v8999 = vrot.slane %v8865, 5
  %v9000 = vrot.slane %v8999, 4
  %v9001 = vrot.slane %v8003, 5
  %v9002 = vsel %vm2065, %v9000, %v9001
  %v9003 = vrot.slane %v9001, 4
  %v9004 = vrot.slane %v8065, 5
  %v9005 = vsel %vm2065, %v9003, %v9004
  %v9006 = vrot.slane %v8866, 5
  %v9007 = vrot.slane %v9006, 4
  %v9008 = vrot.slane %v8005, 5
  %v9009 = vsel %vm2065, %v9007, %v9008
  %v9010 = vrot.slane %v9008, 4
  %v9011 = vrot.slane %v8066, 5
  %v9012 = vsel %vm2065, %v9010, %v9011
  %v9013 = vrot.slane %v8867, 5
  %v9014 = vrot.slane %v9013, 4
  %v9015 = vrot.slane %v8007, 5
  %v9016 = vsel %vm2065, %v9014, %v9015
  %v9017 = vrot.slane %v9015, 4
  %v9018 = vrot.slane %v8067, 5
  %v9019 = vsel %vm2065, %v9017, %v9018
  %v9020 = vrot.slane %v8868, 5
  %v9021 = vrot.slane %v9020, 4
  %v9022 = vrot.slane %v8009, 5
  %v9023 = vsel %vm2065, %v9021, %v9022
  %v9024 = vrot.slane %v9022, 4
  %v9025 = vrot.slane %v8068, 5
  %v9026 = vsel %vm2065, %v9024, %v9025
  %v9027 = vrot.slane %v8869, 5
  %v9028 = vrot.slane %v9027, 4
  %v9029 = vrot.slane %v8011, 5
  %v9030 = vsel %vm2065, %v9028, %v9029
  %v9031 = vrot.slane %v9029, 4
  %v9032 = vrot.slane %v8069, 5
  %v9033 = vsel %vm2065, %v9031, %v9032
  %v9034 = vrot.slane %v8870, 5
  %v9035 = vrot.slane %v9034, 4
  %v9036 = vrot.slane %v8013, 5
  %v9037 = vsel %vm2065, %v9035, %v9036
  %v9038 = vrot.slane %v9036, 4
  %v9039 = vrot.slane %v8070, 5
  %v9040 = vsel %vm2065, %v9038, %v9039
  %v9041 = vrot.slane %v8871, 5
  %v9042 = vrot.slane %v9041, 4
  %v9043 = vrot.slane %v8015, 5
  %v9044 = vsel %vm2065, %v9042, %v9043
  %v9045 = vrot.slane %v9043, 4
  %v9046 = vrot.slane %v8071, 5
  %v9047 = vsel %vm2065, %v9045, %v9046
  %v9048 = vrot.slane %v8872, 5
  %v9049 = vrot.slane %v9048, 4
  %v9050 = vrot.slane %v8017, 5
  %v9051 = vsel %vm2065, %v9049, %v9050
  %v9052 = vrot.slane %v9050, 4
  %v9053 = vrot.slane %v8072, 5
  %v9054 = vsel %vm2065, %v9052, %v9053
  %v9055 = vrot.slane %v8873, 5
  %v9056 = vrot.slane %v9055, 4
  %v9057 = vrot.slane %v8019, 5
  %v9058 = vsel %vm2065, %v9056, %v9057
  %v9059 = vrot.slane %v9057, 4
  %v9060 = vrot.slane %v8073, 5
  %v9061 = vsel %vm2065, %v9059, %v9060
  %v9062 = vrot.slane %v8874, 5
  %v9063 = vrot.slane %v9062, 4
  %v9064 = vrot.slane %v8021, 5
  %v9065 = vsel %vm2065, %v9063, %v9064
  %v9066 = vrot.slane %v9064, 4
  %v9067 = vrot.slane %v8074, 5
  %v9068 = vsel %vm2065, %v9066, %v9067
  %v9069 = vrot.slane %v8875, 5
  %v9070 = vrot.slane %v9069, 4
  %v9071 = vrot.slane %v8023, 5
  %v9072 = vsel %vm2065, %v9070, %v9071
  %v9073 = vrot.slane %v9071, 4
  %v9074 = vrot.slane %v8075, 5
  %v9075 = vsel %vm2065, %v9073, %v9074
  %v9076 = vrot.slane %v8876, 5
  %v9077 = vrot.slane %v9076, 4
  %v9078 = vrot.slane %v8025, 5
  %v9079 = vsel %vm2065, %v9077, %v9078
  %v9080 = vrot.slane %v9078, 4
  %v9081 = vrot.slane %v8076, 5
  %v9082 = vsel %vm2065, %v9080, %v9081
  %v9083 = vrot.slane %v8877, 5
  %v9084 = vrot.slane %v9083, 4
  %v9085 = vrot.slane %v8027, 5
  %v9086 = vsel %vm2065, %v9084, %v9085
  %v9087 = vrot.slane %v9085, 4
  %v9088 = vrot.slane %v8077, 5
  %v9089 = vsel %vm2065, %v9087, %v9088
  %v9090 = vrot.slane %v8878, 5
  %v9091 = vrot.slane %v9090, 4
  %v9092 = vrot.slane %v8029, 5
  %v9093 = vsel %vm2065, %v9091, %v9092
  %v9094 = vrot.slane %v9092, 4
  %v9095 = vrot.slane %v8078, 5
  %v9096 = vsel %vm2065, %v9094, %v9095
  %v9097 = vrot.slane %v8879, 5
  %v9098 = vrot.slane %v9097, 4
  %v9099 = vrot.slane %v8031, 5
  %v9100 = vsel %vm2065, %v9098, %v9099
  %v9101 = vrot.slane %v9099, 4
  %v9102 = vrot.slane %v8079, 5
  %v9103 = vsel %vm2065, %v9101, %v9102
  %v9104 = vrot.slane %v8880, 5
  %v9105 = vrot.slane %v9104, 4
  %v9106 = vrot.slane %v8033, 5
  %v9107 = vsel %vm2065, %v9105, %v9106
  %v9108 = vrot.slane %v9106, 4
  %v9109 = vrot.slane %v8080, 5
  %v9110 = vsel %vm2065, %v9108, %v9109
  %v9111 = vrot.slane %v8881, 5
  %v9112 = vrot.slane %v9111, 4
  %v9113 = vrot.slane %v8035, 5
  %v9114 = vsel %vm2065, %v9112, %v9113
  %v9115 = vrot.slane %v9113, 4
  %v9116 = vrot.slane %v8081, 5
  %v9117 = vsel %vm2065, %v9115, %v9116
  %v9118 = vrot.slane %v8882, 5
  %v9119 = vrot.slane %v9118, 4
  %v9120 = vrot.slane %v8037, 5
  %v9121 = vsel %vm2065, %v9119, %v9120
  %v9122 = vrot.slane %v9120, 4
  %v9123 = vrot.slane %v8082, 5
  %v9124 = vsel %vm2065, %v9122, %v9123
  %v9125 = vrot.slane %v8883, 5
  %v9126 = vrot.slane %v9125, 4
  %v9127 = vrot.slane %v8039, 5
  %v9128 = vsel %vm2065, %v9126, %v9127
  %v9129 = vrot.slane %v9127, 4
  %v9130 = vrot.slane %v8083, 5
  %v9131 = vsel %vm2065, %v9129, %v9130
  %v9132 = vrot.slane %v8884, 5
  %v9133 = vrot.slane %v9132, 4
  %v9134 = vrot.slane %v8041, 5
  %v9135 = vsel %vm2065, %v9133, %v9134
  %v9136 = vrot.slane %v9134, 4
  %v9137 = vrot.slane %v8084, 5
  %v9138 = vsel %vm2065, %v9136, %v9137
  %v9139 = vrot.slane %v8885, 5
  %v9140 = vrot.slane %v9139, 4
  %v9141 = vrot.slane %v8043, 5
  %v9142 = vsel %vm2065, %v9140, %v9141
  %v9143 = vrot.slane %v9141, 4
  %v9144 = vrot.slane %v8085, 5
  %v9145 = vsel %vm2065, %v9143, %v9144
  %v9146 = vrot.slane %v8886, 5
  %v9147 = vrot.slane %v9146, 4
  %v9148 = vrot.slane %v8045, 5
  %v9149 = vsel %vm2065, %v9147, %v9148
  %v9150 = vrot.slane %v9148, 4
  %v9151 = vrot.slane %v8086, 5
  %v9152 = vsel %vm2065, %v9150, %v9151
  %v9153 = vrot.slane %v8887, 5
  %v9154 = vrot.slane %v9153, 4
  %v9155 = vrot.slane %v8047, 5
  %v9156 = vsel %vm2065, %v9154, %v9155
  %v9157 = vrot.slane %v9155, 4
  %v9158 = vrot.slane %v8087, 5
  %v9159 = vsel %vm2065, %v9157, %v9158
  %v9160 = vrot.slane %v8888, 5
  %v9161 = vrot.slane %v9160, 4
  %v9162 = vrot.slane %v8049, 5
  %v9163 = vsel %vm2065, %v9161, %v9162
  %v9164 = vrot.slane %v9162, 4
  %v9165 = vrot.slane %v8088, 5
  %v9166 = vsel %vm2065, %v9164, %v9165
  %v9167 = vrot.slane %v8889, 5
  %v9168 = vrot.slane %v9167, 4
  %v9169 = vrot.slane %v8051, 5
  %v9170 = vsel %vm2065, %v9168, %v9169
  %v9171 = vrot.slane %v9169, 4
  %v9172 = vrot.slane %v8089, 5
  %v9173 = vsel %vm2065, %v9171, %v9172
  %v9174 = vrot.slane %v8890, 5
  %v9175 = vrot.slane %v9174, 4
  %v9176 = vrot.slane %v8053, 5
  %v9177 = vsel %vm2065, %v9175, %v9176
  %v9178 = vrot.slane %v9176, 4
  %v9179 = vrot.slane %v8090, 5
  %v9180 = vsel %vm2065, %v9178, %v9179
  %v9181 = vrot.slane %v8891, 5
  %v9182 = vrot.slane %v9181, 4
  %v9183 = vrot.slane %v8055, 5
  %v9184 = vsel %vm2065, %v9182, %v9183
  %v9185 = vrot.slane %v9183, 4
  %v9186 = vrot.slane %v8091, 5
  %v9187 = vsel %vm2065, %v9185, %v9186
  %v9188 = vrot.slane %v8892, 5
  %v9189 = vrot.slane %v9188, 4
  %v9190 = vrot.slane %v8057, 5
  %v9191 = vsel %vm2065, %v9189, %v9190
  %v9192 = vrot.slane %v9190, 4
  %v9193 = vrot.slane %v8092, 5
  %v9194 = vsel %vm2065, %v9192, %v9193
  %v9195 = vrot.slane %v8893, 5
  %v9196 = vrot.slane %v9195, 4
  %v9197 = vrot.slane %v8059, 5
  %v9198 = vsel %vm2065, %v9196, %v9197
  %v9199 = vrot.slane %v9197, 4
  %v9200 = vrot.slane %v8093, 5
  %v9201 = vsel %vm2065, %v9199, %v9200
  %v9202 = vrot.slane %v8894, 5
  %v9203 = vrot.slane %v9202, 4
  %v9204 = vrot.slane %v8061, 5
  %v9205 = vsel %vm2065, %v9203, %v9204
  %v9206 = vrot.slane %v9204, 4
  %v9207 = vrot.slane %v8094, 5
  %v9208 = vsel %vm2065, %v9206, %v9207
  %v9209 = vrot.slane %v8895, 5
  %v9210 = vrot.slane %v9209, 4
  %v9211 = vrot.slane %v8063, 5
  %v9212 = vsel %vm2065, %v9210, %v9211
  %v9213 = vrot.slane %v9211, 4
  %v9214 = vrot.slane %v8095, 5
  %v9215 = vsel %vm2065, %v9213, %v9214
  %v9216 = vld [vmem:[%s838] sm:$0xf]
  %v9217 = vld [vmem:[%s838 + $0x4] sm:$0xf]
  %v9218 = vld [vmem:[%s838 + $0xc] sm:$0xf]
  %v9219 = vld [vmem:[%s838 + $0x10] sm:$0xf]
  %v9220 = vld [vmem:[%s838 + $0x18] sm:$0xf]
  %v9221 = vld [vmem:[%s838 + $0x1c] sm:$0xf]
  %v9222 = vld [vmem:[%s838 + $0x24] sm:$0xf]
  %v9223 = vld [vmem:[%s838 + $0x28] sm:$0xf]
  %v9224 = vld [vmem:[%s838 + $0x30] sm:$0xf]
  %v9225 = vld [vmem:[%s838 + $0x34] sm:$0xf]
  %v9226 = vld [vmem:[%s838 + $0x3c] sm:$0xf]
  %v9227 = vld [vmem:[%s838 + $0x40] sm:$0xf]
  %v9228 = vld [vmem:[%s838 + $0x48] sm:$0xf]
  %v9229 = vld [vmem:[%s838 + $0x4c] sm:$0xf]
  %v9230 = vld [vmem:[%s838 + $0x54] sm:$0xf]
  %v9231 = vld [vmem:[%s838 + $0x58] sm:$0xf]
  %v9232 = vld [vmem:[%s838 + $0x60] sm:$0xf]
  %v9233 = vld [vmem:[%s838 + $0x64] sm:$0xf]
  %v9234 = vld [vmem:[%s838 + $0x6c] sm:$0xf]
  %v9235 = vld [vmem:[%s838 + $0x70] sm:$0xf]
  %v9236 = vld [vmem:[%s838 + $0x78] sm:$0xf]
  %v9237 = vld [vmem:[%s838 + $0x7c] sm:$0xf]
  %v9238 = vld [vmem:[%s838 + $0x84] sm:$0xf]
  %v9239 = vld [vmem:[%s838 + $0x88] sm:$0xf]
  %v9240 = vld [vmem:[%s838 + $0x90] sm:$0xf]
  %v9241 = vld [vmem:[%s838 + $0x94] sm:$0xf]
  %v9242 = vld [vmem:[%s838 + $0x9c] sm:$0xf]
  %v9243 = vld [vmem:[%s838 + $0xa0] sm:$0xf]
  %v9244 = vld [vmem:[%s838 + $0xa8] sm:$0xf]
  %v9245 = vld [vmem:[%s838 + $0xac] sm:$0xf]
  %v9246 = vld [vmem:[%s838 + $0xb4] sm:$0xf]
  %v9247 = vld [vmem:[%s838 + $0xb8] sm:$0xf]
  %v9248 = vld [vmem:[%s838 + $0xd8] sm:$0xf]
  %v9249 = vld [vmem:[%s838 + $0xdc] sm:$0xf]
  %v9250 = vld [vmem:[%s838 + $0xe4] sm:$0xf]
  %v9251 = vld [vmem:[%s838 + $0xe8] sm:$0xf]
  %v9252 = vld [vmem:[%s838 + $0xf0] sm:$0xf]
  %v9253 = vld [vmem:[%s838 + $0xf4] sm:$0xf]
  %v9254 = vld [vmem:[%s838 + $0xfc] sm:$0xf]
  %v9255 = vld [vmem:[%s838 + $0x100] sm:$0xf]
  %v9256 = vld [vmem:[%s838 + $0x108] sm:$0xf]
  %v9257 = vld [vmem:[%s838 + $0x10c] sm:$0xf]
  %v9258 = vld [vmem:[%s838 + $0x114] sm:$0xf]
  %v9259 = vld [vmem:[%s838 + $0x118] sm:$0xf]
  %v9260 = vld [vmem:[%s838 + $0x120] sm:$0xf]
  %v9261 = vld [vmem:[%s838 + $0x124] sm:$0xf]
  %v9262 = vld [vmem:[%s838 + $0x12c] sm:$0xf]
  %v9263 = vld [vmem:[%s838 + $0x130] sm:$0xf]
  %v9264 = vld [vmem:[%s838 + $0x138] sm:$0xf]
  %v9265 = vld [vmem:[%s838 + $0x13c] sm:$0xf]
  %v9266 = vld [vmem:[%s838 + $0x144] sm:$0xf]
  %v9267 = vld [vmem:[%s838 + $0x148] sm:$0xf]
  %v9268 = vld [vmem:[%s838 + $0x150] sm:$0xf]
  %v9269 = vld [vmem:[%s838 + $0x154] sm:$0xf]
  %v9270 = vld [vmem:[%s838 + $0x15c] sm:$0xf]
  %v9271 = vld [vmem:[%s838 + $0x160] sm:$0xf]
  %v9272 = vld [vmem:[%s838 + $0x168] sm:$0xf]
  %v9273 = vld [vmem:[%s838 + $0x16c] sm:$0xf]
  %v9274 = vld [vmem:[%s838 + $0x174] sm:$0xf]
  %v9275 = vld [vmem:[%s838 + $0x178] sm:$0xf]
  %v9276 = vld [vmem:[%s838 + $0x180] sm:$0xf]
  %v9277 = vld [vmem:[%s838 + $0x184] sm:$0xf]
  %v9278 = vld [vmem:[%s838 + $0x18c] sm:$0xf]
  %v9279 = vld [vmem:[%s838 + $0x190] sm:$0xf]
  %v9280 = vld [vmem:[%s838 + $0x8] sm:$0x1]
  %v9281 = vld [vmem:[%s838 + $0x14] sm:$0x1]
  %v9282 = vld [vmem:[%s838 + $0x20] sm:$0x1]
  %v9283 = vld [vmem:[%s838 + $0x2c] sm:$0x1]
  %v9284 = vld [vmem:[%s838 + $0x38] sm:$0x1]
  %v9285 = vld [vmem:[%s838 + $0x44] sm:$0x1]
  %v9286 = vld [vmem:[%s838 + $0x50] sm:$0x1]
  %v9287 = vld [vmem:[%s838 + $0x5c] sm:$0x1]
  %v9288 = vld [vmem:[%s838 + $0x68] sm:$0x1]
  %v9289 = vld [vmem:[%s838 + $0x74] sm:$0x1]
  %v9290 = vld [vmem:[%s838 + $0x80] sm:$0x1]
  %v9291 = vld [vmem:[%s838 + $0x8c] sm:$0x1]
  %v9292 = vld [vmem:[%s838 + $0x98] sm:$0x1]
  %v9293 = vld [vmem:[%s838 + $0xa4] sm:$0x1]
  %v9294 = vld [vmem:[%s838 + $0xb0] sm:$0x1]
  %v9295 = vld [vmem:[%s838 + $0xbc] sm:$0x1]
  %v9296 = vld [vmem:[%s838 + $0xe0] sm:$0x1]
  %v9297 = vld [vmem:[%s838 + $0xec] sm:$0x1]
  %v9298 = vld [vmem:[%s838 + $0xf8] sm:$0x1]
  %v9299 = vld [vmem:[%s838 + $0x104] sm:$0x1]
  %v9300 = vld [vmem:[%s838 + $0x110] sm:$0x1]
  %v9301 = vld [vmem:[%s838 + $0x11c] sm:$0x1]
  %v9302 = vld [vmem:[%s838 + $0x128] sm:$0x1]
  %v9303 = vld [vmem:[%s838 + $0x134] sm:$0x1]
  %v9304 = vld [vmem:[%s838 + $0x140] sm:$0x1]
  %v9305 = vld [vmem:[%s838 + $0x14c] sm:$0x1]
  %v9306 = vld [vmem:[%s838 + $0x158] sm:$0x1]
  %v9307 = vld [vmem:[%s838 + $0x164] sm:$0x1]
  %v9308 = vld [vmem:[%s838 + $0x170] sm:$0x1]
  %v9309 = vld [vmem:[%s838 + $0x17c] sm:$0x1]
  %v9310 = vld [vmem:[%s838 + $0x188] sm:$0x1]
  %v9311 = vld [vmem:[%s838 + $0x194] sm:$0x1]
  %v9313 = vshrl.u32 %v9216, 16
  %v9315 = vrot.slane %v9313, 4
  %v9316 = vshll.u32 %v9216, 16
  %v9318 = vrot.slane %v9316, 5
  %v9319 = vor.u32 %v9315, %v9318
  %v9320 = vrot.slane %v9319, 4
  %v9322 = vshll.u32 %v9217, 16
  %v9324 = vrot.slane %v9322, 5
  %v9325 = vsel %vm1166, %v9320, %v9324
  %v9326 = vshrl.u32 %v9217, 16
  %v9328 = vrot.slane %v9326, 4
  %v9329 = vor.u32 %v9328, %v9324
  %v9330 = vrot.slane %v9329, 4
  %v9332 = vshll.u32 %v9280, 16
  %v9334 = vrot.slane %v9332, 5
  %v9335 = vsel %vm1166, %v9330, %v9334
  %v9337 = vshrl.u32 %v9218, 16
  %v9339 = vrot.slane %v9337, 4
  %v9340 = vshll.u32 %v9218, 16
  %v9342 = vrot.slane %v9340, 5
  %v9343 = vor.u32 %v9339, %v9342
  %v9344 = vrot.slane %v9343, 4
  %v9346 = vshll.u32 %v9219, 16
  %v9348 = vrot.slane %v9346, 5
  %v9349 = vsel %vm1166, %v9344, %v9348
  %v9350 = vshrl.u32 %v9219, 16
  %v9352 = vrot.slane %v9350, 4
  %v9353 = vor.u32 %v9352, %v9348
  %v9354 = vrot.slane %v9353, 4
  %v9356 = vshll.u32 %v9281, 16
  %v9358 = vrot.slane %v9356, 5
  %v9359 = vsel %vm1166, %v9354, %v9358
  %v9361 = vshrl.u32 %v9220, 16
  %v9363 = vrot.slane %v9361, 4
  %v9364 = vshll.u32 %v9220, 16
  %v9366 = vrot.slane %v9364, 5
  %v9367 = vor.u32 %v9363, %v9366
  %v9368 = vrot.slane %v9367, 4
  %v9370 = vshll.u32 %v9221, 16
  %v9372 = vrot.slane %v9370, 5
  %v9373 = vsel %vm1166, %v9368, %v9372
  %v9374 = vshrl.u32 %v9221, 16
  %v9376 = vrot.slane %v9374, 4
  %v9377 = vor.u32 %v9376, %v9372
  %v9378 = vrot.slane %v9377, 4
  %v9380 = vshll.u32 %v9282, 16
  %v9382 = vrot.slane %v9380, 5
  %v9383 = vsel %vm1166, %v9378, %v9382
  %v9385 = vshrl.u32 %v9222, 16
  %v9387 = vrot.slane %v9385, 4
  %v9388 = vshll.u32 %v9222, 16
  %v9390 = vrot.slane %v9388, 5
  %v9391 = vor.u32 %v9387, %v9390
  %v9392 = vrot.slane %v9391, 4
  %v9394 = vshll.u32 %v9223, 16
  %v9396 = vrot.slane %v9394, 5
  %v9397 = vsel %vm1166, %v9392, %v9396
  %v9398 = vshrl.u32 %v9223, 16
  %v9400 = vrot.slane %v9398, 4
  %v9401 = vor.u32 %v9400, %v9396
  %v9402 = vrot.slane %v9401, 4
  %v9404 = vshll.u32 %v9283, 16
  %v9406 = vrot.slane %v9404, 5
  %v9407 = vsel %vm1166, %v9402, %v9406
  %v9409 = vshrl.u32 %v9224, 16
  %v9411 = vrot.slane %v9409, 4
  %v9412 = vshll.u32 %v9224, 16
  %v9414 = vrot.slane %v9412, 5
  %v9415 = vor.u32 %v9411, %v9414
  %v9416 = vrot.slane %v9415, 4
  %v9418 = vshll.u32 %v9225, 16
  %v9420 = vrot.slane %v9418, 5
  %v9421 = vsel %vm1166, %v9416, %v9420
  %v9422 = vshrl.u32 %v9225, 16
  %v9424 = vrot.slane %v9422, 4
  %v9425 = vor.u32 %v9424, %v9420
  %v9426 = vrot.slane %v9425, 4
  %v9428 = vshll.u32 %v9284, 16
  %v9430 = vrot.slane %v9428, 5
  %v9431 = vsel %vm1166, %v9426, %v9430
  %v9433 = vshrl.u32 %v9226, 16
  %v9435 = vrot.slane %v9433, 4
  %v9436 = vshll.u32 %v9226, 16
  %v9438 = vrot.slane %v9436, 5
  %v9439 = vor.u32 %v9435, %v9438
  %v9440 = vrot.slane %v9439, 4
  %v9442 = vshll.u32 %v9227, 16
  %v9444 = vrot.slane %v9442, 5
  %v9445 = vsel %vm1166, %v9440, %v9444
  %v9446 = vshrl.u32 %v9227, 16
  %v9448 = vrot.slane %v9446, 4
  %v9449 = vor.u32 %v9448, %v9444
  %v9450 = vrot.slane %v9449, 4
  %v9452 = vshll.u32 %v9285, 16
  %v9454 = vrot.slane %v9452, 5
  %v9455 = vsel %vm1166, %v9450, %v9454
  %v9457 = vshrl.u32 %v9228, 16
  %v9459 = vrot.slane %v9457, 4
  %v9460 = vshll.u32 %v9228, 16
  %v9462 = vrot.slane %v9460, 5
  %v9463 = vor.u32 %v9459, %v9462
  %v9464 = vrot.slane %v9463, 4
  %v9466 = vshll.u32 %v9229, 16
  %v9468 = vrot.slane %v9466, 5
  %v9469 = vsel %vm1166, %v9464, %v9468
  %v9470 = vshrl.u32 %v9229, 16
  %v9472 = vrot.slane %v9470, 4
  %v9473 = vor.u32 %v9472, %v9468
  %v9474 = vrot.slane %v9473, 4
  %v9476 = vshll.u32 %v9286, 16
  %v9478 = vrot.slane %v9476, 5
  %v9479 = vsel %vm1166, %v9474, %v9478
  %v9481 = vshrl.u32 %v9230, 16
  %v9483 = vrot.slane %v9481, 4
  %v9484 = vshll.u32 %v9230, 16
  %v9486 = vrot.slane %v9484, 5
  %v9487 = vor.u32 %v9483, %v9486
  %v9488 = vrot.slane %v9487, 4
  %v9490 = vshll.u32 %v9231, 16
  %v9492 = vrot.slane %v9490, 5
  %v9493 = vsel %vm1166, %v9488, %v9492
  %v9494 = vshrl.u32 %v9231, 16
  %v9496 = vrot.slane %v9494, 4
  %v9497 = vor.u32 %v9496, %v9492
  %v9498 = vrot.slane %v9497, 4
  %v9500 = vshll.u32 %v9287, 16
  %v9502 = vrot.slane %v9500, 5
  %v9503 = vsel %vm1166, %v9498, %v9502
  %v9505 = vshrl.u32 %v9232, 16
  %v9507 = vrot.slane %v9505, 4
  %v9508 = vshll.u32 %v9232, 16
  %v9510 = vrot.slane %v9508, 5
  %v9511 = vor.u32 %v9507, %v9510
  %v9512 = vrot.slane %v9511, 4
  %v9514 = vshll.u32 %v9233, 16
  %v9516 = vrot.slane %v9514, 5
  %v9517 = vsel %vm1166, %v9512, %v9516
  %v9518 = vshrl.u32 %v9233, 16
  %v9520 = vrot.slane %v9518, 4
  %v9521 = vor.u32 %v9520, %v9516
  %v9522 = vrot.slane %v9521, 4
  %v9524 = vshll.u32 %v9288, 16
  %v9526 = vrot.slane %v9524, 5
  %v9527 = vsel %vm1166, %v9522, %v9526
  %v9529 = vshrl.u32 %v9234, 16
  %v9531 = vrot.slane %v9529, 4
  %v9532 = vshll.u32 %v9234, 16
  %v9534 = vrot.slane %v9532, 5
  %v9535 = vor.u32 %v9531, %v9534
  %v9536 = vrot.slane %v9535, 4
  %v9538 = vshll.u32 %v9235, 16
  %v9540 = vrot.slane %v9538, 5
  %v9541 = vsel %vm1166, %v9536, %v9540
  %v9542 = vshrl.u32 %v9235, 16
  %v9544 = vrot.slane %v9542, 4
  %v9545 = vor.u32 %v9544, %v9540
  %v9546 = vrot.slane %v9545, 4
  %v9548 = vshll.u32 %v9289, 16
  %v9550 = vrot.slane %v9548, 5
  %v9551 = vsel %vm1166, %v9546, %v9550
  %v9553 = vshrl.u32 %v9236, 16
  %v9555 = vrot.slane %v9553, 4
  %v9556 = vshll.u32 %v9236, 16
  %v9558 = vrot.slane %v9556, 5
  %v9559 = vor.u32 %v9555, %v9558
  %v9560 = vrot.slane %v9559, 4
  %v9562 = vshll.u32 %v9237, 16
  %v9564 = vrot.slane %v9562, 5
  %v9565 = vsel %vm1166, %v9560, %v9564
  %v9566 = vshrl.u32 %v9237, 16
  %v9568 = vrot.slane %v9566, 4
  %v9569 = vor.u32 %v9568, %v9564
  %v9570 = vrot.slane %v9569, 4
  %v9572 = vshll.u32 %v9290, 16
  %v9574 = vrot.slane %v9572, 5
  %v9575 = vsel %vm1166, %v9570, %v9574
  %v9577 = vshrl.u32 %v9238, 16
  %v9579 = vrot.slane %v9577, 4
  %v9580 = vshll.u32 %v9238, 16
  %v9582 = vrot.slane %v9580, 5
  %v9583 = vor.u32 %v9579, %v9582
  %v9584 = vrot.slane %v9583, 4
  %v9586 = vshll.u32 %v9239, 16
  %v9588 = vrot.slane %v9586, 5
  %v9589 = vsel %vm1166, %v9584, %v9588
  %v9590 = vshrl.u32 %v9239, 16
  %v9592 = vrot.slane %v9590, 4
  %v9593 = vor.u32 %v9592, %v9588
  %v9594 = vrot.slane %v9593, 4
  %v9596 = vshll.u32 %v9291, 16
  %v9598 = vrot.slane %v9596, 5
  %v9599 = vsel %vm1166, %v9594, %v9598
  %v9601 = vshrl.u32 %v9240, 16
  %v9603 = vrot.slane %v9601, 4
  %v9604 = vshll.u32 %v9240, 16
  %v9606 = vrot.slane %v9604, 5
  %v9607 = vor.u32 %v9603, %v9606
  %v9608 = vrot.slane %v9607, 4
  %v9610 = vshll.u32 %v9241, 16
  %v9612 = vrot.slane %v9610, 5
  %v9613 = vsel %vm1166, %v9608, %v9612
  %v9614 = vshrl.u32 %v9241, 16
  %v9616 = vrot.slane %v9614, 4
  %v9617 = vor.u32 %v9616, %v9612
  %v9618 = vrot.slane %v9617, 4
  %v9620 = vshll.u32 %v9292, 16
  %v9622 = vrot.slane %v9620, 5
  %v9623 = vsel %vm1166, %v9618, %v9622
  %v9625 = vshrl.u32 %v9242, 16
  %v9627 = vrot.slane %v9625, 4
  %v9628 = vshll.u32 %v9242, 16
  %v9630 = vrot.slane %v9628, 5
  %v9631 = vor.u32 %v9627, %v9630
  %v9632 = vrot.slane %v9631, 4
  %v9634 = vshll.u32 %v9243, 16
  %v9636 = vrot.slane %v9634, 5
  %v9637 = vsel %vm1166, %v9632, %v9636
  %v9638 = vshrl.u32 %v9243, 16
  %v9640 = vrot.slane %v9638, 4
  %v9641 = vor.u32 %v9640, %v9636
  %v9642 = vrot.slane %v9641, 4
  %v9644 = vshll.u32 %v9293, 16
  %v9646 = vrot.slane %v9644, 5
  %v9647 = vsel %vm1166, %v9642, %v9646
  %v9649 = vshrl.u32 %v9244, 16
  %v9651 = vrot.slane %v9649, 4
  %v9652 = vshll.u32 %v9244, 16
  %v9654 = vrot.slane %v9652, 5
  %v9655 = vor.u32 %v9651, %v9654
  %v9656 = vrot.slane %v9655, 4
  %v9658 = vshll.u32 %v9245, 16
  %v9660 = vrot.slane %v9658, 5
  %v9661 = vsel %vm1166, %v9656, %v9660
  %v9662 = vshrl.u32 %v9245, 16
  %v9664 = vrot.slane %v9662, 4
  %v9665 = vor.u32 %v9664, %v9660
  %v9666 = vrot.slane %v9665, 4
  %v9668 = vshll.u32 %v9294, 16
  %v9670 = vrot.slane %v9668, 5
  %v9671 = vsel %vm1166, %v9666, %v9670
  %v9673 = vshrl.u32 %v9246, 16
  %v9675 = vrot.slane %v9673, 4
  %v9676 = vshll.u32 %v9246, 16
  %v9678 = vrot.slane %v9676, 5
  %v9679 = vor.u32 %v9675, %v9678
  %v9680 = vrot.slane %v9679, 4
  %v9682 = vshll.u32 %v9247, 16
  %v9684 = vrot.slane %v9682, 5
  %v9685 = vsel %vm1166, %v9680, %v9684
  %v9686 = vshrl.u32 %v9247, 16
  %v9688 = vrot.slane %v9686, 4
  %v9689 = vor.u32 %v9688, %v9684
  %v9690 = vrot.slane %v9689, 4
  %v9692 = vshll.u32 %v9295, 16
  %v9694 = vrot.slane %v9692, 5
  %v9695 = vsel %vm1166, %v9690, %v9694
  %v9697 = vshrl.u32 %v9248, 16
  %v9699 = vrot.slane %v9697, 4
  %v9700 = vshll.u32 %v9248, 16
  %v9702 = vrot.slane %v9700, 5
  %v9703 = vor.u32 %v9699, %v9702
  %v9704 = vrot.slane %v9703, 4
  %v9706 = vshll.u32 %v9249, 16
  %v9708 = vrot.slane %v9706, 5
  %v9709 = vsel %vm1166, %v9704, %v9708
  %v9710 = vshrl.u32 %v9249, 16
  %v9712 = vrot.slane %v9710, 4
  %v9713 = vor.u32 %v9712, %v9708
  %v9714 = vrot.slane %v9713, 4
  %v9716 = vshll.u32 %v9296, 16
  %v9718 = vrot.slane %v9716, 5
  %v9719 = vsel %vm1166, %v9714, %v9718
  %v9721 = vshrl.u32 %v9250, 16
  %v9723 = vrot.slane %v9721, 4
  %v9724 = vshll.u32 %v9250, 16
  %v9726 = vrot.slane %v9724, 5
  %v9727 = vor.u32 %v9723, %v9726
  %v9728 = vrot.slane %v9727, 4
  %v9730 = vshll.u32 %v9251, 16
  %v9732 = vrot.slane %v9730, 5
  %v9733 = vsel %vm1166, %v9728, %v9732
  %v9734 = vshrl.u32 %v9251, 16
  %v9736 = vrot.slane %v9734, 4
  %v9737 = vor.u32 %v9736, %v9732
  %v9738 = vrot.slane %v9737, 4
  %v9740 = vshll.u32 %v9297, 16
  %v9742 = vrot.slane %v9740, 5
  %v9743 = vsel %vm1166, %v9738, %v9742
  %v9745 = vshrl.u32 %v9252, 16
  %v9747 = vrot.slane %v9745, 4
  %v9748 = vshll.u32 %v9252, 16
  %v9750 = vrot.slane %v9748, 5
  %v9751 = vor.u32 %v9747, %v9750
  %v9752 = vrot.slane %v9751, 4
  %v9754 = vshll.u32 %v9253, 16
  %v9756 = vrot.slane %v9754, 5
  %v9757 = vsel %vm1166, %v9752, %v9756
  %v9758 = vshrl.u32 %v9253, 16
  %v9760 = vrot.slane %v9758, 4
  %v9761 = vor.u32 %v9760, %v9756
  %v9762 = vrot.slane %v9761, 4
  %v9764 = vshll.u32 %v9298, 16
  %v9766 = vrot.slane %v9764, 5
  %v9767 = vsel %vm1166, %v9762, %v9766
  %v9769 = vshrl.u32 %v9254, 16
  %v9771 = vrot.slane %v9769, 4
  %v9772 = vshll.u32 %v9254, 16
  %v9774 = vrot.slane %v9772, 5
  %v9775 = vor.u32 %v9771, %v9774
  %v9776 = vrot.slane %v9775, 4
  %v9778 = vshll.u32 %v9255, 16
  %v9780 = vrot.slane %v9778, 5
  %v9781 = vsel %vm1166, %v9776, %v9780
  %v9782 = vshrl.u32 %v9255, 16
  %v9784 = vrot.slane %v9782, 4
  %v9785 = vor.u32 %v9784, %v9780
  %v9786 = vrot.slane %v9785, 4
  %v9788 = vshll.u32 %v9299, 16
  %v9790 = vrot.slane %v9788, 5
  %v9791 = vsel %vm1166, %v9786, %v9790
  %v9793 = vshrl.u32 %v9256, 16
  %v9795 = vrot.slane %v9793, 4
  %v9796 = vshll.u32 %v9256, 16
  %v9798 = vrot.slane %v9796, 5
  %v9799 = vor.u32 %v9795, %v9798
  %v9800 = vrot.slane %v9799, 4
  %v9802 = vshll.u32 %v9257, 16
  %v9804 = vrot.slane %v9802, 5
  %v9805 = vsel %vm1166, %v9800, %v9804
  %v9806 = vshrl.u32 %v9257, 16
  %v9808 = vrot.slane %v9806, 4
  %v9809 = vor.u32 %v9808, %v9804
  %v9810 = vrot.slane %v9809, 4
  %v9812 = vshll.u32 %v9300, 16
  %v9814 = vrot.slane %v9812, 5
  %v9815 = vsel %vm1166, %v9810, %v9814
  %v9817 = vshrl.u32 %v9258, 16
  %v9819 = vrot.slane %v9817, 4
  %v9820 = vshll.u32 %v9258, 16
  %v9822 = vrot.slane %v9820, 5
  %v9823 = vor.u32 %v9819, %v9822
  %v9824 = vrot.slane %v9823, 4
  %v9826 = vshll.u32 %v9259, 16
  %v9828 = vrot.slane %v9826, 5
  %v9829 = vsel %vm1166, %v9824, %v9828
  %v9830 = vshrl.u32 %v9259, 16
  %v9832 = vrot.slane %v9830, 4
  %v9833 = vor.u32 %v9832, %v9828
  %v9834 = vrot.slane %v9833, 4
  %v9836 = vshll.u32 %v9301, 16
  %v9838 = vrot.slane %v9836, 5
  %v9839 = vsel %vm1166, %v9834, %v9838
  %v9841 = vshrl.u32 %v9260, 16
  %v9843 = vrot.slane %v9841, 4
  %v9844 = vshll.u32 %v9260, 16
  %v9846 = vrot.slane %v9844, 5
  %v9847 = vor.u32 %v9843, %v9846
  %v9848 = vrot.slane %v9847, 4
  %v9850 = vshll.u32 %v9261, 16
  %v9852 = vrot.slane %v9850, 5
  %v9853 = vsel %vm1166, %v9848, %v9852
  %v9854 = vshrl.u32 %v9261, 16
  %v9856 = vrot.slane %v9854, 4
  %v9857 = vor.u32 %v9856, %v9852
  %v9858 = vrot.slane %v9857, 4
  %v9860 = vshll.u32 %v9302, 16
  %v9862 = vrot.slane %v9860, 5
  %v9863 = vsel %vm1166, %v9858, %v9862
  %v9865 = vshrl.u32 %v9262, 16
  %v9867 = vrot.slane %v9865, 4
  %v9868 = vshll.u32 %v9262, 16
  %v9870 = vrot.slane %v9868, 5
  %v9871 = vor.u32 %v9867, %v9870
  %v9872 = vrot.slane %v9871, 4
  %v9874 = vshll.u32 %v9263, 16
  %v9876 = vrot.slane %v9874, 5
  %v9877 = vsel %vm1166, %v9872, %v9876
  %v9878 = vshrl.u32 %v9263, 16
  %v9880 = vrot.slane %v9878, 4
  %v9881 = vor.u32 %v9880, %v9876
  %v9882 = vrot.slane %v9881, 4
  %v9884 = vshll.u32 %v9303, 16
  %v9886 = vrot.slane %v9884, 5
  %v9887 = vsel %vm1166, %v9882, %v9886
  %v9889 = vshrl.u32 %v9264, 16
  %v9891 = vrot.slane %v9889, 4
  %v9892 = vshll.u32 %v9264, 16
  %v9894 = vrot.slane %v9892, 5
  %v9895 = vor.u32 %v9891, %v9894
  %v9896 = vrot.slane %v9895, 4
  %v9898 = vshll.u32 %v9265, 16
  %v9900 = vrot.slane %v9898, 5
  %v9901 = vsel %vm1166, %v9896, %v9900
  %v9902 = vshrl.u32 %v9265, 16
  %v9904 = vrot.slane %v9902, 4
  %v9905 = vor.u32 %v9904, %v9900
  %v9906 = vrot.slane %v9905, 4
  %v9908 = vshll.u32 %v9304, 16
  %v9910 = vrot.slane %v9908, 5
  %v9911 = vsel %vm1166, %v9906, %v9910
  %v9913 = vshrl.u32 %v9266, 16
  %v9915 = vrot.slane %v9913, 4
  %v9916 = vshll.u32 %v9266, 16
  %v9918 = vrot.slane %v9916, 5
  %v9919 = vor.u32 %v9915, %v9918
  %v9920 = vrot.slane %v9919, 4
  %v9922 = vshll.u32 %v9267, 16
  %v9924 = vrot.slane %v9922, 5
  %v9925 = vsel %vm1166, %v9920, %v9924
  %v9926 = vshrl.u32 %v9267, 16
  %v9928 = vrot.slane %v9926, 4
  %v9929 = vor.u32 %v9928, %v9924
  %v9930 = vrot.slane %v9929, 4
  %v9932 = vshll.u32 %v9305, 16
  %v9934 = vrot.slane %v9932, 5
  %v9935 = vsel %vm1166, %v9930, %v9934
  %v9937 = vshrl.u32 %v9268, 16
  %v9939 = vrot.slane %v9937, 4
  %v9940 = vshll.u32 %v9268, 16
  %v9942 = vrot.slane %v9940, 5
  %v9943 = vor.u32 %v9939, %v9942
  %v9944 = vrot.slane %v9943, 4
  %v9946 = vshll.u32 %v9269, 16
  %v9948 = vrot.slane %v9946, 5
  %v9949 = vsel %vm1166, %v9944, %v9948
  %v9950 = vshrl.u32 %v9269, 16
  %v9952 = vrot.slane %v9950, 4
  %v9953 = vor.u32 %v9952, %v9948
  %v9954 = vrot.slane %v9953, 4
  %v9956 = vshll.u32 %v9306, 16
  %v9958 = vrot.slane %v9956, 5
  %v9959 = vsel %vm1166, %v9954, %v9958
  %v9961 = vshrl.u32 %v9270, 16
  %v9963 = vrot.slane %v9961, 4
  %v9964 = vshll.u32 %v9270, 16
  %v9966 = vrot.slane %v9964, 5
  %v9967 = vor.u32 %v9963, %v9966
  %v9968 = vrot.slane %v9967, 4
  %v9970 = vshll.u32 %v9271, 16
  %v9972 = vrot.slane %v9970, 5
  %v9973 = vsel %vm1166, %v9968, %v9972
  %v9974 = vshrl.u32 %v9271, 16
  %v9976 = vrot.slane %v9974, 4
  %v9977 = vor.u32 %v9976, %v9972
  %v9978 = vrot.slane %v9977, 4
  %v9980 = vshll.u32 %v9307, 16
  %v9982 = vrot.slane %v9980, 5
  %v9983 = vsel %vm1166, %v9978, %v9982
  %v9985 = vshrl.u32 %v9272, 16
  %v9987 = vrot.slane %v9985, 4
  %v9988 = vshll.u32 %v9272, 16
  %v9990 = vrot.slane %v9988, 5
  %v9991 = vor.u32 %v9987, %v9990
  %v9992 = vrot.slane %v9991, 4
  %v9994 = vshll.u32 %v9273, 16
  %v9996 = vrot.slane %v9994, 5
  %v9997 = vsel %vm1166, %v9992, %v9996
  %v9998 = vshrl.u32 %v9273, 16
  %v10000 = vrot.slane %v9998, 4
  %v10001 = vor.u32 %v10000, %v9996
  %v10002 = vrot.slane %v10001, 4
  %v10004 = vshll.u32 %v9308, 16
  %v10006 = vrot.slane %v10004, 5
  %v10007 = vsel %vm1166, %v10002, %v10006
  %v10009 = vshrl.u32 %v9274, 16
  %v10011 = vrot.slane %v10009, 4
  %v10012 = vshll.u32 %v9274, 16
  %v10014 = vrot.slane %v10012, 5
  %v10015 = vor.u32 %v10011, %v10014
  %v10016 = vrot.slane %v10015, 4
  %v10018 = vshll.u32 %v9275, 16
  %v10020 = vrot.slane %v10018, 5
  %v10021 = vsel %vm1166, %v10016, %v10020
  %v10022 = vshrl.u32 %v9275, 16
  %v10024 = vrot.slane %v10022, 4
  %v10025 = vor.u32 %v10024, %v10020
  %v10026 = vrot.slane %v10025, 4
  %v10028 = vshll.u32 %v9309, 16
  %v10030 = vrot.slane %v10028, 5
  %v10031 = vsel %vm1166, %v10026, %v10030
  %v10033 = vshrl.u32 %v9276, 16
  %v10035 = vrot.slane %v10033, 4
  %v10036 = vshll.u32 %v9276, 16
  %v10038 = vrot.slane %v10036, 5
  %v10039 = vor.u32 %v10035, %v10038
  %v10040 = vrot.slane %v10039, 4
  %v10042 = vshll.u32 %v9277, 16
  %v10044 = vrot.slane %v10042, 5
  %v10045 = vsel %vm1166, %v10040, %v10044
  %v10046 = vshrl.u32 %v9277, 16
  %v10048 = vrot.slane %v10046, 4
  %v10049 = vor.u32 %v10048, %v10044
  %v10050 = vrot.slane %v10049, 4
  %v10052 = vshll.u32 %v9310, 16
  %v10054 = vrot.slane %v10052, 5
  %v10055 = vsel %vm1166, %v10050, %v10054
  %v10057 = vshrl.u32 %v9278, 16
  %v10059 = vrot.slane %v10057, 4
  %v10060 = vshll.u32 %v9278, 16
  %v10062 = vrot.slane %v10060, 5
  %v10063 = vor.u32 %v10059, %v10062
  %v10064 = vrot.slane %v10063, 4
  %v10066 = vshll.u32 %v9279, 16
  %v10068 = vrot.slane %v10066, 5
  %v10069 = vsel %vm1166, %v10064, %v10068
  %v10070 = vshrl.u32 %v9279, 16
  %v10072 = vrot.slane %v10070, 4
  %v10073 = vor.u32 %v10072, %v10068
  %v10074 = vrot.slane %v10073, 4
  %v10076 = vshll.u32 %v9311, 16
  %v10078 = vrot.slane %v10076, 5
  %v10079 = vsel %vm1166, %v10074, %v10078
  %v10080 = vld [vmem:[%s838] sm:$0xe]
  %v10081 = vld [vmem:[%s838 + $0xc] sm:$0xe]
  %v10082 = vld [vmem:[%s838 + $0x18] sm:$0xe]
  %v10083 = vld [vmem:[%s838 + $0x24] sm:$0xe]
  %v10084 = vld [vmem:[%s838 + $0x30] sm:$0xe]
  %v10085 = vld [vmem:[%s838 + $0x3c] sm:$0xe]
  %v10086 = vld [vmem:[%s838 + $0x48] sm:$0xe]
  %v10087 = vld [vmem:[%s838 + $0x54] sm:$0xe]
  %v10088 = vld [vmem:[%s838 + $0x60] sm:$0xe]
  %v10089 = vld [vmem:[%s838 + $0x6c] sm:$0xe]
  %v10090 = vld [vmem:[%s838 + $0x78] sm:$0xe]
  %v10091 = vld [vmem:[%s838 + $0x84] sm:$0xe]
  %v10092 = vld [vmem:[%s838 + $0x90] sm:$0xe]
  %v10093 = vld [vmem:[%s838 + $0x9c] sm:$0xe]
  %v10094 = vld [vmem:[%s838 + $0xa8] sm:$0xe]
  %v10095 = vld [vmem:[%s838 + $0xb4] sm:$0xe]
  %v10096 = vld [vmem:[%s838 + $0xd8] sm:$0xe]
  %v10097 = vld [vmem:[%s838 + $0xe4] sm:$0xe]
  %v10098 = vld [vmem:[%s838 + $0xf0] sm:$0xe]
  %v10099 = vld [vmem:[%s838 + $0xfc] sm:$0xe]
  %v10100 = vld [vmem:[%s838 + $0x108] sm:$0xe]
  %v10101 = vld [vmem:[%s838 + $0x114] sm:$0xe]
  %v10102 = vld [vmem:[%s838 + $0x120] sm:$0xe]
  %v10103 = vld [vmem:[%s838 + $0x12c] sm:$0xe]
  %v10104 = vld [vmem:[%s838 + $0x138] sm:$0xe]
  %v10105 = vld [vmem:[%s838 + $0x144] sm:$0xe]
  %v10106 = vld [vmem:[%s838 + $0x150] sm:$0xe]
  %v10107 = vld [vmem:[%s838 + $0x15c] sm:$0xe]
  %v10108 = vld [vmem:[%s838 + $0x168] sm:$0xe]
  %v10109 = vld [vmem:[%s838 + $0x174] sm:$0xe]
  %v10110 = vld [vmem:[%s838 + $0x180] sm:$0xe]
  %v10111 = vld [vmem:[%s838 + $0x18c] sm:$0xe]
  %v10208 = vrot.slane %v10080, 5
  %v10209 = vrot.slane %v10208, 4
  %v10210 = vrot.slane %v9217, 5
  %v10211 = vsel %vm2065, %v10209, %v10210
  %v10212 = vrot.slane %v10210, 4
  %v10213 = vrot.slane %v9280, 5
  %v10214 = vsel %vm2065, %v10212, %v10213
  %v10215 = vrot.slane %v10081, 5
  %v10216 = vrot.slane %v10215, 4
  %v10217 = vrot.slane %v9219, 5
  %v10218 = vsel %vm2065, %v10216, %v10217
  %v10219 = vrot.slane %v10217, 4
  %v10220 = vrot.slane %v9281, 5
  %v10221 = vsel %vm2065, %v10219, %v10220
  %v10222 = vrot.slane %v10082, 5
  %v10223 = vrot.slane %v10222, 4
  %v10224 = vrot.slane %v9221, 5
  %v10225 = vsel %vm2065, %v10223, %v10224
  %v10226 = vrot.slane %v10224, 4
  %v10227 = vrot.slane %v9282, 5
  %v10228 = vsel %vm2065, %v10226, %v10227
  %v10229 = vrot.slane %v10083, 5
  %v10230 = vrot.slane %v10229, 4
  %v10231 = vrot.slane %v9223, 5
  %v10232 = vsel %vm2065, %v10230, %v10231
  %v10233 = vrot.slane %v10231, 4
  %v10234 = vrot.slane %v9283, 5
  %v10235 = vsel %vm2065, %v10233, %v10234
  %v10236 = vrot.slane %v10084, 5
  %v10237 = vrot.slane %v10236, 4
  %v10238 = vrot.slane %v9225, 5
  %v10239 = vsel %vm2065, %v10237, %v10238
  %v10240 = vrot.slane %v10238, 4
  %v10241 = vrot.slane %v9284, 5
  %v10242 = vsel %vm2065, %v10240, %v10241
  %v10243 = vrot.slane %v10085, 5
  %v10244 = vrot.slane %v10243, 4
  %v10245 = vrot.slane %v9227, 5
  %v10246 = vsel %vm2065, %v10244, %v10245
  %v10247 = vrot.slane %v10245, 4
  %v10248 = vrot.slane %v9285, 5
  %v10249 = vsel %vm2065, %v10247, %v10248
  %v10250 = vrot.slane %v10086, 5
  %v10251 = vrot.slane %v10250, 4
  %v10252 = vrot.slane %v9229, 5
  %v10253 = vsel %vm2065, %v10251, %v10252
  %v10254 = vrot.slane %v10252, 4
  %v10255 = vrot.slane %v9286, 5
  %v10256 = vsel %vm2065, %v10254, %v10255
  %v10257 = vrot.slane %v10087, 5
  %v10258 = vrot.slane %v10257, 4
  %v10259 = vrot.slane %v9231, 5
  %v10260 = vsel %vm2065, %v10258, %v10259
  %v10261 = vrot.slane %v10259, 4
  %v10262 = vrot.slane %v9287, 5
  %v10263 = vsel %vm2065, %v10261, %v10262
  %v10264 = vrot.slane %v10088, 5
  %v10265 = vrot.slane %v10264, 4
  %v10266 = vrot.slane %v9233, 5
  %v10267 = vsel %vm2065, %v10265, %v10266
  %v10268 = vrot.slane %v10266, 4
  %v10269 = vrot.slane %v9288, 5
  %v10270 = vsel %vm2065, %v10268, %v10269
  %v10271 = vrot.slane %v10089, 5
  %v10272 = vrot.slane %v10271, 4
  %v10273 = vrot.slane %v9235, 5
  %v10274 = vsel %vm2065, %v10272, %v10273
  %v10275 = vrot.slane %v10273, 4
  %v10276 = vrot.slane %v9289, 5
  %v10277 = vsel %vm2065, %v10275, %v10276
  %v10278 = vrot.slane %v10090, 5
  %v10279 = vrot.slane %v10278, 4
  %v10280 = vrot.slane %v9237, 5
  %v10281 = vsel %vm2065, %v10279, %v10280
  %v10282 = vrot.slane %v10280, 4
  %v10283 = vrot.slane %v9290, 5
  %v10284 = vsel %vm2065, %v10282, %v10283
  %v10285 = vrot.slane %v10091, 5
  %v10286 = vrot.slane %v10285, 4
  %v10287 = vrot.slane %v9239, 5
  %v10288 = vsel %vm2065, %v10286, %v10287
  %v10289 = vrot.slane %v10287, 4
  %v10290 = vrot.slane %v9291, 5
  %v10291 = vsel %vm2065, %v10289, %v10290
  %v10292 = vrot.slane %v10092, 5
  %v10293 = vrot.slane %v10292, 4
  %v10294 = vrot.slane %v9241, 5
  %v10295 = vsel %vm2065, %v10293, %v10294
  %v10296 = vrot.slane %v10294, 4
  %v10297 = vrot.slane %v9292, 5
  %v10298 = vsel %vm2065, %v10296, %v10297
  %v10299 = vrot.slane %v10093, 5
  %v10300 = vrot.slane %v10299, 4
  %v10301 = vrot.slane %v9243, 5
  %v10302 = vsel %vm2065, %v10300, %v10301
  %v10303 = vrot.slane %v10301, 4
  %v10304 = vrot.slane %v9293, 5
  %v10305 = vsel %vm2065, %v10303, %v10304
  %v10306 = vrot.slane %v10094, 5
  %v10307 = vrot.slane %v10306, 4
  %v10308 = vrot.slane %v9245, 5
  %v10309 = vsel %vm2065, %v10307, %v10308
  %v10310 = vrot.slane %v10308, 4
  %v10311 = vrot.slane %v9294, 5
  %v10312 = vsel %vm2065, %v10310, %v10311
  %v10313 = vrot.slane %v10095, 5
  %v10314 = vrot.slane %v10313, 4
  %v10315 = vrot.slane %v9247, 5
  %v10316 = vsel %vm2065, %v10314, %v10315
  %v10317 = vrot.slane %v10315, 4
  %v10318 = vrot.slane %v9295, 5
  %v10319 = vsel %vm2065, %v10317, %v10318
  %v10320 = vrot.slane %v10096, 5
  %v10321 = vrot.slane %v10320, 4
  %v10322 = vrot.slane %v9249, 5
  %v10323 = vsel %vm2065, %v10321, %v10322
  %v10324 = vrot.slane %v10322, 4
  %v10325 = vrot.slane %v9296, 5
  %v10326 = vsel %vm2065, %v10324, %v10325
  %v10327 = vrot.slane %v10097, 5
  %v10328 = vrot.slane %v10327, 4
  %v10329 = vrot.slane %v9251, 5
  %v10330 = vsel %vm2065, %v10328, %v10329
  %v10331 = vrot.slane %v10329, 4
  %v10332 = vrot.slane %v9297, 5
  %v10333 = vsel %vm2065, %v10331, %v10332
  %v10334 = vrot.slane %v10098, 5
  %v10335 = vrot.slane %v10334, 4
  %v10336 = vrot.slane %v9253, 5
  %v10337 = vsel %vm2065, %v10335, %v10336
  %v10338 = vrot.slane %v10336, 4
  %v10339 = vrot.slane %v9298, 5
  %v10340 = vsel %vm2065, %v10338, %v10339
  %v10341 = vrot.slane %v10099, 5
  %v10342 = vrot.slane %v10341, 4
  %v10343 = vrot.slane %v9255, 5
  %v10344 = vsel %vm2065, %v10342, %v10343
  %v10345 = vrot.slane %v10343, 4
  %v10346 = vrot.slane %v9299, 5
  %v10347 = vsel %vm2065, %v10345, %v10346
  %v10348 = vrot.slane %v10100, 5
  %v10349 = vrot.slane %v10348, 4
  %v10350 = vrot.slane %v9257, 5
  %v10351 = vsel %vm2065, %v10349, %v10350
  %v10352 = vrot.slane %v10350, 4
  %v10353 = vrot.slane %v9300, 5
  %v10354 = vsel %vm2065, %v10352, %v10353
  %v10355 = vrot.slane %v10101, 5
  %v10356 = vrot.slane %v10355, 4
  %v10357 = vrot.slane %v9259, 5
  %v10358 = vsel %vm2065, %v10356, %v10357
  %v10359 = vrot.slane %v10357, 4
  %v10360 = vrot.slane %v9301, 5
  %v10361 = vsel %vm2065, %v10359, %v10360
  %v10362 = vrot.slane %v10102, 5
  %v10363 = vrot.slane %v10362, 4
  %v10364 = vrot.slane %v9261, 5
  %v10365 = vsel %vm2065, %v10363, %v10364
  %v10366 = vrot.slane %v10364, 4
  %v10367 = vrot.slane %v9302, 5
  %v10368 = vsel %vm2065, %v10366, %v10367
  %v10369 = vrot.slane %v10103, 5
  %v10370 = vrot.slane %v10369, 4
  %v10371 = vrot.slane %v9263, 5
  %v10372 = vsel %vm2065, %v10370, %v10371
  %v10373 = vrot.slane %v10371, 4
  %v10374 = vrot.slane %v9303, 5
  %v10375 = vsel %vm2065, %v10373, %v10374
  %v10376 = vrot.slane %v10104, 5
  %v10377 = vrot.slane %v10376, 4
  %v10378 = vrot.slane %v9265, 5
  %v10379 = vsel %vm2065, %v10377, %v10378
  %v10380 = vrot.slane %v10378, 4
  %v10381 = vrot.slane %v9304, 5
  %v10382 = vsel %vm2065, %v10380, %v10381
  %v10383 = vrot.slane %v10105, 5
  %v10384 = vrot.slane %v10383, 4
  %v10385 = vrot.slane %v9267, 5
  %v10386 = vsel %vm2065, %v10384, %v10385
  %v10387 = vrot.slane %v10385, 4
  %v10388 = vrot.slane %v9305, 5
  %v10389 = vsel %vm2065, %v10387, %v10388
  %v10390 = vrot.slane %v10106, 5
  %v10391 = vrot.slane %v10390, 4
  %v10392 = vrot.slane %v9269, 5
  %v10393 = vsel %vm2065, %v10391, %v10392
  %v10394 = vrot.slane %v10392, 4
  %v10395 = vrot.slane %v9306, 5
  %v10396 = vsel %vm2065, %v10394, %v10395
  %v10397 = vrot.slane %v10107, 5
  %v10398 = vrot.slane %v10397, 4
  %v10399 = vrot.slane %v9271, 5
  %v10400 = vsel %vm2065, %v10398, %v10399
  %v10401 = vrot.slane %v10399, 4
  %v10402 = vrot.slane %v9307, 5
  %v10403 = vsel %vm2065, %v10401, %v10402
  %v10404 = vrot.slane %v10108, 5
  %v10405 = vrot.slane %v10404, 4
  %v10406 = vrot.slane %v9273, 5
  %v10407 = vsel %vm2065, %v10405, %v10406
  %v10408 = vrot.slane %v10406, 4
  %v10409 = vrot.slane %v9308, 5
  %v10410 = vsel %vm2065, %v10408, %v10409
  %v10411 = vrot.slane %v10109, 5
  %v10412 = vrot.slane %v10411, 4
  %v10413 = vrot.slane %v9275, 5
  %v10414 = vsel %vm2065, %v10412, %v10413
  %v10415 = vrot.slane %v10413, 4
  %v10416 = vrot.slane %v9309, 5
  %v10417 = vsel %vm2065, %v10415, %v10416
  %v10418 = vrot.slane %v10110, 5
  %v10419 = vrot.slane %v10418, 4
  %v10420 = vrot.slane %v9277, 5
  %v10421 = vsel %vm2065, %v10419, %v10420
  %v10422 = vrot.slane %v10420, 4
  %v10423 = vrot.slane %v9310, 5
  %v10424 = vsel %vm2065, %v10422, %v10423
  %v10425 = vrot.slane %v10111, 5
  %v10426 = vrot.slane %v10425, 4
  %v10427 = vrot.slane %v9279, 5
  %v10428 = vsel %vm2065, %v10426, %v10427
  %v10429 = vrot.slane %v10427, 4
  %v10430 = vrot.slane %v9311, 5
  %v10431 = vsel %vm2065, %v10429, %v10430
  %v10432 = vld [vmem:[%s3506] sm:$0xf]
  %v10433 = vld [vmem:[%s3506 + $0x4] sm:$0xf]
  %v10434 = vld [vmem:[%s3506 + $0xc] sm:$0xf]
  %v10435 = vld [vmem:[%s3506 + $0x10] sm:$0xf]
  %v10436 = vld [vmem:[%s3506 + $0x18] sm:$0xf]
  %v10437 = vld [vmem:[%s3506 + $0x1c] sm:$0xf]
  %v10438 = vld [vmem:[%s3506 + $0x24] sm:$0xf]
  %v10439 = vld [vmem:[%s3506 + $0x28] sm:$0xf]
  %v10440 = vld [vmem:[%s3506 + $0x30] sm:$0xf]
  %v10441 = vld [vmem:[%s3506 + $0x34] sm:$0xf]
  %v10442 = vld [vmem:[%s3506 + $0x3c] sm:$0xf]
  %v10443 = vld [vmem:[%s3506 + $0x40] sm:$0xf]
  %v10444 = vld [vmem:[%s3506 + $0x48] sm:$0xf]
  %v10445 = vld [vmem:[%s3506 + $0x4c] sm:$0xf]
  %v10446 = vld [vmem:[%s3506 + $0x54] sm:$0xf]
  %v10447 = vld [vmem:[%s3506 + $0x58] sm:$0xf]
  %v10448 = vld [vmem:[%s3506 + $0x60] sm:$0xf]
  %v10449 = vld [vmem:[%s3506 + $0x64] sm:$0xf]
  %v10450 = vld [vmem:[%s3506 + $0x6c] sm:$0xf]
  %v10451 = vld [vmem:[%s3506 + $0x70] sm:$0xf]
  %v10452 = vld [vmem:[%s3506 + $0x78] sm:$0xf]
  %v10453 = vld [vmem:[%s3506 + $0x7c] sm:$0xf]
  %v10454 = vld [vmem:[%s3506 + $0x84] sm:$0xf]
  %v10455 = vld [vmem:[%s3506 + $0x88] sm:$0xf]
  %v10456 = vld [vmem:[%s3506 + $0x90] sm:$0xf]
  %v10457 = vld [vmem:[%s3506 + $0x94] sm:$0xf]
  %v10458 = vld [vmem:[%s3506 + $0x9c] sm:$0xf]
  %v10459 = vld [vmem:[%s3506 + $0xa0] sm:$0xf]
  %v10460 = vld [vmem:[%s3506 + $0xa8] sm:$0xf]
  %v10461 = vld [vmem:[%s3506 + $0xac] sm:$0xf]
  %v10462 = vld [vmem:[%s3506 + $0xb4] sm:$0xf]
  %v10463 = vld [vmem:[%s3506 + $0xb8] sm:$0xf]
  %v10464 = vld [vmem:[%s3506 + $0xd8] sm:$0xf]
  %v10465 = vld [vmem:[%s3506 + $0xdc] sm:$0xf]
  %v10466 = vld [vmem:[%s3506 + $0xe4] sm:$0xf]
  %v10467 = vld [vmem:[%s3506 + $0xe8] sm:$0xf]
  %v10468 = vld [vmem:[%s3506 + $0xf0] sm:$0xf]
  %v10469 = vld [vmem:[%s3506 + $0xf4] sm:$0xf]
  %v10470 = vld [vmem:[%s3506 + $0xfc] sm:$0xf]
  %v10471 = vld [vmem:[%s3506 + $0x100] sm:$0xf]
  %v10472 = vld [vmem:[%s3506 + $0x108] sm:$0xf]
  %v10473 = vld [vmem:[%s3506 + $0x10c] sm:$0xf]
  %v10474 = vld [vmem:[%s3506 + $0x114] sm:$0xf]
  %v10475 = vld [vmem:[%s3506 + $0x118] sm:$0xf]
  %v10476 = vld [vmem:[%s3506 + $0x120] sm:$0xf]
  %v10477 = vld [vmem:[%s3506 + $0x124] sm:$0xf]
  %v10478 = vld [vmem:[%s3506 + $0x12c] sm:$0xf]
  %v10479 = vld [vmem:[%s3506 + $0x130] sm:$0xf]
  %v10480 = vld [vmem:[%s3506 + $0x138] sm:$0xf]
  %v10481 = vld [vmem:[%s3506 + $0x13c] sm:$0xf]
  %v10482 = vld [vmem:[%s3506 + $0x144] sm:$0xf]
  %v10483 = vld [vmem:[%s3506 + $0x148] sm:$0xf]
  %v10484 = vld [vmem:[%s3506 + $0x150] sm:$0xf]
  %v10485 = vld [vmem:[%s3506 + $0x154] sm:$0xf]
  %v10486 = vld [vmem:[%s3506 + $0x15c] sm:$0xf]
  %v10487 = vld [vmem:[%s3506 + $0x160] sm:$0xf]
  %v10488 = vld [vmem:[%s3506 + $0x168] sm:$0xf]
  %v10489 = vld [vmem:[%s3506 + $0x16c] sm:$0xf]
  %v10490 = vld [vmem:[%s3506 + $0x174] sm:$0xf]
  %v10491 = vld [vmem:[%s3506 + $0x178] sm:$0xf]
  %v10492 = vld [vmem:[%s3506 + $0x180] sm:$0xf]
  %v10493 = vld [vmem:[%s3506 + $0x184] sm:$0xf]
  %v10494 = vld [vmem:[%s3506 + $0x18c] sm:$0xf]
  %v10495 = vld [vmem:[%s3506 + $0x190] sm:$0xf]
  %v10496 = vld [vmem:[%s3506 + $0x8] sm:$0x1]
  %v10497 = vld [vmem:[%s3506 + $0x14] sm:$0x1]
  %v10498 = vld [vmem:[%s3506 + $0x20] sm:$0x1]
  %v10499 = vld [vmem:[%s3506 + $0x2c] sm:$0x1]
  %v10500 = vld [vmem:[%s3506 + $0x38] sm:$0x1]
  %v10501 = vld [vmem:[%s3506 + $0x44] sm:$0x1]
  %v10502 = vld [vmem:[%s3506 + $0x50] sm:$0x1]
  %v10503 = vld [vmem:[%s3506 + $0x5c] sm:$0x1]
  %v10504 = vld [vmem:[%s3506 + $0x68] sm:$0x1]
  %v10505 = vld [vmem:[%s3506 + $0x74] sm:$0x1]
  %v10506 = vld [vmem:[%s3506 + $0x80] sm:$0x1]
  %v10507 = vld [vmem:[%s3506 + $0x8c] sm:$0x1]
  %v10508 = vld [vmem:[%s3506 + $0x98] sm:$0x1]
  %v10509 = vld [vmem:[%s3506 + $0xa4] sm:$0x1]
  %v10510 = vld [vmem:[%s3506 + $0xb0] sm:$0x1]
  %v10511 = vld [vmem:[%s3506 + $0xbc] sm:$0x1]
  %v10512 = vld [vmem:[%s3506 + $0xe0] sm:$0x1]
  %v10513 = vld [vmem:[%s3506 + $0xec] sm:$0x1]
  %v10514 = vld [vmem:[%s3506 + $0xf8] sm:$0x1]
  %v10515 = vld [vmem:[%s3506 + $0x104] sm:$0x1]
  %v10516 = vld [vmem:[%s3506 + $0x110] sm:$0x1]
  %v10517 = vld [vmem:[%s3506 + $0x11c] sm:$0x1]
  %v10518 = vld [vmem:[%s3506 + $0x128] sm:$0x1]
  %v10519 = vld [vmem:[%s3506 + $0x134] sm:$0x1]
  %v10520 = vld [vmem:[%s3506 + $0x140] sm:$0x1]
  %v10521 = vld [vmem:[%s3506 + $0x14c] sm:$0x1]
  %v10522 = vld [vmem:[%s3506 + $0x158] sm:$0x1]
  %v10523 = vld [vmem:[%s3506 + $0x164] sm:$0x1]
  %v10524 = vld [vmem:[%s3506 + $0x170] sm:$0x1]
  %v10525 = vld [vmem:[%s3506 + $0x17c] sm:$0x1]
  %v10526 = vld [vmem:[%s3506 + $0x188] sm:$0x1]
  %v10527 = vld [vmem:[%s3506 + $0x194] sm:$0x1]
  %v10529 = vshrl.u32 %v10432, 16
  %v10531 = vrot.slane %v10529, 4
  %v10532 = vshll.u32 %v10432, 16
  %v10534 = vrot.slane %v10532, 5
  %v10535 = vor.u32 %v10531, %v10534
  %v10536 = vrot.slane %v10535, 4
  %v10538 = vshll.u32 %v10433, 16
  %v10540 = vrot.slane %v10538, 5
  %v10541 = vsel %vm1166, %v10536, %v10540
  %v10542 = vshrl.u32 %v10433, 16
  %v10544 = vrot.slane %v10542, 4
  %v10545 = vor.u32 %v10544, %v10540
  %v10546 = vrot.slane %v10545, 4
  %v10548 = vshll.u32 %v10496, 16
  %v10550 = vrot.slane %v10548, 5
  %v10551 = vsel %vm1166, %v10546, %v10550
  %v10553 = vshrl.u32 %v10434, 16
  %v10555 = vrot.slane %v10553, 4
  %v10556 = vshll.u32 %v10434, 16
  %v10558 = vrot.slane %v10556, 5
  %v10559 = vor.u32 %v10555, %v10558
  %v10560 = vrot.slane %v10559, 4
  %v10562 = vshll.u32 %v10435, 16
  %v10564 = vrot.slane %v10562, 5
  %v10565 = vsel %vm1166, %v10560, %v10564
  %v10566 = vshrl.u32 %v10435, 16
  %v10568 = vrot.slane %v10566, 4
  %v10569 = vor.u32 %v10568, %v10564
  %v10570 = vrot.slane %v10569, 4
  %v10572 = vshll.u32 %v10497, 16
  %v10574 = vrot.slane %v10572, 5
  %v10575 = vsel %vm1166, %v10570, %v10574
  %v10577 = vshrl.u32 %v10436, 16
  %v10579 = vrot.slane %v10577, 4
  %v10580 = vshll.u32 %v10436, 16
  %v10582 = vrot.slane %v10580, 5
  %v10583 = vor.u32 %v10579, %v10582
  %v10584 = vrot.slane %v10583, 4
  %v10586 = vshll.u32 %v10437, 16
  %v10588 = vrot.slane %v10586, 5
  %v10589 = vsel %vm1166, %v10584, %v10588
  %v10590 = vshrl.u32 %v10437, 16
  %v10592 = vrot.slane %v10590, 4
  %v10593 = vor.u32 %v10592, %v10588
  %v10594 = vrot.slane %v10593, 4
  %v10596 = vshll.u32 %v10498, 16
  %v10598 = vrot.slane %v10596, 5
  %v10599 = vsel %vm1166, %v10594, %v10598
  %v10601 = vshrl.u32 %v10438, 16
  %v10603 = vrot.slane %v10601, 4
  %v10604 = vshll.u32 %v10438, 16
  %v10606 = vrot.slane %v10604, 5
  %v10607 = vor.u32 %v10603, %v10606
  %v10608 = vrot.slane %v10607, 4
  %v10610 = vshll.u32 %v10439, 16
  %v10612 = vrot.slane %v10610, 5
  %v10613 = vsel %vm1166, %v10608, %v10612
  %v10614 = vshrl.u32 %v10439, 16
  %v10616 = vrot.slane %v10614, 4
  %v10617 = vor.u32 %v10616, %v10612
  %v10618 = vrot.slane %v10617, 4
  %v10620 = vshll.u32 %v10499, 16
  %v10622 = vrot.slane %v10620, 5
  %v10623 = vsel %vm1166, %v10618, %v10622
  %v10625 = vshrl.u32 %v10440, 16
  %v10627 = vrot.slane %v10625, 4
  %v10628 = vshll.u32 %v10440, 16
  %v10630 = vrot.slane %v10628, 5
  %v10631 = vor.u32 %v10627, %v10630
  %v10632 = vrot.slane %v10631, 4
  %v10634 = vshll.u32 %v10441, 16
  %v10636 = vrot.slane %v10634, 5
  %v10637 = vsel %vm1166, %v10632, %v10636
  %v10638 = vshrl.u32 %v10441, 16
  %v10640 = vrot.slane %v10638, 4
  %v10641 = vor.u32 %v10640, %v10636
  %v10642 = vrot.slane %v10641, 4
  %v10644 = vshll.u32 %v10500, 16
  %v10646 = vrot.slane %v10644, 5
  %v10647 = vsel %vm1166, %v10642, %v10646
  %v10649 = vshrl.u32 %v10442, 16
  %v10651 = vrot.slane %v10649, 4
  %v10652 = vshll.u32 %v10442, 16
  %v10654 = vrot.slane %v10652, 5
  %v10655 = vor.u32 %v10651, %v10654
  %v10656 = vrot.slane %v10655, 4
  %v10658 = vshll.u32 %v10443, 16
  %v10660 = vrot.slane %v10658, 5
  %v10661 = vsel %vm1166, %v10656, %v10660
  %v10662 = vshrl.u32 %v10443, 16
  %v10664 = vrot.slane %v10662, 4
  %v10665 = vor.u32 %v10664, %v10660
  %v10666 = vrot.slane %v10665, 4
  %v10668 = vshll.u32 %v10501, 16
  %v10670 = vrot.slane %v10668, 5
  %v10671 = vsel %vm1166, %v10666, %v10670
  %v10673 = vshrl.u32 %v10444, 16
  %v10675 = vrot.slane %v10673, 4
  %v10676 = vshll.u32 %v10444, 16
  %v10678 = vrot.slane %v10676, 5
  %v10679 = vor.u32 %v10675, %v10678
  %v10680 = vrot.slane %v10679, 4
  %v10682 = vshll.u32 %v10445, 16
  %v10684 = vrot.slane %v10682, 5
  %v10685 = vsel %vm1166, %v10680, %v10684
  %v10686 = vshrl.u32 %v10445, 16
  %v10688 = vrot.slane %v10686, 4
  %v10689 = vor.u32 %v10688, %v10684
  %v10690 = vrot.slane %v10689, 4
  %v10692 = vshll.u32 %v10502, 16
  %v10694 = vrot.slane %v10692, 5
  %v10695 = vsel %vm1166, %v10690, %v10694
  %v10697 = vshrl.u32 %v10446, 16
  %v10699 = vrot.slane %v10697, 4
  %v10700 = vshll.u32 %v10446, 16
  %v10702 = vrot.slane %v10700, 5
  %v10703 = vor.u32 %v10699, %v10702
  %v10704 = vrot.slane %v10703, 4
  %v10706 = vshll.u32 %v10447, 16
  %v10708 = vrot.slane %v10706, 5
  %v10709 = vsel %vm1166, %v10704, %v10708
  %v10710 = vshrl.u32 %v10447, 16
  %v10712 = vrot.slane %v10710, 4
  %v10713 = vor.u32 %v10712, %v10708
  %v10714 = vrot.slane %v10713, 4
  %v10716 = vshll.u32 %v10503, 16
  %v10718 = vrot.slane %v10716, 5
  %v10719 = vsel %vm1166, %v10714, %v10718
  %v10721 = vshrl.u32 %v10448, 16
  %v10723 = vrot.slane %v10721, 4
  %v10724 = vshll.u32 %v10448, 16
  %v10726 = vrot.slane %v10724, 5
  %v10727 = vor.u32 %v10723, %v10726
  %v10728 = vrot.slane %v10727, 4
  %v10730 = vshll.u32 %v10449, 16
  %v10732 = vrot.slane %v10730, 5
  %v10733 = vsel %vm1166, %v10728, %v10732
  %v10734 = vshrl.u32 %v10449, 16
  %v10736 = vrot.slane %v10734, 4
  %v10737 = vor.u32 %v10736, %v10732
  %v10738 = vrot.slane %v10737, 4
  %v10740 = vshll.u32 %v10504, 16
  %v10742 = vrot.slane %v10740, 5
  %v10743 = vsel %vm1166, %v10738, %v10742
  %v10745 = vshrl.u32 %v10450, 16
  %v10747 = vrot.slane %v10745, 4
  %v10748 = vshll.u32 %v10450, 16
  %v10750 = vrot.slane %v10748, 5
  %v10751 = vor.u32 %v10747, %v10750
  %v10752 = vrot.slane %v10751, 4
  %v10754 = vshll.u32 %v10451, 16
  %v10756 = vrot.slane %v10754, 5
  %v10757 = vsel %vm1166, %v10752, %v10756
  %v10758 = vshrl.u32 %v10451, 16
  %v10760 = vrot.slane %v10758, 4
  %v10761 = vor.u32 %v10760, %v10756
  %v10762 = vrot.slane %v10761, 4
  %v10764 = vshll.u32 %v10505, 16
  %v10766 = vrot.slane %v10764, 5
  %v10767 = vsel %vm1166, %v10762, %v10766
  %v10769 = vshrl.u32 %v10452, 16
  %v10771 = vrot.slane %v10769, 4
  %v10772 = vshll.u32 %v10452, 16
  %v10774 = vrot.slane %v10772, 5
  %v10775 = vor.u32 %v10771, %v10774
  %v10776 = vrot.slane %v10775, 4
  %v10778 = vshll.u32 %v10453, 16
  %v10780 = vrot.slane %v10778, 5
  %v10781 = vsel %vm1166, %v10776, %v10780
  %v10782 = vshrl.u32 %v10453, 16
  %v10784 = vrot.slane %v10782, 4
  %v10785 = vor.u32 %v10784, %v10780
  %v10786 = vrot.slane %v10785, 4
  %v10788 = vshll.u32 %v10506, 16
  %v10790 = vrot.slane %v10788, 5
  %v10791 = vsel %vm1166, %v10786, %v10790
  %v10793 = vshrl.u32 %v10454, 16
  %v10795 = vrot.slane %v10793, 4
  %v10796 = vshll.u32 %v10454, 16
  %v10798 = vrot.slane %v10796, 5
  %v10799 = vor.u32 %v10795, %v10798
  %v10800 = vrot.slane %v10799, 4
  %v10802 = vshll.u32 %v10455, 16
  %v10804 = vrot.slane %v10802, 5
  %v10805 = vsel %vm1166, %v10800, %v10804
  %v10806 = vshrl.u32 %v10455, 16
  %v10808 = vrot.slane %v10806, 4
  %v10809 = vor.u32 %v10808, %v10804
  %v10810 = vrot.slane %v10809, 4
  %v10812 = vshll.u32 %v10507, 16
  %v10814 = vrot.slane %v10812, 5
  %v10815 = vsel %vm1166, %v10810, %v10814
  %v10817 = vshrl.u32 %v10456, 16
  %v10819 = vrot.slane %v10817, 4
  %v10820 = vshll.u32 %v10456, 16
  %v10822 = vrot.slane %v10820, 5
  %v10823 = vor.u32 %v10819, %v10822
  %v10824 = vrot.slane %v10823, 4
  %v10826 = vshll.u32 %v10457, 16
  %v10828 = vrot.slane %v10826, 5
  %v10829 = vsel %vm1166, %v10824, %v10828
  %v10830 = vshrl.u32 %v10457, 16
  %v10832 = vrot.slane %v10830, 4
  %v10833 = vor.u32 %v10832, %v10828
  %v10834 = vrot.slane %v10833, 4
  %v10836 = vshll.u32 %v10508, 16
  %v10838 = vrot.slane %v10836, 5
  %v10839 = vsel %vm1166, %v10834, %v10838
  %v10841 = vshrl.u32 %v10458, 16
  %v10843 = vrot.slane %v10841, 4
  %v10844 = vshll.u32 %v10458, 16
  %v10846 = vrot.slane %v10844, 5
  %v10847 = vor.u32 %v10843, %v10846
  %v10848 = vrot.slane %v10847, 4
  %v10850 = vshll.u32 %v10459, 16
  %v10852 = vrot.slane %v10850, 5
  %v10853 = vsel %vm1166, %v10848, %v10852
  %v10854 = vshrl.u32 %v10459, 16
  %v10856 = vrot.slane %v10854, 4
  %v10857 = vor.u32 %v10856, %v10852
  %v10858 = vrot.slane %v10857, 4
  %v10860 = vshll.u32 %v10509, 16
  %v10862 = vrot.slane %v10860, 5
  %v10863 = vsel %vm1166, %v10858, %v10862
  %v10865 = vshrl.u32 %v10460, 16
  %v10867 = vrot.slane %v10865, 4
  %v10868 = vshll.u32 %v10460, 16
  %v10870 = vrot.slane %v10868, 5
  %v10871 = vor.u32 %v10867, %v10870
  %v10872 = vrot.slane %v10871, 4
  %v10874 = vshll.u32 %v10461, 16
  %v10876 = vrot.slane %v10874, 5
  %v10877 = vsel %vm1166, %v10872, %v10876
  %v10878 = vshrl.u32 %v10461, 16
  %v10880 = vrot.slane %v10878, 4
  %v10881 = vor.u32 %v10880, %v10876
  %v10882 = vrot.slane %v10881, 4
  %v10884 = vshll.u32 %v10510, 16
  %v10886 = vrot.slane %v10884, 5
  %v10887 = vsel %vm1166, %v10882, %v10886
  %v10889 = vshrl.u32 %v10462, 16
  %v10891 = vrot.slane %v10889, 4
  %v10892 = vshll.u32 %v10462, 16
  %v10894 = vrot.slane %v10892, 5
  %v10895 = vor.u32 %v10891, %v10894
  %v10896 = vrot.slane %v10895, 4
  %v10898 = vshll.u32 %v10463, 16
  %v10900 = vrot.slane %v10898, 5
  %v10901 = vsel %vm1166, %v10896, %v10900
  %v10902 = vshrl.u32 %v10463, 16
  %v10904 = vrot.slane %v10902, 4
  %v10905 = vor.u32 %v10904, %v10900
  %v10906 = vrot.slane %v10905, 4
  %v10908 = vshll.u32 %v10511, 16
  %v10910 = vrot.slane %v10908, 5
  %v10911 = vsel %vm1166, %v10906, %v10910
  %v10913 = vshrl.u32 %v10464, 16
  %v10915 = vrot.slane %v10913, 4
  %v10916 = vshll.u32 %v10464, 16
  %v10918 = vrot.slane %v10916, 5
  %v10919 = vor.u32 %v10915, %v10918
  %v10920 = vrot.slane %v10919, 4
  %v10922 = vshll.u32 %v10465, 16
  %v10924 = vrot.slane %v10922, 5
  %v10925 = vsel %vm1166, %v10920, %v10924
  %v10926 = vshrl.u32 %v10465, 16
  %v10928 = vrot.slane %v10926, 4
  %v10929 = vor.u32 %v10928, %v10924
  %v10930 = vrot.slane %v10929, 4
  %v10932 = vshll.u32 %v10512, 16
  %v10934 = vrot.slane %v10932, 5
  %v10935 = vsel %vm1166, %v10930, %v10934
  %v10937 = vshrl.u32 %v10466, 16
  %v10939 = vrot.slane %v10937, 4
  %v10940 = vshll.u32 %v10466, 16
  %v10942 = vrot.slane %v10940, 5
  %v10943 = vor.u32 %v10939, %v10942
  %v10944 = vrot.slane %v10943, 4
  %v10946 = vshll.u32 %v10467, 16
  %v10948 = vrot.slane %v10946, 5
  %v10949 = vsel %vm1166, %v10944, %v10948
  %v10950 = vshrl.u32 %v10467, 16
  %v10952 = vrot.slane %v10950, 4
  %v10953 = vor.u32 %v10952, %v10948
  %v10954 = vrot.slane %v10953, 4
  %v10956 = vshll.u32 %v10513, 16
  %v10958 = vrot.slane %v10956, 5
  %v10959 = vsel %vm1166, %v10954, %v10958
  %v10961 = vshrl.u32 %v10468, 16
  %v10963 = vrot.slane %v10961, 4
  %v10964 = vshll.u32 %v10468, 16
  %v10966 = vrot.slane %v10964, 5
  %v10967 = vor.u32 %v10963, %v10966
  %v10968 = vrot.slane %v10967, 4
  %v10970 = vshll.u32 %v10469, 16
  %v10972 = vrot.slane %v10970, 5
  %v10973 = vsel %vm1166, %v10968, %v10972
  %v10974 = vshrl.u32 %v10469, 16
  %v10976 = vrot.slane %v10974, 4
  %v10977 = vor.u32 %v10976, %v10972
  %v10978 = vrot.slane %v10977, 4
  %v10980 = vshll.u32 %v10514, 16
  %v10982 = vrot.slane %v10980, 5
  %v10983 = vsel %vm1166, %v10978, %v10982
  %v10985 = vshrl.u32 %v10470, 16
  %v10987 = vrot.slane %v10985, 4
  %v10988 = vshll.u32 %v10470, 16
  %v10990 = vrot.slane %v10988, 5
  %v10991 = vor.u32 %v10987, %v10990
  %v10992 = vrot.slane %v10991, 4
  %v10994 = vshll.u32 %v10471, 16
  %v10996 = vrot.slane %v10994, 5
  %v10997 = vsel %vm1166, %v10992, %v10996
  %v10998 = vshrl.u32 %v10471, 16
  %v11000 = vrot.slane %v10998, 4
  %v11001 = vor.u32 %v11000, %v10996
  %v11002 = vrot.slane %v11001, 4
  %v11004 = vshll.u32 %v10515, 16
  %v11006 = vrot.slane %v11004, 5
  %v11007 = vsel %vm1166, %v11002, %v11006
  %v11009 = vshrl.u32 %v10472, 16
  %v11011 = vrot.slane %v11009, 4
  %v11012 = vshll.u32 %v10472, 16
  %v11014 = vrot.slane %v11012, 5
  %v11015 = vor.u32 %v11011, %v11014
  %v11016 = vrot.slane %v11015, 4
  %v11018 = vshll.u32 %v10473, 16
  %v11020 = vrot.slane %v11018, 5
  %v11021 = vsel %vm1166, %v11016, %v11020
  %v11022 = vshrl.u32 %v10473, 16
  %v11024 = vrot.slane %v11022, 4
  %v11025 = vor.u32 %v11024, %v11020
  %v11026 = vrot.slane %v11025, 4
  %v11028 = vshll.u32 %v10516, 16
  %v11030 = vrot.slane %v11028, 5
  %v11031 = vsel %vm1166, %v11026, %v11030
  %v11033 = vshrl.u32 %v10474, 16
  %v11035 = vrot.slane %v11033, 4
  %v11036 = vshll.u32 %v10474, 16
  %v11038 = vrot.slane %v11036, 5
  %v11039 = vor.u32 %v11035, %v11038
  %v11040 = vrot.slane %v11039, 4
  %v11042 = vshll.u32 %v10475, 16
  %v11044 = vrot.slane %v11042, 5
  %v11045 = vsel %vm1166, %v11040, %v11044
  %v11046 = vshrl.u32 %v10475, 16
  %v11048 = vrot.slane %v11046, 4
  %v11049 = vor.u32 %v11048, %v11044
  %v11050 = vrot.slane %v11049, 4
  %v11052 = vshll.u32 %v10517, 16
  %v11054 = vrot.slane %v11052, 5
  %v11055 = vsel %vm1166, %v11050, %v11054
  %v11057 = vshrl.u32 %v10476, 16
  %v11059 = vrot.slane %v11057, 4
  %v11060 = vshll.u32 %v10476, 16
  %v11062 = vrot.slane %v11060, 5
  %v11063 = vor.u32 %v11059, %v11062
  %v11064 = vrot.slane %v11063, 4
  %v11066 = vshll.u32 %v10477, 16
  %v11068 = vrot.slane %v11066, 5
  %v11069 = vsel %vm1166, %v11064, %v11068
  %v11070 = vshrl.u32 %v10477, 16
  %v11072 = vrot.slane %v11070, 4
  %v11073 = vor.u32 %v11072, %v11068
  %v11074 = vrot.slane %v11073, 4
  %v11076 = vshll.u32 %v10518, 16
  %v11078 = vrot.slane %v11076, 5
  %v11079 = vsel %vm1166, %v11074, %v11078
  %v11081 = vshrl.u32 %v10478, 16
  %v11083 = vrot.slane %v11081, 4
  %v11084 = vshll.u32 %v10478, 16
  %v11086 = vrot.slane %v11084, 5
  %v11087 = vor.u32 %v11083, %v11086
  %v11088 = vrot.slane %v11087, 4
  %v11090 = vshll.u32 %v10479, 16
  %v11092 = vrot.slane %v11090, 5
  %v11093 = vsel %vm1166, %v11088, %v11092
  %v11094 = vshrl.u32 %v10479, 16
  %v11096 = vrot.slane %v11094, 4
  %v11097 = vor.u32 %v11096, %v11092
  %v11098 = vrot.slane %v11097, 4
  %v11100 = vshll.u32 %v10519, 16
  %v11102 = vrot.slane %v11100, 5
  %v11103 = vsel %vm1166, %v11098, %v11102
  %v11105 = vshrl.u32 %v10480, 16
  %v11107 = vrot.slane %v11105, 4
  %v11108 = vshll.u32 %v10480, 16
  %v11110 = vrot.slane %v11108, 5
  %v11111 = vor.u32 %v11107, %v11110
  %v11112 = vrot.slane %v11111, 4
  %v11114 = vshll.u32 %v10481, 16
  %v11116 = vrot.slane %v11114, 5
  %v11117 = vsel %vm1166, %v11112, %v11116
  %v11118 = vshrl.u32 %v10481, 16
  %v11120 = vrot.slane %v11118, 4
  %v11121 = vor.u32 %v11120, %v11116
  %v11122 = vrot.slane %v11121, 4
  %v11124 = vshll.u32 %v10520, 16
  %v11126 = vrot.slane %v11124, 5
  %v11127 = vsel %vm1166, %v11122, %v11126
  %v11129 = vshrl.u32 %v10482, 16
  %v11131 = vrot.slane %v11129, 4
  %v11132 = vshll.u32 %v10482, 16
  %v11134 = vrot.slane %v11132, 5
  %v11135 = vor.u32 %v11131, %v11134
  %v11136 = vrot.slane %v11135, 4
  %v11138 = vshll.u32 %v10483, 16
  %v11140 = vrot.slane %v11138, 5
  %v11141 = vsel %vm1166, %v11136, %v11140
  %v11142 = vshrl.u32 %v10483, 16
  %v11144 = vrot.slane %v11142, 4
  %v11145 = vor.u32 %v11144, %v11140
  %v11146 = vrot.slane %v11145, 4
  %v11148 = vshll.u32 %v10521, 16
  %v11150 = vrot.slane %v11148, 5
  %v11151 = vsel %vm1166, %v11146, %v11150
  %v11153 = vshrl.u32 %v10484, 16
  %v11155 = vrot.slane %v11153, 4
  %v11156 = vshll.u32 %v10484, 16
  %v11158 = vrot.slane %v11156, 5
  %v11159 = vor.u32 %v11155, %v11158
  %v11160 = vrot.slane %v11159, 4
  %v11162 = vshll.u32 %v10485, 16
  %v11164 = vrot.slane %v11162, 5
  %v11165 = vsel %vm1166, %v11160, %v11164
  %v11166 = vshrl.u32 %v10485, 16
  %v11168 = vrot.slane %v11166, 4
  %v11169 = vor.u32 %v11168, %v11164
  %v11170 = vrot.slane %v11169, 4
  %v11172 = vshll.u32 %v10522, 16
  %v11174 = vrot.slane %v11172, 5
  %v11175 = vsel %vm1166, %v11170, %v11174
  %v11177 = vshrl.u32 %v10486, 16
  %v11179 = vrot.slane %v11177, 4
  %v11180 = vshll.u32 %v10486, 16
  %v11182 = vrot.slane %v11180, 5
  %v11183 = vor.u32 %v11179, %v11182
  %v11184 = vrot.slane %v11183, 4
  %v11186 = vshll.u32 %v10487, 16
  %v11188 = vrot.slane %v11186, 5
  %v11189 = vsel %vm1166, %v11184, %v11188
  %v11190 = vshrl.u32 %v10487, 16
  %v11192 = vrot.slane %v11190, 4
  %v11193 = vor.u32 %v11192, %v11188
  %v11194 = vrot.slane %v11193, 4
  %v11196 = vshll.u32 %v10523, 16
  %v11198 = vrot.slane %v11196, 5
  %v11199 = vsel %vm1166, %v11194, %v11198
  %v11201 = vshrl.u32 %v10488, 16
  %v11203 = vrot.slane %v11201, 4
  %v11204 = vshll.u32 %v10488, 16
  %v11206 = vrot.slane %v11204, 5
  %v11207 = vor.u32 %v11203, %v11206
  %v11208 = vrot.slane %v11207, 4
  %v11210 = vshll.u32 %v10489, 16
  %v11212 = vrot.slane %v11210, 5
  %v11213 = vsel %vm1166, %v11208, %v11212
  %v11214 = vshrl.u32 %v10489, 16
  %v11216 = vrot.slane %v11214, 4
  %v11217 = vor.u32 %v11216, %v11212
  %v11218 = vrot.slane %v11217, 4
  %v11220 = vshll.u32 %v10524, 16
  %v11222 = vrot.slane %v11220, 5
  %v11223 = vsel %vm1166, %v11218, %v11222
  %v11225 = vshrl.u32 %v10490, 16
  %v11227 = vrot.slane %v11225, 4
  %v11228 = vshll.u32 %v10490, 16
  %v11230 = vrot.slane %v11228, 5
  %v11231 = vor.u32 %v11227, %v11230
  %v11232 = vrot.slane %v11231, 4
  %v11234 = vshll.u32 %v10491, 16
  %v11236 = vrot.slane %v11234, 5
  %v11237 = vsel %vm1166, %v11232, %v11236
  %v11238 = vshrl.u32 %v10491, 16
  %v11240 = vrot.slane %v11238, 4
  %v11241 = vor.u32 %v11240, %v11236
  %v11242 = vrot.slane %v11241, 4
  %v11244 = vshll.u32 %v10525, 16
  %v11246 = vrot.slane %v11244, 5
  %v11247 = vsel %vm1166, %v11242, %v11246
  %v11249 = vshrl.u32 %v10492, 16
  %v11251 = vrot.slane %v11249, 4
  %v11252 = vshll.u32 %v10492, 16
  %v11254 = vrot.slane %v11252, 5
  %v11255 = vor.u32 %v11251, %v11254
  %v11256 = vrot.slane %v11255, 4
  %v11258 = vshll.u32 %v10493, 16
  %v11260 = vrot.slane %v11258, 5
  %v11261 = vsel %vm1166, %v11256, %v11260
  %v11262 = vshrl.u32 %v10493, 16
  %v11264 = vrot.slane %v11262, 4
  %v11265 = vor.u32 %v11264, %v11260
  %v11266 = vrot.slane %v11265, 4
  %v11268 = vshll.u32 %v10526, 16
  %v11270 = vrot.slane %v11268, 5
  %v11271 = vsel %vm1166, %v11266, %v11270
  %v11273 = vshrl.u32 %v10494, 16
  %v11275 = vrot.slane %v11273, 4
  %v11276 = vshll.u32 %v10494, 16
  %v11278 = vrot.slane %v11276, 5
  %v11279 = vor.u32 %v11275, %v11278
  %v11280 = vrot.slane %v11279, 4
  %v11282 = vshll.u32 %v10495, 16
  %v11284 = vrot.slane %v11282, 5
  %v11285 = vsel %vm1166, %v11280, %v11284
  %v11286 = vshrl.u32 %v10495, 16
  %v11288 = vrot.slane %v11286, 4
  %v11289 = vor.u32 %v11288, %v11284
  %v11290 = vrot.slane %v11289, 4
  %v11292 = vshll.u32 %v10527, 16
  %v11294 = vrot.slane %v11292, 5
  %v11295 = vsel %vm1166, %v11290, %v11294
  %v11296 = vld [vmem:[%s3506] sm:$0xe]
  %v11297 = vld [vmem:[%s3506 + $0xc] sm:$0xe]
  %v11298 = vld [vmem:[%s3506 + $0x18] sm:$0xe]
  %v11299 = vld [vmem:[%s3506 + $0x24] sm:$0xe]
  %v11300 = vld [vmem:[%s3506 + $0x30] sm:$0xe]
  %v11301 = vld [vmem:[%s3506 + $0x3c] sm:$0xe]
  %v11302 = vld [vmem:[%s3506 + $0x48] sm:$0xe]
  %v11303 = vld [vmem:[%s3506 + $0x54] sm:$0xe]
  %v11304 = vld [vmem:[%s3506 + $0x60] sm:$0xe]
  %v11305 = vld [vmem:[%s3506 + $0x6c] sm:$0xe]
  %v11306 = vld [vmem:[%s3506 + $0x78] sm:$0xe]
  %v11307 = vld [vmem:[%s3506 + $0x84] sm:$0xe]
  %v11308 = vld [vmem:[%s3506 + $0x90] sm:$0xe]
  %v11309 = vld [vmem:[%s3506 + $0x9c] sm:$0xe]
  %v11310 = vld [vmem:[%s3506 + $0xa8] sm:$0xe]
  %v11311 = vld [vmem:[%s3506 + $0xb4] sm:$0xe]
  %v11312 = vld [vmem:[%s3506 + $0xd8] sm:$0xe]
  %v11313 = vld [vmem:[%s3506 + $0xe4] sm:$0xe]
  %v11314 = vld [vmem:[%s3506 + $0xf0] sm:$0xe]
  %v11315 = vld [vmem:[%s3506 + $0xfc] sm:$0xe]
  %v11316 = vld [vmem:[%s3506 + $0x108] sm:$0xe]
  %v11317 = vld [vmem:[%s3506 + $0x114] sm:$0xe]
  %v11318 = vld [vmem:[%s3506 + $0x120] sm:$0xe]
  %v11319 = vld [vmem:[%s3506 + $0x12c] sm:$0xe]
  %v11320 = vld [vmem:[%s3506 + $0x138] sm:$0xe]
  %v11321 = vld [vmem:[%s3506 + $0x144] sm:$0xe]
  %v11322 = vld [vmem:[%s3506 + $0x150] sm:$0xe]
  %v11323 = vld [vmem:[%s3506 + $0x15c] sm:$0xe]
  %v11324 = vld [vmem:[%s3506 + $0x168] sm:$0xe]
  %v11325 = vld [vmem:[%s3506 + $0x174] sm:$0xe]
  %v11326 = vld [vmem:[%s3506 + $0x180] sm:$0xe]
  %v11327 = vld [vmem:[%s3506 + $0x18c] sm:$0xe]
  %v11424 = vrot.slane %v11296, 5
  %v11425 = vrot.slane %v11424, 4
  %v11426 = vrot.slane %v10433, 5
  %v11427 = vsel %vm2065, %v11425, %v11426
  %v11428 = vrot.slane %v11426, 4
  %v11429 = vrot.slane %v10496, 5
  %v11430 = vsel %vm2065, %v11428, %v11429
  %v11431 = vrot.slane %v11297, 5
  %v11432 = vrot.slane %v11431, 4
  %v11433 = vrot.slane %v10435, 5
  %v11434 = vsel %vm2065, %v11432, %v11433
  %v11435 = vrot.slane %v11433, 4
  %v11436 = vrot.slane %v10497, 5
  %v11437 = vsel %vm2065, %v11435, %v11436
  %v11438 = vrot.slane %v11298, 5
  %v11439 = vrot.slane %v11438, 4
  %v11440 = vrot.slane %v10437, 5
  %v11441 = vsel %vm2065, %v11439, %v11440
  %v11442 = vrot.slane %v11440, 4
  %v11443 = vrot.slane %v10498, 5
  %v11444 = vsel %vm2065, %v11442, %v11443
  %v11445 = vrot.slane %v11299, 5
  %v11446 = vrot.slane %v11445, 4
  %v11447 = vrot.slane %v10439, 5
  %v11448 = vsel %vm2065, %v11446, %v11447
  %v11449 = vrot.slane %v11447, 4
  %v11450 = vrot.slane %v10499, 5
  %v11451 = vsel %vm2065, %v11449, %v11450
  %v11452 = vrot.slane %v11300, 5
  %v11453 = vrot.slane %v11452, 4
  %v11454 = vrot.slane %v10441, 5
  %v11455 = vsel %vm2065, %v11453, %v11454
  %v11456 = vrot.slane %v11454, 4
  %v11457 = vrot.slane %v10500, 5
  %v11458 = vsel %vm2065, %v11456, %v11457
  %v11459 = vrot.slane %v11301, 5
  %v11460 = vrot.slane %v11459, 4
  %v11461 = vrot.slane %v10443, 5
  %v11462 = vsel %vm2065, %v11460, %v11461
  %v11463 = vrot.slane %v11461, 4
  %v11464 = vrot.slane %v10501, 5
  %v11465 = vsel %vm2065, %v11463, %v11464
  %v11466 = vrot.slane %v11302, 5
  %v11467 = vrot.slane %v11466, 4
  %v11468 = vrot.slane %v10445, 5
  %v11469 = vsel %vm2065, %v11467, %v11468
  %v11470 = vrot.slane %v11468, 4
  %v11471 = vrot.slane %v10502, 5
  %v11472 = vsel %vm2065, %v11470, %v11471
  %v11473 = vrot.slane %v11303, 5
  %v11474 = vrot.slane %v11473, 4
  %v11475 = vrot.slane %v10447, 5
  %v11476 = vsel %vm2065, %v11474, %v11475
  %v11477 = vrot.slane %v11475, 4
  %v11478 = vrot.slane %v10503, 5
  %v11479 = vsel %vm2065, %v11477, %v11478
  %v11480 = vrot.slane %v11304, 5
  %v11481 = vrot.slane %v11480, 4
  %v11482 = vrot.slane %v10449, 5
  %v11483 = vsel %vm2065, %v11481, %v11482
  %v11484 = vrot.slane %v11482, 4
  %v11485 = vrot.slane %v10504, 5
  %v11486 = vsel %vm2065, %v11484, %v11485
  %v11487 = vrot.slane %v11305, 5
  %v11488 = vrot.slane %v11487, 4
  %v11489 = vrot.slane %v10451, 5
  %v11490 = vsel %vm2065, %v11488, %v11489
  %v11491 = vrot.slane %v11489, 4
  %v11492 = vrot.slane %v10505, 5
  %v11493 = vsel %vm2065, %v11491, %v11492
  %v11494 = vrot.slane %v11306, 5
  %v11495 = vrot.slane %v11494, 4
  %v11496 = vrot.slane %v10453, 5
  %v11497 = vsel %vm2065, %v11495, %v11496
  %v11498 = vrot.slane %v11496, 4
  %v11499 = vrot.slane %v10506, 5
  %v11500 = vsel %vm2065, %v11498, %v11499
  %v11501 = vrot.slane %v11307, 5
  %v11502 = vrot.slane %v11501, 4
  %v11503 = vrot.slane %v10455, 5
  %v11504 = vsel %vm2065, %v11502, %v11503
  %v11505 = vrot.slane %v11503, 4
  %v11506 = vrot.slane %v10507, 5
  %v11507 = vsel %vm2065, %v11505, %v11506
  %v11508 = vrot.slane %v11308, 5
  %v11509 = vrot.slane %v11508, 4
  %v11510 = vrot.slane %v10457, 5
  %v11511 = vsel %vm2065, %v11509, %v11510
  %v11512 = vrot.slane %v11510, 4
  %v11513 = vrot.slane %v10508, 5
  %v11514 = vsel %vm2065, %v11512, %v11513
  %v11515 = vrot.slane %v11309, 5
  %v11516 = vrot.slane %v11515, 4
  %v11517 = vrot.slane %v10459, 5
  %v11518 = vsel %vm2065, %v11516, %v11517
  %v11519 = vrot.slane %v11517, 4
  %v11520 = vrot.slane %v10509, 5
  %v11521 = vsel %vm2065, %v11519, %v11520
  %v11522 = vrot.slane %v11310, 5
  %v11523 = vrot.slane %v11522, 4
  %v11524 = vrot.slane %v10461, 5
  %v11525 = vsel %vm2065, %v11523, %v11524
  %v11526 = vrot.slane %v11524, 4
  %v11527 = vrot.slane %v10510, 5
  %v11528 = vsel %vm2065, %v11526, %v11527
  %v11529 = vrot.slane %v11311, 5
  %v11530 = vrot.slane %v11529, 4
  %v11531 = vrot.slane %v10463, 5
  %v11532 = vsel %vm2065, %v11530, %v11531
  %v11533 = vrot.slane %v11531, 4
  %v11534 = vrot.slane %v10511, 5
  %v11535 = vsel %vm2065, %v11533, %v11534
  %v11536 = vrot.slane %v11312, 5
  %v11537 = vrot.slane %v11536, 4
  %v11538 = vrot.slane %v10465, 5
  %v11539 = vsel %vm2065, %v11537, %v11538
  %v11540 = vrot.slane %v11538, 4
  %v11541 = vrot.slane %v10512, 5
  %v11542 = vsel %vm2065, %v11540, %v11541
  %v11543 = vrot.slane %v11313, 5
  %v11544 = vrot.slane %v11543, 4
  %v11545 = vrot.slane %v10467, 5
  %v11546 = vsel %vm2065, %v11544, %v11545
  %v11547 = vrot.slane %v11545, 4
  %v11548 = vrot.slane %v10513, 5
  %v11549 = vsel %vm2065, %v11547, %v11548
  %v11550 = vrot.slane %v11314, 5
  %v11551 = vrot.slane %v11550, 4
  %v11552 = vrot.slane %v10469, 5
  %v11553 = vsel %vm2065, %v11551, %v11552
  %v11554 = vrot.slane %v11552, 4
  %v11555 = vrot.slane %v10514, 5
  %v11556 = vsel %vm2065, %v11554, %v11555
  %v11557 = vrot.slane %v11315, 5
  %v11558 = vrot.slane %v11557, 4
  %v11559 = vrot.slane %v10471, 5
  %v11560 = vsel %vm2065, %v11558, %v11559
  %v11561 = vrot.slane %v11559, 4
  %v11562 = vrot.slane %v10515, 5
  %v11563 = vsel %vm2065, %v11561, %v11562
  %v11564 = vrot.slane %v11316, 5
  %v11565 = vrot.slane %v11564, 4
  %v11566 = vrot.slane %v10473, 5
  %v11567 = vsel %vm2065, %v11565, %v11566
  %v11568 = vrot.slane %v11566, 4
  %v11569 = vrot.slane %v10516, 5
  %v11570 = vsel %vm2065, %v11568, %v11569
  %v11571 = vrot.slane %v11317, 5
  %v11572 = vrot.slane %v11571, 4
  %v11573 = vrot.slane %v10475, 5
  %v11574 = vsel %vm2065, %v11572, %v11573
  %v11575 = vrot.slane %v11573, 4
  %v11576 = vrot.slane %v10517, 5
  %v11577 = vsel %vm2065, %v11575, %v11576
  %v11578 = vrot.slane %v11318, 5
  %v11579 = vrot.slane %v11578, 4
  %v11580 = vrot.slane %v10477, 5
  %v11581 = vsel %vm2065, %v11579, %v11580
  %v11582 = vrot.slane %v11580, 4
  %v11583 = vrot.slane %v10518, 5
  %v11584 = vsel %vm2065, %v11582, %v11583
  %v11585 = vrot.slane %v11319, 5
  %v11586 = vrot.slane %v11585, 4
  %v11587 = vrot.slane %v10479, 5
  %v11588 = vsel %vm2065, %v11586, %v11587
  %v11589 = vrot.slane %v11587, 4
  %v11590 = vrot.slane %v10519, 5
  %v11591 = vsel %vm2065, %v11589, %v11590
  %v11592 = vrot.slane %v11320, 5
  %v11593 = vrot.slane %v11592, 4
  %v11594 = vrot.slane %v10481, 5
  %v11595 = vsel %vm2065, %v11593, %v11594
  %v11596 = vrot.slane %v11594, 4
  %v11597 = vrot.slane %v10520, 5
  %v11598 = vsel %vm2065, %v11596, %v11597
  %v11599 = vrot.slane %v11321, 5
  %v11600 = vrot.slane %v11599, 4
  %v11601 = vrot.slane %v10483, 5
  %v11602 = vsel %vm2065, %v11600, %v11601
  %v11603 = vrot.slane %v11601, 4
  %v11604 = vrot.slane %v10521, 5
  %v11605 = vsel %vm2065, %v11603, %v11604
  %v11606 = vrot.slane %v11322, 5
  %v11607 = vrot.slane %v11606, 4
  %v11608 = vrot.slane %v10485, 5
  %v11609 = vsel %vm2065, %v11607, %v11608
  %v11610 = vrot.slane %v11608, 4
  %v11611 = vrot.slane %v10522, 5
  %v11612 = vsel %vm2065, %v11610, %v11611
  %v11613 = vrot.slane %v11323, 5
  %v11614 = vrot.slane %v11613, 4
  %v11615 = vrot.slane %v10487, 5
  %v11616 = vsel %vm2065, %v11614, %v11615
  %v11617 = vrot.slane %v11615, 4
  %v11618 = vrot.slane %v10523, 5
  %v11619 = vsel %vm2065, %v11617, %v11618
  %v11620 = vrot.slane %v11324, 5
  %v11621 = vrot.slane %v11620, 4
  %v11622 = vrot.slane %v10489, 5
  %v11623 = vsel %vm2065, %v11621, %v11622
  %v11624 = vrot.slane %v11622, 4
  %v11625 = vrot.slane %v10524, 5
  %v11626 = vsel %vm2065, %v11624, %v11625
  %v11627 = vrot.slane %v11325, 5
  %v11628 = vrot.slane %v11627, 4
  %v11629 = vrot.slane %v10491, 5
  %v11630 = vsel %vm2065, %v11628, %v11629
  %v11631 = vrot.slane %v11629, 4
  %v11632 = vrot.slane %v10525, 5
  %v11633 = vsel %vm2065, %v11631, %v11632
  %v11634 = vrot.slane %v11326, 5
  %v11635 = vrot.slane %v11634, 4
  %v11636 = vrot.slane %v10493, 5
  %v11637 = vsel %vm2065, %v11635, %v11636
  %v11638 = vrot.slane %v11636, 4
  %v11639 = vrot.slane %v10526, 5
  %v11640 = vsel %vm2065, %v11638, %v11639
  %v11641 = vrot.slane %v11327, 5
  %v11642 = vrot.slane %v11641, 4
  %v11643 = vrot.slane %v10495, 5
  %v11644 = vsel %vm2065, %v11642, %v11643
  %v11645 = vrot.slane %v11643, 4
  %v11646 = vrot.slane %v10527, 5
  %v11647 = vsel %vm2065, %v11645, %v11646
  %v11680 = vunpack.c.l.b16 %v8000
  %v11681 = vunpack.c.l.b16 %v8001
  %v11682 = vunpack.c.l.b16 %v8002
  %v11683 = vunpack.c.l.b16 %v8003
  %v11684 = vunpack.c.l.b16 %v8004
  %v11685 = vunpack.c.l.b16 %v8005
  %v11686 = vunpack.c.l.b16 %v8006
  %v11687 = vunpack.c.l.b16 %v8007
  %v11688 = vunpack.c.l.b16 %v8008
  %v11689 = vunpack.c.l.b16 %v8009
  %v11690 = vunpack.c.l.b16 %v8010
  %v11691 = vunpack.c.l.b16 %v8011
  %v11692 = vunpack.c.l.b16 %v8012
  %v11693 = vunpack.c.l.b16 %v8013
  %v11694 = vunpack.c.l.b16 %v8014
  %v11695 = vunpack.c.l.b16 %v8015
  %v11696 = vunpack.c.l.b16 %v8016
  %v11697 = vunpack.c.l.b16 %v8017
  %v11698 = vunpack.c.l.b16 %v8018
  %v11699 = vunpack.c.l.b16 %v8019
  %v11700 = vunpack.c.l.b16 %v8020
  %v11701 = vunpack.c.l.b16 %v8021
  %v11702 = vunpack.c.l.b16 %v8022
  %v11703 = vunpack.c.l.b16 %v8023
  %v11704 = vunpack.c.l.b16 %v8024
  %v11705 = vunpack.c.l.b16 %v8025
  %v11706 = vunpack.c.l.b16 %v8026
  %v11707 = vunpack.c.l.b16 %v8027
  %v11708 = vunpack.c.l.b16 %v8028
  %v11709 = vunpack.c.l.b16 %v8029
  %v11710 = vunpack.c.l.b16 %v8030
  %v11711 = vunpack.c.l.b16 %v8031
  %v11712 = vunpack.c.l.b16 %v8032
  %v11713 = vunpack.c.l.b16 %v8033
  %v11714 = vunpack.c.l.b16 %v8034
  %v11715 = vunpack.c.l.b16 %v8035
  %v11716 = vunpack.c.l.b16 %v8036
  %v11717 = vunpack.c.l.b16 %v8037
  %v11718 = vunpack.c.l.b16 %v8038
  %v11719 = vunpack.c.l.b16 %v8039
  %v11720 = vunpack.c.l.b16 %v8040
  %v11721 = vunpack.c.l.b16 %v8041
  %v11722 = vunpack.c.l.b16 %v8042
  %v11723 = vunpack.c.l.b16 %v8043
  %v11724 = vunpack.c.l.b16 %v8044
  %v11725 = vunpack.c.l.b16 %v8045
  %v11726 = vunpack.c.l.b16 %v8046
  %v11727 = vunpack.c.l.b16 %v8047
  %v11728 = vunpack.c.l.b16 %v8048
  %v11729 = vunpack.c.l.b16 %v8049
  %v11730 = vunpack.c.l.b16 %v8050
  %v11731 = vunpack.c.l.b16 %v8051
  %v11732 = vunpack.c.l.b16 %v8052
  %v11733 = vunpack.c.l.b16 %v8053
  %v11734 = vunpack.c.l.b16 %v8054
  %v11735 = vunpack.c.l.b16 %v8055
  %v11736 = vunpack.c.l.b16 %v8056
  %v11737 = vunpack.c.l.b16 %v8057
  %v11738 = vunpack.c.l.b16 %v8058
  %v11739 = vunpack.c.l.b16 %v8059
  %v11740 = vunpack.c.l.b16 %v8060
  %v11741 = vunpack.c.l.b16 %v8061
  %v11742 = vunpack.c.l.b16 %v8062
  %v11743 = vunpack.c.l.b16 %v8063
  %v11744 = vpack.c.b16 %v11681, %v11680
  %v11745 = vpack.c.b16 %v11683, %v11682
  %v11746 = vpack.c.b16 %v11685, %v11684
  %v11747 = vpack.c.b16 %v11687, %v11686
  %v11748 = vpack.c.b16 %v11689, %v11688
  %v11749 = vpack.c.b16 %v11691, %v11690
  %v11750 = vpack.c.b16 %v11693, %v11692
  %v11751 = vpack.c.b16 %v11695, %v11694
  %v11752 = vpack.c.b16 %v11697, %v11696
  %v11753 = vpack.c.b16 %v11699, %v11698
  %v11754 = vpack.c.b16 %v11701, %v11700
  %v11755 = vpack.c.b16 %v11703, %v11702
  %v11756 = vpack.c.b16 %v11705, %v11704
  %v11757 = vpack.c.b16 %v11707, %v11706
  %v11758 = vpack.c.b16 %v11709, %v11708
  %v11759 = vpack.c.b16 %v11711, %v11710
  %v11760 = vpack.c.b16 %v11713, %v11712
  %v11761 = vpack.c.b16 %v11715, %v11714
  %v11762 = vpack.c.b16 %v11717, %v11716
  %v11763 = vpack.c.b16 %v11719, %v11718
  %v11764 = vpack.c.b16 %v11721, %v11720
  %v11765 = vpack.c.b16 %v11723, %v11722
  %v11766 = vpack.c.b16 %v11725, %v11724
  %v11767 = vpack.c.b16 %v11727, %v11726
  %v11768 = vpack.c.b16 %v11729, %v11728
  %v11769 = vpack.c.b16 %v11731, %v11730
  %v11770 = vpack.c.b16 %v11733, %v11732
  %v11771 = vpack.c.b16 %v11735, %v11734
  %v11772 = vpack.c.b16 %v11737, %v11736
  %v11773 = vpack.c.b16 %v11739, %v11738
  %v11774 = vpack.c.b16 %v11741, %v11740
  %v11775 = vpack.c.b16 %v11743, %v11742
  %v11776 = vunpack.c.l.b16 %v8109
  %v11777 = vunpack.c.l.b16 %v8119
  %v11778 = vunpack.c.l.b16 %v8133
  %v11779 = vunpack.c.l.b16 %v8143
  %v11780 = vunpack.c.l.b16 %v8157
  %v11781 = vunpack.c.l.b16 %v8167
  %v11782 = vunpack.c.l.b16 %v8181
  %v11783 = vunpack.c.l.b16 %v8191
  %v11784 = vunpack.c.l.b16 %v8205
  %v11785 = vunpack.c.l.b16 %v8215
  %v11786 = vunpack.c.l.b16 %v8229
  %v11787 = vunpack.c.l.b16 %v8239
  %v11788 = vunpack.c.l.b16 %v8253
  %v11789 = vunpack.c.l.b16 %v8263
  %v11790 = vunpack.c.l.b16 %v8277
  %v11791 = vunpack.c.l.b16 %v8287
  %v11792 = vunpack.c.l.b16 %v8301
  %v11793 = vunpack.c.l.b16 %v8311
  %v11794 = vunpack.c.l.b16 %v8325
  %v11795 = vunpack.c.l.b16 %v8335
  %v11796 = vunpack.c.l.b16 %v8349
  %v11797 = vunpack.c.l.b16 %v8359
  %v11798 = vunpack.c.l.b16 %v8373
  %v11799 = vunpack.c.l.b16 %v8383
  %v11800 = vunpack.c.l.b16 %v8397
  %v11801 = vunpack.c.l.b16 %v8407
  %v11802 = vunpack.c.l.b16 %v8421
  %v11803 = vunpack.c.l.b16 %v8431
  %v11804 = vunpack.c.l.b16 %v8445
  %v11805 = vunpack.c.l.b16 %v8455
  %v11806 = vunpack.c.l.b16 %v8469
  %v11807 = vunpack.c.l.b16 %v8479
  %v11808 = vunpack.c.l.b16 %v8493
  %v11809 = vunpack.c.l.b16 %v8503
  %v11810 = vunpack.c.l.b16 %v8517
  %v11811 = vunpack.c.l.b16 %v8527
  %v11812 = vunpack.c.l.b16 %v8541
  %v11813 = vunpack.c.l.b16 %v8551
  %v11814 = vunpack.c.l.b16 %v8565
  %v11815 = vunpack.c.l.b16 %v8575
  %v11816 = vunpack.c.l.b16 %v8589
  %v11817 = vunpack.c.l.b16 %v8599
  %v11818 = vunpack.c.l.b16 %v8613
  %v11819 = vunpack.c.l.b16 %v8623
  %v11820 = vunpack.c.l.b16 %v8637
  %v11821 = vunpack.c.l.b16 %v8647
  %v11822 = vunpack.c.l.b16 %v8661
  %v11823 = vunpack.c.l.b16 %v8671
  %v11824 = vunpack.c.l.b16 %v8685
  %v11825 = vunpack.c.l.b16 %v8695
  %v11826 = vunpack.c.l.b16 %v8709
  %v11827 = vunpack.c.l.b16 %v8719
  %v11828 = vunpack.c.l.b16 %v8733
  %v11829 = vunpack.c.l.b16 %v8743
  %v11830 = vunpack.c.l.b16 %v8757
  %v11831 = vunpack.c.l.b16 %v8767
  %v11832 = vunpack.c.l.b16 %v8781
  %v11833 = vunpack.c.l.b16 %v8791
  %v11834 = vunpack.c.l.b16 %v8805
  %v11835 = vunpack.c.l.b16 %v8815
  %v11836 = vunpack.c.l.b16 %v8829
  %v11837 = vunpack.c.l.b16 %v8839
  %v11838 = vunpack.c.l.b16 %v8853
  %v11839 = vunpack.c.l.b16 %v8863
  %v11840 = vpack.c.b16 %v11777, %v11776
  %v11841 = vpack.c.b16 %v11779, %v11778
  %v11842 = vpack.c.b16 %v11781, %v11780
  %v11843 = vpack.c.b16 %v11783, %v11782
  %v11844 = vpack.c.b16 %v11785, %v11784
  %v11845 = vpack.c.b16 %v11787, %v11786
  %v11846 = vpack.c.b16 %v11789, %v11788
  %v11847 = vpack.c.b16 %v11791, %v11790
  %v11848 = vpack.c.b16 %v11793, %v11792
  %v11849 = vpack.c.b16 %v11795, %v11794
  %v11850 = vpack.c.b16 %v11797, %v11796
  %v11851 = vpack.c.b16 %v11799, %v11798
  %v11852 = vpack.c.b16 %v11801, %v11800
  %v11853 = vpack.c.b16 %v11803, %v11802
  %v11854 = vpack.c.b16 %v11805, %v11804
  %v11855 = vpack.c.b16 %v11807, %v11806
  %v11856 = vpack.c.b16 %v11809, %v11808
  %v11857 = vpack.c.b16 %v11811, %v11810
  %v11858 = vpack.c.b16 %v11813, %v11812
  %v11859 = vpack.c.b16 %v11815, %v11814
  %v11860 = vpack.c.b16 %v11817, %v11816
  %v11861 = vpack.c.b16 %v11819, %v11818
  %v11862 = vpack.c.b16 %v11821, %v11820
  %v11863 = vpack.c.b16 %v11823, %v11822
  %v11864 = vpack.c.b16 %v11825, %v11824
  %v11865 = vpack.c.b16 %v11827, %v11826
  %v11866 = vpack.c.b16 %v11829, %v11828
  %v11867 = vpack.c.b16 %v11831, %v11830
  %v11868 = vpack.c.b16 %v11833, %v11832
  %v11869 = vpack.c.b16 %v11835, %v11834
  %v11870 = vpack.c.b16 %v11837, %v11836
  %v11871 = vpack.c.b16 %v11839, %v11838
  %11872 = vrot.lane.b32.xlu0 %v11840, 4
  %v11873 = vpop.permute.xlu0 %11872
  %11874 = vrot.lane.b32.xlu0 %v11841, 4
  %v11875 = vpop.permute.xlu0 %11874
  %11876 = vrot.lane.b32.xlu0 %v11842, 4
  %v11877 = vpop.permute.xlu0 %11876
  %11878 = vrot.lane.b32.xlu0 %v11843, 4
  %v11879 = vpop.permute.xlu0 %11878
  %11880 = vrot.lane.b32.xlu0 %v11844, 4
  %v11881 = vpop.permute.xlu0 %11880
  %11882 = vrot.lane.b32.xlu0 %v11845, 4
  %v11883 = vpop.permute.xlu0 %11882
  %11884 = vrot.lane.b32.xlu0 %v11846, 4
  %v11885 = vpop.permute.xlu0 %11884
  %11886 = vrot.lane.b32.xlu0 %v11847, 4
  %v11887 = vpop.permute.xlu0 %11886
  %11888 = vrot.lane.b32.xlu0 %v11848, 4
  %v11889 = vpop.permute.xlu0 %11888
  %11890 = vrot.lane.b32.xlu0 %v11849, 4
  %v11891 = vpop.permute.xlu0 %11890
  %11892 = vrot.lane.b32.xlu0 %v11850, 4
  %v11893 = vpop.permute.xlu0 %11892
  %11894 = vrot.lane.b32.xlu0 %v11851, 4
  %v11895 = vpop.permute.xlu0 %11894
  %11896 = vrot.lane.b32.xlu0 %v11852, 4
  %v11897 = vpop.permute.xlu0 %11896
  %11898 = vrot.lane.b32.xlu0 %v11853, 4
  %v11899 = vpop.permute.xlu0 %11898
  %11900 = vrot.lane.b32.xlu0 %v11854, 4
  %v11901 = vpop.permute.xlu0 %11900
  %11902 = vrot.lane.b32.xlu0 %v11855, 4
  %v11903 = vpop.permute.xlu0 %11902
  %11904 = vrot.lane.b32.xlu0 %v11856, 4
  %v11905 = vpop.permute.xlu0 %11904
  %11906 = vrot.lane.b32.xlu0 %v11857, 4
  %v11907 = vpop.permute.xlu0 %11906
  %11908 = vrot.lane.b32.xlu0 %v11858, 4
  %v11909 = vpop.permute.xlu0 %11908
  %11910 = vrot.lane.b32.xlu0 %v11859, 4
  %v11911 = vpop.permute.xlu0 %11910
  %11912 = vrot.lane.b32.xlu0 %v11860, 4
  %v11913 = vpop.permute.xlu0 %11912
  %11914 = vrot.lane.b32.xlu0 %v11861, 4
  %v11915 = vpop.permute.xlu0 %11914
  %11916 = vrot.lane.b32.xlu0 %v11862, 4
  %v11917 = vpop.permute.xlu0 %11916
  %11918 = vrot.lane.b32.xlu0 %v11863, 4
  %v11919 = vpop.permute.xlu0 %11918
  %11920 = vrot.lane.b32.xlu0 %v11864, 4
  %v11921 = vpop.permute.xlu0 %11920
  %11922 = vrot.lane.b32.xlu0 %v11865, 4
  %v11923 = vpop.permute.xlu0 %11922
  %11924 = vrot.lane.b32.xlu0 %v11866, 4
  %v11925 = vpop.permute.xlu0 %11924
  %11926 = vrot.lane.b32.xlu0 %v11867, 4
  %v11927 = vpop.permute.xlu0 %11926
  %11928 = vrot.lane.b32.xlu0 %v11868, 4
  %v11929 = vpop.permute.xlu0 %11928
  %11930 = vrot.lane.b32.xlu0 %v11869, 4
  %v11931 = vpop.permute.xlu0 %11930
  %11932 = vrot.lane.b32.xlu0 %v11870, 4
  %v11933 = vpop.permute.xlu0 %11932
  %11934 = vrot.lane.b32.xlu0 %v11871, 4
  %v11935 = vpop.permute.xlu0 %11934
  %v11936 = vunpack.c.l.b16 %v8995
  %v11937 = vunpack.c.l.b16 %v8998
  %v11938 = vunpack.c.l.b16 %v9002
  %v11939 = vunpack.c.l.b16 %v9005
  %v11940 = vunpack.c.l.b16 %v9009
  %v11941 = vunpack.c.l.b16 %v9012
  %v11942 = vunpack.c.l.b16 %v9016
  %v11943 = vunpack.c.l.b16 %v9019
  %v11944 = vunpack.c.l.b16 %v9023
  %v11945 = vunpack.c.l.b16 %v9026
  %v11946 = vunpack.c.l.b16 %v9030
  %v11947 = vunpack.c.l.b16 %v9033
  %v11948 = vunpack.c.l.b16 %v9037
  %v11949 = vunpack.c.l.b16 %v9040
  %v11950 = vunpack.c.l.b16 %v9044
  %v11951 = vunpack.c.l.b16 %v9047
  %v11952 = vunpack.c.l.b16 %v9051
  %v11953 = vunpack.c.l.b16 %v9054
  %v11954 = vunpack.c.l.b16 %v9058
  %v11955 = vunpack.c.l.b16 %v9061
  %v11956 = vunpack.c.l.b16 %v9065
  %v11957 = vunpack.c.l.b16 %v9068
  %v11958 = vunpack.c.l.b16 %v9072
  %v11959 = vunpack.c.l.b16 %v9075
  %v11960 = vunpack.c.l.b16 %v9079
  %v11961 = vunpack.c.l.b16 %v9082
  %v11962 = vunpack.c.l.b16 %v9086
  %v11963 = vunpack.c.l.b16 %v9089
  %v11964 = vunpack.c.l.b16 %v9093
  %v11965 = vunpack.c.l.b16 %v9096
  %v11966 = vunpack.c.l.b16 %v9100
  %v11967 = vunpack.c.l.b16 %v9103
  %v11968 = vunpack.c.l.b16 %v9107
  %v11969 = vunpack.c.l.b16 %v9110
  %v11970 = vunpack.c.l.b16 %v9114
  %v11971 = vunpack.c.l.b16 %v9117
  %v11972 = vunpack.c.l.b16 %v9121
  %v11973 = vunpack.c.l.b16 %v9124
  %v11974 = vunpack.c.l.b16 %v9128
  %v11975 = vunpack.c.l.b16 %v9131
  %v11976 = vunpack.c.l.b16 %v9135
  %v11977 = vunpack.c.l.b16 %v9138
  %v11978 = vunpack.c.l.b16 %v9142
  %v11979 = vunpack.c.l.b16 %v9145
  %v11980 = vunpack.c.l.b16 %v9149
  %v11981 = vunpack.c.l.b16 %v9152
  %v11982 = vunpack.c.l.b16 %v9156
  %v11983 = vunpack.c.l.b16 %v9159
  %v11984 = vunpack.c.l.b16 %v9163
  %v11985 = vunpack.c.l.b16 %v9166
  %v11986 = vunpack.c.l.b16 %v9170
  %v11987 = vunpack.c.l.b16 %v9173
  %v11988 = vunpack.c.l.b16 %v9177
  %v11989 = vunpack.c.l.b16 %v9180
  %v11990 = vunpack.c.l.b16 %v9184
  %v11991 = vunpack.c.l.b16 %v9187
  %v11992 = vunpack.c.l.b16 %v9191
  %v11993 = vunpack.c.l.b16 %v9194
  %v11994 = vunpack.c.l.b16 %v9198
  %v11995 = vunpack.c.l.b16 %v9201
  %v11996 = vunpack.c.l.b16 %v9205
  %v11997 = vunpack.c.l.b16 %v9208
  %v11998 = vunpack.c.l.b16 %v9212
  %v11999 = vunpack.c.l.b16 %v9215
  %v12000 = vpack.c.b16 %v11937, %v11936
  %v12001 = vpack.c.b16 %v11939, %v11938
  %v12002 = vpack.c.b16 %v11941, %v11940
  %v12003 = vpack.c.b16 %v11943, %v11942
  %v12004 = vpack.c.b16 %v11945, %v11944
  %v12005 = vpack.c.b16 %v11947, %v11946
  %v12006 = vpack.c.b16 %v11949, %v11948
  %v12007 = vpack.c.b16 %v11951, %v11950
  %v12008 = vpack.c.b16 %v11953, %v11952
  %v12009 = vpack.c.b16 %v11955, %v11954
  %v12010 = vpack.c.b16 %v11957, %v11956
  %v12011 = vpack.c.b16 %v11959, %v11958
  %v12012 = vpack.c.b16 %v11961, %v11960
  %v12013 = vpack.c.b16 %v11963, %v11962
  %v12014 = vpack.c.b16 %v11965, %v11964
  %v12015 = vpack.c.b16 %v11967, %v11966
  %v12016 = vpack.c.b16 %v11969, %v11968
  %v12017 = vpack.c.b16 %v11971, %v11970
  %v12018 = vpack.c.b16 %v11973, %v11972
  %v12019 = vpack.c.b16 %v11975, %v11974
  %v12020 = vpack.c.b16 %v11977, %v11976
  %v12021 = vpack.c.b16 %v11979, %v11978
  %v12022 = vpack.c.b16 %v11981, %v11980
  %v12023 = vpack.c.b16 %v11983, %v11982
  %v12024 = vpack.c.b16 %v11985, %v11984
  %v12025 = vpack.c.b16 %v11987, %v11986
  %v12026 = vpack.c.b16 %v11989, %v11988
  %v12027 = vpack.c.b16 %v11991, %v11990
  %v12028 = vpack.c.b16 %v11993, %v11992
  %v12029 = vpack.c.b16 %v11995, %v11994
  %v12030 = vpack.c.b16 %v11997, %v11996
  %v12031 = vpack.c.b16 %v11999, %v11998
  %12032 = vrot.lane.b32.xlu0 %v12000, 8
  %v12033 = vpop.permute.xlu0 %12032
  %12034 = vrot.lane.b32.xlu0 %v12001, 8
  %v12035 = vpop.permute.xlu0 %12034
  %12036 = vrot.lane.b32.xlu0 %v12002, 8
  %v12037 = vpop.permute.xlu0 %12036
  %12038 = vrot.lane.b32.xlu0 %v12003, 8
  %v12039 = vpop.permute.xlu0 %12038
  %12040 = vrot.lane.b32.xlu0 %v12004, 8
  %v12041 = vpop.permute.xlu0 %12040
  %12042 = vrot.lane.b32.xlu0 %v12005, 8
  %v12043 = vpop.permute.xlu0 %12042
  %12044 = vrot.lane.b32.xlu0 %v12006, 8
  %v12045 = vpop.permute.xlu0 %12044
  %12046 = vrot.lane.b32.xlu0 %v12007, 8
  %v12047 = vpop.permute.xlu0 %12046
  %12048 = vrot.lane.b32.xlu0 %v12008, 8
  %v12049 = vpop.permute.xlu0 %12048
  %12050 = vrot.lane.b32.xlu0 %v12009, 8
  %v12051 = vpop.permute.xlu0 %12050
  %12052 = vrot.lane.b32.xlu0 %v12010, 8
  %v12053 = vpop.permute.xlu0 %12052
  %12054 = vrot.lane.b32.xlu0 %v12011, 8
  %v12055 = vpop.permute.xlu0 %12054
  %12056 = vrot.lane.b32.xlu0 %v12012, 8
  %v12057 = vpop.permute.xlu0 %12056
  %12058 = vrot.lane.b32.xlu0 %v12013, 8
  %v12059 = vpop.permute.xlu0 %12058
  %12060 = vrot.lane.b32.xlu0 %v12014, 8
  %v12061 = vpop.permute.xlu0 %12060
  %12062 = vrot.lane.b32.xlu0 %v12015, 8
  %v12063 = vpop.permute.xlu0 %12062
  %12064 = vrot.lane.b32.xlu0 %v12016, 8
  %v12065 = vpop.permute.xlu0 %12064
  %12066 = vrot.lane.b32.xlu0 %v12017, 8
  %v12067 = vpop.permute.xlu0 %12066
  %12068 = vrot.lane.b32.xlu0 %v12018, 8
  %v12069 = vpop.permute.xlu0 %12068
  %12070 = vrot.lane.b32.xlu0 %v12019, 8
  %v12071 = vpop.permute.xlu0 %12070
  %12072 = vrot.lane.b32.xlu0 %v12020, 8
  %v12073 = vpop.permute.xlu0 %12072
  %12074 = vrot.lane.b32.xlu0 %v12021, 8
  %v12075 = vpop.permute.xlu0 %12074
  %12076 = vrot.lane.b32.xlu0 %v12022, 8
  %v12077 = vpop.permute.xlu0 %12076
  %12078 = vrot.lane.b32.xlu0 %v12023, 8
  %v12079 = vpop.permute.xlu0 %12078
  %12080 = vrot.lane.b32.xlu0 %v12024, 8
  %v12081 = vpop.permute.xlu0 %12080
  %12082 = vrot.lane.b32.xlu0 %v12025, 8
  %v12083 = vpop.permute.xlu0 %12082
  %12084 = vrot.lane.b32.xlu0 %v12026, 8
  %v12085 = vpop.permute.xlu0 %12084
  %12086 = vrot.lane.b32.xlu0 %v12027, 8
  %v12087 = vpop.permute.xlu0 %12086
  %12088 = vrot.lane.b32.xlu0 %v12028, 8
  %v12089 = vpop.permute.xlu0 %12088
  %12090 = vrot.lane.b32.xlu0 %v12029, 8
  %v12091 = vpop.permute.xlu0 %12090
  %12092 = vrot.lane.b32.xlu0 %v12030, 8
  %v12093 = vpop.permute.xlu0 %12092
  %12094 = vrot.lane.b32.xlu0 %v12031, 8
  %v12095 = vpop.permute.xlu0 %12094
  %v12128 = vunpack.c.l.b16 %v9216
  %v12129 = vunpack.c.l.b16 %v9217
  %v12130 = vunpack.c.l.b16 %v9218
  %v12131 = vunpack.c.l.b16 %v9219
  %v12132 = vunpack.c.l.b16 %v9220
  %v12133 = vunpack.c.l.b16 %v9221
  %v12134 = vunpack.c.l.b16 %v9222
  %v12135 = vunpack.c.l.b16 %v9223
  %v12136 = vunpack.c.l.b16 %v9224
  %v12137 = vunpack.c.l.b16 %v9225
  %v12138 = vunpack.c.l.b16 %v9226
  %v12139 = vunpack.c.l.b16 %v9227
  %v12140 = vunpack.c.l.b16 %v9228
  %v12141 = vunpack.c.l.b16 %v9229
  %v12142 = vunpack.c.l.b16 %v9230
  %v12143 = vunpack.c.l.b16 %v9231
  %v12144 = vunpack.c.l.b16 %v9232
  %v12145 = vunpack.c.l.b16 %v9233
  %v12146 = vunpack.c.l.b16 %v9234
  %v12147 = vunpack.c.l.b16 %v9235
  %v12148 = vunpack.c.l.b16 %v9236
  %v12149 = vunpack.c.l.b16 %v9237
  %v12150 = vunpack.c.l.b16 %v9238
  %v12151 = vunpack.c.l.b16 %v9239
  %v12152 = vunpack.c.l.b16 %v9240
  %v12153 = vunpack.c.l.b16 %v9241
  %v12154 = vunpack.c.l.b16 %v9242
  %v12155 = vunpack.c.l.b16 %v9243
  %v12156 = vunpack.c.l.b16 %v9244
  %v12157 = vunpack.c.l.b16 %v9245
  %v12158 = vunpack.c.l.b16 %v9246
  %v12159 = vunpack.c.l.b16 %v9247
  %v12160 = vunpack.c.l.b16 %v9248
  %v12161 = vunpack.c.l.b16 %v9249
  %v12162 = vunpack.c.l.b16 %v9250
  %v12163 = vunpack.c.l.b16 %v9251
  %v12164 = vunpack.c.l.b16 %v9252
  %v12165 = vunpack.c.l.b16 %v9253
  %v12166 = vunpack.c.l.b16 %v9254
  %v12167 = vunpack.c.l.b16 %v9255
  %v12168 = vunpack.c.l.b16 %v9256
  %v12169 = vunpack.c.l.b16 %v9257
  %v12170 = vunpack.c.l.b16 %v9258
  %v12171 = vunpack.c.l.b16 %v9259
  %v12172 = vunpack.c.l.b16 %v9260
  %v12173 = vunpack.c.l.b16 %v9261
  %v12174 = vunpack.c.l.b16 %v9262
  %v12175 = vunpack.c.l.b16 %v9263
  %v12176 = vunpack.c.l.b16 %v9264
  %v12177 = vunpack.c.l.b16 %v9265
  %v12178 = vunpack.c.l.b16 %v9266
  %v12179 = vunpack.c.l.b16 %v9267
  %v12180 = vunpack.c.l.b16 %v9268
  %v12181 = vunpack.c.l.b16 %v9269
  %v12182 = vunpack.c.l.b16 %v9270
  %v12183 = vunpack.c.l.b16 %v9271
  %v12184 = vunpack.c.l.b16 %v9272
  %v12185 = vunpack.c.l.b16 %v9273
  %v12186 = vunpack.c.l.b16 %v9274
  %v12187 = vunpack.c.l.b16 %v9275
  %v12188 = vunpack.c.l.b16 %v9276
  %v12189 = vunpack.c.l.b16 %v9277
  %v12190 = vunpack.c.l.b16 %v9278
  %v12191 = vunpack.c.l.b16 %v9279
  %v12192 = vpack.c.b16 %v12129, %v12128
  %v12193 = vpack.c.b16 %v12131, %v12130
  %v12194 = vpack.c.b16 %v12133, %v12132
  %v12195 = vpack.c.b16 %v12135, %v12134
  %v12196 = vpack.c.b16 %v12137, %v12136
  %v12197 = vpack.c.b16 %v12139, %v12138
  %v12198 = vpack.c.b16 %v12141, %v12140
  %v12199 = vpack.c.b16 %v12143, %v12142
  %v12200 = vpack.c.b16 %v12145, %v12144
  %v12201 = vpack.c.b16 %v12147, %v12146
  %v12202 = vpack.c.b16 %v12149, %v12148
  %v12203 = vpack.c.b16 %v12151, %v12150
  %v12204 = vpack.c.b16 %v12153, %v12152
  %v12205 = vpack.c.b16 %v12155, %v12154
  %v12206 = vpack.c.b16 %v12157, %v12156
  %v12207 = vpack.c.b16 %v12159, %v12158
  %v12208 = vpack.c.b16 %v12161, %v12160
  %v12209 = vpack.c.b16 %v12163, %v12162
  %v12210 = vpack.c.b16 %v12165, %v12164
  %v12211 = vpack.c.b16 %v12167, %v12166
  %v12212 = vpack.c.b16 %v12169, %v12168
  %v12213 = vpack.c.b16 %v12171, %v12170
  %v12214 = vpack.c.b16 %v12173, %v12172
  %v12215 = vpack.c.b16 %v12175, %v12174
  %v12216 = vpack.c.b16 %v12177, %v12176
  %v12217 = vpack.c.b16 %v12179, %v12178
  %v12218 = vpack.c.b16 %v12181, %v12180
  %v12219 = vpack.c.b16 %v12183, %v12182
  %v12220 = vpack.c.b16 %v12185, %v12184
  %v12221 = vpack.c.b16 %v12187, %v12186
  %v12222 = vpack.c.b16 %v12189, %v12188
  %v12223 = vpack.c.b16 %v12191, %v12190
  %12224 = vrot.lane.b32.xlu0 %v12192, 12
  %v12225 = vpop.permute.xlu0 %12224
  %12226 = vrot.lane.b32.xlu0 %v12193, 12
  %v12227 = vpop.permute.xlu0 %12226
  %12228 = vrot.lane.b32.xlu0 %v12194, 12
  %v12229 = vpop.permute.xlu0 %12228
  %12230 = vrot.lane.b32.xlu0 %v12195, 12
  %v12231 = vpop.permute.xlu0 %12230
  %12232 = vrot.lane.b32.xlu0 %v12196, 12
  %v12233 = vpop.permute.xlu0 %12232
  %12234 = vrot.lane.b32.xlu0 %v12197, 12
  %v12235 = vpop.permute.xlu0 %12234
  %12236 = vrot.lane.b32.xlu0 %v12198, 12
  %v12237 = vpop.permute.xlu0 %12236
  %12238 = vrot.lane.b32.xlu0 %v12199, 12
  %v12239 = vpop.permute.xlu0 %12238
  %12240 = vrot.lane.b32.xlu0 %v12200, 12
  %v12241 = vpop.permute.xlu0 %12240
  %12242 = vrot.lane.b32.xlu0 %v12201, 12
  %v12243 = vpop.permute.xlu0 %12242
  %12244 = vrot.lane.b32.xlu0 %v12202, 12
  %v12245 = vpop.permute.xlu0 %12244
  %12246 = vrot.lane.b32.xlu0 %v12203, 12
  %v12247 = vpop.permute.xlu0 %12246
  %12248 = vrot.lane.b32.xlu0 %v12204, 12
  %v12249 = vpop.permute.xlu0 %12248
  %12250 = vrot.lane.b32.xlu0 %v12205, 12
  %v12251 = vpop.permute.xlu0 %12250
  %12252 = vrot.lane.b32.xlu0 %v12206, 12
  %v12253 = vpop.permute.xlu0 %12252
  %12254 = vrot.lane.b32.xlu0 %v12207, 12
  %v12255 = vpop.permute.xlu0 %12254
  %12256 = vrot.lane.b32.xlu0 %v12208, 12
  %v12257 = vpop.permute.xlu0 %12256
  %12258 = vrot.lane.b32.xlu0 %v12209, 12
  %v12259 = vpop.permute.xlu0 %12258
  %12260 = vrot.lane.b32.xlu0 %v12210, 12
  %v12261 = vpop.permute.xlu0 %12260
  %12262 = vrot.lane.b32.xlu0 %v12211, 12
  %v12263 = vpop.permute.xlu0 %12262
  %12264 = vrot.lane.b32.xlu0 %v12212, 12
  %v12265 = vpop.permute.xlu0 %12264
  %12266 = vrot.lane.b32.xlu0 %v12213, 12
  %v12267 = vpop.permute.xlu0 %12266
  %12268 = vrot.lane.b32.xlu0 %v12214, 12
  %v12269 = vpop.permute.xlu0 %12268
  %12270 = vrot.lane.b32.xlu0 %v12215, 12
  %v12271 = vpop.permute.xlu0 %12270
  %12272 = vrot.lane.b32.xlu0 %v12216, 12
  %v12273 = vpop.permute.xlu0 %12272
  %12274 = vrot.lane.b32.xlu0 %v12217, 12
  %v12275 = vpop.permute.xlu0 %12274
  %12276 = vrot.lane.b32.xlu0 %v12218, 12
  %v12277 = vpop.permute.xlu0 %12276
  %12278 = vrot.lane.b32.xlu0 %v12219, 12
  %v12279 = vpop.permute.xlu0 %12278
  %12280 = vrot.lane.b32.xlu0 %v12220, 12
  %v12281 = vpop.permute.xlu0 %12280
  %12282 = vrot.lane.b32.xlu0 %v12221, 12
  %v12283 = vpop.permute.xlu0 %12282
  %12284 = vrot.lane.b32.xlu0 %v12222, 12
  %v12285 = vpop.permute.xlu0 %12284
  %12286 = vrot.lane.b32.xlu0 %v12223, 12
  %v12287 = vpop.permute.xlu0 %12286
  %v12288 = vunpack.c.l.b16 %v9325
  %v12289 = vunpack.c.l.b16 %v9335
  %v12290 = vunpack.c.l.b16 %v9349
  %v12291 = vunpack.c.l.b16 %v9359
  %v12292 = vunpack.c.l.b16 %v9373
  %v12293 = vunpack.c.l.b16 %v9383
  %v12294 = vunpack.c.l.b16 %v9397
  %v12295 = vunpack.c.l.b16 %v9407
  %v12296 = vunpack.c.l.b16 %v9421
  %v12297 = vunpack.c.l.b16 %v9431
  %v12298 = vunpack.c.l.b16 %v9445
  %v12299 = vunpack.c.l.b16 %v9455
  %v12300 = vunpack.c.l.b16 %v9469
  %v12301 = vunpack.c.l.b16 %v9479
  %v12302 = vunpack.c.l.b16 %v9493
  %v12303 = vunpack.c.l.b16 %v9503
  %v12304 = vunpack.c.l.b16 %v9517
  %v12305 = vunpack.c.l.b16 %v9527
  %v12306 = vunpack.c.l.b16 %v9541
  %v12307 = vunpack.c.l.b16 %v9551
  %v12308 = vunpack.c.l.b16 %v9565
  %v12309 = vunpack.c.l.b16 %v9575
  %v12310 = vunpack.c.l.b16 %v9589
  %v12311 = vunpack.c.l.b16 %v9599
  %v12312 = vunpack.c.l.b16 %v9613
  %v12313 = vunpack.c.l.b16 %v9623
  %v12314 = vunpack.c.l.b16 %v9637
  %v12315 = vunpack.c.l.b16 %v9647
  %v12316 = vunpack.c.l.b16 %v9661
  %v12317 = vunpack.c.l.b16 %v9671
  %v12318 = vunpack.c.l.b16 %v9685
  %v12319 = vunpack.c.l.b16 %v9695
  %v12320 = vunpack.c.l.b16 %v9709
  %v12321 = vunpack.c.l.b16 %v9719
  %v12322 = vunpack.c.l.b16 %v9733
  %v12323 = vunpack.c.l.b16 %v9743
  %v12324 = vunpack.c.l.b16 %v9757
  %v12325 = vunpack.c.l.b16 %v9767
  %v12326 = vunpack.c.l.b16 %v9781
  %v12327 = vunpack.c.l.b16 %v9791
  %v12328 = vunpack.c.l.b16 %v9805
  %v12329 = vunpack.c.l.b16 %v9815
  %v12330 = vunpack.c.l.b16 %v9829
  %v12331 = vunpack.c.l.b16 %v9839
  %v12332 = vunpack.c.l.b16 %v9853
  %v12333 = vunpack.c.l.b16 %v9863
  %v12334 = vunpack.c.l.b16 %v9877
  %v12335 = vunpack.c.l.b16 %v9887
  %v12336 = vunpack.c.l.b16 %v9901
  %v12337 = vunpack.c.l.b16 %v9911
  %v12338 = vunpack.c.l.b16 %v9925
  %v12339 = vunpack.c.l.b16 %v9935
  %v12340 = vunpack.c.l.b16 %v9949
  %v12341 = vunpack.c.l.b16 %v9959
  %v12342 = vunpack.c.l.b16 %v9973
  %v12343 = vunpack.c.l.b16 %v9983
  %v12344 = vunpack.c.l.b16 %v9997
  %v12345 = vunpack.c.l.b16 %v10007
  %v12346 = vunpack.c.l.b16 %v10021
  %v12347 = vunpack.c.l.b16 %v10031
  %v12348 = vunpack.c.l.b16 %v10045
  %v12349 = vunpack.c.l.b16 %v10055
  %v12350 = vunpack.c.l.b16 %v10069
  %v12351 = vunpack.c.l.b16 %v10079
  %v12352 = vpack.c.b16 %v12289, %v12288
  %v12353 = vpack.c.b16 %v12291, %v12290
  %v12354 = vpack.c.b16 %v12293, %v12292
  %v12355 = vpack.c.b16 %v12295, %v12294
  %v12356 = vpack.c.b16 %v12297, %v12296
  %v12357 = vpack.c.b16 %v12299, %v12298
  %v12358 = vpack.c.b16 %v12301, %v12300
  %v12359 = vpack.c.b16 %v12303, %v12302
  %v12360 = vpack.c.b16 %v12305, %v12304
  %v12361 = vpack.c.b16 %v12307, %v12306
  %v12362 = vpack.c.b16 %v12309, %v12308
  %v12363 = vpack.c.b16 %v12311, %v12310
  %v12364 = vpack.c.b16 %v12313, %v12312
  %v12365 = vpack.c.b16 %v12315, %v12314
  %v12366 = vpack.c.b16 %v12317, %v12316
  %v12367 = vpack.c.b16 %v12319, %v12318
  %v12368 = vpack.c.b16 %v12321, %v12320
  %v12369 = vpack.c.b16 %v12323, %v12322
  %v12370 = vpack.c.b16 %v12325, %v12324
  %v12371 = vpack.c.b16 %v12327, %v12326
  %v12372 = vpack.c.b16 %v12329, %v12328
  %v12373 = vpack.c.b16 %v12331, %v12330
  %v12374 = vpack.c.b16 %v12333, %v12332
  %v12375 = vpack.c.b16 %v12335, %v12334
  %v12376 = vpack.c.b16 %v12337, %v12336
  %v12377 = vpack.c.b16 %v12339, %v12338
  %v12378 = vpack.c.b16 %v12341, %v12340
  %v12379 = vpack.c.b16 %v12343, %v12342
  %v12380 = vpack.c.b16 %v12345, %v12344
  %v12381 = vpack.c.b16 %v12347, %v12346
  %v12382 = vpack.c.b16 %v12349, %v12348
  %v12383 = vpack.c.b16 %v12351, %v12350
  %12384 = vrot.lane.b32.xlu0 %v12352, 16
  %v12385 = vpop.permute.xlu0 %12384
  %12386 = vrot.lane.b32.xlu0 %v12353, 16
  %v12387 = vpop.permute.xlu0 %12386
  %12388 = vrot.lane.b32.xlu0 %v12354, 16
  %v12389 = vpop.permute.xlu0 %12388
  %12390 = vrot.lane.b32.xlu0 %v12355, 16
  %v12391 = vpop.permute.xlu0 %12390
  %12392 = vrot.lane.b32.xlu0 %v12356, 16
  %v12393 = vpop.permute.xlu0 %12392
  %12394 = vrot.lane.b32.xlu0 %v12357, 16
  %v12395 = vpop.permute.xlu0 %12394
  %12396 = vrot.lane.b32.xlu0 %v12358, 16
  %v12397 = vpop.permute.xlu0 %12396
  %12398 = vrot.lane.b32.xlu0 %v12359, 16
  %v12399 = vpop.permute.xlu0 %12398
  %12400 = vrot.lane.b32.xlu0 %v12360, 16
  %v12401 = vpop.permute.xlu0 %12400
  %12402 = vrot.lane.b32.xlu0 %v12361, 16
  %v12403 = vpop.permute.xlu0 %12402
  %12404 = vrot.lane.b32.xlu0 %v12362, 16
  %v12405 = vpop.permute.xlu0 %12404
  %12406 = vrot.lane.b32.xlu0 %v12363, 16
  %v12407 = vpop.permute.xlu0 %12406
  %12408 = vrot.lane.b32.xlu0 %v12364, 16
  %v12409 = vpop.permute.xlu0 %12408
  %12410 = vrot.lane.b32.xlu0 %v12365, 16
  %v12411 = vpop.permute.xlu0 %12410
  %12412 = vrot.lane.b32.xlu0 %v12366, 16
  %v12413 = vpop.permute.xlu0 %12412
  %12414 = vrot.lane.b32.xlu0 %v12367, 16
  %v12415 = vpop.permute.xlu0 %12414
  %12416 = vrot.lane.b32.xlu0 %v12368, 16
  %v12417 = vpop.permute.xlu0 %12416
  %12418 = vrot.lane.b32.xlu0 %v12369, 16
  %v12419 = vpop.permute.xlu0 %12418
  %12420 = vrot.lane.b32.xlu0 %v12370, 16
  %v12421 = vpop.permute.xlu0 %12420
  %12422 = vrot.lane.b32.xlu0 %v12371, 16
  %v12423 = vpop.permute.xlu0 %12422
  %12424 = vrot.lane.b32.xlu0 %v12372, 16
  %v12425 = vpop.permute.xlu0 %12424
  %12426 = vrot.lane.b32.xlu0 %v12373, 16
  %v12427 = vpop.permute.xlu0 %12426
  %12428 = vrot.lane.b32.xlu0 %v12374, 16
  %v12429 = vpop.permute.xlu0 %12428
  %12430 = vrot.lane.b32.xlu0 %v12375, 16
  %v12431 = vpop.permute.xlu0 %12430
  %12432 = vrot.lane.b32.xlu0 %v12376, 16
  %v12433 = vpop.permute.xlu0 %12432
  %12434 = vrot.lane.b32.xlu0 %v12377, 16
  %v12435 = vpop.permute.xlu0 %12434
  %12436 = vrot.lane.b32.xlu0 %v12378, 16
  %v12437 = vpop.permute.xlu0 %12436
  %12438 = vrot.lane.b32.xlu0 %v12379, 16
  %v12439 = vpop.permute.xlu0 %12438
  %12440 = vrot.lane.b32.xlu0 %v12380, 16
  %v12441 = vpop.permute.xlu0 %12440
  %12442 = vrot.lane.b32.xlu0 %v12381, 16
  %v12443 = vpop.permute.xlu0 %12442
  %12444 = vrot.lane.b32.xlu0 %v12382, 16
  %v12445 = vpop.permute.xlu0 %12444
  %12446 = vrot.lane.b32.xlu0 %v12383, 16
  %v12447 = vpop.permute.xlu0 %12446
  %v12448 = vunpack.c.l.b16 %v10211
  %v12449 = vunpack.c.l.b16 %v10214
  %v12450 = vunpack.c.l.b16 %v10218
  %v12451 = vunpack.c.l.b16 %v10221
  %v12452 = vunpack.c.l.b16 %v10225
  %v12453 = vunpack.c.l.b16 %v10228
  %v12454 = vunpack.c.l.b16 %v10232
  %v12455 = vunpack.c.l.b16 %v10235
  %v12456 = vunpack.c.l.b16 %v10239
  %v12457 = vunpack.c.l.b16 %v10242
  %v12458 = vunpack.c.l.b16 %v10246
  %v12459 = vunpack.c.l.b16 %v10249
  %v12460 = vunpack.c.l.b16 %v10253
  %v12461 = vunpack.c.l.b16 %v10256
  %v12462 = vunpack.c.l.b16 %v10260
  %v12463 = vunpack.c.l.b16 %v10263
  %v12464 = vunpack.c.l.b16 %v10267
  %v12465 = vunpack.c.l.b16 %v10270
  %v12466 = vunpack.c.l.b16 %v10274
  %v12467 = vunpack.c.l.b16 %v10277
  %v12468 = vunpack.c.l.b16 %v10281
  %v12469 = vunpack.c.l.b16 %v10284
  %v12470 = vunpack.c.l.b16 %v10288
  %v12471 = vunpack.c.l.b16 %v10291
  %v12472 = vunpack.c.l.b16 %v10295
  %v12473 = vunpack.c.l.b16 %v10298
  %v12474 = vunpack.c.l.b16 %v10302
  %v12475 = vunpack.c.l.b16 %v10305
  %v12476 = vunpack.c.l.b16 %v10309
  %v12477 = vunpack.c.l.b16 %v10312
  %v12478 = vunpack.c.l.b16 %v10316
  %v12479 = vunpack.c.l.b16 %v10319
  %v12480 = vunpack.c.l.b16 %v10323
  %v12481 = vunpack.c.l.b16 %v10326
  %v12482 = vunpack.c.l.b16 %v10330
  %v12483 = vunpack.c.l.b16 %v10333
  %v12484 = vunpack.c.l.b16 %v10337
  %v12485 = vunpack.c.l.b16 %v10340
  %v12486 = vunpack.c.l.b16 %v10344
  %v12487 = vunpack.c.l.b16 %v10347
  %v12488 = vunpack.c.l.b16 %v10351
  %v12489 = vunpack.c.l.b16 %v10354
  %v12490 = vunpack.c.l.b16 %v10358
  %v12491 = vunpack.c.l.b16 %v10361
  %v12492 = vunpack.c.l.b16 %v10365
  %v12493 = vunpack.c.l.b16 %v10368
  %v12494 = vunpack.c.l.b16 %v10372
  %v12495 = vunpack.c.l.b16 %v10375
  %v12496 = vunpack.c.l.b16 %v10379
  %v12497 = vunpack.c.l.b16 %v10382
  %v12498 = vunpack.c.l.b16 %v10386
  %v12499 = vunpack.c.l.b16 %v10389
  %v12500 = vunpack.c.l.b16 %v10393
  %v12501 = vunpack.c.l.b16 %v10396
  %v12502 = vunpack.c.l.b16 %v10400
  %v12503 = vunpack.c.l.b16 %v10403
  %v12504 = vunpack.c.l.b16 %v10407
  %v12505 = vunpack.c.l.b16 %v10410
  %v12506 = vunpack.c.l.b16 %v10414
  %v12507 = vunpack.c.l.b16 %v10417
  %v12508 = vunpack.c.l.b16 %v10421
  %v12509 = vunpack.c.l.b16 %v10424
  %v12510 = vunpack.c.l.b16 %v10428
  %v12511 = vunpack.c.l.b16 %v10431
  %v12512 = vpack.c.b16 %v12449, %v12448
  %v12513 = vpack.c.b16 %v12451, %v12450
  %v12514 = vpack.c.b16 %v12453, %v12452
  %v12515 = vpack.c.b16 %v12455, %v12454
  %v12516 = vpack.c.b16 %v12457, %v12456
  %v12517 = vpack.c.b16 %v12459, %v12458
  %v12518 = vpack.c.b16 %v12461, %v12460
  %v12519 = vpack.c.b16 %v12463, %v12462
  %v12520 = vpack.c.b16 %v12465, %v12464
  %v12521 = vpack.c.b16 %v12467, %v12466
  %v12522 = vpack.c.b16 %v12469, %v12468
  %v12523 = vpack.c.b16 %v12471, %v12470
  %v12524 = vpack.c.b16 %v12473, %v12472
  %v12525 = vpack.c.b16 %v12475, %v12474
  %v12526 = vpack.c.b16 %v12477, %v12476
  %v12527 = vpack.c.b16 %v12479, %v12478
  %v12528 = vpack.c.b16 %v12481, %v12480
  %v12529 = vpack.c.b16 %v12483, %v12482
  %v12530 = vpack.c.b16 %v12485, %v12484
  %v12531 = vpack.c.b16 %v12487, %v12486
  %v12532 = vpack.c.b16 %v12489, %v12488
  %v12533 = vpack.c.b16 %v12491, %v12490
  %v12534 = vpack.c.b16 %v12493, %v12492
  %v12535 = vpack.c.b16 %v12495, %v12494
  %v12536 = vpack.c.b16 %v12497, %v12496
  %v12537 = vpack.c.b16 %v12499, %v12498
  %v12538 = vpack.c.b16 %v12501, %v12500
  %v12539 = vpack.c.b16 %v12503, %v12502
  %v12540 = vpack.c.b16 %v12505, %v12504
  %v12541 = vpack.c.b16 %v12507, %v12506
  %v12542 = vpack.c.b16 %v12509, %v12508
  %v12543 = vpack.c.b16 %v12511, %v12510
  %12544 = vrot.lane.b32.xlu0 %v12512, 20
  %v12545 = vpop.permute.xlu0 %12544
  %12546 = vrot.lane.b32.xlu0 %v12513, 20
  %v12547 = vpop.permute.xlu0 %12546
  %12548 = vrot.lane.b32.xlu0 %v12514, 20
  %v12549 = vpop.permute.xlu0 %12548
  %12550 = vrot.lane.b32.xlu0 %v12515, 20
  %v12551 = vpop.permute.xlu0 %12550
  %12552 = vrot.lane.b32.xlu0 %v12516, 20
  %v12553 = vpop.permute.xlu0 %12552
  %12554 = vrot.lane.b32.xlu0 %v12517, 20
  %v12555 = vpop.permute.xlu0 %12554
  %12556 = vrot.lane.b32.xlu0 %v12518, 20
  %v12557 = vpop.permute.xlu0 %12556
  %12558 = vrot.lane.b32.xlu0 %v12519, 20
  %v12559 = vpop.permute.xlu0 %12558
  %12560 = vrot.lane.b32.xlu0 %v12520, 20
  %v12561 = vpop.permute.xlu0 %12560
  %12562 = vrot.lane.b32.xlu0 %v12521, 20
  %v12563 = vpop.permute.xlu0 %12562
  %12564 = vrot.lane.b32.xlu0 %v12522, 20
  %v12565 = vpop.permute.xlu0 %12564
  %12566 = vrot.lane.b32.xlu0 %v12523, 20
  %v12567 = vpop.permute.xlu0 %12566
  %12568 = vrot.lane.b32.xlu0 %v12524, 20
  %v12569 = vpop.permute.xlu0 %12568
  %12570 = vrot.lane.b32.xlu0 %v12525, 20
  %v12571 = vpop.permute.xlu0 %12570
  %12572 = vrot.lane.b32.xlu0 %v12526, 20
  %v12573 = vpop.permute.xlu0 %12572
  %12574 = vrot.lane.b32.xlu0 %v12527, 20
  %v12575 = vpop.permute.xlu0 %12574
  %12576 = vrot.lane.b32.xlu0 %v12528, 20
  %v12577 = vpop.permute.xlu0 %12576
  %12578 = vrot.lane.b32.xlu0 %v12529, 20
  %v12579 = vpop.permute.xlu0 %12578
  %12580 = vrot.lane.b32.xlu0 %v12530, 20
  %v12581 = vpop.permute.xlu0 %12580
  %12582 = vrot.lane.b32.xlu0 %v12531, 20
  %v12583 = vpop.permute.xlu0 %12582
  %12584 = vrot.lane.b32.xlu0 %v12532, 20
  %v12585 = vpop.permute.xlu0 %12584
  %12586 = vrot.lane.b32.xlu0 %v12533, 20
  %v12587 = vpop.permute.xlu0 %12586
  %12588 = vrot.lane.b32.xlu0 %v12534, 20
  %v12589 = vpop.permute.xlu0 %12588
  %12590 = vrot.lane.b32.xlu0 %v12535, 20
  %v12591 = vpop.permute.xlu0 %12590
  %12592 = vrot.lane.b32.xlu0 %v12536, 20
  %v12593 = vpop.permute.xlu0 %12592
  %12594 = vrot.lane.b32.xlu0 %v12537, 20
  %v12595 = vpop.permute.xlu0 %12594
  %12596 = vrot.lane.b32.xlu0 %v12538, 20
  %v12597 = vpop.permute.xlu0 %12596
  %12598 = vrot.lane.b32.xlu0 %v12539, 20
  %v12599 = vpop.permute.xlu0 %12598
  %12600 = vrot.lane.b32.xlu0 %v12540, 20
  %v12601 = vpop.permute.xlu0 %12600
  %12602 = vrot.lane.b32.xlu0 %v12541, 20
  %v12603 = vpop.permute.xlu0 %12602
  %12604 = vrot.lane.b32.xlu0 %v12542, 20
  %v12605 = vpop.permute.xlu0 %12604
  %12606 = vrot.lane.b32.xlu0 %v12543, 20
  %v12607 = vpop.permute.xlu0 %12606
  %v12640 = vunpack.c.l.b16 %v10432
  %v12641 = vunpack.c.l.b16 %v10433
  %v12642 = vunpack.c.l.b16 %v10434
  %v12643 = vunpack.c.l.b16 %v10435
  %v12644 = vunpack.c.l.b16 %v10436
  %v12645 = vunpack.c.l.b16 %v10437
  %v12646 = vunpack.c.l.b16 %v10438
  %v12647 = vunpack.c.l.b16 %v10439
  %v12648 = vunpack.c.l.b16 %v10440
  %v12649 = vunpack.c.l.b16 %v10441
  %v12650 = vunpack.c.l.b16 %v10442
  %v12651 = vunpack.c.l.b16 %v10443
  %v12652 = vunpack.c.l.b16 %v10444
  %v12653 = vunpack.c.l.b16 %v10445
  %v12654 = vunpack.c.l.b16 %v10446
  %v12655 = vunpack.c.l.b16 %v10447
  %v12656 = vunpack.c.l.b16 %v10448
  %v12657 = vunpack.c.l.b16 %v10449
  %v12658 = vunpack.c.l.b16 %v10450
  %v12659 = vunpack.c.l.b16 %v10451
  %v12660 = vunpack.c.l.b16 %v10452
  %v12661 = vunpack.c.l.b16 %v10453
  %v12662 = vunpack.c.l.b16 %v10454
  %v12663 = vunpack.c.l.b16 %v10455
  %v12664 = vunpack.c.l.b16 %v10456
  %v12665 = vunpack.c.l.b16 %v10457
  %v12666 = vunpack.c.l.b16 %v10458
  %v12667 = vunpack.c.l.b16 %v10459
  %v12668 = vunpack.c.l.b16 %v10460
  %v12669 = vunpack.c.l.b16 %v10461
  %v12670 = vunpack.c.l.b16 %v10462
  %v12671 = vunpack.c.l.b16 %v10463
  %v12672 = vunpack.c.l.b16 %v10464
  %v12673 = vunpack.c.l.b16 %v10465
  %v12674 = vunpack.c.l.b16 %v10466
  %v12675 = vunpack.c.l.b16 %v10467
  %v12676 = vunpack.c.l.b16 %v10468
  %v12677 = vunpack.c.l.b16 %v10469
  %v12678 = vunpack.c.l.b16 %v10470
  %v12679 = vunpack.c.l.b16 %v10471
  %v12680 = vunpack.c.l.b16 %v10472
  %v12681 = vunpack.c.l.b16 %v10473
  %v12682 = vunpack.c.l.b16 %v10474
  %v12683 = vunpack.c.l.b16 %v10475
  %v12684 = vunpack.c.l.b16 %v10476
  %v12685 = vunpack.c.l.b16 %v10477
  %v12686 = vunpack.c.l.b16 %v10478
  %v12687 = vunpack.c.l.b16 %v10479
  %v12688 = vunpack.c.l.b16 %v10480
  %v12689 = vunpack.c.l.b16 %v10481
  %v12690 = vunpack.c.l.b16 %v10482
  %v12691 = vunpack.c.l.b16 %v10483
  %v12692 = vunpack.c.l.b16 %v10484
  %v12693 = vunpack.c.l.b16 %v10485
  %v12694 = vunpack.c.l.b16 %v10486
  %v12695 = vunpack.c.l.b16 %v10487
  %v12696 = vunpack.c.l.b16 %v10488
  %v12697 = vunpack.c.l.b16 %v10489
  %v12698 = vunpack.c.l.b16 %v10490
  %v12699 = vunpack.c.l.b16 %v10491
  %v12700 = vunpack.c.l.b16 %v10492
  %v12701 = vunpack.c.l.b16 %v10493
  %v12702 = vunpack.c.l.b16 %v10494
  %v12703 = vunpack.c.l.b16 %v10495
  %v12704 = vpack.c.b16 %v12641, %v12640
  %v12705 = vpack.c.b16 %v12643, %v12642
  %v12706 = vpack.c.b16 %v12645, %v12644
  %v12707 = vpack.c.b16 %v12647, %v12646
  %v12708 = vpack.c.b16 %v12649, %v12648
  %v12709 = vpack.c.b16 %v12651, %v12650
  %v12710 = vpack.c.b16 %v12653, %v12652
  %v12711 = vpack.c.b16 %v12655, %v12654
  %v12712 = vpack.c.b16 %v12657, %v12656
  %v12713 = vpack.c.b16 %v12659, %v12658
  %v12714 = vpack.c.b16 %v12661, %v12660
  %v12715 = vpack.c.b16 %v12663, %v12662
  %v12716 = vpack.c.b16 %v12665, %v12664
  %v12717 = vpack.c.b16 %v12667, %v12666
  %v12718 = vpack.c.b16 %v12669, %v12668
  %v12719 = vpack.c.b16 %v12671, %v12670
  %v12720 = vpack.c.b16 %v12673, %v12672
  %v12721 = vpack.c.b16 %v12675, %v12674
  %v12722 = vpack.c.b16 %v12677, %v12676
  %v12723 = vpack.c.b16 %v12679, %v12678
  %v12724 = vpack.c.b16 %v12681, %v12680
  %v12725 = vpack.c.b16 %v12683, %v12682
  %v12726 = vpack.c.b16 %v12685, %v12684
  %v12727 = vpack.c.b16 %v12687, %v12686
  %v12728 = vpack.c.b16 %v12689, %v12688
  %v12729 = vpack.c.b16 %v12691, %v12690
  %v12730 = vpack.c.b16 %v12693, %v12692
  %v12731 = vpack.c.b16 %v12695, %v12694
  %v12732 = vpack.c.b16 %v12697, %v12696
  %v12733 = vpack.c.b16 %v12699, %v12698
  %v12734 = vpack.c.b16 %v12701, %v12700
  %v12735 = vpack.c.b16 %v12703, %v12702
  %12736 = vrot.lane.b32.xlu0 %v12704, 24
  %v12737 = vpop.permute.xlu0 %12736
  %12738 = vrot.lane.b32.xlu0 %v12705, 24
  %v12739 = vpop.permute.xlu0 %12738
  %12740 = vrot.lane.b32.xlu0 %v12706, 24
  %v12741 = vpop.permute.xlu0 %12740
  %12742 = vrot.lane.b32.xlu0 %v12707, 24
  %v12743 = vpop.permute.xlu0 %12742
  %12744 = vrot.lane.b32.xlu0 %v12708, 24
  %v12745 = vpop.permute.xlu0 %12744
  %12746 = vrot.lane.b32.xlu0 %v12709, 24
  %v12747 = vpop.permute.xlu0 %12746
  %12748 = vrot.lane.b32.xlu0 %v12710, 24
  %v12749 = vpop.permute.xlu0 %12748
  %12750 = vrot.lane.b32.xlu0 %v12711, 24
  %v12751 = vpop.permute.xlu0 %12750
  %12752 = vrot.lane.b32.xlu0 %v12712, 24
  %v12753 = vpop.permute.xlu0 %12752
  %12754 = vrot.lane.b32.xlu0 %v12713, 24
  %v12755 = vpop.permute.xlu0 %12754
  %12756 = vrot.lane.b32.xlu0 %v12714, 24
  %v12757 = vpop.permute.xlu0 %12756
  %12758 = vrot.lane.b32.xlu0 %v12715, 24
  %v12759 = vpop.permute.xlu0 %12758
  %12760 = vrot.lane.b32.xlu0 %v12716, 24
  %v12761 = vpop.permute.xlu0 %12760
  %12762 = vrot.lane.b32.xlu0 %v12717, 24
  %v12763 = vpop.permute.xlu0 %12762
  %12764 = vrot.lane.b32.xlu0 %v12718, 24
  %v12765 = vpop.permute.xlu0 %12764
  %12766 = vrot.lane.b32.xlu0 %v12719, 24
  %v12767 = vpop.permute.xlu0 %12766
  %12768 = vrot.lane.b32.xlu0 %v12720, 24
  %v12769 = vpop.permute.xlu0 %12768
  %12770 = vrot.lane.b32.xlu0 %v12721, 24
  %v12771 = vpop.permute.xlu0 %12770
  %12772 = vrot.lane.b32.xlu0 %v12722, 24
  %v12773 = vpop.permute.xlu0 %12772
  %12774 = vrot.lane.b32.xlu0 %v12723, 24
  %v12775 = vpop.permute.xlu0 %12774
  %12776 = vrot.lane.b32.xlu0 %v12724, 24
  %v12777 = vpop.permute.xlu0 %12776
  %12778 = vrot.lane.b32.xlu0 %v12725, 24
  %v12779 = vpop.permute.xlu0 %12778
  %12780 = vrot.lane.b32.xlu0 %v12726, 24
  %v12781 = vpop.permute.xlu0 %12780
  %12782 = vrot.lane.b32.xlu0 %v12727, 24
  %v12783 = vpop.permute.xlu0 %12782
  %12784 = vrot.lane.b32.xlu0 %v12728, 24
  %v12785 = vpop.permute.xlu0 %12784
  %12786 = vrot.lane.b32.xlu0 %v12729, 24
  %v12787 = vpop.permute.xlu0 %12786
  %12788 = vrot.lane.b32.xlu0 %v12730, 24
  %v12789 = vpop.permute.xlu0 %12788
  %12790 = vrot.lane.b32.xlu0 %v12731, 24
  %v12791 = vpop.permute.xlu0 %12790
  %12792 = vrot.lane.b32.xlu0 %v12732, 24
  %v12793 = vpop.permute.xlu0 %12792
  %12794 = vrot.lane.b32.xlu0 %v12733, 24
  %v12795 = vpop.permute.xlu0 %12794
  %12796 = vrot.lane.b32.xlu0 %v12734, 24
  %v12797 = vpop.permute.xlu0 %12796
  %12798 = vrot.lane.b32.xlu0 %v12735, 24
  %v12799 = vpop.permute.xlu0 %12798
  %v12800 = vunpack.c.l.b16 %v10541
  %v12801 = vunpack.c.l.b16 %v10551
  %v12802 = vunpack.c.l.b16 %v10565
  %v12803 = vunpack.c.l.b16 %v10575
  %v12804 = vunpack.c.l.b16 %v10589
  %v12805 = vunpack.c.l.b16 %v10599
  %v12806 = vunpack.c.l.b16 %v10613
  %v12807 = vunpack.c.l.b16 %v10623
  %v12808 = vunpack.c.l.b16 %v10637
  %v12809 = vunpack.c.l.b16 %v10647
  %v12810 = vunpack.c.l.b16 %v10661
  %v12811 = vunpack.c.l.b16 %v10671
  %v12812 = vunpack.c.l.b16 %v10685
  %v12813 = vunpack.c.l.b16 %v10695
  %v12814 = vunpack.c.l.b16 %v10709
  %v12815 = vunpack.c.l.b16 %v10719
  %v12816 = vunpack.c.l.b16 %v10733
  %v12817 = vunpack.c.l.b16 %v10743
  %v12818 = vunpack.c.l.b16 %v10757
  %v12819 = vunpack.c.l.b16 %v10767
  %v12820 = vunpack.c.l.b16 %v10781
  %v12821 = vunpack.c.l.b16 %v10791
  %v12822 = vunpack.c.l.b16 %v10805
  %v12823 = vunpack.c.l.b16 %v10815
  %v12824 = vunpack.c.l.b16 %v10829
  %v12825 = vunpack.c.l.b16 %v10839
  %v12826 = vunpack.c.l.b16 %v10853
  %v12827 = vunpack.c.l.b16 %v10863
  %v12828 = vunpack.c.l.b16 %v10877
  %v12829 = vunpack.c.l.b16 %v10887
  %v12830 = vunpack.c.l.b16 %v10901
  %v12831 = vunpack.c.l.b16 %v10911
  %v12832 = vunpack.c.l.b16 %v10925
  %v12833 = vunpack.c.l.b16 %v10935
  %v12834 = vunpack.c.l.b16 %v10949
  %v12835 = vunpack.c.l.b16 %v10959
  %v12836 = vunpack.c.l.b16 %v10973
  %v12837 = vunpack.c.l.b16 %v10983
  %v12838 = vunpack.c.l.b16 %v10997
  %v12839 = vunpack.c.l.b16 %v11007
  %v12840 = vunpack.c.l.b16 %v11021
  %v12841 = vunpack.c.l.b16 %v11031
  %v12842 = vunpack.c.l.b16 %v11045
  %v12843 = vunpack.c.l.b16 %v11055
  %v12844 = vunpack.c.l.b16 %v11069
  %v12845 = vunpack.c.l.b16 %v11079
  %v12846 = vunpack.c.l.b16 %v11093
  %v12847 = vunpack.c.l.b16 %v11103
  %v12848 = vunpack.c.l.b16 %v11117
  %v12849 = vunpack.c.l.b16 %v11127
  %v12850 = vunpack.c.l.b16 %v11141
  %v12851 = vunpack.c.l.b16 %v11151
  %v12852 = vunpack.c.l.b16 %v11165
  %v12853 = vunpack.c.l.b16 %v11175
  %v12854 = vunpack.c.l.b16 %v11189
  %v12855 = vunpack.c.l.b16 %v11199
  %v12856 = vunpack.c.l.b16 %v11213
  %v12857 = vunpack.c.l.b16 %v11223
  %v12858 = vunpack.c.l.b16 %v11237
  %v12859 = vunpack.c.l.b16 %v11247
  %v12860 = vunpack.c.l.b16 %v11261
  %v12861 = vunpack.c.l.b16 %v11271
  %v12862 = vunpack.c.l.b16 %v11285
  %v12863 = vunpack.c.l.b16 %v11295
  %v12864 = vpack.c.b16 %v12801, %v12800
  %v12865 = vpack.c.b16 %v12803, %v12802
  %v12866 = vpack.c.b16 %v12805, %v12804
  %v12867 = vpack.c.b16 %v12807, %v12806
  %v12868 = vpack.c.b16 %v12809, %v12808
  %v12869 = vpack.c.b16 %v12811, %v12810
  %v12870 = vpack.c.b16 %v12813, %v12812
  %v12871 = vpack.c.b16 %v12815, %v12814
  %v12872 = vpack.c.b16 %v12817, %v12816
  %v12873 = vpack.c.b16 %v12819, %v12818
  %v12874 = vpack.c.b16 %v12821, %v12820
  %v12875 = vpack.c.b16 %v12823, %v12822
  %v12876 = vpack.c.b16 %v12825, %v12824
  %v12877 = vpack.c.b16 %v12827, %v12826
  %v12878 = vpack.c.b16 %v12829, %v12828
  %v12879 = vpack.c.b16 %v12831, %v12830
  %v12880 = vpack.c.b16 %v12833, %v12832
  %v12881 = vpack.c.b16 %v12835, %v12834
  %v12882 = vpack.c.b16 %v12837, %v12836
  %v12883 = vpack.c.b16 %v12839, %v12838
  %v12884 = vpack.c.b16 %v12841, %v12840
  %v12885 = vpack.c.b16 %v12843, %v12842
  %v12886 = vpack.c.b16 %v12845, %v12844
  %v12887 = vpack.c.b16 %v12847, %v12846
  %v12888 = vpack.c.b16 %v12849, %v12848
  %v12889 = vpack.c.b16 %v12851, %v12850
  %v12890 = vpack.c.b16 %v12853, %v12852
  %v12891 = vpack.c.b16 %v12855, %v12854
  %v12892 = vpack.c.b16 %v12857, %v12856
  %v12893 = vpack.c.b16 %v12859, %v12858
  %v12894 = vpack.c.b16 %v12861, %v12860
  %v12895 = vpack.c.b16 %v12863, %v12862
  %12896 = vrot.lane.b32.xlu0 %v12864, 28
  %v12897 = vpop.permute.xlu0 %12896
  %12898 = vrot.lane.b32.xlu0 %v12865, 28
  %v12899 = vpop.permute.xlu0 %12898
  %12900 = vrot.lane.b32.xlu0 %v12866, 28
  %v12901 = vpop.permute.xlu0 %12900
  %12902 = vrot.lane.b32.xlu0 %v12867, 28
  %v12903 = vpop.permute.xlu0 %12902
  %12904 = vrot.lane.b32.xlu0 %v12868, 28
  %v12905 = vpop.permute.xlu0 %12904
  %12906 = vrot.lane.b32.xlu0 %v12869, 28
  %v12907 = vpop.permute.xlu0 %12906
  %12908 = vrot.lane.b32.xlu0 %v12870, 28
  %v12909 = vpop.permute.xlu0 %12908
  %12910 = vrot.lane.b32.xlu0 %v12871, 28
  %v12911 = vpop.permute.xlu0 %12910
  %12912 = vrot.lane.b32.xlu0 %v12872, 28
  %v12913 = vpop.permute.xlu0 %12912
  %12914 = vrot.lane.b32.xlu0 %v12873, 28
  %v12915 = vpop.permute.xlu0 %12914
  %12916 = vrot.lane.b32.xlu0 %v12874, 28
  %v12917 = vpop.permute.xlu0 %12916
  %12918 = vrot.lane.b32.xlu0 %v12875, 28
  %v12919 = vpop.permute.xlu0 %12918
  %12920 = vrot.lane.b32.xlu0 %v12876, 28
  %v12921 = vpop.permute.xlu0 %12920
  %12922 = vrot.lane.b32.xlu0 %v12877, 28
  %v12923 = vpop.permute.xlu0 %12922
  %12924 = vrot.lane.b32.xlu0 %v12878, 28
  %v12925 = vpop.permute.xlu0 %12924
  %12926 = vrot.lane.b32.xlu0 %v12879, 28
  %v12927 = vpop.permute.xlu0 %12926
  %12928 = vrot.lane.b32.xlu0 %v12880, 28
  %v12929 = vpop.permute.xlu0 %12928
  %12930 = vrot.lane.b32.xlu0 %v12881, 28
  %v12931 = vpop.permute.xlu0 %12930
  %12932 = vrot.lane.b32.xlu0 %v12882, 28
  %v12933 = vpop.permute.xlu0 %12932
  %12934 = vrot.lane.b32.xlu0 %v12883, 28
  %v12935 = vpop.permute.xlu0 %12934
  %12936 = vrot.lane.b32.xlu0 %v12884, 28
  %v12937 = vpop.permute.xlu0 %12936
  %12938 = vrot.lane.b32.xlu0 %v12885, 28
  %v12939 = vpop.permute.xlu0 %12938
  %12940 = vrot.lane.b32.xlu0 %v12886, 28
  %v12941 = vpop.permute.xlu0 %12940
  %12942 = vrot.lane.b32.xlu0 %v12887, 28
  %v12943 = vpop.permute.xlu0 %12942
  %12944 = vrot.lane.b32.xlu0 %v12888, 28
  %v12945 = vpop.permute.xlu0 %12944
  %12946 = vrot.lane.b32.xlu0 %v12889, 28
  %v12947 = vpop.permute.xlu0 %12946
  %12948 = vrot.lane.b32.xlu0 %v12890, 28
  %v12949 = vpop.permute.xlu0 %12948
  %12950 = vrot.lane.b32.xlu0 %v12891, 28
  %v12951 = vpop.permute.xlu0 %12950
  %12952 = vrot.lane.b32.xlu0 %v12892, 28
  %v12953 = vpop.permute.xlu0 %12952
  %12954 = vrot.lane.b32.xlu0 %v12893, 28
  %v12955 = vpop.permute.xlu0 %12954
  %12956 = vrot.lane.b32.xlu0 %v12894, 28
  %v12957 = vpop.permute.xlu0 %12956
  %12958 = vrot.lane.b32.xlu0 %v12895, 28
  %v12959 = vpop.permute.xlu0 %12958
  %v12960 = vunpack.c.l.b16 %v11427
  %v12961 = vunpack.c.l.b16 %v11430
  %v12962 = vunpack.c.l.b16 %v11434
  %v12963 = vunpack.c.l.b16 %v11437
  %v12964 = vunpack.c.l.b16 %v11441
  %v12965 = vunpack.c.l.b16 %v11444
  %v12966 = vunpack.c.l.b16 %v11448
  %v12967 = vunpack.c.l.b16 %v11451
  %v12968 = vunpack.c.l.b16 %v11455
  %v12969 = vunpack.c.l.b16 %v11458
  %v12970 = vunpack.c.l.b16 %v11462
  %v12971 = vunpack.c.l.b16 %v11465
  %v12972 = vunpack.c.l.b16 %v11469
  %v12973 = vunpack.c.l.b16 %v11472
  %v12974 = vunpack.c.l.b16 %v11476
  %v12975 = vunpack.c.l.b16 %v11479
  %v12976 = vunpack.c.l.b16 %v11483
  %v12977 = vunpack.c.l.b16 %v11486
  %v12978 = vunpack.c.l.b16 %v11490
  %v12979 = vunpack.c.l.b16 %v11493
  %v12980 = vunpack.c.l.b16 %v11497
  %v12981 = vunpack.c.l.b16 %v11500
  %v12982 = vunpack.c.l.b16 %v11504
  %v12983 = vunpack.c.l.b16 %v11507
  %v12984 = vunpack.c.l.b16 %v11511
  %v12985 = vunpack.c.l.b16 %v11514
  %v12986 = vunpack.c.l.b16 %v11518
  %v12987 = vunpack.c.l.b16 %v11521
  %v12988 = vunpack.c.l.b16 %v11525
  %v12989 = vunpack.c.l.b16 %v11528
  %v12990 = vunpack.c.l.b16 %v11532
  %v12991 = vunpack.c.l.b16 %v11535
  %v12992 = vunpack.c.l.b16 %v11539
  %v12993 = vunpack.c.l.b16 %v11542
  %v12994 = vunpack.c.l.b16 %v11546
  %v12995 = vunpack.c.l.b16 %v11549
  %v12996 = vunpack.c.l.b16 %v11553
  %v12997 = vunpack.c.l.b16 %v11556
  %v12998 = vunpack.c.l.b16 %v11560
  %v12999 = vunpack.c.l.b16 %v11563
  %v13000 = vunpack.c.l.b16 %v11567
  %v13001 = vunpack.c.l.b16 %v11570
  %v13002 = vunpack.c.l.b16 %v11574
  %v13003 = vunpack.c.l.b16 %v11577
  %v13004 = vunpack.c.l.b16 %v11581
  %v13005 = vunpack.c.l.b16 %v11584
  %v13006 = vunpack.c.l.b16 %v11588
  %v13007 = vunpack.c.l.b16 %v11591
  %v13008 = vunpack.c.l.b16 %v11595
  %v13009 = vunpack.c.l.b16 %v11598
  %v13010 = vunpack.c.l.b16 %v11602
  %v13011 = vunpack.c.l.b16 %v11605
  %v13012 = vunpack.c.l.b16 %v11609
  %v13013 = vunpack.c.l.b16 %v11612
  %v13014 = vunpack.c.l.b16 %v11616
  %v13015 = vunpack.c.l.b16 %v11619
  %v13016 = vunpack.c.l.b16 %v11623
  %v13017 = vunpack.c.l.b16 %v11626
  %v13018 = vunpack.c.l.b16 %v11630
  %v13019 = vunpack.c.l.b16 %v11633
  %v13020 = vunpack.c.l.b16 %v11637
  %v13021 = vunpack.c.l.b16 %v11640
  %v13022 = vunpack.c.l.b16 %v11644
  %v13023 = vunpack.c.l.b16 %v11647
  %v13024 = vpack.c.b16 %v12961, %v12960
  %v13025 = vpack.c.b16 %v12963, %v12962
  %v13026 = vpack.c.b16 %v12965, %v12964
  %v13027 = vpack.c.b16 %v12967, %v12966
  %v13028 = vpack.c.b16 %v12969, %v12968
  %v13029 = vpack.c.b16 %v12971, %v12970
  %v13030 = vpack.c.b16 %v12973, %v12972
  %v13031 = vpack.c.b16 %v12975, %v12974
  %v13032 = vpack.c.b16 %v12977, %v12976
  %v13033 = vpack.c.b16 %v12979, %v12978
  %v13034 = vpack.c.b16 %v12981, %v12980
  %v13035 = vpack.c.b16 %v12983, %v12982
  %v13036 = vpack.c.b16 %v12985, %v12984
  %v13037 = vpack.c.b16 %v12987, %v12986
  %v13038 = vpack.c.b16 %v12989, %v12988
  %v13039 = vpack.c.b16 %v12991, %v12990
  %v13040 = vpack.c.b16 %v12993, %v12992
  %v13041 = vpack.c.b16 %v12995, %v12994
  %v13042 = vpack.c.b16 %v12997, %v12996
  %v13043 = vpack.c.b16 %v12999, %v12998
  %v13044 = vpack.c.b16 %v13001, %v13000
  %v13045 = vpack.c.b16 %v13003, %v13002
  %v13046 = vpack.c.b16 %v13005, %v13004
  %v13047 = vpack.c.b16 %v13007, %v13006
  %v13048 = vpack.c.b16 %v13009, %v13008
  %v13049 = vpack.c.b16 %v13011, %v13010
  %v13050 = vpack.c.b16 %v13013, %v13012
  %v13051 = vpack.c.b16 %v13015, %v13014
  %v13052 = vpack.c.b16 %v13017, %v13016
  %v13053 = vpack.c.b16 %v13019, %v13018
  %v13054 = vpack.c.b16 %v13021, %v13020
  %v13055 = vpack.c.b16 %v13023, %v13022
  %13056 = vrot.lane.b32.xlu0 %v13024, 32
  %v13057 = vpop.permute.xlu0 %13056
  %13058 = vrot.lane.b32.xlu0 %v13025, 32
  %v13059 = vpop.permute.xlu0 %13058
  %13060 = vrot.lane.b32.xlu0 %v13026, 32
  %v13061 = vpop.permute.xlu0 %13060
  %13062 = vrot.lane.b32.xlu0 %v13027, 32
  %v13063 = vpop.permute.xlu0 %13062
  %13064 = vrot.lane.b32.xlu0 %v13028, 32
  %v13065 = vpop.permute.xlu0 %13064
  %13066 = vrot.lane.b32.xlu0 %v13029, 32
  %v13067 = vpop.permute.xlu0 %13066
  %13068 = vrot.lane.b32.xlu0 %v13030, 32
  %v13069 = vpop.permute.xlu0 %13068
  %13070 = vrot.lane.b32.xlu0 %v13031, 32
  %v13071 = vpop.permute.xlu0 %13070
  %13072 = vrot.lane.b32.xlu0 %v13032, 32
  %v13073 = vpop.permute.xlu0 %13072
  %13074 = vrot.lane.b32.xlu0 %v13033, 32
  %v13075 = vpop.permute.xlu0 %13074
  %13076 = vrot.lane.b32.xlu0 %v13034, 32
  %v13077 = vpop.permute.xlu0 %13076
  %13078 = vrot.lane.b32.xlu0 %v13035, 32
  %v13079 = vpop.permute.xlu0 %13078
  %13080 = vrot.lane.b32.xlu0 %v13036, 32
  %v13081 = vpop.permute.xlu0 %13080
  %13082 = vrot.lane.b32.xlu0 %v13037, 32
  %v13083 = vpop.permute.xlu0 %13082
  %13084 = vrot.lane.b32.xlu0 %v13038, 32
  %v13085 = vpop.permute.xlu0 %13084
  %13086 = vrot.lane.b32.xlu0 %v13039, 32
  %v13087 = vpop.permute.xlu0 %13086
  %13088 = vrot.lane.b32.xlu0 %v13040, 32
  %v13089 = vpop.permute.xlu0 %13088
  %13090 = vrot.lane.b32.xlu0 %v13041, 32
  %v13091 = vpop.permute.xlu0 %13090
  %13092 = vrot.lane.b32.xlu0 %v13042, 32
  %v13093 = vpop.permute.xlu0 %13092
  %13094 = vrot.lane.b32.xlu0 %v13043, 32
  %v13095 = vpop.permute.xlu0 %13094
  %13096 = vrot.lane.b32.xlu0 %v13044, 32
  %v13097 = vpop.permute.xlu0 %13096
  %13098 = vrot.lane.b32.xlu0 %v13045, 32
  %v13099 = vpop.permute.xlu0 %13098
  %13100 = vrot.lane.b32.xlu0 %v13046, 32
  %v13101 = vpop.permute.xlu0 %13100
  %13102 = vrot.lane.b32.xlu0 %v13047, 32
  %v13103 = vpop.permute.xlu0 %13102
  %13104 = vrot.lane.b32.xlu0 %v13048, 32
  %v13105 = vpop.permute.xlu0 %13104
  %13106 = vrot.lane.b32.xlu0 %v13049, 32
  %v13107 = vpop.permute.xlu0 %13106
  %13108 = vrot.lane.b32.xlu0 %v13050, 32
  %v13109 = vpop.permute.xlu0 %13108
  %13110 = vrot.lane.b32.xlu0 %v13051, 32
  %v13111 = vpop.permute.xlu0 %13110
  %13112 = vrot.lane.b32.xlu0 %v13052, 32
  %v13113 = vpop.permute.xlu0 %13112
  %13114 = vrot.lane.b32.xlu0 %v13053, 32
  %v13115 = vpop.permute.xlu0 %13114
  %13116 = vrot.lane.b32.xlu0 %v13054, 32
  %v13117 = vpop.permute.xlu0 %13116
  %13118 = vrot.lane.b32.xlu0 %v13055, 32
  %v13119 = vpop.permute.xlu0 %13118
  %v13122 = vsel %vm6195, %v11744, %v11873
  %v13125 = vsel %vm6195, %v11745, %v11875
  %v13128 = vsel %vm6195, %v11746, %v11877
  %v13131 = vsel %vm6195, %v11747, %v11879
  %v13134 = vsel %vm6195, %v11748, %v11881
  %v13137 = vsel %vm6195, %v11749, %v11883
  %v13140 = vsel %vm6195, %v11750, %v11885
  %v13143 = vsel %vm6195, %v11751, %v11887
  %v13146 = vsel %vm6195, %v11752, %v11889
  %v13149 = vsel %vm6195, %v11753, %v11891
  %v13152 = vsel %vm6195, %v11754, %v11893
  %v13155 = vsel %vm6195, %v11755, %v11895
  %v13158 = vsel %vm6195, %v11756, %v11897
  %v13161 = vsel %vm6195, %v11757, %v11899
  %v13164 = vsel %vm6195, %v11758, %v11901
  %v13167 = vsel %vm6195, %v11759, %v11903
  %v13170 = vsel %vm6195, %v11760, %v11905
  %v13173 = vsel %vm6195, %v11761, %v11907
  %v13176 = vsel %vm6195, %v11762, %v11909
  %v13179 = vsel %vm6195, %v11763, %v11911
  %v13182 = vsel %vm6195, %v11764, %v11913
  %v13185 = vsel %vm6195, %v11765, %v11915
  %v13188 = vsel %vm6195, %v11766, %v11917
  %v13191 = vsel %vm6195, %v11767, %v11919
  %v13194 = vsel %vm6195, %v11768, %v11921
  %v13197 = vsel %vm6195, %v11769, %v11923
  %v13200 = vsel %vm6195, %v11770, %v11925
  %v13203 = vsel %vm6195, %v11771, %v11927
  %v13206 = vsel %vm6195, %v11772, %v11929
  %v13209 = vsel %vm6195, %v11773, %v11931
  %v13212 = vsel %vm6195, %v11774, %v11933
  %v13215 = vsel %vm6195, %v11775, %v11935
  %v13217 = vsel %vm6292, %v13122, %v12033
  %v13219 = vsel %vm6292, %v13125, %v12035
  %v13221 = vsel %vm6292, %v13128, %v12037
  %v13223 = vsel %vm6292, %v13131, %v12039
  %v13225 = vsel %vm6292, %v13134, %v12041
  %v13227 = vsel %vm6292, %v13137, %v12043
  %v13229 = vsel %vm6292, %v13140, %v12045
  %v13231 = vsel %vm6292, %v13143, %v12047
  %v13233 = vsel %vm6292, %v13146, %v12049
  %v13235 = vsel %vm6292, %v13149, %v12051
  %v13237 = vsel %vm6292, %v13152, %v12053
  %v13239 = vsel %vm6292, %v13155, %v12055
  %v13241 = vsel %vm6292, %v13158, %v12057
  %v13243 = vsel %vm6292, %v13161, %v12059
  %v13245 = vsel %vm6292, %v13164, %v12061
  %v13247 = vsel %vm6292, %v13167, %v12063
  %v13249 = vsel %vm6292, %v13170, %v12065
  %v13251 = vsel %vm6292, %v13173, %v12067
  %v13253 = vsel %vm6292, %v13176, %v12069
  %v13255 = vsel %vm6292, %v13179, %v12071
  %v13257 = vsel %vm6292, %v13182, %v12073
  %v13259 = vsel %vm6292, %v13185, %v12075
  %v13261 = vsel %vm6292, %v13188, %v12077
  %v13263 = vsel %vm6292, %v13191, %v12079
  %v13265 = vsel %vm6292, %v13194, %v12081
  %v13267 = vsel %vm6292, %v13197, %v12083
  %v13269 = vsel %vm6292, %v13200, %v12085
  %v13271 = vsel %vm6292, %v13203, %v12087
  %v13273 = vsel %vm6292, %v13206, %v12089
  %v13275 = vsel %vm6292, %v13209, %v12091
  %v13277 = vsel %vm6292, %v13212, %v12093
  %v13279 = vsel %vm6292, %v13215, %v12095
  %v13281 = vsel %vm6357, %v13217, %v12225
  %v13283 = vsel %vm6357, %v13219, %v12227
  %v13285 = vsel %vm6357, %v13221, %v12229
  %v13287 = vsel %vm6357, %v13223, %v12231
  %v13289 = vsel %vm6357, %v13225, %v12233
  %v13291 = vsel %vm6357, %v13227, %v12235
  %v13293 = vsel %vm6357, %v13229, %v12237
  %v13295 = vsel %vm6357, %v13231, %v12239
  %v13297 = vsel %vm6357, %v13233, %v12241
  %v13299 = vsel %vm6357, %v13235, %v12243
  %v13301 = vsel %vm6357, %v13237, %v12245
  %v13303 = vsel %vm6357, %v13239, %v12247
  %v13305 = vsel %vm6357, %v13241, %v12249
  %v13307 = vsel %vm6357, %v13243, %v12251
  %v13309 = vsel %vm6357, %v13245, %v12253
  %v13311 = vsel %vm6357, %v13247, %v12255
  %v13313 = vsel %vm6357, %v13249, %v12257
  %v13315 = vsel %vm6357, %v13251, %v12259
  %v13317 = vsel %vm6357, %v13253, %v12261
  %v13319 = vsel %vm6357, %v13255, %v12263
  %v13321 = vsel %vm6357, %v13257, %v12265
  %v13323 = vsel %vm6357, %v13259, %v12267
  %v13325 = vsel %vm6357, %v13261, %v12269
  %v13327 = vsel %vm6357, %v13263, %v12271
  %v13329 = vsel %vm6357, %v13265, %v12273
  %v13331 = vsel %vm6357, %v13267, %v12275
  %v13333 = vsel %vm6357, %v13269, %v12277
  %v13335 = vsel %vm6357, %v13271, %v12279
  %v13337 = vsel %vm6357, %v13273, %v12281
  %v13339 = vsel %vm6357, %v13275, %v12283
  %v13341 = vsel %vm6357, %v13277, %v12285
  %v13343 = vsel %vm6357, %v13279, %v12287
  %v13345 = vsel %vm6422, %v13281, %v12385
  %v13347 = vsel %vm6422, %v13283, %v12387
  %v13349 = vsel %vm6422, %v13285, %v12389
  %v13351 = vsel %vm6422, %v13287, %v12391
  %v13353 = vsel %vm6422, %v13289, %v12393
  %v13355 = vsel %vm6422, %v13291, %v12395
  %v13357 = vsel %vm6422, %v13293, %v12397
  %v13359 = vsel %vm6422, %v13295, %v12399
  %v13361 = vsel %vm6422, %v13297, %v12401
  %v13363 = vsel %vm6422, %v13299, %v12403
  %v13365 = vsel %vm6422, %v13301, %v12405
  %v13367 = vsel %vm6422, %v13303, %v12407
  %v13369 = vsel %vm6422, %v13305, %v12409
  %v13371 = vsel %vm6422, %v13307, %v12411
  %v13373 = vsel %vm6422, %v13309, %v12413
  %v13375 = vsel %vm6422, %v13311, %v12415
  %v13377 = vsel %vm6422, %v13313, %v12417
  %v13379 = vsel %vm6422, %v13315, %v12419
  %v13381 = vsel %vm6422, %v13317, %v12421
  %v13383 = vsel %vm6422, %v13319, %v12423
  %v13385 = vsel %vm6422, %v13321, %v12425
  %v13387 = vsel %vm6422, %v13323, %v12427
  %v13389 = vsel %vm6422, %v13325, %v12429
  %v13391 = vsel %vm6422, %v13327, %v12431
  %v13393 = vsel %vm6422, %v13329, %v12433
  %v13395 = vsel %vm6422, %v13331, %v12435
  %v13397 = vsel %vm6422, %v13333, %v12437
  %v13399 = vsel %vm6422, %v13335, %v12439
  %v13401 = vsel %vm6422, %v13337, %v12441
  %v13403 = vsel %vm6422, %v13339, %v12443
  %v13405 = vsel %vm6422, %v13341, %v12445
  %v13407 = vsel %vm6422, %v13343, %v12447
  %v13409 = vsel %vm6487, %v13345, %v12545
  %v13411 = vsel %vm6487, %v13347, %v12547
  %v13413 = vsel %vm6487, %v13349, %v12549
  %v13415 = vsel %vm6487, %v13351, %v12551
  %v13417 = vsel %vm6487, %v13353, %v12553
  %v13419 = vsel %vm6487, %v13355, %v12555
  %v13421 = vsel %vm6487, %v13357, %v12557
  %v13423 = vsel %vm6487, %v13359, %v12559
  %v13425 = vsel %vm6487, %v13361, %v12561
  %v13427 = vsel %vm6487, %v13363, %v12563
  %v13429 = vsel %vm6487, %v13365, %v12565
  %v13431 = vsel %vm6487, %v13367, %v12567
  %v13433 = vsel %vm6487, %v13369, %v12569
  %v13435 = vsel %vm6487, %v13371, %v12571
  %v13437 = vsel %vm6487, %v13373, %v12573
  %v13439 = vsel %vm6487, %v13375, %v12575
  %v13441 = vsel %vm6487, %v13377, %v12577
  %v13443 = vsel %vm6487, %v13379, %v12579
  %v13445 = vsel %vm6487, %v13381, %v12581
  %v13447 = vsel %vm6487, %v13383, %v12583
  %v13449 = vsel %vm6487, %v13385, %v12585
  %v13451 = vsel %vm6487, %v13387, %v12587
  %v13453 = vsel %vm6487, %v13389, %v12589
  %v13455 = vsel %vm6487, %v13391, %v12591
  %v13457 = vsel %vm6487, %v13393, %v12593
  %v13459 = vsel %vm6487, %v13395, %v12595
  %v13461 = vsel %vm6487, %v13397, %v12597
  %v13463 = vsel %vm6487, %v13399, %v12599
  %v13465 = vsel %vm6487, %v13401, %v12601
  %v13467 = vsel %vm6487, %v13403, %v12603
  %v13469 = vsel %vm6487, %v13405, %v12605
  %v13471 = vsel %vm6487, %v13407, %v12607
  %v13473 = vsel %vm6552, %v13409, %v12737
  %v13475 = vsel %vm6552, %v13411, %v12739
  %v13477 = vsel %vm6552, %v13413, %v12741
  %v13479 = vsel %vm6552, %v13415, %v12743
  %v13481 = vsel %vm6552, %v13417, %v12745
  %v13483 = vsel %vm6552, %v13419, %v12747
  %v13485 = vsel %vm6552, %v13421, %v12749
  %v13487 = vsel %vm6552, %v13423, %v12751
  %v13489 = vsel %vm6552, %v13425, %v12753
  %v13491 = vsel %vm6552, %v13427, %v12755
  %v13493 = vsel %vm6552, %v13429, %v12757
  %v13495 = vsel %vm6552, %v13431, %v12759
  %v13497 = vsel %vm6552, %v13433, %v12761
  %v13499 = vsel %vm6552, %v13435, %v12763
  %v13501 = vsel %vm6552, %v13437, %v12765
  %v13503 = vsel %vm6552, %v13439, %v12767
  %v13505 = vsel %vm6552, %v13441, %v12769
  %v13507 = vsel %vm6552, %v13443, %v12771
  %v13509 = vsel %vm6552, %v13445, %v12773
  %v13511 = vsel %vm6552, %v13447, %v12775
  %v13513 = vsel %vm6552, %v13449, %v12777
  %v13515 = vsel %vm6552, %v13451, %v12779
  %v13517 = vsel %vm6552, %v13453, %v12781
  %v13519 = vsel %vm6552, %v13455, %v12783
  %v13521 = vsel %vm6552, %v13457, %v12785
  %v13523 = vsel %vm6552, %v13459, %v12787
  %v13525 = vsel %vm6552, %v13461, %v12789
  %v13527 = vsel %vm6552, %v13463, %v12791
  %v13529 = vsel %vm6552, %v13465, %v12793
  %v13531 = vsel %vm6552, %v13467, %v12795
  %v13533 = vsel %vm6552, %v13469, %v12797
  %v13535 = vsel %vm6552, %v13471, %v12799
  %v13537 = vsel %vm6617, %v13473, %v12897
  %v13539 = vsel %vm6617, %v13475, %v12899
  %v13541 = vsel %vm6617, %v13477, %v12901
  %v13543 = vsel %vm6617, %v13479, %v12903
  %v13545 = vsel %vm6617, %v13481, %v12905
  %v13547 = vsel %vm6617, %v13483, %v12907
  %v13549 = vsel %vm6617, %v13485, %v12909
  %v13551 = vsel %vm6617, %v13487, %v12911
  %v13553 = vsel %vm6617, %v13489, %v12913
  %v13555 = vsel %vm6617, %v13491, %v12915
  %v13557 = vsel %vm6617, %v13493, %v12917
  %v13559 = vsel %vm6617, %v13495, %v12919
  %v13561 = vsel %vm6617, %v13497, %v12921
  %v13563 = vsel %vm6617, %v13499, %v12923
  %v13565 = vsel %vm6617, %v13501, %v12925
  %v13567 = vsel %vm6617, %v13503, %v12927
  %v13569 = vsel %vm6617, %v13505, %v12929
  %v13571 = vsel %vm6617, %v13507, %v12931
  %v13573 = vsel %vm6617, %v13509, %v12933
  %v13575 = vsel %vm6617, %v13511, %v12935
  %v13577 = vsel %vm6617, %v13513, %v12937
  %v13579 = vsel %vm6617, %v13515, %v12939
  %v13581 = vsel %vm6617, %v13517, %v12941
  %v13583 = vsel %vm6617, %v13519, %v12943
  %v13585 = vsel %vm6617, %v13521, %v12945
  %v13587 = vsel %vm6617, %v13523, %v12947
  %v13589 = vsel %vm6617, %v13525, %v12949
  %v13591 = vsel %vm6617, %v13527, %v12951
  %v13593 = vsel %vm6617, %v13529, %v12953
  %v13595 = vsel %vm6617, %v13531, %v12955
  %v13597 = vsel %vm6617, %v13533, %v12957
  %v13599 = vsel %vm6617, %v13535, %v12959
  %v13601 = vsel %vm6682, %v13537, %v13057
  %v13603 = vsel %vm6682, %v13539, %v13059
  %v13605 = vsel %vm6682, %v13541, %v13061
  %v13607 = vsel %vm6682, %v13543, %v13063
  %v13609 = vsel %vm6682, %v13545, %v13065
  %v13611 = vsel %vm6682, %v13547, %v13067
  %v13613 = vsel %vm6682, %v13549, %v13069
  %v13615 = vsel %vm6682, %v13551, %v13071
  %v13617 = vsel %vm6682, %v13553, %v13073
  %v13619 = vsel %vm6682, %v13555, %v13075
  %v13621 = vsel %vm6682, %v13557, %v13077
  %v13623 = vsel %vm6682, %v13559, %v13079
  %v13625 = vsel %vm6682, %v13561, %v13081
  %v13627 = vsel %vm6682, %v13563, %v13083
  %v13629 = vsel %vm6682, %v13565, %v13085
  %v13631 = vsel %vm6682, %v13567, %v13087
  %v13633 = vsel %vm6682, %v13569, %v13089
  %v13635 = vsel %vm6682, %v13571, %v13091
  %v13637 = vsel %vm6682, %v13573, %v13093
  %v13639 = vsel %vm6682, %v13575, %v13095
  %v13641 = vsel %vm6682, %v13577, %v13097
  %v13643 = vsel %vm6682, %v13579, %v13099
  %v13645 = vsel %vm6682, %v13581, %v13101
  %v13647 = vsel %vm6682, %v13583, %v13103
  %v13649 = vsel %vm6682, %v13585, %v13105
  %v13651 = vsel %vm6682, %v13587, %v13107
  %v13653 = vsel %vm6682, %v13589, %v13109
  %v13655 = vsel %vm6682, %v13591, %v13111
  %v13657 = vsel %vm6682, %v13593, %v13113
  %v13659 = vsel %vm6682, %v13595, %v13115
  %v13661 = vsel %vm6682, %v13597, %v13117
  %v13663 = vsel %vm6682, %v13599, %v13119
  %v13664 = vld [vmem:[%s3] sm:$0xf]
  %v13665 = vld [vmem:[%s3 + $0x4] sm:$0xf]
  %v13666 = vld [vmem:[%s3 + $0x8] sm:$0xf]
  %v13667 = vld [vmem:[%s3 + $0xc] sm:$0xf]
  %v13668 = vld [vmem:[%s3 + $0x10] sm:$0x3]
  %v13669 = vld [vmem:[%s4] sm:$0x1]
  %v13671 = vperm.slane %v13669, 0
  %v13678 = vunpack.c.l.b16 %v13664
  %v13679 = vunpack.c.l.b16 %v13665
  %v13680 = vunpack.c.l.b16 %v13666
  %v13681 = vunpack.c.l.b16 %v13667
  %v13682 = vunpack.c.l.b16 %v13668
  %v13683 = vpack.c.b16 %v13679, %v13678
  %v13684 = vpack.c.b16 %v13681, %v13680
  %v13685 = vpack.c.b16 %v13682, %v13682
  %v13688 = vsel %vm6771, %v13601, 0
  %v13690 = vsel %vm6771, %v13603, 0
  %v13692 = vsel %vm6771, %v13605, 0
  %v13694 = vsel %vm6771, %v13607, 0
  %v13696 = vsel %vm6771, %v13609, 0
  %v13698 = vsel %vm6771, %v13611, 0
  %v13700 = vsel %vm6771, %v13613, 0
  %v13702 = vsel %vm6771, %v13615, 0
  %v13704 = vsel %vm6771, %v13617, 0
  %v13706 = vsel %vm6771, %v13619, 0
  %v13708 = vsel %vm6771, %v13621, 0
  %v13710 = vsel %vm6771, %v13623, 0
  %v13712 = vsel %vm6771, %v13625, 0
  %v13714 = vsel %vm6771, %v13627, 0
  %v13716 = vsel %vm6771, %v13629, 0
  %v13718 = vsel %vm6771, %v13631, 0
  %v13720 = vsel %vm6771, %v13633, 0
  %v13722 = vsel %vm6771, %v13635, 0
  %v13724 = vsel %vm6771, %v13637, 0
  %v13726 = vsel %vm6771, %v13639, 0
  %v13728 = vsel %vm6771, %v13641, 0
  %v13730 = vsel %vm6771, %v13643, 0
  %v13732 = vsel %vm6771, %v13645, 0
  %v13734 = vsel %vm6771, %v13647, 0
  %v13736 = vsel %vm6771, %v13649, 0
  %v13738 = vsel %vm6771, %v13651, 0
  %v13740 = vsel %vm6771, %v13653, 0
  %v13742 = vsel %vm6771, %v13655, 0
  %v13744 = vsel %vm6771, %v13657, 0
  %v13746 = vsel %vm6771, %v13659, 0
  %v13748 = vsel %vm6771, %v13661, 0
  %v13750 = vsel %vm6771, %v13663, 0
  %v13753 = vsel %vm6836, %v13685, 0
  %13755 = vmatpush.bf16.msra.mxu0 0
  %13756 = vmatpush.bf16.msra.mxu0 0
  %13757 = vmatpush.bf16.msra.mxu0 0
  %13758 = vmatpush.bf16.msra.mxu0 0
  %13759 = vmatpush.bf16.msra.mxu0 0
  %13760 = vmatpush.bf16.msra.mxu0 %v13753
  %13761 = vmatpush.bf16.msra.mxu0 %v13684
  %13762 = vmatpush.bf16.msra.mxu0 %v13683
  %13763 = vmatmul.bf16.gmra.mxu0 %v13688
  %v13764 = vpop.f32.mrf.mxu0
  %v13765 = vadd.f32 %v13671, %v13764
  %v13766 = vpop.f32.mrf.mxu0
  %v13767 = vadd.f32 %v13671, %v13766
  %13768 = vmatmul.bf16.gmra.mxu0 %v13690
  %v13769 = vpop.f32.mrf.mxu0
  %v13770 = vadd.f32 %v13671, %v13769
  %v13771 = vpop.f32.mrf.mxu0
  %v13772 = vadd.f32 %v13671, %v13771
  %13773 = vmatmul.bf16.gmra.mxu0 %v13692
  %v13774 = vpop.f32.mrf.mxu0
  %v13775 = vadd.f32 %v13671, %v13774
  %v13776 = vpop.f32.mrf.mxu0
  %v13777 = vadd.f32 %v13671, %v13776
  %13778 = vmatmul.bf16.gmra.mxu0 %v13694
  %v13779 = vpop.f32.mrf.mxu0
  %v13780 = vadd.f32 %v13671, %v13779
  %v13781 = vpop.f32.mrf.mxu0
  %v13782 = vadd.f32 %v13671, %v13781
  %13783 = vmatmul.bf16.gmra.mxu0 %v13696
  %v13784 = vpop.f32.mrf.mxu0
  %v13785 = vadd.f32 %v13671, %v13784
  %v13786 = vpop.f32.mrf.mxu0
  %v13787 = vadd.f32 %v13671, %v13786
  %13788 = vmatmul.bf16.gmra.mxu0 %v13698
  %v13789 = vpop.f32.mrf.mxu0
  %v13790 = vadd.f32 %v13671, %v13789
  %v13791 = vpop.f32.mrf.mxu0
  %v13792 = vadd.f32 %v13671, %v13791
  %13793 = vmatmul.bf16.gmra.mxu0 %v13700
  %v13794 = vpop.f32.mrf.mxu0
  %v13795 = vadd.f32 %v13671, %v13794
  %v13796 = vpop.f32.mrf.mxu0
  %v13797 = vadd.f32 %v13671, %v13796
  %13798 = vmatmul.bf16.gmra.mxu0 %v13702
  %v13799 = vpop.f32.mrf.mxu0
  %v13800 = vadd.f32 %v13671, %v13799
  %v13801 = vpop.f32.mrf.mxu0
  %v13802 = vadd.f32 %v13671, %v13801
  %13803 = vmatmul.bf16.gmra.mxu0 %v13704
  %v13804 = vpop.f32.mrf.mxu0
  %v13805 = vadd.f32 %v13671, %v13804
  %v13806 = vpop.f32.mrf.mxu0
  %v13807 = vadd.f32 %v13671, %v13806
  %13808 = vmatmul.bf16.gmra.mxu0 %v13706
  %v13809 = vpop.f32.mrf.mxu0
  %v13810 = vadd.f32 %v13671, %v13809
  %v13811 = vpop.f32.mrf.mxu0
  %v13812 = vadd.f32 %v13671, %v13811
  %13813 = vmatmul.bf16.gmra.mxu0 %v13708
  %v13814 = vpop.f32.mrf.mxu0
  %v13815 = vadd.f32 %v13671, %v13814
  %v13816 = vpop.f32.mrf.mxu0
  %v13817 = vadd.f32 %v13671, %v13816
  %13818 = vmatmul.bf16.gmra.mxu0 %v13710
  %v13819 = vpop.f32.mrf.mxu0
  %v13820 = vadd.f32 %v13671, %v13819
  %v13821 = vpop.f32.mrf.mxu0
  %v13822 = vadd.f32 %v13671, %v13821
  %13823 = vmatmul.bf16.gmra.mxu0 %v13712
  %v13824 = vpop.f32.mrf.mxu0
  %v13825 = vadd.f32 %v13671, %v13824
  %v13826 = vpop.f32.mrf.mxu0
  %v13827 = vadd.f32 %v13671, %v13826
  %13828 = vmatmul.bf16.gmra.mxu0 %v13714
  %v13829 = vpop.f32.mrf.mxu0
  %v13830 = vadd.f32 %v13671, %v13829
  %v13831 = vpop.f32.mrf.mxu0
  %v13832 = vadd.f32 %v13671, %v13831
  %13833 = vmatmul.bf16.gmra.mxu0 %v13716
  %v13834 = vpop.f32.mrf.mxu0
  %v13835 = vadd.f32 %v13671, %v13834
  %v13836 = vpop.f32.mrf.mxu0
  %v13837 = vadd.f32 %v13671, %v13836
  %13838 = vmatmul.bf16.gmra.mxu0 %v13718
  %v13839 = vpop.f32.mrf.mxu0
  %v13840 = vadd.f32 %v13671, %v13839
  %v13841 = vpop.f32.mrf.mxu0
  %v13842 = vadd.f32 %v13671, %v13841
  %13843 = vmatmul.bf16.gmra.mxu0 %v13720
  %v13844 = vpop.f32.mrf.mxu0
  %v13845 = vadd.f32 %v13671, %v13844
  %v13846 = vpop.f32.mrf.mxu0
  %v13847 = vadd.f32 %v13671, %v13846
  %13848 = vmatmul.bf16.gmra.mxu0 %v13722
  %v13849 = vpop.f32.mrf.mxu0
  %v13850 = vadd.f32 %v13671, %v13849
  %v13851 = vpop.f32.mrf.mxu0
  %v13852 = vadd.f32 %v13671, %v13851
  %13853 = vmatmul.bf16.gmra.mxu0 %v13724
  %v13854 = vpop.f32.mrf.mxu0
  %v13855 = vadd.f32 %v13671, %v13854
  %v13856 = vpop.f32.mrf.mxu0
  %v13857 = vadd.f32 %v13671, %v13856
  %13858 = vmatmul.bf16.gmra.mxu0 %v13726
  %v13859 = vpop.f32.mrf.mxu0
  %v13860 = vadd.f32 %v13671, %v13859
  %v13861 = vpop.f32.mrf.mxu0
  %v13862 = vadd.f32 %v13671, %v13861
  %13863 = vmatmul.bf16.gmra.mxu0 %v13728
  %v13864 = vpop.f32.mrf.mxu0
  %v13865 = vadd.f32 %v13671, %v13864
  %v13866 = vpop.f32.mrf.mxu0
  %v13867 = vadd.f32 %v13671, %v13866
  %13868 = vmatmul.bf16.gmra.mxu0 %v13730
  %v13869 = vpop.f32.mrf.mxu0
  %v13870 = vadd.f32 %v13671, %v13869
  %v13871 = vpop.f32.mrf.mxu0
  %v13872 = vadd.f32 %v13671, %v13871
  %13873 = vmatmul.bf16.gmra.mxu0 %v13732
  %v13874 = vpop.f32.mrf.mxu0
  %v13875 = vadd.f32 %v13671, %v13874
  %v13876 = vpop.f32.mrf.mxu0
  %v13877 = vadd.f32 %v13671, %v13876
  %13878 = vmatmul.bf16.gmra.mxu0 %v13734
  %v13879 = vpop.f32.mrf.mxu0
  %v13880 = vadd.f32 %v13671, %v13879
  %v13881 = vpop.f32.mrf.mxu0
  %v13882 = vadd.f32 %v13671, %v13881
  %13883 = vmatmul.bf16.gmra.mxu0 %v13736
  %v13884 = vpop.f32.mrf.mxu0
  %v13885 = vadd.f32 %v13671, %v13884
  %v13886 = vpop.f32.mrf.mxu0
  %v13887 = vadd.f32 %v13671, %v13886
  %13888 = vmatmul.bf16.gmra.mxu0 %v13738
  %v13889 = vpop.f32.mrf.mxu0
  %v13890 = vadd.f32 %v13671, %v13889
  %v13891 = vpop.f32.mrf.mxu0
  %v13892 = vadd.f32 %v13671, %v13891
  %13893 = vmatmul.bf16.gmra.mxu0 %v13740
  %v13894 = vpop.f32.mrf.mxu0
  %v13895 = vadd.f32 %v13671, %v13894
  %v13896 = vpop.f32.mrf.mxu0
  %v13897 = vadd.f32 %v13671, %v13896
  %13898 = vmatmul.bf16.gmra.mxu0 %v13742
  %v13899 = vpop.f32.mrf.mxu0
  %v13900 = vadd.f32 %v13671, %v13899
  %v13901 = vpop.f32.mrf.mxu0
  %v13902 = vadd.f32 %v13671, %v13901
  %13903 = vmatmul.bf16.gmra.mxu0 %v13744
  %v13904 = vpop.f32.mrf.mxu0
  %v13905 = vadd.f32 %v13671, %v13904
  %v13906 = vpop.f32.mrf.mxu0
  %v13907 = vadd.f32 %v13671, %v13906
  %13908 = vmatmul.bf16.gmra.mxu0 %v13746
  %v13909 = vpop.f32.mrf.mxu0
  %v13910 = vadd.f32 %v13671, %v13909
  %v13911 = vpop.f32.mrf.mxu0
  %v13912 = vadd.f32 %v13671, %v13911
  %13913 = vmatmul.bf16.gmra.mxu0 %v13748
  %v13914 = vpop.f32.mrf.mxu0
  %v13915 = vadd.f32 %v13671, %v13914
  %v13916 = vpop.f32.mrf.mxu0
  %v13917 = vadd.f32 %v13671, %v13916
  %13918 = vmatmul.bf16.gmra.mxu0 %v13750
  %v13919 = vpop.f32.mrf.mxu0
  %v13920 = vadd.f32 %v13671, %v13919
  %v13921 = vpop.f32.mrf.mxu0
  %v13922 = vadd.f32 %v13671, %v13921
  %13923 = vdwg.mxu0
  %v13924 = vmax.f32 %v13765, 0.0
  %v13925 = vmax.f32 %v13767, 0.0
  %v13926 = vmax.f32 %v13770, 0.0
  %v13927 = vmax.f32 %v13772, 0.0
  %v13928 = vmax.f32 %v13775, 0.0
  %v13929 = vmax.f32 %v13777, 0.0
  %v13930 = vmax.f32 %v13780, 0.0
  %v13931 = vmax.f32 %v13782, 0.0
  %v13932 = vmax.f32 %v13785, 0.0
  %v13933 = vmax.f32 %v13787, 0.0
  %v13934 = vmax.f32 %v13790, 0.0
  %v13935 = vmax.f32 %v13792, 0.0
  %v13936 = vmax.f32 %v13795, 0.0
  %v13937 = vmax.f32 %v13797, 0.0
  %v13938 = vmax.f32 %v13800, 0.0
  %v13939 = vmax.f32 %v13802, 0.0
  %v13940 = vmax.f32 %v13805, 0.0
  %v13941 = vmax.f32 %v13807, 0.0
  %v13942 = vmax.f32 %v13810, 0.0
  %v13943 = vmax.f32 %v13812, 0.0
  %v13944 = vmax.f32 %v13815, 0.0
  %v13945 = vmax.f32 %v13817, 0.0
  %v13946 = vmax.f32 %v13820, 0.0
  %v13947 = vmax.f32 %v13822, 0.0
  %v13948 = vmax.f32 %v13825, 0.0
  %v13949 = vmax.f32 %v13827, 0.0
  %v13950 = vmax.f32 %v13830, 0.0
  %v13951 = vmax.f32 %v13832, 0.0
  %v13952 = vmax.f32 %v13835, 0.0
  %v13953 = vmax.f32 %v13837, 0.0
  %v13954 = vmax.f32 %v13840, 0.0
  %v13955 = vmax.f32 %v13842, 0.0
  %v13956 = vmax.f32 %v13845, 0.0
  %v13957 = vmax.f32 %v13847, 0.0
  %v13958 = vmax.f32 %v13850, 0.0
  %v13959 = vmax.f32 %v13852, 0.0
  %v13960 = vmax.f32 %v13855, 0.0
  %v13961 = vmax.f32 %v13857, 0.0
  %v13962 = vmax.f32 %v13860, 0.0
  %v13963 = vmax.f32 %v13862, 0.0
  %v13964 = vmax.f32 %v13865, 0.0
  %v13965 = vmax.f32 %v13867, 0.0
  %v13966 = vmax.f32 %v13870, 0.0
  %v13967 = vmax.f32 %v13872, 0.0
  %v13968 = vmax.f32 %v13875, 0.0
  %v13969 = vmax.f32 %v13877, 0.0
  %v13970 = vmax.f32 %v13880, 0.0
  %v13971 = vmax.f32 %v13882, 0.0
  %v13972 = vmax.f32 %v13885, 0.0
  %v13973 = vmax.f32 %v13887, 0.0
  %v13974 = vmax.f32 %v13890, 0.0
  %v13975 = vmax.f32 %v13892, 0.0
  %v13976 = vmax.f32 %v13895, 0.0
  %v13977 = vmax.f32 %v13897, 0.0
  %v13978 = vmax.f32 %v13900, 0.0
  %v13979 = vmax.f32 %v13902, 0.0
  %v13980 = vmax.f32 %v13905, 0.0
  %v13981 = vmax.f32 %v13907, 0.0
  %v13982 = vmax.f32 %v13910, 0.0
  %v13983 = vmax.f32 %v13912, 0.0
  %v13984 = vmax.f32 %v13915, 0.0
  %v13985 = vmax.f32 %v13917, 0.0
  %v13986 = vmax.f32 %v13920, 0.0
  %v13987 = vmax.f32 %v13922, 0.0
  %v13988 = vunpack.c.l.bf16 %v21
  %v13989 = vunpack.c.l.bf16 %v22
  %v13990 = vunpack.c.l.bf16 %v23
  %v13991 = vunpack.c.l.bf16 %v24
  %v13992 = vunpack.c.l.bf16 %v25
  %v13993 = vunpack.c.l.bf16 %v26
  %v13994 = vunpack.c.l.bf16 %v27
  %v13995 = vunpack.c.l.bf16 %v28
  %v13996 = vunpack.c.l.bf16 %v29
  %v13997 = vunpack.c.l.bf16 %v30
  %v13998 = vunpack.c.l.bf16 %v31
  %v13999 = vunpack.c.l.bf16 %v32
  %v14000 = vunpack.c.l.bf16 %v33
  %v14001 = vunpack.c.l.bf16 %v34
  %v14002 = vunpack.c.l.bf16 %v35
  %v14003 = vunpack.c.l.bf16 %v36
  %v14004 = vunpack.c.l.bf16 %v37
  %v14005 = vunpack.c.l.bf16 %v38
  %v14006 = vunpack.c.l.bf16 %v39
  %v14007 = vunpack.c.l.bf16 %v40
  %v14008 = vunpack.c.l.bf16 %v41
  %v14009 = vunpack.c.l.bf16 %v42
  %v14010 = vunpack.c.l.bf16 %v43
  %v14011 = vunpack.c.l.bf16 %v44
  %v14012 = vunpack.c.l.bf16 %v45
  %v14013 = vunpack.c.l.bf16 %v46
  %v14014 = vunpack.c.l.bf16 %v47
  %v14015 = vunpack.c.l.bf16 %v48
  %v14016 = vunpack.c.l.bf16 %v49
  %v14017 = vunpack.c.l.bf16 %v50
  %v14018 = vunpack.c.l.bf16 %v51
  %v14019 = vunpack.c.l.bf16 %v52
  %v14020 = vunpack.c.l.bf16 %v53
  %v14021 = vunpack.c.l.bf16 %v54
  %v14022 = vunpack.c.l.bf16 %v55
  %v14023 = vunpack.c.l.bf16 %v56
  %v14024 = vunpack.c.l.bf16 %v57
  %v14025 = vunpack.c.l.bf16 %v58
  %v14026 = vunpack.c.l.bf16 %v59
  %v14027 = vunpack.c.l.bf16 %v60
  %v14028 = vunpack.c.l.bf16 %v61
  %v14029 = vunpack.c.l.bf16 %v62
  %v14030 = vunpack.c.l.bf16 %v63
  %v14031 = vunpack.c.l.bf16 %v64
  %v14032 = vunpack.c.l.bf16 %v65
  %v14033 = vunpack.c.l.bf16 %v66
  %v14034 = vunpack.c.l.bf16 %v67
  %v14035 = vunpack.c.l.bf16 %v68
  %v14036 = vunpack.c.l.bf16 %v69
  %v14037 = vunpack.c.l.bf16 %v70
  %v14038 = vunpack.c.l.bf16 %v71
  %v14039 = vunpack.c.l.bf16 %v72
  %v14040 = vunpack.c.l.bf16 %v73
  %v14041 = vunpack.c.l.bf16 %v74
  %v14042 = vunpack.c.l.bf16 %v75
  %v14043 = vunpack.c.l.bf16 %v76
  %v14044 = vunpack.c.l.bf16 %v77
  %v14045 = vunpack.c.l.bf16 %v78
  %v14046 = vunpack.c.l.bf16 %v79
  %v14047 = vunpack.c.l.bf16 %v80
  %v14048 = vunpack.c.l.bf16 %v81
  %v14049 = vunpack.c.l.bf16 %v82
  %v14050 = vunpack.c.l.bf16 %v83
  %v14051 = vunpack.c.l.bf16 %v84
  %v14052 = vadd.f32 %v13924, %v13988
  %v14053 = vadd.f32 %v13925, %v13989
  %v14054 = vadd.f32 %v13926, %v13990
  %v14055 = vadd.f32 %v13927, %v13991
  %v14056 = vadd.f32 %v13928, %v13992
  %v14057 = vadd.f32 %v13929, %v13993
  %v14058 = vadd.f32 %v13930, %v13994
  %v14059 = vadd.f32 %v13931, %v13995
  %v14060 = vadd.f32 %v13932, %v13996
  %v14061 = vadd.f32 %v13933, %v13997
  %v14062 = vadd.f32 %v13934, %v13998
  %v14063 = vadd.f32 %v13935, %v13999
  %v14064 = vadd.f32 %v13936, %v14000
  %v14065 = vadd.f32 %v13937, %v14001
  %v14066 = vadd.f32 %v13938, %v14002
  %v14067 = vadd.f32 %v13939, %v14003
  %v14068 = vadd.f32 %v13940, %v14004
  %v14069 = vadd.f32 %v13941, %v14005
  %v14070 = vadd.f32 %v13942, %v14006
  %v14071 = vadd.f32 %v13943, %v14007
  %v14072 = vadd.f32 %v13944, %v14008
  %v14073 = vadd.f32 %v13945, %v14009
  %v14074 = vadd.f32 %v13946, %v14010
  %v14075 = vadd.f32 %v13947, %v14011
  %v14076 = vadd.f32 %v13948, %v14012
  %v14077 = vadd.f32 %v13949, %v14013
  %v14078 = vadd.f32 %v13950, %v14014
  %v14079 = vadd.f32 %v13951, %v14015
  %v14080 = vadd.f32 %v13952, %v14016
  %v14081 = vadd.f32 %v13953, %v14017
  %v14082 = vadd.f32 %v13954, %v14018
  %v14083 = vadd.f32 %v13955, %v14019
  %v14084 = vadd.f32 %v13956, %v14020
  %v14085 = vadd.f32 %v13957, %v14021
  %v14086 = vadd.f32 %v13958, %v14022
  %v14087 = vadd.f32 %v13959, %v14023
  %v14088 = vadd.f32 %v13960, %v14024
  %v14089 = vadd.f32 %v13961, %v14025
  %v14090 = vadd.f32 %v13962, %v14026
  %v14091 = vadd.f32 %v13963, %v14027
  %v14092 = vadd.f32 %v13964, %v14028
  %v14093 = vadd.f32 %v13965, %v14029
  %v14094 = vadd.f32 %v13966, %v14030
  %v14095 = vadd.f32 %v13967, %v14031
  %v14096 = vadd.f32 %v13968, %v14032
  %v14097 = vadd.f32 %v13969, %v14033
  %v14098 = vadd.f32 %v13970, %v14034
  %v14099 = vadd.f32 %v13971, %v14035
  %v14100 = vadd.f32 %v13972, %v14036
  %v14101 = vadd.f32 %v13973, %v14037
  %v14102 = vadd.f32 %v13974, %v14038
  %v14103 = vadd.f32 %v13975, %v14039
  %v14104 = vadd.f32 %v13976, %v14040
  %v14105 = vadd.f32 %v13977, %v14041
  %v14106 = vadd.f32 %v13978, %v14042
  %v14107 = vadd.f32 %v13979, %v14043
  %v14108 = vadd.f32 %v13980, %v14044
  %v14109 = vadd.f32 %v13981, %v14045
  %v14110 = vadd.f32 %v13982, %v14046
  %v14111 = vadd.f32 %v13983, %v14047
  %v14112 = vadd.f32 %v13984, %v14048
  %v14113 = vadd.f32 %v13985, %v14049
  %v14114 = vadd.f32 %v13986, %v14050
  %v14115 = vadd.f32 %v13987, %v14051
  %v14116 = vmax.f32 %v14052, 0.0
  %v14117 = vmax.f32 %v14053, 0.0
  %v14118 = vmax.f32 %v14054, 0.0
  %v14119 = vmax.f32 %v14055, 0.0
  %v14120 = vmax.f32 %v14056, 0.0
  %v14121 = vmax.f32 %v14057, 0.0
  %v14122 = vmax.f32 %v14058, 0.0
  %v14123 = vmax.f32 %v14059, 0.0
  %v14124 = vmax.f32 %v14060, 0.0
  %v14125 = vmax.f32 %v14061, 0.0
  %v14126 = vmax.f32 %v14062, 0.0
  %v14127 = vmax.f32 %v14063, 0.0
  %v14128 = vmax.f32 %v14064, 0.0
  %v14129 = vmax.f32 %v14065, 0.0
  %v14130 = vmax.f32 %v14066, 0.0
  %v14131 = vmax.f32 %v14067, 0.0
  %v14132 = vmax.f32 %v14068, 0.0
  %v14133 = vmax.f32 %v14069, 0.0
  %v14134 = vmax.f32 %v14070, 0.0
  %v14135 = vmax.f32 %v14071, 0.0
  %v14136 = vmax.f32 %v14072, 0.0
  %v14137 = vmax.f32 %v14073, 0.0
  %v14138 = vmax.f32 %v14074, 0.0
  %v14139 = vmax.f32 %v14075, 0.0
  %v14140 = vmax.f32 %v14076, 0.0
  %v14141 = vmax.f32 %v14077, 0.0
  %v14142 = vmax.f32 %v14078, 0.0
  %v14143 = vmax.f32 %v14079, 0.0
  %v14144 = vmax.f32 %v14080, 0.0
  %v14145 = vmax.f32 %v14081, 0.0
  %v14146 = vmax.f32 %v14082, 0.0
  %v14147 = vmax.f32 %v14083, 0.0
  %v14148 = vmax.f32 %v14084, 0.0
  %v14149 = vmax.f32 %v14085, 0.0
  %v14150 = vmax.f32 %v14086, 0.0
  %v14151 = vmax.f32 %v14087, 0.0
  %v14152 = vmax.f32 %v14088, 0.0
  %v14153 = vmax.f32 %v14089, 0.0
  %v14154 = vmax.f32 %v14090, 0.0
  %v14155 = vmax.f32 %v14091, 0.0
  %v14156 = vmax.f32 %v14092, 0.0
  %v14157 = vmax.f32 %v14093, 0.0
  %v14158 = vmax.f32 %v14094, 0.0
  %v14159 = vmax.f32 %v14095, 0.0
  %v14160 = vmax.f32 %v14096, 0.0
  %v14161 = vmax.f32 %v14097, 0.0
  %v14162 = vmax.f32 %v14098, 0.0
  %v14163 = vmax.f32 %v14099, 0.0
  %v14164 = vmax.f32 %v14100, 0.0
  %v14165 = vmax.f32 %v14101, 0.0
  %v14166 = vmax.f32 %v14102, 0.0
  %v14167 = vmax.f32 %v14103, 0.0
  %v14168 = vmax.f32 %v14104, 0.0
  %v14169 = vmax.f32 %v14105, 0.0
  %v14170 = vmax.f32 %v14106, 0.0
  %v14171 = vmax.f32 %v14107, 0.0
  %v14172 = vmax.f32 %v14108, 0.0
  %v14173 = vmax.f32 %v14109, 0.0
  %v14174 = vmax.f32 %v14110, 0.0
  %v14175 = vmax.f32 %v14111, 0.0
  %v14176 = vmax.f32 %v14112, 0.0
  %v14177 = vmax.f32 %v14113, 0.0
  %v14178 = vmax.f32 %v14114, 0.0
  %v14179 = vmax.f32 %v14115, 0.0
  %14180 = vxpose.xlu0.b32.start [1/16] %v14116, 128
  %14181 = vxpose.xlu0.b32.cont [2/16] %v14117, 128
  %14182 = vxpose.xlu0.b32.cont [3/16] %v14118, 128
  %14183 = vxpose.xlu0.b32.cont [4/16] %v14119, 128
  %14184 = vxpose.xlu0.b32.cont [5/16] %v14120, 128
  %14185 = vxpose.xlu0.b32.cont [6/16] %v14121, 128
  %14186 = vxpose.xlu0.b32.cont [7/16] %v14122, 128
  %14187 = vxpose.xlu0.b32.cont [8/16] %v14123, 128
  %14188 = vxpose.xlu0.b32.cont [9/16] %v14124, 128
  %14189 = vxpose.xlu0.b32.cont [10/16] %v14125, 128
  %14190 = vxpose.xlu0.b32.cont [11/16] %v14126, 128
  %14191 = vxpose.xlu0.b32.cont [12/16] %v14127, 128
  %14192 = vxpose.xlu0.b32.cont [13/16] %v14128, 128
  %14193 = vxpose.xlu0.b32.cont [14/16] %v14129, 128
  %14194 = vxpose.xlu0.b32.cont [15/16] %v14130, 128
  %14195 = vxpose.xlu0.b32.end [16/16] %v14131, 128
  %v14196 = vpop.trf.xlu0
  %v14197 = vpop.trf.xlu0
  %v14198 = vpop.trf.xlu0
  %v14199 = vpop.trf.xlu0
  %v14200 = vpop.trf.xlu0
  %v14201 = vpop.trf.xlu0
  %v14202 = vpop.trf.xlu0
  %v14203 = vpop.trf.xlu0
  %v14204 = vpop.trf.xlu0
  %v14205 = vpop.trf.xlu0
  %v14206 = vpop.trf.xlu0
  %v14207 = vpop.trf.xlu0
  %v14208 = vpop.trf.xlu0
  %v14209 = vpop.trf.xlu0
  %v14210 = vpop.trf.xlu0
  %v14211 = vpop.trf.xlu0
  %14212 = vxpose.xlu0.b32.start [1/16] %v14132, 128
  %14213 = vxpose.xlu0.b32.cont [2/16] %v14133, 128
  %14214 = vxpose.xlu0.b32.cont [3/16] %v14134, 128
  %14215 = vxpose.xlu0.b32.cont [4/16] %v14135, 128
  %14216 = vxpose.xlu0.b32.cont [5/16] %v14136, 128
  %14217 = vxpose.xlu0.b32.cont [6/16] %v14137, 128
  %14218 = vxpose.xlu0.b32.cont [7/16] %v14138, 128
  %14219 = vxpose.xlu0.b32.cont [8/16] %v14139, 128
  %14220 = vxpose.xlu0.b32.cont [9/16] %v14140, 128
  %14221 = vxpose.xlu0.b32.cont [10/16] %v14141, 128
  %14222 = vxpose.xlu0.b32.cont [11/16] %v14142, 128
  %14223 = vxpose.xlu0.b32.cont [12/16] %v14143, 128
  %14224 = vxpose.xlu0.b32.cont [13/16] %v14144, 128
  %14225 = vxpose.xlu0.b32.cont [14/16] %v14145, 128
  %14226 = vxpose.xlu0.b32.cont [15/16] %v14146, 128
  %14227 = vxpose.xlu0.b32.end [16/16] %v14147, 128
  %v14228 = vpop.trf.xlu0
  %v14229 = vpop.trf.xlu0
  %v14230 = vpop.trf.xlu0
  %v14231 = vpop.trf.xlu0
  %v14232 = vpop.trf.xlu0
  %v14233 = vpop.trf.xlu0
  %v14234 = vpop.trf.xlu0
  %v14235 = vpop.trf.xlu0
  %v14236 = vpop.trf.xlu0
  %v14237 = vpop.trf.xlu0
  %v14238 = vpop.trf.xlu0
  %v14239 = vpop.trf.xlu0
  %v14240 = vpop.trf.xlu0
  %v14241 = vpop.trf.xlu0
  %v14242 = vpop.trf.xlu0
  %v14243 = vpop.trf.xlu0
  %14244 = vxpose.xlu0.b32.start [1/16] %v14148, 128
  %14245 = vxpose.xlu0.b32.cont [2/16] %v14149, 128
  %14246 = vxpose.xlu0.b32.cont [3/16] %v14150, 128
  %14247 = vxpose.xlu0.b32.cont [4/16] %v14151, 128
  %14248 = vxpose.xlu0.b32.cont [5/16] %v14152, 128
  %14249 = vxpose.xlu0.b32.cont [6/16] %v14153, 128
  %14250 = vxpose.xlu0.b32.cont [7/16] %v14154, 128
  %14251 = vxpose.xlu0.b32.cont [8/16] %v14155, 128
  %14252 = vxpose.xlu0.b32.cont [9/16] %v14156, 128
  %14253 = vxpose.xlu0.b32.cont [10/16] %v14157, 128
  %14254 = vxpose.xlu0.b32.cont [11/16] %v14158, 128
  %14255 = vxpose.xlu0.b32.cont [12/16] %v14159, 128
  %14256 = vxpose.xlu0.b32.cont [13/16] %v14160, 128
  %14257 = vxpose.xlu0.b32.cont [14/16] %v14161, 128
  %14258 = vxpose.xlu0.b32.cont [15/16] %v14162, 128
  %14259 = vxpose.xlu0.b32.end [16/16] %v14163, 128
  %v14260 = vpop.trf.xlu0
  %v14261 = vpop.trf.xlu0
  %v14262 = vpop.trf.xlu0
  %v14263 = vpop.trf.xlu0
  %v14264 = vpop.trf.xlu0
  %v14265 = vpop.trf.xlu0
  %v14266 = vpop.trf.xlu0
  %v14267 = vpop.trf.xlu0
  %v14268 = vpop.trf.xlu0
  %v14269 = vpop.trf.xlu0
  %v14270 = vpop.trf.xlu0
  %v14271 = vpop.trf.xlu0
  %v14272 = vpop.trf.xlu0
  %v14273 = vpop.trf.xlu0
  %v14274 = vpop.trf.xlu0
  %v14275 = vpop.trf.xlu0
  %14276 = vxpose.xlu0.b32.start [1/16] %v14164, 128
  %14277 = vxpose.xlu0.b32.cont [2/16] %v14165, 128
  %14278 = vxpose.xlu0.b32.cont [3/16] %v14166, 128
  %14279 = vxpose.xlu0.b32.cont [4/16] %v14167, 128
  %14280 = vxpose.xlu0.b32.cont [5/16] %v14168, 128
  %14281 = vxpose.xlu0.b32.cont [6/16] %v14169, 128
  %14282 = vxpose.xlu0.b32.cont [7/16] %v14170, 128
  %14283 = vxpose.xlu0.b32.cont [8/16] %v14171, 128
  %14284 = vxpose.xlu0.b32.cont [9/16] %v14172, 128
  %14285 = vxpose.xlu0.b32.cont [10/16] %v14173, 128
  %14286 = vxpose.xlu0.b32.cont [11/16] %v14174, 128
  %14287 = vxpose.xlu0.b32.cont [12/16] %v14175, 128
  %14288 = vxpose.xlu0.b32.cont [13/16] %v14176, 128
  %14289 = vxpose.xlu0.b32.cont [14/16] %v14177, 128
  %14290 = vxpose.xlu0.b32.cont [15/16] %v14178, 128
  %14291 = vxpose.xlu0.b32.end [16/16] %v14179, 128
  %v14292 = vpop.trf.xlu0
  %v14293 = vpop.trf.xlu0
  %v14294 = vpop.trf.xlu0
  %v14295 = vpop.trf.xlu0
  %v14296 = vpop.trf.xlu0
  %v14297 = vpop.trf.xlu0
  %v14298 = vpop.trf.xlu0
  %v14299 = vpop.trf.xlu0
  %v14300 = vpop.trf.xlu0
  %v14301 = vpop.trf.xlu0
  %v14302 = vpop.trf.xlu0
  %v14303 = vpop.trf.xlu0
  %v14304 = vpop.trf.xlu0
  %v14305 = vpop.trf.xlu0
  %v14306 = vpop.trf.xlu0
  %v14307 = vpop.trf.xlu0
  %v14312 = vrot.slane %v14228, 4
  %v14313 = vrot.slane %v14292, 4
  %vm14314 = vcmask 1043456
  %v14315 = vsel %vm14314, %v14196, %v14312
  %v14316 = vsel %vm14314, %v14260, %v14313
  %14319 = vst [vmem:[%s5] sm:$0xff] %v14315
  %14320 = vst [vmem:[%s5 + $0x8] sm:$0xff] %v14316
  // Predicated region
  $region22: #{basic_block_forward.1} parent=0 // pred_check
    _
  $region23: #{basic_block_forward.1} parent=0 // pred_check_branch
    %14322 = sbr.rel (0) target = $region25
  $region24: #{basic_block_forward.1} parent=0 // pred_region
    _
  $region25: #{basic_block_forward.1} parent=0 // pred_fallthru
    _
  // Predicated region
  $region26: #{basic_block_forward.1} parent=0 // pred_check
    _
  $region27: #{basic_block_forward.1} parent=0 // pred_check_branch
    %14324 = sbr.rel (0) target = $region29
  $region28: #{basic_block_forward.1} parent=0 // pred_region
    _
  $region29: #{basic_block_forward.1} parent=0 // pred_fallthru
    _

</llo_original>
